<compile_context>
chip_gen: v7x
topology: tpu7x:2x2x1
jax: 0.10.0
libtpu: 0.0.40
codegen_flags: <defaults>
</compile_context>

<pallas_src>
import functools

import jax
import jax.numpy as jnp
from jax.experimental import pallas as pl
from jax.experimental.pallas import tpu as pltpu

HIDDEN = 128
N_LAYERS = 2
N_CLASS = 2
IGNORE_INDEX = 2
B_TILE = 1024          # rows per grid step


def _gelu(x):
    # BERT-style tanh-approximation GELU (matches the repo's custom GELU class).
    # Weak-typed constants keep the compute dtype of x (f32 or bf16).
    return 0.5 * x * (1.0 + jnp.tanh(0.7978845608028654 * (x + 0.044715 * (x * x * x))))


@functools.lru_cache(maxsize=None)
def _pick_act_dtype():
    """bf16 GELU/tanh on chips with a bf16 VPU/EUP (v6e/v7x); f32 on v5e and older."""
    try:
        kind = jax.devices()[0].device_kind.lower()
    except Exception:
        return jnp.float32
    if not ("v6" in kind or "v7" in kind or "trillium" in kind):
        return jnp.float32            # v5e: no bf16 VPU/EUP -> keep f32 elementwise math
    try:                              # verify the bf16 elementwise path lowers here
        def _probe(x_ref, o_ref):
            o_ref[...] = _gelu(x_ref[...])
        y = pl.pallas_call(
            _probe, out_shape=jax.ShapeDtypeStruct((8, 128), jnp.bfloat16)
        )(jnp.ones((8, 128), jnp.bfloat16))
        jax.block_until_ready(y)
        return jnp.bfloat16
    except Exception:
        return jnp.float32


# --------------------------------------------------------------------------- #
# Kernel
# --------------------------------------------------------------------------- #
def _predictor_kernel(data_ref, tgt_ref, *rest, act_dtype):
    """rest = (*fused_param_refs, partials_out_ref)."""
    out_ref = rest[-1]
    param_refs = rest[:-1]
    n_gelu = (len(param_refs) - 2) // 2

    # ---- fused MLP forward: n_layers GELU stages + binary-margin head
    x = data_ref[...]                                             # [Bt, H] bf16
    for l in range(n_gelu):
        w, b = param_refs[2 * l], param_refs[2 * l + 1]
        h = jnp.dot(x, w[...], preferred_element_type=jnp.float32) + b[...]   # f32
        x = _gelu(h.astype(act_dtype)).astype(jnp.bfloat16)
    wh, bh = param_refs[-2], param_refs[-1]
    d = jnp.dot(x, wh[...], preferred_element_type=jnp.float32) + bh[...]     # [Bt, 1] f32

    # ---- binary-margin epilogue on the [Bt,1] lane-sparse column
    # t in {-1, 0, +1}: +1 -> label 0, -1 -> label 1, 0 -> ignore_index / padding
    t = tgt_ref[...].astype(jnp.float32)                          # [Bt, 1]
    valid = t * t
    z = t * d                                                     # +/- logit margin
    sp = jnp.maximum(z, 0.0) + jnp.log(1.0 + jnp.exp(-jnp.abs(z)))  # stable softplus
    pred_pm = jnp.where(d > 0.0, 1.0, -1.0)                       # argmax with tie -> class 0

    loss_tile = jnp.sum(valid * sp, keepdims=True)                # (1,1)
    cnt_tile = jnp.sum(valid, keepdims=True)                      # (1,1)
    corr_tile = jnp.sum(jnp.where(t * pred_pm < 0.0, 1.0, 0.0), keepdims=True)

    # ---- lane-dense per-tile partial-sum block: lanes 0/1/2 = loss, count, correct
    sub = jax.lax.broadcasted_iota(jnp.int32, (8, 128), 0)
    lane = jax.lax.broadcasted_iota(jnp.int32, (8, 128), 1)
    blk = jnp.where((sub == 0) & (lane == 0), loss_tile, 0.0)
    blk = jnp.where((sub == 0) & (lane == 1), cnt_tile, blk)
    blk = jnp.where((sub == 0) & (lane == 2), corr_tile, blk)
    out_ref[...] = blk


# --------------------------------------------------------------------------- #
# Host-side parameter folding (5 matmuls -> 3) + bf16 cast + binary-margin head
# --------------------------------------------------------------------------- #
def _fuse_params(params):
    hp = jax.lax.Precision.HIGHEST
    n_layers = (len(params) - 2) // 4
    wp, bp = params[-2], params[-1]
    # 2-class head folded to the logit difference (class1 - class0)
    wp_d = wp[:, 1:2] - wp[:, 0:1]                      # [H, 1]
    bp_d = bp[:, 1:2] - bp[:, 0:1]                      # [1, 1]

    ws, bs = [params[0]], [params[1]]                   # w1_0, b1_0 (pre-GELU)
    for l in range(n_layers):
        w2, b2 = params[4 * l + 2], params[4 * l + 3]
        if l + 1 < n_layers:
            w1n, b1n = params[4 * (l + 1)], params[4 * (l + 1) + 1]
            ws.append(jnp.dot(w2, w1n, precision=hp))
            bs.append(jnp.dot(b2, w1n, precision=hp) + b1n)
        else:
            ws.append(jnp.dot(w2, wp_d, precision=hp))
            bs.append(jnp.dot(b2, wp_d, precision=hp) + bp_d)

    fused = []
    for w, b in zip(ws, bs):
        # bf16 weights feed the MXU natively; biases stay f32 (added post-accumulate)
        fused += [w.astype(jnp.bfloat16), b.astype(jnp.float32)]
    return fused


def _encode_targets(labels):
    """labels {0,1,2} -> bf16 {-1,+1,0}: sign of the margin loss, 0 = ignored."""
    lbl = labels.reshape(-1, 1).astype(jnp.int32)
    return jnp.where(lbl == 1, -1.0, jnp.where(lbl == 0, 1.0, 0.0)).astype(jnp.bfloat16)


# --------------------------------------------------------------------------- #
# pallas_call wrapper
# --------------------------------------------------------------------------- #
def _predictor_stats(data, labels, params, b_tile=B_TILE, act_dtype=None):
    """Single fused forward over all rows; returns (loss_sum, valid_count, correct)."""
    assert params[-2].shape[-1] == N_CLASS == 2, "kernel specializes the 2-class head"
    if act_dtype is None:
        act_dtype = _pick_act_dtype()

    fused = _fuse_params(params)
    tgt = _encode_targets(labels)                       # [B, 1] bf16 in {-1, 0, +1}
    data_bf16 = data.astype(jnp.bfloat16)               # stream activations as bf16

    b, h = data.shape
    b_pad = ((b + b_tile - 1) // b_tile) * b_tile
    if b_pad != b:
        data_bf16 = jnp.pad(data_bf16, ((0, b_pad - b), (0, 0)))
        tgt = jnp.pad(tgt, ((0, b_pad - b), (0, 0)))    # padded rows: tgt=0 -> ignored
    num_tiles = b_pad // b_tile

    in_specs = (
        [pl.BlockSpec((b_tile, h), lambda i: (i, 0)),            # data tile per step
         pl.BlockSpec((b_tile, 1), lambda i: (i, 0))]            # per-row target code
        # constant block index -> folded weights/biases DMA'd once, resident in VMEM
        + [pl.BlockSpec(p.shape, lambda i: (0, 0)) for p in fused]
    )
    # one lane-dense (8,128) partial-sum block per grid step
    out_spec = pl.BlockSpec((8, 128), lambda i: (i, 0))
    out_shape = jax.ShapeDtypeStruct((num_tiles * 8, 128), jnp.float32)

    partials = pl.pallas_call(
        functools.partial(_predictor_kernel, act_dtype=act_dtype),
        grid=(num_tiles,),
        in_specs=in_specs,
        out_specs=out_spec,
        out_shape=out_shape,
        compiler_params=pltpu.CompilerParams(
            dimension_semantics=("parallel",)),   # independent tiles: v7x uses both TCs
    )(data_bf16, tgt, *fused)

    totals = jnp.sum(partials, axis=0)            # wrapper-side reduce of per-tile partials
    loss_sum = totals[0]
    count = totals[1]
    correct = totals[2].astype(jnp.int32)
    return loss_sum, count, correct


def predictor_forward(data, labels, params, train, b_tile=B_TILE):
    """Mirrors Predictor.forward: mean NLL loss (train=True) or #correct (train=False)."""
    loss_sum, count, correct = _predictor_stats(data, labels, params, b_tile)
    if train:
        return loss_sum / count      # NaN if every label is ignore_index (matches torch)
    return correct


def predictor_forward_both(data, labels, params, b_tile=B_TILE):
    """Merged train+eval path: one forward pass yields both loss and #correct."""
    loss_sum, count, correct = _predictor_stats(data, labels, params, b_tile)
    return loss_sum / count, correct


# --------------------------------------------------------------------------- #
# Parameter init + pure-JAX references for validation
# --------------------------------------------------------------------------- #
def init_params(key, hidden=HIDDEN, n_layers=N_LAYERS, n_class=N_CLASS):
    """Deterministic synthetic parameters (weights [in,out], biases [1,out])."""
    params = []
    for _ in range(n_layers):
        key, k1, k2, k3, k4 = jax.random.split(key, 5)
        params += [
            jax.random.normal(k1, (hidden, hidden), jnp.float32) * 0.1,
            jax.random.normal(k2, (1, hidden), jnp.float32) * 0.1,
            jax.random.normal(k3, (hidden, hidden), jnp.float32) * 0.1,
            jax.random.normal(k4, (1, hidden), jnp.float32) * 0.1,
        ]
    key, kp, kb = jax.random.split(key, 3)
    params += [
        jax.random.normal(kp, (hidden, n_class), jnp.float32) * 0.1,
        jax.random.normal(kb, (1, n_class), jnp.float32) * 0.1,
    ]
    return params


def _reference_forward(data, labels, params):
    """Unfused f32 reference with the original log-softmax / NLL / argmax semantics."""
    hp = jax.lax.Precision.HIGHEST
    x = data
    n_layers = (len(params) - 2) // 4
    for l in range(n_layers):
        w1, b1, w2, b2 = params[4 * l: 4 * l + 4]
        x = _gelu(jnp.dot(x, w1, precision=hp) + b1)
        x = jnp.dot(x, w2, precision=hp) + b2
    logits = jnp.dot(x, params[-2], precision=hp) + params[-1]
    logp = jax.nn.log_softmax(logits, axis=-1)
    lbl = labels[:, 0].astype(jnp.int32)
    valid = lbl != IGNORE_INDEX
    picked = jnp.take_along_axis(logp, jnp.clip(lbl, 0, 1)[:, None], axis=1)[:, 0]
    loss = -jnp.sum(jnp.where(valid, picked, 0.0)) / jnp.sum(valid)
    pred = jnp.argmax(logits, axis=-1)
    correct = jnp.sum((pred == lbl).astype(jnp.int32))
    return loss, correct


def _fused_reference(data, labels, params, act_dtype):
    """Pure-JAX replica of the exact kernel math (folded bf16 weights, margin head)."""
    fused = _fuse_params(params)
    x = data.astype(jnp.bfloat16)
    n_gelu = (len(fused) - 2) // 2
    for l in range(n_gelu):
        w, b = fused[2 * l], fused[2 * l + 1]
        h = jnp.dot(x, w, preferred_element_type=jnp.float32) + b
        x = _gelu(h.astype(act_dtype)).astype(jnp.bfloat16)
    d = (jnp.dot(x, fused[-2], preferred_element_type=jnp.float32) + fused[-1])[:, 0]
    lbl = labels[:, 0].astype(jnp.int32)
    t = jnp.where(lbl == 1, -1.0, jnp.where(lbl == 0, 1.0, 0.0))
    valid = t * t
    z = t * d
    sp = jnp.maximum(z, 0.0) + jnp.log(1.0 + jnp.exp(-jnp.abs(z)))
    loss = jnp.sum(valid * sp) / jnp.sum(valid)
    pred_pm = jnp.where(d > 0.0, 1.0, -1.0)
    correct = jnp.sum((t * pred_pm < 0.0).astype(jnp.int32))
    return loss, correct


if __name__ == "__main__":
    key = jax.random.PRNGKey(0)
    kd, kl, kp = jax.random.split(key, 3)

    B = 600                                   # not a multiple of the tile -> exercises padding
    data = jax.random.normal(kd, (B, HIDDEN), jnp.float32)
    # labels in {0, 1, 2}; 2 == ignore_index for the train-mode NLL loss
    labels = jax.random.randint(kl, (B, 1), 0, N_CLASS + 1, dtype=jnp.int32)
    labels = labels.at[0, 0].set(0).at[1, 0].set(1)   # guarantee some valid labels

    params = init_params(kp)
    act_dtype = _pick_act_dtype()

    # Production config (B_TILE=1024 -> single grid step here after padding).
    loss = predictor_forward(data, labels, params, train=True)        # scalar f32
    correct = predictor_forward(data, labels, params, train=False)    # scalar i32
    loss2, correct2 = predictor_forward_both(data, labels, params)    # merged path
    # Small tiles -> 3 grid steps: exercises the multi-tile grid + partial-sum reduce.
    ls_s, cnt_s, corr_s = _predictor_stats(data, labels, params, b_tile=256)
    jax.block_until_ready((loss, correct, loss2, correct2, ls_s, cnt_s, corr_s))
    loss_small = float(ls_s) / float(cnt_s)

    # Kernel vs pure-JAX replica of the same fused bf16 math (tight-ish check).
    loss_f, corr_f = _fused_reference(data, labels, params, act_dtype)
    assert abs(float(loss) - float(loss_f)) < 1e-2 * (1.0 + abs(float(loss_f))), \
        (float(loss), float(loss_f))
    assert abs(int(correct) - int(corr_f)) <= 10, (int(correct), int(corr_f))

    # Kernel vs unfused f32 reference (fusion + bf16 MXU/GELU shift numerics slightly).
    loss_ref, correct_ref = _reference_forward(data, labels, params)
    assert abs(float(loss) - float(loss_ref)) < 6e-2 * (1.0 + abs(float(loss_ref))), \
        (float(loss), float(loss_ref))
    assert abs(int(correct) - int(correct_ref)) <= 20, (int(correct), int(correct_ref))

    # Internal consistency: merged path and small-tile path agree with the big-tile path.
    assert abs(float(loss2) - float(loss)) < 1e-6
    assert int(correct2) == int(correct)
    assert abs(loss_small - float(loss)) < 1e-3 * (1.0 + abs(float(loss)))
    assert abs(int(corr_s) - int(correct)) <= 2

    print("KERNEL_OK")
</pallas_src>

<mosaic_0001>
module attributes {stable_mosaic.version = 11 : i64} {
  func.func @_predictor_kernel(%arg0: i32, %arg1: memref<1024x128xbf16, #tpu.memory_space<vmem>>, %arg2: memref<1024x1xbf16, #tpu.memory_space<vmem>>, %arg3: memref<128x128xbf16, #tpu.memory_space<vmem>>, %arg4: memref<1x128xf32, #tpu.memory_space<vmem>>, %arg5: memref<128x128xbf16, #tpu.memory_space<vmem>>, %arg6: memref<1x128xf32, #tpu.memory_space<vmem>>, %arg7: memref<128x1xbf16, #tpu.memory_space<vmem>>, %arg8: memref<1x1xf32, #tpu.memory_space<vmem>>, %arg9: memref<8x128xf32, #tpu.memory_space<vmem>>) attributes {dimension_semantics = [#tpu.dimension_semantics<parallel>], iteration_bounds = array<i64: 1>, scalar_prefetch = 0 : i64, scratch_operands = 0 : i64, tpu.core_type = #tpu.core_type<tc>, window_params = [{transform_indices = @transform_0, window_bounds = array<i64: 1024, 128>}, {transform_indices = @transform_1, window_bounds = array<i64: 1024, 1>}, {pipeline_mode = #tpu.pipeline_mode<synchronous>, transform_indices = @transform_2, window_bounds = array<i64: 128, 128>}, {pipeline_mode = #tpu.pipeline_mode<synchronous>, transform_indices = @transform_3, window_bounds = array<i64: 1, 128>}, {pipeline_mode = #tpu.pipeline_mode<synchronous>, transform_indices = @transform_4, window_bounds = array<i64: 128, 128>}, {pipeline_mode = #tpu.pipeline_mode<synchronous>, transform_indices = @transform_5, window_bounds = array<i64: 1, 128>}, {pipeline_mode = #tpu.pipeline_mode<synchronous>, transform_indices = @transform_6, window_bounds = array<i64: 128, 1>}, {pipeline_mode = #tpu.pipeline_mode<synchronous>, transform_indices = @transform_7, window_bounds = array<i64: 1, 1>}, {transform_indices = @transform_8, window_bounds = array<i64: 8, 128>}]} {
    %c0 = arith.constant 0 : index
    %c0_0 = arith.constant 0 : index
    %0 = vector.load %arg1[%c0, %c0_0] : memref<1024x128xbf16, #tpu.memory_space<vmem>>, vector<1024x128xbf16>
    %c0_1 = arith.constant 0 : index
    %c0_2 = arith.constant 0 : index
    %1 = vector.load %arg3[%c0_1, %c0_2] : memref<128x128xbf16, #tpu.memory_space<vmem>>, vector<128x128xbf16>
    %cst = arith.constant dense<0.000000e+00> : vector<1024x128xf32>
    %2 = tpu.matmul %0, %1, %cst {dimension_numbers = #tpu.dot_dimension_numbers<[1], [0], [0], [1], [0, 0, 1, 1], [], []>} : vector<1024x128xbf16>, vector<128x128xbf16>, vector<1024x128xf32> -> vector<1024x128xf32>
    %c0_3 = arith.constant 0 : index
    %c0_4 = arith.constant 0 : index
    %3 = vector.load %arg4[%c0_3, %c0_4] : memref<1x128xf32, #tpu.memory_space<vmem>>, vector<1x128xf32>
    %4 = vector.broadcast %3 : vector<1x128xf32> to vector<1024x128xf32>
    %5 = arith.addf %2, %4 : vector<1024x128xf32>
    %cst_5 = arith.constant 5.000000e-01 : f32
    %6 = vector.broadcast %cst_5 : f32 to vector<1024x128xf32>
    %7 = arith.mulf %6, %5 : vector<1024x128xf32>
    %8 = arith.mulf %5, %5 : vector<1024x128xf32>
    %9 = arith.mulf %8, %5 : vector<1024x128xf32>
    %cst_6 = arith.constant 4.471500e-02 : f32
    %10 = vector.broadcast %cst_6 : f32 to vector<1024x128xf32>
    %11 = arith.mulf %10, %9 : vector<1024x128xf32>
    %12 = arith.addf %5, %11 : vector<1024x128xf32>
    %cst_7 = arith.constant 0.797884583 : f32
    %13 = vector.broadcast %cst_7 : f32 to vector<1024x128xf32>
    %14 = arith.mulf %13, %12 : vector<1024x128xf32>
    %15 = math.tanh %14 : vector<1024x128xf32>
    %cst_8 = arith.constant 1.000000e+00 : f32
    %16 = vector.broadcast %cst_8 : f32 to vector<1024x128xf32>
    %17 = arith.addf %16, %15 : vector<1024x128xf32>
    %18 = arith.mulf %7, %17 : vector<1024x128xf32>
    %19 = arith.truncf %18 : vector<1024x128xf32> to vector<1024x128xbf16>
    %c0_9 = arith.constant 0 : index
    %c0_10 = arith.constant 0 : index
    %20 = vector.load %arg5[%c0_9, %c0_10] : memref<128x128xbf16, #tpu.memory_space<vmem>>, vector<128x128xbf16>
    %cst_11 = arith.constant dense<0.000000e+00> : vector<1024x128xf32>
    %21 = tpu.matmul %19, %20, %cst_11 {dimension_numbers = #tpu.dot_dimension_numbers<[1], [0], [0], [1], [0, 0, 1, 1], [], []>} : vector<1024x128xbf16>, vector<128x128xbf16>, vector<1024x128xf32> -> vector<1024x128xf32>
    %c0_12 = arith.constant 0 : index
    %c0_13 = arith.constant 0 : index
    %22 = vector.load %arg6[%c0_12, %c0_13] : memref<1x128xf32, #tpu.memory_space<vmem>>, vector<1x128xf32>
    %23 = vector.broadcast %22 : vector<1x128xf32> to vector<1024x128xf32>
    %24 = arith.addf %21, %23 : vector<1024x128xf32>
    %cst_14 = arith.constant 5.000000e-01 : f32
    %25 = vector.broadcast %cst_14 : f32 to vector<1024x128xf32>
    %26 = arith.mulf %25, %24 : vector<1024x128xf32>
    %27 = arith.mulf %24, %24 : vector<1024x128xf32>
    %28 = arith.mulf %27, %24 : vector<1024x128xf32>
    %cst_15 = arith.constant 4.471500e-02 : f32
    %29 = vector.broadcast %cst_15 : f32 to vector<1024x128xf32>
    %30 = arith.mulf %29, %28 : vector<1024x128xf32>
    %31 = arith.addf %24, %30 : vector<1024x128xf32>
    %cst_16 = arith.constant 0.797884583 : f32
    %32 = vector.broadcast %cst_16 : f32 to vector<1024x128xf32>
    %33 = arith.mulf %32, %31 : vector<1024x128xf32>
    %34 = math.tanh %33 : vector<1024x128xf32>
    %cst_17 = arith.constant 1.000000e+00 : f32
    %35 = vector.broadcast %cst_17 : f32 to vector<1024x128xf32>
    %36 = arith.addf %35, %34 : vector<1024x128xf32>
    %37 = arith.mulf %26, %36 : vector<1024x128xf32>
    %38 = arith.truncf %37 : vector<1024x128xf32> to vector<1024x128xbf16>
    %c0_18 = arith.constant 0 : index
    %c0_19 = arith.constant 0 : index
    %39 = vector.load %arg7[%c0_18, %c0_19] : memref<128x1xbf16, #tpu.memory_space<vmem>>, vector<128x1xbf16>
    %cst_20 = arith.constant dense<0.000000e+00> : vector<1024x1xf32>
    %40 = tpu.matmul %38, %39, %cst_20 {dimension_numbers = #tpu.dot_dimension_numbers<[1], [0], [0], [1], [0, 0, 1, 1], [], []>} : vector<1024x128xbf16>, vector<128x1xbf16>, vector<1024x1xf32> -> vector<1024x1xf32>
    %c0_21 = arith.constant 0 : index
    %c0_22 = arith.constant 0 : index
    %41 = vector.load %arg8[%c0_21, %c0_22] : memref<1x1xf32, #tpu.memory_space<vmem>>, vector<1x1xf32>
    %42 = vector.broadcast %41 : vector<1x1xf32> to vector<1024x1xf32>
    %43 = arith.addf %40, %42 : vector<1024x1xf32>
    %c0_23 = arith.constant 0 : index
    %c0_24 = arith.constant 0 : index
    %44 = vector.load %arg2[%c0_23, %c0_24] : memref<1024x1xbf16, #tpu.memory_space<vmem>>, vector<1024x1xbf16>
    %45 = arith.extf %44 : vector<1024x1xbf16> to vector<1024x1xf32>
    %46 = arith.mulf %45, %45 : vector<1024x1xf32>
    %47 = arith.mulf %45, %43 : vector<1024x1xf32>
    %cst_25 = arith.constant 0.000000e+00 : f32
    %48 = vector.broadcast %cst_25 : f32 to vector<1024x1xf32>
    %49 = arith.maximumf %47, %48 : vector<1024x1xf32>
    %50 = math.absf %47 : vector<1024x1xf32>
    %cst_26 = arith.constant 0.000000e+00 : f32
    %51 = vector.broadcast %cst_26 : f32 to vector<1024x1xf32>
    %52 = arith.subf %51, %50 : vector<1024x1xf32>
    %53 = math.exp %52 : vector<1024x1xf32>
    %cst_27 = arith.constant 1.000000e+00 : f32
    %54 = vector.broadcast %cst_27 : f32 to vector<1024x1xf32>
    %55 = arith.addf %54, %53 : vector<1024x1xf32>
    %56 = math.log %55 : vector<1024x1xf32>
    %57 = arith.addf %49, %56 : vector<1024x1xf32>
    %cst_28 = arith.constant 0.000000e+00 : f32
    %58 = vector.broadcast %cst_28 : f32 to vector<1024x1xf32>
    %59 = arith.cmpf ogt, %43, %58 : vector<1024x1xf32>
    %cst_29 = arith.constant 1.000000e+00 : f32
    %cst_30 = arith.constant -1.000000e+00 : f32
    %60 = vector.broadcast %cst_29 : f32 to vector<1024x1xf32>
    %61 = vector.broadcast %cst_30 : f32 to vector<1024x1xf32>
    %62 = arith.select %59, %60, %61 : vector<1024x1xi1>, vector<1024x1xf32>
    %63 = arith.mulf %46, %57 : vector<1024x1xf32>
    %64 = vector.shape_cast %63 : vector<1024x1xf32> to vector<1x1024x1xf32>
    %cst_31 = arith.constant dense<0.000000e+00> : vector<1xf32>
    %65 = vector.multi_reduction <add>, %64, %cst_31 [1, 2] : vector<1x1024x1xf32> to vector<1xf32>
    %66 = vector.shape_cast %65 : vector<1xf32> to vector<1x1x1xf32>
    %67 = vector.extract %66[0, 0, 0] : f32 from vector<1x1x1xf32>
    %68 = vector.broadcast %67 : f32 to vector<1x1xf32>
    %69 = vector.shape_cast %46 : vector<1024x1xf32> to vector<1x1024x1xf32>
    %cst_32 = arith.constant dense<0.000000e+00> : vector<1xf32>
    %70 = vector.multi_reduction <add>, %69, %cst_32 [1, 2] : vector<1x1024x1xf32> to vector<1xf32>
    %71 = vector.shape_cast %70 : vector<1xf32> to vector<1x1x1xf32>
    %72 = vector.extract %71[0, 0, 0] : f32 from vector<1x1x1xf32>
    %73 = vector.broadcast %72 : f32 to vector<1x1xf32>
    %74 = arith.mulf %45, %62 : vector<1024x1xf32>
    %cst_33 = arith.constant 0.000000e+00 : f32
    %75 = vector.broadcast %cst_33 : f32 to vector<1024x1xf32>
    %76 = arith.cmpf olt, %74, %75 : vector<1024x1xf32>
    %cst_34 = arith.constant 1.000000e+00 : f32
    %cst_35 = arith.constant 0.000000e+00 : f32
    %77 = vector.broadcast %cst_34 : f32 to vector<1024x1xf32>
    %78 = vector.broadcast %cst_35 : f32 to vector<1024x1xf32>
    %79 = arith.select %76, %77, %78 : vector<1024x1xi1>, vector<1024x1xf32>
    %80 = vector.shape_cast %79 : vector<1024x1xf32> to vector<1x1024x1xf32>
    %cst_36 = arith.constant dense<0.000000e+00> : vector<1xf32>
    %81 = vector.multi_reduction <add>, %80, %cst_36 [1, 2] : vector<1x1024x1xf32> to vector<1xf32>
    %82 = vector.shape_cast %81 : vector<1xf32> to vector<1x1x1xf32>
    %83 = vector.extract %82[0, 0, 0] : f32 from vector<1x1x1xf32>
    %84 = vector.broadcast %83 : f32 to vector<1x1xf32>
    %85 = tpu.iota {dimensions = array<i32: 0>} : vector<8x128xi32>
    %86 = tpu.iota {dimensions = array<i32: 1>} : vector<8x128xi32>
    %c0_i32 = arith.constant 0 : i32
    %87 = vector.broadcast %c0_i32 : i32 to vector<8x128xi32>
    %88 = arith.cmpi eq, %85, %87 : vector<8x128xi32>
    %c0_i32_37 = arith.constant 0 : i32
    %89 = vector.broadcast %c0_i32_37 : i32 to vector<8x128xi32>
    %90 = arith.cmpi eq, %86, %89 : vector<8x128xi32>
    %91 = arith.andi %88, %90 : vector<8x128xi1>
    %cst_38 = arith.constant 0.000000e+00 : f32
    %92 = vector.shape_cast %68 : vector<1x1xf32> to vector<1x1xf32>
    %93 = vector.broadcast %92 : vector<1x1xf32> to vector<8x128xf32>
    %94 = vector.broadcast %cst_38 : f32 to vector<8x128xf32>
    %95 = arith.select %91, %93, %94 : vector<8x128xi1>, vector<8x128xf32>
    %c0_i32_39 = arith.constant 0 : i32
    %96 = vector.broadcast %c0_i32_39 : i32 to vector<8x128xi32>
    %97 = arith.cmpi eq, %85, %96 : vector<8x128xi32>
    %c1_i32 = arith.constant 1 : i32
    %98 = vector.broadcast %c1_i32 : i32 to vector<8x128xi32>
    %99 = arith.cmpi eq, %86, %98 : vector<8x128xi32>
    %100 = arith.andi %97, %99 : vector<8x128xi1>
    %101 = vector.shape_cast %73 : vector<1x1xf32> to vector<1x1xf32>
    %102 = vector.broadcast %101 : vector<1x1xf32> to vector<8x128xf32>
    %103 = arith.select %100, %102, %95 : vector<8x128xi1>, vector<8x128xf32>
    %c0_i32_40 = arith.constant 0 : i32
    %104 = vector.broadcast %c0_i32_40 : i32 to vector<8x128xi32>
    %105 = arith.cmpi eq, %85, %104 : vector<8x128xi32>
    %c2_i32 = arith.constant 2 : i32
    %106 = vector.broadcast %c2_i32 : i32 to vector<8x128xi32>
    %107 = arith.cmpi eq, %86, %106 : vector<8x128xi32>
    %108 = arith.andi %105, %107 : vector<8x128xi1>
    %109 = vector.shape_cast %84 : vector<1x1xf32> to vector<1x1xf32>
    %110 = vector.broadcast %109 : vector<1x1xf32> to vector<8x128xf32>
    %111 = arith.select %108, %110, %103 : vector<8x128xi1>, vector<8x128xf32>
    %c0_41 = arith.constant 0 : index
    %c0_42 = arith.constant 0 : index
    %112 = vector.load %arg9[%c0_41, %c0_42] : memref<8x128xf32, #tpu.memory_space<vmem>>, vector<8x128xf32>
    tpu.vector_store %arg9[%c0_41, %c0_42], %111 {strides = array<i32>} : memref<8x128xf32, #tpu.memory_space<vmem>>, vector<8x128xf32>,
    return
  }
  func.func @transform_0(%arg0: i32) -> (i32, i32) {
    %c0_i32 = arith.constant 0 : i32
    %c0_i32_0 = arith.constant 0 : i32
    return %arg0, %c0_i32 : i32, i32
  }
  func.func @transform_1(%arg0: i32) -> (i32, i32) {
    %c0_i32 = arith.constant 0 : i32
    %c0_i32_0 = arith.constant 0 : i32
    return %arg0, %c0_i32 : i32, i32
  }
  func.func @transform_2(%arg0: i32) -> (i32, i32) {
    %c0_i32 = arith.constant 0 : i32
    %c0_i32_0 = arith.constant 0 : i32
    %c0_i32_1 = arith.constant 0 : i32
    return %c0_i32, %c0_i32_0 : i32, i32
  }
  func.func @transform_3(%arg0: i32) -> (i32, i32) {
    %c0_i32 = arith.constant 0 : i32
    %c0_i32_0 = arith.constant 0 : i32
    %c0_i32_1 = arith.constant 0 : i32
    return %c0_i32, %c0_i32_0 : i32, i32
  }
  func.func @transform_4(%arg0: i32) -> (i32, i32) {
    %c0_i32 = arith.constant 0 : i32
    %c0_i32_0 = arith.constant 0 : i32
    %c0_i32_1 = arith.constant 0 : i32
    return %c0_i32, %c0_i32_0 : i32, i32
  }
  func.func @transform_5(%arg0: i32) -> (i32, i32) {
    %c0_i32 = arith.constant 0 : i32
    %c0_i32_0 = arith.constant 0 : i32
    %c0_i32_1 = arith.constant 0 : i32
    return %c0_i32, %c0_i32_0 : i32, i32
  }
  func.func @transform_6(%arg0: i32) -> (i32, i32) {
    %c0_i32 = arith.constant 0 : i32
    %c0_i32_0 = arith.constant 0 : i32
    %c0_i32_1 = arith.constant 0 : i32
    return %c0_i32, %c0_i32_0 : i32, i32
  }
  func.func @transform_7(%arg0: i32) -> (i32, i32) {
    %c0_i32 = arith.constant 0 : i32
    %c0_i32_0 = arith.constant 0 : i32
    %c0_i32_1 = arith.constant 0 : i32
    return %c0_i32, %c0_i32_0 : i32, i32
  }
  func.func @transform_8(%arg0: i32) -> (i32, i32) {
    %c0_i32 = arith.constant 0 : i32
    %c0_i32_0 = arith.constant 0 : i32
    return %arg0, %c0_i32 : i32, i32
  }
}

</mosaic_0001>

<llo_original>
// kernel: tpu_custom_call.1
$region0: #{tpu_custom_call.1}
  #allocation0 [shape = 'u32[]', space=smem, size = 0x4, offset = 0x4, fixed_abs, tag = 'smem constant byte address 0x4 - core index']
  #allocation1 [shape = 'u32[144,128]{1,0:T(1,128)}', space=vmem, size = 0x12000, scoped, tag = 'internal scratch']
  #allocation2 [shape = 'f32[1,1]{1,0:T(1,128)S(1)}', space=vmem, size = 0x200, scoped, tag = 'scoped memory for tpu_custom_call.1']
  %s0 = inlined_call_operand.vmem [shape: bf16[1024,128], index: 0, kind: input, shape index: {}]
  %s1 = inlined_call_operand.vmem [shape: bf16[1024,1], index: 1, kind: input, shape index: {}]
  %s2 = inlined_call_operand.vmem [shape: bf16[128,128], index: 2, kind: input, shape index: {}]
  %s3 = inlined_call_operand.vmem [shape: f32[1,128], index: 3, kind: input, shape index: {}]
  %s4 = inlined_call_operand.hbm [shape: bf16[128,128], index: 4, kind: input, shape index: {}]
  %s5 = inlined_call_operand.vmem [shape: f32[1,128], index: 5, kind: input, shape index: {}]
  %s6 = inlined_call_operand.vmem [shape: bf16[128,1], index: 6, kind: input, shape index: {}]
  %s7 = inlined_call_operand.<no memory space> [shape: f32[1,1], index: 7, kind: input, shape index: {}]
  %s8 = inlined_call_operand.hbm [shape: f32[8,128], index: 8, kind: output, shape index: {}]
  %s9 = sld [smem:[#allocation0]]
  $region46: #{tpu_custom_call.1} parent=0
    _
  %s11 = ssub.s32 1, %s9
  %s12 = scalar_select 0, %s11, %s9
  %v13 = vstv %s7
  %14 = vst [vmem:[#allocation2] sm:$0x1] %v13
  $region1: #{tpu_custom_call.1} parent=0
    #allocation3 [shape = 'u8[32768]{0}', space=vmem, size = 0x8000, scoped, tag = 'input window, operand 4, single buffered']
    #allocation4 [shape = 's32[1]{0}', space=sflag, size = 0x4, scoped, tag = 'scoped memory for tpu_custom_call.1']
    #allocation5 [shape = 's32[1]{0}', space=sflag, size = 0x4, scoped, tag = 'scoped memory for tpu_custom_call.1']
    #allocation6 [shape = 'u8[4096]{0}', space=vmem, size = 0x1000, scoped, tag = 'output window, operand 0, single buffered']
    %15 = vsyncpa [#allocation4], 0
    %16 = vsyncpa [#allocation5], 0
    // Predicated region
    $region2: #{tpu_custom_call.1} parent=1 // pred_check
      _
    $region3: #{tpu_custom_call.1} parent=1 // pred_check_branch
      %18 = sbr.rel (0) target = $region5
    $region4: #{tpu_custom_call.1} parent=1 // pred_region
      _
    $region5: #{tpu_custom_call.1} parent=1 // pred_fallthru
      _
    // Predicated region
    $region6: #{tpu_custom_call.1} parent=1 // pred_check
      _
    $region7: #{tpu_custom_call.1} parent=1 // pred_check_branch
      %20 = sbr.rel (0) target = $region9
    $region8: #{tpu_custom_call.1} parent=1 // pred_region
      _
    $region9: #{tpu_custom_call.1} parent=1 // pred_fallthru
      _
    // Predicated region
    $region10: #{tpu_custom_call.1} parent=1 // pred_check
      _
    $region11: #{tpu_custom_call.1} parent=1 // pred_check_branch
      %22 = sbr.rel (0) target = $region13
    $region12: #{tpu_custom_call.1} parent=1 // pred_region
      _
    $region13: #{tpu_custom_call.1} parent=1 // pred_fallthru
      _
    // Predicated region
    $region14: #{tpu_custom_call.1} parent=1 // pred_check
      _
    $region15: #{tpu_custom_call.1} parent=1 // pred_check_branch
      %24 = sbr.rel (0) target = $region17
    $region16: #{tpu_custom_call.1} parent=1 // pred_region
      _
    $region17: #{tpu_custom_call.1} parent=1 // pred_fallthru
      _
    // Predicated region
    $region18: #{tpu_custom_call.1} parent=1 // pred_check
      _
    $region19: #{tpu_custom_call.1} parent=1 // pred_check_branch
      %26 = sbr.rel (0) target = $region21
    $region20: #{tpu_custom_call.1} parent=1 // pred_region
      %s28 = ssub.s32 1024, 1024
      %29 = vsyncadd [#allocation4], %s28
      %s30 = sshll.u32 [#allocation3], 4
      %s31 = int_to_ptr.vmem [resolvable:$true] %s30
      %36 = dma.hbm_to_vmem [thread:$0]  %s4, 1024, %s31, [#allocation4], 64, 64, 4
    $region21: #{tpu_custom_call.1} parent=1 // pred_fallthru
      _
    // Predicated region
    $region22: #{tpu_custom_call.1} parent=1 // pred_check
      _
    $region23: #{tpu_custom_call.1} parent=1 // pred_check_branch
      %38 = sbr.rel (0) target = $region25
    $region24: #{tpu_custom_call.1} parent=1 // pred_region
      _
    $region25: #{tpu_custom_call.1} parent=1 // pred_fallthru
      _
    // Predicated region
    $region26: #{tpu_custom_call.1} parent=1 // pred_check
      _
    $region27: #{tpu_custom_call.1} parent=1 // pred_check_branch
      %40 = sbr.rel (0) target = $region29
    $region28: #{tpu_custom_call.1} parent=1 // pred_region
      _
    $region29: #{tpu_custom_call.1} parent=1 // pred_fallthru
      _
    // Predicated region
    $region30: #{tpu_custom_call.1} parent=1 // pred_check
      _
    $region31: #{tpu_custom_call.1} parent=1 // pred_check_branch
      %42 = sbr.rel (0) target = $region33
    $region32: #{tpu_custom_call.1} parent=1 // pred_region
      _
    $region33: #{tpu_custom_call.1} parent=1 // pred_fallthru
      _
    // Predicated region
    $region34: #{tpu_custom_call.1} parent=1 // pred_check
      _
    $region35: #{tpu_custom_call.1} parent=1 // pred_check_branch
      %44 = sbr.rel (0) target = $region37
    $region36: #{tpu_custom_call.1} parent=1 // pred_region
      %45 = dma.done [#allocation4], 1024
    $region37: #{tpu_custom_call.1} parent=1 // pred_fallthru
      _
    %v47 = vld [vmem:[%s0] sm:$0xf]
    %v48 = vld [vmem:[%s0 + $0x4] sm:$0xf]
    %v49 = vld [vmem:[%s0 + $0x8] sm:$0xf]
    %v50 = vld [vmem:[%s0 + $0xc] sm:$0xf]
    %v51 = vld [vmem:[%s0 + $0x10] sm:$0xf]
    %v52 = vld [vmem:[%s0 + $0x14] sm:$0xf]
    %v53 = vld [vmem:[%s0 + $0x18] sm:$0xf]
    %v54 = vld [vmem:[%s0 + $0x1c] sm:$0xf]
    %v55 = vld [vmem:[%s0 + $0x20] sm:$0xf]
    %v56 = vld [vmem:[%s0 + $0x24] sm:$0xf]
    %v57 = vld [vmem:[%s0 + $0x28] sm:$0xf]
    %v58 = vld [vmem:[%s0 + $0x2c] sm:$0xf]
    %v59 = vld [vmem:[%s0 + $0x30] sm:$0xf]
    %v60 = vld [vmem:[%s0 + $0x34] sm:$0xf]
    %v61 = vld [vmem:[%s0 + $0x38] sm:$0xf]
    %v62 = vld [vmem:[%s0 + $0x3c] sm:$0xf]
    %v63 = vld [vmem:[%s0 + $0x40] sm:$0xf]
    %v64 = vld [vmem:[%s0 + $0x44] sm:$0xf]
    %v65 = vld [vmem:[%s0 + $0x48] sm:$0xf]
    %v66 = vld [vmem:[%s0 + $0x4c] sm:$0xf]
    %v67 = vld [vmem:[%s0 + $0x50] sm:$0xf]
    %v68 = vld [vmem:[%s0 + $0x54] sm:$0xf]
    %v69 = vld [vmem:[%s0 + $0x58] sm:$0xf]
    %v70 = vld [vmem:[%s0 + $0x5c] sm:$0xf]
    %v71 = vld [vmem:[%s0 + $0x60] sm:$0xf]
    %v72 = vld [vmem:[%s0 + $0x64] sm:$0xf]
    %v73 = vld [vmem:[%s0 + $0x68] sm:$0xf]
    %v74 = vld [vmem:[%s0 + $0x6c] sm:$0xf]
    %v75 = vld [vmem:[%s0 + $0x70] sm:$0xf]
    %v76 = vld [vmem:[%s0 + $0x74] sm:$0xf]
    %v77 = vld [vmem:[%s0 + $0x78] sm:$0xf]
    %v78 = vld [vmem:[%s0 + $0x7c] sm:$0xf]
    %v79 = vld [vmem:[%s0 + $0x80] sm:$0xf]
    %v80 = vld [vmem:[%s0 + $0x84] sm:$0xf]
    %v81 = vld [vmem:[%s0 + $0x88] sm:$0xf]
    %v82 = vld [vmem:[%s0 + $0x8c] sm:$0xf]
    %v83 = vld [vmem:[%s0 + $0x90] sm:$0xf]
    %v84 = vld [vmem:[%s0 + $0x94] sm:$0xf]
    %v85 = vld [vmem:[%s0 + $0x98] sm:$0xf]
    %v86 = vld [vmem:[%s0 + $0x9c] sm:$0xf]
    %v87 = vld [vmem:[%s0 + $0xa0] sm:$0xf]
    %v88 = vld [vmem:[%s0 + $0xa4] sm:$0xf]
    %v89 = vld [vmem:[%s0 + $0xa8] sm:$0xf]
    %v90 = vld [vmem:[%s0 + $0xac] sm:$0xf]
    %v91 = vld [vmem:[%s0 + $0xb0] sm:$0xf]
    %v92 = vld [vmem:[%s0 + $0xb4] sm:$0xf]
    %v93 = vld [vmem:[%s0 + $0xb8] sm:$0xf]
    %v94 = vld [vmem:[%s0 + $0xbc] sm:$0xf]
    %v95 = vld [vmem:[%s0 + $0xc0] sm:$0xf]
    %v96 = vld [vmem:[%s0 + $0xc4] sm:$0xf]
    %v97 = vld [vmem:[%s0 + $0xc8] sm:$0xf]
    %v98 = vld [vmem:[%s0 + $0xcc] sm:$0xf]
    %v99 = vld [vmem:[%s0 + $0xd0] sm:$0xf]
    %v100 = vld [vmem:[%s0 + $0xd4] sm:$0xf]
    %v101 = vld [vmem:[%s0 + $0xd8] sm:$0xf]
    %v102 = vld [vmem:[%s0 + $0xdc] sm:$0xf]
    %v103 = vld [vmem:[%s0 + $0xe0] sm:$0xf]
    %v104 = vld [vmem:[%s0 + $0xe4] sm:$0xf]
    %v105 = vld [vmem:[%s0 + $0xe8] sm:$0xf]
    %v106 = vld [vmem:[%s0 + $0xec] sm:$0xf]
    %v107 = vld [vmem:[%s0 + $0xf0] sm:$0xf]
    %v108 = vld [vmem:[%s0 + $0xf4] sm:$0xf]
    %v109 = vld [vmem:[%s0 + $0xf8] sm:$0xf]
    %v110 = vld [vmem:[%s0 + $0xfc] sm:$0xf]
    %v111 = vld [vmem:[%s0 + $0x100] sm:$0xf]
    %v112 = vld [vmem:[%s0 + $0x104] sm:$0xf]
    %v113 = vld [vmem:[%s0 + $0x108] sm:$0xf]
    %v114 = vld [vmem:[%s0 + $0x10c] sm:$0xf]
    %v115 = vld [vmem:[%s0 + $0x110] sm:$0xf]
    %v116 = vld [vmem:[%s0 + $0x114] sm:$0xf]
    %v117 = vld [vmem:[%s0 + $0x118] sm:$0xf]
    %v118 = vld [vmem:[%s0 + $0x11c] sm:$0xf]
    %v119 = vld [vmem:[%s0 + $0x120] sm:$0xf]
    %v120 = vld [vmem:[%s0 + $0x124] sm:$0xf]
    %v121 = vld [vmem:[%s0 + $0x128] sm:$0xf]
    %v122 = vld [vmem:[%s0 + $0x12c] sm:$0xf]
    %v123 = vld [vmem:[%s0 + $0x130] sm:$0xf]
    %v124 = vld [vmem:[%s0 + $0x134] sm:$0xf]
    %v125 = vld [vmem:[%s0 + $0x138] sm:$0xf]
    %v126 = vld [vmem:[%s0 + $0x13c] sm:$0xf]
    %v127 = vld [vmem:[%s0 + $0x140] sm:$0xf]
    %v128 = vld [vmem:[%s0 + $0x144] sm:$0xf]
    %v129 = vld [vmem:[%s0 + $0x148] sm:$0xf]
    %v130 = vld [vmem:[%s0 + $0x14c] sm:$0xf]
    %v131 = vld [vmem:[%s0 + $0x150] sm:$0xf]
    %v132 = vld [vmem:[%s0 + $0x154] sm:$0xf]
    %v133 = vld [vmem:[%s0 + $0x158] sm:$0xf]
    %v134 = vld [vmem:[%s0 + $0x15c] sm:$0xf]
    %v135 = vld [vmem:[%s0 + $0x160] sm:$0xf]
    %v136 = vld [vmem:[%s0 + $0x164] sm:$0xf]
    %v137 = vld [vmem:[%s0 + $0x168] sm:$0xf]
    %v138 = vld [vmem:[%s0 + $0x16c] sm:$0xf]
    %v139 = vld [vmem:[%s0 + $0x170] sm:$0xf]
    %v140 = vld [vmem:[%s0 + $0x174] sm:$0xf]
    %v141 = vld [vmem:[%s0 + $0x178] sm:$0xf]
    %v142 = vld [vmem:[%s0 + $0x17c] sm:$0xf]
    %v143 = vld [vmem:[%s0 + $0x180] sm:$0xf]
    %v144 = vld [vmem:[%s0 + $0x184] sm:$0xf]
    %v145 = vld [vmem:[%s0 + $0x188] sm:$0xf]
    %v146 = vld [vmem:[%s0 + $0x18c] sm:$0xf]
    %v147 = vld [vmem:[%s0 + $0x190] sm:$0xf]
    %v148 = vld [vmem:[%s0 + $0x194] sm:$0xf]
    %v149 = vld [vmem:[%s0 + $0x198] sm:$0xf]
    %v150 = vld [vmem:[%s0 + $0x19c] sm:$0xf]
    %v151 = vld [vmem:[%s0 + $0x1a0] sm:$0xf]
    %v152 = vld [vmem:[%s0 + $0x1a4] sm:$0xf]
    %v153 = vld [vmem:[%s0 + $0x1a8] sm:$0xf]
    %v154 = vld [vmem:[%s0 + $0x1ac] sm:$0xf]
    %v155 = vld [vmem:[%s0 + $0x1b0] sm:$0xf]
    %v156 = vld [vmem:[%s0 + $0x1b4] sm:$0xf]
    %v157 = vld [vmem:[%s0 + $0x1b8] sm:$0xf]
    %v158 = vld [vmem:[%s0 + $0x1bc] sm:$0xf]
    %v159 = vld [vmem:[%s0 + $0x1c0] sm:$0xf]
    %v160 = vld [vmem:[%s0 + $0x1c4] sm:$0xf]
    %v161 = vld [vmem:[%s0 + $0x1c8] sm:$0xf]
    %v162 = vld [vmem:[%s0 + $0x1cc] sm:$0xf]
    %v163 = vld [vmem:[%s0 + $0x1d0] sm:$0xf]
    %v164 = vld [vmem:[%s0 + $0x1d4] sm:$0xf]
    %v165 = vld [vmem:[%s0 + $0x1d8] sm:$0xf]
    %v166 = vld [vmem:[%s0 + $0x1dc] sm:$0xf]
    %v167 = vld [vmem:[%s0 + $0x1e0] sm:$0xf]
    %v168 = vld [vmem:[%s0 + $0x1e4] sm:$0xf]
    %v169 = vld [vmem:[%s0 + $0x1e8] sm:$0xf]
    %v170 = vld [vmem:[%s0 + $0x1ec] sm:$0xf]
    %v171 = vld [vmem:[%s0 + $0x1f0] sm:$0xf]
    %v172 = vld [vmem:[%s0 + $0x1f4] sm:$0xf]
    %v173 = vld [vmem:[%s0 + $0x1f8] sm:$0xf]
    %v174 = vld [vmem:[%s0 + $0x1fc] sm:$0xf]
    %v175 = vld [vmem:[%s2] sm:$0xf]
    %v176 = vld [vmem:[%s2 + $0x4] sm:$0xf]
    %v177 = vld [vmem:[%s2 + $0x8] sm:$0xf]
    %v178 = vld [vmem:[%s2 + $0xc] sm:$0xf]
    %v179 = vld [vmem:[%s2 + $0x10] sm:$0xf]
    %v180 = vld [vmem:[%s2 + $0x14] sm:$0xf]
    %v181 = vld [vmem:[%s2 + $0x18] sm:$0xf]
    %v182 = vld [vmem:[%s2 + $0x1c] sm:$0xf]
    %v183 = vld [vmem:[%s2 + $0x20] sm:$0xf]
    %v184 = vld [vmem:[%s2 + $0x24] sm:$0xf]
    %v185 = vld [vmem:[%s2 + $0x28] sm:$0xf]
    %v186 = vld [vmem:[%s2 + $0x2c] sm:$0xf]
    %v187 = vld [vmem:[%s2 + $0x30] sm:$0xf]
    %v188 = vld [vmem:[%s2 + $0x34] sm:$0xf]
    %v189 = vld [vmem:[%s2 + $0x38] sm:$0xf]
    %v190 = vld [vmem:[%s2 + $0x3c] sm:$0xf]
    %v191 = vld [vmem:[%s3] sm:$0x1]
    %v193 = vlaneseq
    %v194 = vshrl.u32 %v193, 7
    %v195 = vsub.s32 0, %v194
    %v196 = vrot.slane %v191, %v195
    %v326 = vunpack.c.l.b16 %v47
    %v327 = vunpack.c.l.b16 %v48
    %v328 = vunpack.c.l.b16 %v49
    %v329 = vunpack.c.l.b16 %v50
    %v330 = vunpack.c.l.b16 %v51
    %v331 = vunpack.c.l.b16 %v52
    %v332 = vunpack.c.l.b16 %v53
    %v333 = vunpack.c.l.b16 %v54
    %v334 = vunpack.c.l.b16 %v55
    %v335 = vunpack.c.l.b16 %v56
    %v336 = vunpack.c.l.b16 %v57
    %v337 = vunpack.c.l.b16 %v58
    %v338 = vunpack.c.l.b16 %v59
    %v339 = vunpack.c.l.b16 %v60
    %v340 = vunpack.c.l.b16 %v61
    %v341 = vunpack.c.l.b16 %v62
    %v342 = vunpack.c.l.b16 %v63
    %v343 = vunpack.c.l.b16 %v64
    %v344 = vunpack.c.l.b16 %v65
    %v345 = vunpack.c.l.b16 %v66
    %v346 = vunpack.c.l.b16 %v67
    %v347 = vunpack.c.l.b16 %v68
    %v348 = vunpack.c.l.b16 %v69
    %v349 = vunpack.c.l.b16 %v70
    %v350 = vunpack.c.l.b16 %v71
    %v351 = vunpack.c.l.b16 %v72
    %v352 = vunpack.c.l.b16 %v73
    %v353 = vunpack.c.l.b16 %v74
    %v354 = vunpack.c.l.b16 %v75
    %v355 = vunpack.c.l.b16 %v76
    %v356 = vunpack.c.l.b16 %v77
    %v357 = vunpack.c.l.b16 %v78
    %v358 = vunpack.c.l.b16 %v79
    %v359 = vunpack.c.l.b16 %v80
    %v360 = vunpack.c.l.b16 %v81
    %v361 = vunpack.c.l.b16 %v82
    %v362 = vunpack.c.l.b16 %v83
    %v363 = vunpack.c.l.b16 %v84
    %v364 = vunpack.c.l.b16 %v85
    %v365 = vunpack.c.l.b16 %v86
    %v366 = vunpack.c.l.b16 %v87
    %v367 = vunpack.c.l.b16 %v88
    %v368 = vunpack.c.l.b16 %v89
    %v369 = vunpack.c.l.b16 %v90
    %v370 = vunpack.c.l.b16 %v91
    %v371 = vunpack.c.l.b16 %v92
    %v372 = vunpack.c.l.b16 %v93
    %v373 = vunpack.c.l.b16 %v94
    %v374 = vunpack.c.l.b16 %v95
    %v375 = vunpack.c.l.b16 %v96
    %v376 = vunpack.c.l.b16 %v97
    %v377 = vunpack.c.l.b16 %v98
    %v378 = vunpack.c.l.b16 %v99
    %v379 = vunpack.c.l.b16 %v100
    %v380 = vunpack.c.l.b16 %v101
    %v381 = vunpack.c.l.b16 %v102
    %v382 = vunpack.c.l.b16 %v103
    %v383 = vunpack.c.l.b16 %v104
    %v384 = vunpack.c.l.b16 %v105
    %v385 = vunpack.c.l.b16 %v106
    %v386 = vunpack.c.l.b16 %v107
    %v387 = vunpack.c.l.b16 %v108
    %v388 = vunpack.c.l.b16 %v109
    %v389 = vunpack.c.l.b16 %v110
    %v390 = vunpack.c.l.b16 %v111
    %v391 = vunpack.c.l.b16 %v112
    %v392 = vunpack.c.l.b16 %v113
    %v393 = vunpack.c.l.b16 %v114
    %v394 = vunpack.c.l.b16 %v115
    %v395 = vunpack.c.l.b16 %v116
    %v396 = vunpack.c.l.b16 %v117
    %v397 = vunpack.c.l.b16 %v118
    %v398 = vunpack.c.l.b16 %v119
    %v399 = vunpack.c.l.b16 %v120
    %v400 = vunpack.c.l.b16 %v121
    %v401 = vunpack.c.l.b16 %v122
    %v402 = vunpack.c.l.b16 %v123
    %v403 = vunpack.c.l.b16 %v124
    %v404 = vunpack.c.l.b16 %v125
    %v405 = vunpack.c.l.b16 %v126
    %v406 = vunpack.c.l.b16 %v127
    %v407 = vunpack.c.l.b16 %v128
    %v408 = vunpack.c.l.b16 %v129
    %v409 = vunpack.c.l.b16 %v130
    %v410 = vunpack.c.l.b16 %v131
    %v411 = vunpack.c.l.b16 %v132
    %v412 = vunpack.c.l.b16 %v133
    %v413 = vunpack.c.l.b16 %v134
    %v414 = vunpack.c.l.b16 %v135
    %v415 = vunpack.c.l.b16 %v136
    %v416 = vunpack.c.l.b16 %v137
    %v417 = vunpack.c.l.b16 %v138
    %v418 = vunpack.c.l.b16 %v139
    %v419 = vunpack.c.l.b16 %v140
    %v420 = vunpack.c.l.b16 %v141
    %v421 = vunpack.c.l.b16 %v142
    %v422 = vunpack.c.l.b16 %v143
    %v423 = vunpack.c.l.b16 %v144
    %v424 = vunpack.c.l.b16 %v145
    %v425 = vunpack.c.l.b16 %v146
    %v426 = vunpack.c.l.b16 %v147
    %v427 = vunpack.c.l.b16 %v148
    %v428 = vunpack.c.l.b16 %v149
    %v429 = vunpack.c.l.b16 %v150
    %v430 = vunpack.c.l.b16 %v151
    %v431 = vunpack.c.l.b16 %v152
    %v432 = vunpack.c.l.b16 %v153
    %v433 = vunpack.c.l.b16 %v154
    %v434 = vunpack.c.l.b16 %v155
    %v435 = vunpack.c.l.b16 %v156
    %v436 = vunpack.c.l.b16 %v157
    %v437 = vunpack.c.l.b16 %v158
    %v438 = vunpack.c.l.b16 %v159
    %v439 = vunpack.c.l.b16 %v160
    %v440 = vunpack.c.l.b16 %v161
    %v441 = vunpack.c.l.b16 %v162
    %v442 = vunpack.c.l.b16 %v163
    %v443 = vunpack.c.l.b16 %v164
    %v444 = vunpack.c.l.b16 %v165
    %v445 = vunpack.c.l.b16 %v166
    %v446 = vunpack.c.l.b16 %v167
    %v447 = vunpack.c.l.b16 %v168
    %v448 = vunpack.c.l.b16 %v169
    %v449 = vunpack.c.l.b16 %v170
    %v450 = vunpack.c.l.b16 %v171
    %v451 = vunpack.c.l.b16 %v172
    %v452 = vunpack.c.l.b16 %v173
    %v453 = vunpack.c.l.b16 %v174
    %v454 = vpack.c.b16 %v327, %v326
    %v455 = vpack.c.b16 %v329, %v328
    %v456 = vpack.c.b16 %v331, %v330
    %v457 = vpack.c.b16 %v333, %v332
    %v458 = vpack.c.b16 %v335, %v334
    %v459 = vpack.c.b16 %v337, %v336
    %v460 = vpack.c.b16 %v339, %v338
    %v461 = vpack.c.b16 %v341, %v340
    %v462 = vpack.c.b16 %v343, %v342
    %v463 = vpack.c.b16 %v345, %v344
    %v464 = vpack.c.b16 %v347, %v346
    %v465 = vpack.c.b16 %v349, %v348
    %v466 = vpack.c.b16 %v351, %v350
    %v467 = vpack.c.b16 %v353, %v352
    %v468 = vpack.c.b16 %v355, %v354
    %v469 = vpack.c.b16 %v357, %v356
    %v470 = vpack.c.b16 %v359, %v358
    %v471 = vpack.c.b16 %v361, %v360
    %v472 = vpack.c.b16 %v363, %v362
    %v473 = vpack.c.b16 %v365, %v364
    %v474 = vpack.c.b16 %v367, %v366
    %v475 = vpack.c.b16 %v369, %v368
    %v476 = vpack.c.b16 %v371, %v370
    %v477 = vpack.c.b16 %v373, %v372
    %v478 = vpack.c.b16 %v375, %v374
    %v479 = vpack.c.b16 %v377, %v376
    %v480 = vpack.c.b16 %v379, %v378
    %v481 = vpack.c.b16 %v381, %v380
    %v482 = vpack.c.b16 %v383, %v382
    %v483 = vpack.c.b16 %v385, %v384
    %v484 = vpack.c.b16 %v387, %v386
    %v485 = vpack.c.b16 %v389, %v388
    %v486 = vpack.c.b16 %v391, %v390
    %v487 = vpack.c.b16 %v393, %v392
    %v488 = vpack.c.b16 %v395, %v394
    %v489 = vpack.c.b16 %v397, %v396
    %v490 = vpack.c.b16 %v399, %v398
    %v491 = vpack.c.b16 %v401, %v400
    %v492 = vpack.c.b16 %v403, %v402
    %v493 = vpack.c.b16 %v405, %v404
    %v494 = vpack.c.b16 %v407, %v406
    %v495 = vpack.c.b16 %v409, %v408
    %v496 = vpack.c.b16 %v411, %v410
    %v497 = vpack.c.b16 %v413, %v412
    %v498 = vpack.c.b16 %v415, %v414
    %v499 = vpack.c.b16 %v417, %v416
    %v500 = vpack.c.b16 %v419, %v418
    %v501 = vpack.c.b16 %v421, %v420
    %v502 = vpack.c.b16 %v423, %v422
    %v503 = vpack.c.b16 %v425, %v424
    %v504 = vpack.c.b16 %v427, %v426
    %v505 = vpack.c.b16 %v429, %v428
    %v506 = vpack.c.b16 %v431, %v430
    %v507 = vpack.c.b16 %v433, %v432
    %v508 = vpack.c.b16 %v435, %v434
    %v509 = vpack.c.b16 %v437, %v436
    %v510 = vpack.c.b16 %v439, %v438
    %v511 = vpack.c.b16 %v441, %v440
    %v512 = vpack.c.b16 %v443, %v442
    %v513 = vpack.c.b16 %v445, %v444
    %v514 = vpack.c.b16 %v447, %v446
    %v515 = vpack.c.b16 %v449, %v448
    %v516 = vpack.c.b16 %v451, %v450
    %v517 = vpack.c.b16 %v453, %v452
    %v598 = vunpack.c.l.b16 %v175
    %v599 = vunpack.c.l.b16 %v176
    %v600 = vunpack.c.l.b16 %v177
    %v601 = vunpack.c.l.b16 %v178
    %v602 = vunpack.c.l.b16 %v179
    %v603 = vunpack.c.l.b16 %v180
    %v604 = vunpack.c.l.b16 %v181
    %v605 = vunpack.c.l.b16 %v182
    %v606 = vunpack.c.l.b16 %v183
    %v607 = vunpack.c.l.b16 %v184
    %v608 = vunpack.c.l.b16 %v185
    %v609 = vunpack.c.l.b16 %v186
    %v610 = vunpack.c.l.b16 %v187
    %v611 = vunpack.c.l.b16 %v188
    %v612 = vunpack.c.l.b16 %v189
    %v613 = vunpack.c.l.b16 %v190
    %v614 = vpack.c.b16 %v599, %v598
    %v615 = vpack.c.b16 %v601, %v600
    %v616 = vpack.c.b16 %v603, %v602
    %v617 = vpack.c.b16 %v605, %v604
    %v618 = vpack.c.b16 %v607, %v606
    %v619 = vpack.c.b16 %v609, %v608
    %v620 = vpack.c.b16 %v611, %v610
    %v621 = vpack.c.b16 %v613, %v612
    %630 = vmatprep.subr.bf16.mxu0 0
    %631 = vmatpush1.bf16.msra.mxu0 %v614
    %632 = vmatprep.subr.bf16.mxu0 0
    %633 = vmatpush1.bf16.msra.mxu0 %v615
    %634 = vmatprep.subr.bf16.mxu0 0
    %635 = vmatpush1.bf16.msra.mxu0 %v616
    %636 = vmatprep.subr.bf16.mxu0 0
    %637 = vmatpush1.bf16.msra.mxu0 %v617
    %638 = vmatprep.subr.bf16.mxu0 0
    %639 = vmatpush1.bf16.msra.mxu0 %v618
    %640 = vmatprep.subr.bf16.mxu0 0
    %641 = vmatpush1.bf16.msra.mxu0 %v619
    %642 = vmatprep.subr.bf16.mxu0 0
    %643 = vmatpush1.bf16.msra.mxu0 %v620
    %644 = vmatprep.subr.bf16.mxu0 0
    %645 = vmatpush1.bf16.msra.mxu0 %v621
    %646 = vmatprep.subr.bf16.mxu0 0
    %647 = vmatpush1.bf16.msra.mxu0 0
    %648 = vmatprep.subr.bf16.mxu0 0
    %649 = vmatpush1.bf16.msra.mxu0 0
    %650 = vmatprep.subr.bf16.mxu0 0
    %651 = vmatpush1.bf16.msra.mxu0 0
    %652 = vmatprep.subr.bf16.mxu0 0
    %653 = vmatpush1.bf16.msra.mxu0 0
    %654 = vmatprep.subr.bf16.mxu0 0
    %655 = vmatpush1.bf16.msra.mxu0 0
    %656 = vmatprep.subr.bf16.mxu0 0
    %657 = vmatpush1.bf16.msra.mxu0 0
    %658 = vmatprep.subr.bf16.mxu0 0
    %659 = vmatpush1.bf16.msra.mxu0 0
    %660 = vmatprep.subr.bf16.mxu0 0
    %661 = vmatpush1.bf16.msra.mxu0 0
    %662 = vmatprep.mubr.bf16.mxu0 0
    %663 = vmatmul.mubr.bf16.gmra.mrb[0].mxu0 %v454
    %v664 = vpop.f32.mrb[0].mxu0
    %v665 = vadd.f32 %v196, %v664
    %v666 = vpop.f32.mrb[0].mxu0
    %v667 = vpop.f32.mrb[0].mxu0
    %v668 = vadd.f32 %v196, %v667
    %v669 = vpop.f32.mrb[0].mxu0
    %670 = vmatprep.mubr.bf16.mxu0 0
    %671 = vmatmul.mubr.bf16.gmra.mrb[0].mxu0 %v455
    %v672 = vpop.f32.mrb[0].mxu0
    %v673 = vadd.f32 %v196, %v672
    %v674 = vpop.f32.mrb[0].mxu0
    %v675 = vpop.f32.mrb[0].mxu0
    %v676 = vadd.f32 %v196, %v675
    %v677 = vpop.f32.mrb[0].mxu0
    %678 = vmatprep.mubr.bf16.mxu0 0
    %679 = vmatmul.mubr.bf16.gmra.mrb[0].mxu0 %v456
    %v680 = vpop.f32.mrb[0].mxu0
    %v681 = vadd.f32 %v196, %v680
    %v682 = vpop.f32.mrb[0].mxu0
    %v683 = vpop.f32.mrb[0].mxu0
    %v684 = vadd.f32 %v196, %v683
    %v685 = vpop.f32.mrb[0].mxu0
    %686 = vmatprep.mubr.bf16.mxu0 0
    %687 = vmatmul.mubr.bf16.gmra.mrb[0].mxu0 %v457
    %v688 = vpop.f32.mrb[0].mxu0
    %v689 = vadd.f32 %v196, %v688
    %v690 = vpop.f32.mrb[0].mxu0
    %v691 = vpop.f32.mrb[0].mxu0
    %v692 = vadd.f32 %v196, %v691
    %v693 = vpop.f32.mrb[0].mxu0
    %694 = vmatprep.mubr.bf16.mxu0 0
    %695 = vmatmul.mubr.bf16.gmra.mrb[0].mxu0 %v458
    %v696 = vpop.f32.mrb[0].mxu0
    %v697 = vadd.f32 %v196, %v696
    %v698 = vpop.f32.mrb[0].mxu0
    %v699 = vpop.f32.mrb[0].mxu0
    %v700 = vadd.f32 %v196, %v699
    %v701 = vpop.f32.mrb[0].mxu0
    %702 = vmatprep.mubr.bf16.mxu0 0
    %703 = vmatmul.mubr.bf16.gmra.mrb[0].mxu0 %v459
    %v704 = vpop.f32.mrb[0].mxu0
    %v705 = vadd.f32 %v196, %v704
    %v706 = vpop.f32.mrb[0].mxu0
    %v707 = vpop.f32.mrb[0].mxu0
    %v708 = vadd.f32 %v196, %v707
    %v709 = vpop.f32.mrb[0].mxu0
    %710 = vmatprep.mubr.bf16.mxu0 0
    %711 = vmatmul.mubr.bf16.gmra.mrb[0].mxu0 %v460
    %v712 = vpop.f32.mrb[0].mxu0
    %v713 = vadd.f32 %v196, %v712
    %v714 = vpop.f32.mrb[0].mxu0
    %v715 = vpop.f32.mrb[0].mxu0
    %v716 = vadd.f32 %v196, %v715
    %v717 = vpop.f32.mrb[0].mxu0
    %718 = vmatprep.mubr.bf16.mxu0 0
    %719 = vmatmul.mubr.bf16.gmra.mrb[0].mxu0 %v461
    %v720 = vpop.f32.mrb[0].mxu0
    %v721 = vadd.f32 %v196, %v720
    %v722 = vpop.f32.mrb[0].mxu0
    %v723 = vpop.f32.mrb[0].mxu0
    %v724 = vadd.f32 %v196, %v723
    %v725 = vpop.f32.mrb[0].mxu0
    %726 = vmatprep.mubr.bf16.mxu0 0
    %727 = vmatmul.mubr.bf16.gmra.mrb[0].mxu0 %v462
    %v728 = vpop.f32.mrb[0].mxu0
    %v729 = vadd.f32 %v196, %v728
    %v730 = vpop.f32.mrb[0].mxu0
    %v731 = vpop.f32.mrb[0].mxu0
    %v732 = vadd.f32 %v196, %v731
    %v733 = vpop.f32.mrb[0].mxu0
    %734 = vmatprep.mubr.bf16.mxu0 0
    %735 = vmatmul.mubr.bf16.gmra.mrb[0].mxu0 %v463
    %v736 = vpop.f32.mrb[0].mxu0
    %v737 = vadd.f32 %v196, %v736
    %v738 = vpop.f32.mrb[0].mxu0
    %v739 = vpop.f32.mrb[0].mxu0
    %v740 = vadd.f32 %v196, %v739
    %v741 = vpop.f32.mrb[0].mxu0
    %742 = vmatprep.mubr.bf16.mxu0 0
    %743 = vmatmul.mubr.bf16.gmra.mrb[0].mxu0 %v464
    %v744 = vpop.f32.mrb[0].mxu0
    %v745 = vadd.f32 %v196, %v744
    %v746 = vpop.f32.mrb[0].mxu0
    %v747 = vpop.f32.mrb[0].mxu0
    %v748 = vadd.f32 %v196, %v747
    %v749 = vpop.f32.mrb[0].mxu0
    %750 = vmatprep.mubr.bf16.mxu0 0
    %751 = vmatmul.mubr.bf16.gmra.mrb[0].mxu0 %v465
    %v752 = vpop.f32.mrb[0].mxu0
    %v753 = vadd.f32 %v196, %v752
    %v754 = vpop.f32.mrb[0].mxu0
    %v755 = vpop.f32.mrb[0].mxu0
    %v756 = vadd.f32 %v196, %v755
    %v757 = vpop.f32.mrb[0].mxu0
    %758 = vmatprep.mubr.bf16.mxu0 0
    %759 = vmatmul.mubr.bf16.gmra.mrb[0].mxu0 %v466
    %v760 = vpop.f32.mrb[0].mxu0
    %v761 = vadd.f32 %v196, %v760
    %v762 = vpop.f32.mrb[0].mxu0
    %v763 = vpop.f32.mrb[0].mxu0
    %v764 = vadd.f32 %v196, %v763
    %v765 = vpop.f32.mrb[0].mxu0
    %766 = vmatprep.mubr.bf16.mxu0 0
    %767 = vmatmul.mubr.bf16.gmra.mrb[0].mxu0 %v467
    %v768 = vpop.f32.mrb[0].mxu0
    %v769 = vadd.f32 %v196, %v768
    %v770 = vpop.f32.mrb[0].mxu0
    %v771 = vpop.f32.mrb[0].mxu0
    %v772 = vadd.f32 %v196, %v771
    %v773 = vpop.f32.mrb[0].mxu0
    %774 = vmatprep.mubr.bf16.mxu0 0
    %775 = vmatmul.mubr.bf16.gmra.mrb[0].mxu0 %v468
    %v776 = vpop.f32.mrb[0].mxu0
    %v777 = vadd.f32 %v196, %v776
    %v778 = vpop.f32.mrb[0].mxu0
    %v779 = vpop.f32.mrb[0].mxu0
    %v780 = vadd.f32 %v196, %v779
    %v781 = vpop.f32.mrb[0].mxu0
    %782 = vmatprep.mubr.bf16.mxu0 0
    %783 = vmatmul.mubr.bf16.gmra.mrb[0].mxu0 %v469
    %v784 = vpop.f32.mrb[0].mxu0
    %v785 = vadd.f32 %v196, %v784
    %v786 = vpop.f32.mrb[0].mxu0
    %v787 = vpop.f32.mrb[0].mxu0
    %v788 = vadd.f32 %v196, %v787
    %v789 = vpop.f32.mrb[0].mxu0
    %790 = vmatprep.mubr.bf16.mxu0 0
    %791 = vmatmul.mubr.bf16.gmra.mrb[0].mxu0 %v470
    %v792 = vpop.f32.mrb[0].mxu0
    %v793 = vadd.f32 %v196, %v792
    %v794 = vpop.f32.mrb[0].mxu0
    %v795 = vpop.f32.mrb[0].mxu0
    %v796 = vadd.f32 %v196, %v795
    %v797 = vpop.f32.mrb[0].mxu0
    %798 = vmatprep.mubr.bf16.mxu0 0
    %799 = vmatmul.mubr.bf16.gmra.mrb[0].mxu0 %v471
    %v800 = vpop.f32.mrb[0].mxu0
    %v801 = vadd.f32 %v196, %v800
    %v802 = vpop.f32.mrb[0].mxu0
    %v803 = vpop.f32.mrb[0].mxu0
    %v804 = vadd.f32 %v196, %v803
    %v805 = vpop.f32.mrb[0].mxu0
    %806 = vmatprep.mubr.bf16.mxu0 0
    %807 = vmatmul.mubr.bf16.gmra.mrb[0].mxu0 %v472
    %v808 = vpop.f32.mrb[0].mxu0
    %v809 = vadd.f32 %v196, %v808
    %v810 = vpop.f32.mrb[0].mxu0
    %v811 = vpop.f32.mrb[0].mxu0
    %v812 = vadd.f32 %v196, %v811
    %v813 = vpop.f32.mrb[0].mxu0
    %814 = vmatprep.mubr.bf16.mxu0 0
    %815 = vmatmul.mubr.bf16.gmra.mrb[0].mxu0 %v473
    %v816 = vpop.f32.mrb[0].mxu0
    %v817 = vadd.f32 %v196, %v816
    %v818 = vpop.f32.mrb[0].mxu0
    %v819 = vpop.f32.mrb[0].mxu0
    %v820 = vadd.f32 %v196, %v819
    %v821 = vpop.f32.mrb[0].mxu0
    %822 = vmatprep.mubr.bf16.mxu0 0
    %823 = vmatmul.mubr.bf16.gmra.mrb[0].mxu0 %v474
    %v824 = vpop.f32.mrb[0].mxu0
    %v825 = vadd.f32 %v196, %v824
    %v826 = vpop.f32.mrb[0].mxu0
    %v827 = vpop.f32.mrb[0].mxu0
    %v828 = vadd.f32 %v196, %v827
    %v829 = vpop.f32.mrb[0].mxu0
    %830 = vmatprep.mubr.bf16.mxu0 0
    %831 = vmatmul.mubr.bf16.gmra.mrb[0].mxu0 %v475
    %v832 = vpop.f32.mrb[0].mxu0
    %v833 = vadd.f32 %v196, %v832
    %v834 = vpop.f32.mrb[0].mxu0
    %v835 = vpop.f32.mrb[0].mxu0
    %v836 = vadd.f32 %v196, %v835
    %v837 = vpop.f32.mrb[0].mxu0
    %838 = vmatprep.mubr.bf16.mxu0 0
    %839 = vmatmul.mubr.bf16.gmra.mrb[0].mxu0 %v476
    %v840 = vpop.f32.mrb[0].mxu0
    %v841 = vadd.f32 %v196, %v840
    %v842 = vpop.f32.mrb[0].mxu0
    %v843 = vpop.f32.mrb[0].mxu0
    %v844 = vadd.f32 %v196, %v843
    %v845 = vpop.f32.mrb[0].mxu0
    %846 = vmatprep.mubr.bf16.mxu0 0
    %847 = vmatmul.mubr.bf16.gmra.mrb[0].mxu0 %v477
    %v848 = vpop.f32.mrb[0].mxu0
    %v849 = vadd.f32 %v196, %v848
    %v850 = vpop.f32.mrb[0].mxu0
    %v851 = vpop.f32.mrb[0].mxu0
    %v852 = vadd.f32 %v196, %v851
    %v853 = vpop.f32.mrb[0].mxu0
    %854 = vmatprep.mubr.bf16.mxu0 0
    %855 = vmatmul.mubr.bf16.gmra.mrb[0].mxu0 %v478
    %v856 = vpop.f32.mrb[0].mxu0
    %v857 = vadd.f32 %v196, %v856
    %v858 = vpop.f32.mrb[0].mxu0
    %v859 = vpop.f32.mrb[0].mxu0
    %v860 = vadd.f32 %v196, %v859
    %v861 = vpop.f32.mrb[0].mxu0
    %862 = vmatprep.mubr.bf16.mxu0 0
    %863 = vmatmul.mubr.bf16.gmra.mrb[0].mxu0 %v479
    %v864 = vpop.f32.mrb[0].mxu0
    %v865 = vadd.f32 %v196, %v864
    %v866 = vpop.f32.mrb[0].mxu0
    %v867 = vpop.f32.mrb[0].mxu0
    %v868 = vadd.f32 %v196, %v867
    %v869 = vpop.f32.mrb[0].mxu0
    %870 = vmatprep.mubr.bf16.mxu0 0
    %871 = vmatmul.mubr.bf16.gmra.mrb[0].mxu0 %v480
    %v872 = vpop.f32.mrb[0].mxu0
    %v873 = vadd.f32 %v196, %v872
    %v874 = vpop.f32.mrb[0].mxu0
    %v875 = vpop.f32.mrb[0].mxu0
    %v876 = vadd.f32 %v196, %v875
    %v877 = vpop.f32.mrb[0].mxu0
    %878 = vmatprep.mubr.bf16.mxu0 0
    %879 = vmatmul.mubr.bf16.gmra.mrb[0].mxu0 %v481
    %v880 = vpop.f32.mrb[0].mxu0
    %v881 = vadd.f32 %v196, %v880
    %v882 = vpop.f32.mrb[0].mxu0
    %v883 = vpop.f32.mrb[0].mxu0
    %v884 = vadd.f32 %v196, %v883
    %v885 = vpop.f32.mrb[0].mxu0
    %886 = vmatprep.mubr.bf16.mxu0 0
    %887 = vmatmul.mubr.bf16.gmra.mrb[0].mxu0 %v482
    %v888 = vpop.f32.mrb[0].mxu0
    %v889 = vadd.f32 %v196, %v888
    %v890 = vpop.f32.mrb[0].mxu0
    %v891 = vpop.f32.mrb[0].mxu0
    %v892 = vadd.f32 %v196, %v891
    %v893 = vpop.f32.mrb[0].mxu0
    %894 = vmatprep.mubr.bf16.mxu0 0
    %895 = vmatmul.mubr.bf16.gmra.mrb[0].mxu0 %v483
    %v896 = vpop.f32.mrb[0].mxu0
    %v897 = vadd.f32 %v196, %v896
    %v898 = vpop.f32.mrb[0].mxu0
    %v899 = vpop.f32.mrb[0].mxu0
    %v900 = vadd.f32 %v196, %v899
    %v901 = vpop.f32.mrb[0].mxu0
    %902 = vmatprep.mubr.bf16.mxu0 0
    %903 = vmatmul.mubr.bf16.gmra.mrb[0].mxu0 %v484
    %v904 = vpop.f32.mrb[0].mxu0
    %v905 = vadd.f32 %v196, %v904
    %v906 = vpop.f32.mrb[0].mxu0
    %v907 = vpop.f32.mrb[0].mxu0
    %v908 = vadd.f32 %v196, %v907
    %v909 = vpop.f32.mrb[0].mxu0
    %910 = vmatprep.mubr.bf16.mxu0 0
    %911 = vmatmul.mubr.bf16.gmra.mrb[0].mxu0 %v485
    %v912 = vpop.f32.mrb[0].mxu0
    %v913 = vadd.f32 %v196, %v912
    %v914 = vpop.f32.mrb[0].mxu0
    %v915 = vpop.f32.mrb[0].mxu0
    %v916 = vadd.f32 %v196, %v915
    %v917 = vpop.f32.mrb[0].mxu0
    %918 = vmatprep.mubr.bf16.mxu0 0
    %919 = vmatmul.mubr.bf16.gmra.mrb[0].mxu0 %v486
    %v920 = vpop.f32.mrb[0].mxu0
    %v921 = vadd.f32 %v196, %v920
    %v922 = vpop.f32.mrb[0].mxu0
    %v923 = vpop.f32.mrb[0].mxu0
    %v924 = vadd.f32 %v196, %v923
    %v925 = vpop.f32.mrb[0].mxu0
    %926 = vmatprep.mubr.bf16.mxu0 0
    %927 = vmatmul.mubr.bf16.gmra.mrb[0].mxu0 %v487
    %v928 = vpop.f32.mrb[0].mxu0
    %v929 = vadd.f32 %v196, %v928
    %v930 = vpop.f32.mrb[0].mxu0
    %v931 = vpop.f32.mrb[0].mxu0
    %v932 = vadd.f32 %v196, %v931
    %v933 = vpop.f32.mrb[0].mxu0
    %934 = vmatprep.mubr.bf16.mxu0 0
    %935 = vmatmul.mubr.bf16.gmra.mrb[0].mxu0 %v488
    %v936 = vpop.f32.mrb[0].mxu0
    %v937 = vadd.f32 %v196, %v936
    %v938 = vpop.f32.mrb[0].mxu0
    %v939 = vpop.f32.mrb[0].mxu0
    %v940 = vadd.f32 %v196, %v939
    %v941 = vpop.f32.mrb[0].mxu0
    %942 = vmatprep.mubr.bf16.mxu0 0
    %943 = vmatmul.mubr.bf16.gmra.mrb[0].mxu0 %v489
    %v944 = vpop.f32.mrb[0].mxu0
    %v945 = vadd.f32 %v196, %v944
    %v946 = vpop.f32.mrb[0].mxu0
    %v947 = vpop.f32.mrb[0].mxu0
    %v948 = vadd.f32 %v196, %v947
    %v949 = vpop.f32.mrb[0].mxu0
    %950 = vmatprep.mubr.bf16.mxu0 0
    %951 = vmatmul.mubr.bf16.gmra.mrb[0].mxu0 %v490
    %v952 = vpop.f32.mrb[0].mxu0
    %v953 = vadd.f32 %v196, %v952
    %v954 = vpop.f32.mrb[0].mxu0
    %v955 = vpop.f32.mrb[0].mxu0
    %v956 = vadd.f32 %v196, %v955
    %v957 = vpop.f32.mrb[0].mxu0
    %958 = vmatprep.mubr.bf16.mxu0 0
    %959 = vmatmul.mubr.bf16.gmra.mrb[0].mxu0 %v491
    %v960 = vpop.f32.mrb[0].mxu0
    %v961 = vadd.f32 %v196, %v960
    %v962 = vpop.f32.mrb[0].mxu0
    %v963 = vpop.f32.mrb[0].mxu0
    %v964 = vadd.f32 %v196, %v963
    %v965 = vpop.f32.mrb[0].mxu0
    %966 = vmatprep.mubr.bf16.mxu0 0
    %967 = vmatmul.mubr.bf16.gmra.mrb[0].mxu0 %v492
    %v968 = vpop.f32.mrb[0].mxu0
    %v969 = vadd.f32 %v196, %v968
    %v970 = vpop.f32.mrb[0].mxu0
    %v971 = vpop.f32.mrb[0].mxu0
    %v972 = vadd.f32 %v196, %v971
    %v973 = vpop.f32.mrb[0].mxu0
    %974 = vmatprep.mubr.bf16.mxu0 0
    %975 = vmatmul.mubr.bf16.gmra.mrb[0].mxu0 %v493
    %v976 = vpop.f32.mrb[0].mxu0
    %v977 = vadd.f32 %v196, %v976
    %v978 = vpop.f32.mrb[0].mxu0
    %v979 = vpop.f32.mrb[0].mxu0
    %v980 = vadd.f32 %v196, %v979
    %v981 = vpop.f32.mrb[0].mxu0
    %982 = vmatprep.mubr.bf16.mxu0 0
    %983 = vmatmul.mubr.bf16.gmra.mrb[0].mxu0 %v494
    %v984 = vpop.f32.mrb[0].mxu0
    %v985 = vadd.f32 %v196, %v984
    %v986 = vpop.f32.mrb[0].mxu0
    %v987 = vpop.f32.mrb[0].mxu0
    %v988 = vadd.f32 %v196, %v987
    %v989 = vpop.f32.mrb[0].mxu0
    %990 = vmatprep.mubr.bf16.mxu0 0
    %991 = vmatmul.mubr.bf16.gmra.mrb[0].mxu0 %v495
    %v992 = vpop.f32.mrb[0].mxu0
    %v993 = vadd.f32 %v196, %v992
    %v994 = vpop.f32.mrb[0].mxu0
    %v995 = vpop.f32.mrb[0].mxu0
    %v996 = vadd.f32 %v196, %v995
    %v997 = vpop.f32.mrb[0].mxu0
    %998 = vmatprep.mubr.bf16.mxu0 0
    %999 = vmatmul.mubr.bf16.gmra.mrb[0].mxu0 %v496
    %v1000 = vpop.f32.mrb[0].mxu0
    %v1001 = vadd.f32 %v196, %v1000
    %v1002 = vpop.f32.mrb[0].mxu0
    %v1003 = vpop.f32.mrb[0].mxu0
    %v1004 = vadd.f32 %v196, %v1003
    %v1005 = vpop.f32.mrb[0].mxu0
    %1006 = vmatprep.mubr.bf16.mxu0 0
    %1007 = vmatmul.mubr.bf16.gmra.mrb[0].mxu0 %v497
    %v1008 = vpop.f32.mrb[0].mxu0
    %v1009 = vadd.f32 %v196, %v1008
    %v1010 = vpop.f32.mrb[0].mxu0
    %v1011 = vpop.f32.mrb[0].mxu0
    %v1012 = vadd.f32 %v196, %v1011
    %v1013 = vpop.f32.mrb[0].mxu0
    %1014 = vmatprep.mubr.bf16.mxu0 0
    %1015 = vmatmul.mubr.bf16.gmra.mrb[0].mxu0 %v498
    %v1016 = vpop.f32.mrb[0].mxu0
    %v1017 = vadd.f32 %v196, %v1016
    %v1018 = vpop.f32.mrb[0].mxu0
    %v1019 = vpop.f32.mrb[0].mxu0
    %v1020 = vadd.f32 %v196, %v1019
    %v1021 = vpop.f32.mrb[0].mxu0
    %1022 = vmatprep.mubr.bf16.mxu0 0
    %1023 = vmatmul.mubr.bf16.gmra.mrb[0].mxu0 %v499
    %v1024 = vpop.f32.mrb[0].mxu0
    %v1025 = vadd.f32 %v196, %v1024
    %v1026 = vpop.f32.mrb[0].mxu0
    %v1027 = vpop.f32.mrb[0].mxu0
    %v1028 = vadd.f32 %v196, %v1027
    %v1029 = vpop.f32.mrb[0].mxu0
    %1030 = vmatprep.mubr.bf16.mxu0 0
    %1031 = vmatmul.mubr.bf16.gmra.mrb[0].mxu0 %v500
    %v1032 = vpop.f32.mrb[0].mxu0
    %v1033 = vadd.f32 %v196, %v1032
    %v1034 = vpop.f32.mrb[0].mxu0
    %v1035 = vpop.f32.mrb[0].mxu0
    %v1036 = vadd.f32 %v196, %v1035
    %v1037 = vpop.f32.mrb[0].mxu0
    %1038 = vmatprep.mubr.bf16.mxu0 0
    %1039 = vmatmul.mubr.bf16.gmra.mrb[0].mxu0 %v501
    %v1040 = vpop.f32.mrb[0].mxu0
    %v1041 = vadd.f32 %v196, %v1040
    %v1042 = vpop.f32.mrb[0].mxu0
    %v1043 = vpop.f32.mrb[0].mxu0
    %v1044 = vadd.f32 %v196, %v1043
    %v1045 = vpop.f32.mrb[0].mxu0
    %1046 = vmatprep.mubr.bf16.mxu0 0
    %1047 = vmatmul.mubr.bf16.gmra.mrb[0].mxu0 %v502
    %v1048 = vpop.f32.mrb[0].mxu0
    %v1049 = vadd.f32 %v196, %v1048
    %v1050 = vpop.f32.mrb[0].mxu0
    %v1051 = vpop.f32.mrb[0].mxu0
    %v1052 = vadd.f32 %v196, %v1051
    %v1053 = vpop.f32.mrb[0].mxu0
    %1054 = vmatprep.mubr.bf16.mxu0 0
    %1055 = vmatmul.mubr.bf16.gmra.mrb[0].mxu0 %v503
    %v1056 = vpop.f32.mrb[0].mxu0
    %v1057 = vadd.f32 %v196, %v1056
    %v1058 = vpop.f32.mrb[0].mxu0
    %v1059 = vpop.f32.mrb[0].mxu0
    %v1060 = vadd.f32 %v196, %v1059
    %v1061 = vpop.f32.mrb[0].mxu0
    %1062 = vmatprep.mubr.bf16.mxu0 0
    %1063 = vmatmul.mubr.bf16.gmra.mrb[0].mxu0 %v504
    %v1064 = vpop.f32.mrb[0].mxu0
    %v1065 = vadd.f32 %v196, %v1064
    %v1066 = vpop.f32.mrb[0].mxu0
    %v1067 = vpop.f32.mrb[0].mxu0
    %v1068 = vadd.f32 %v196, %v1067
    %v1069 = vpop.f32.mrb[0].mxu0
    %1070 = vmatprep.mubr.bf16.mxu0 0
    %1071 = vmatmul.mubr.bf16.gmra.mrb[0].mxu0 %v505
    %v1072 = vpop.f32.mrb[0].mxu0
    %v1073 = vadd.f32 %v196, %v1072
    %v1074 = vpop.f32.mrb[0].mxu0
    %v1075 = vpop.f32.mrb[0].mxu0
    %v1076 = vadd.f32 %v196, %v1075
    %v1077 = vpop.f32.mrb[0].mxu0
    %1078 = vmatprep.mubr.bf16.mxu0 0
    %1079 = vmatmul.mubr.bf16.gmra.mrb[0].mxu0 %v506
    %v1080 = vpop.f32.mrb[0].mxu0
    %v1081 = vadd.f32 %v196, %v1080
    %v1082 = vpop.f32.mrb[0].mxu0
    %v1083 = vpop.f32.mrb[0].mxu0
    %v1084 = vadd.f32 %v196, %v1083
    %v1085 = vpop.f32.mrb[0].mxu0
    %1086 = vmatprep.mubr.bf16.mxu0 0
    %1087 = vmatmul.mubr.bf16.gmra.mrb[0].mxu0 %v507
    %v1088 = vpop.f32.mrb[0].mxu0
    %v1089 = vadd.f32 %v196, %v1088
    %v1090 = vpop.f32.mrb[0].mxu0
    %v1091 = vpop.f32.mrb[0].mxu0
    %v1092 = vadd.f32 %v196, %v1091
    %v1093 = vpop.f32.mrb[0].mxu0
    %1094 = vmatprep.mubr.bf16.mxu0 0
    %1095 = vmatmul.mubr.bf16.gmra.mrb[0].mxu0 %v508
    %v1096 = vpop.f32.mrb[0].mxu0
    %v1097 = vadd.f32 %v196, %v1096
    %v1098 = vpop.f32.mrb[0].mxu0
    %v1099 = vpop.f32.mrb[0].mxu0
    %v1100 = vadd.f32 %v196, %v1099
    %v1101 = vpop.f32.mrb[0].mxu0
    %1102 = vmatprep.mubr.bf16.mxu0 0
    %1103 = vmatmul.mubr.bf16.gmra.mrb[0].mxu0 %v509
    %v1104 = vpop.f32.mrb[0].mxu0
    %v1105 = vadd.f32 %v196, %v1104
    %v1106 = vpop.f32.mrb[0].mxu0
    %v1107 = vpop.f32.mrb[0].mxu0
    %v1108 = vadd.f32 %v196, %v1107
    %v1109 = vpop.f32.mrb[0].mxu0
    %1110 = vmatprep.mubr.bf16.mxu0 0
    %1111 = vmatmul.mubr.bf16.gmra.mrb[0].mxu0 %v510
    %v1112 = vpop.f32.mrb[0].mxu0
    %v1113 = vadd.f32 %v196, %v1112
    %v1114 = vpop.f32.mrb[0].mxu0
    %v1115 = vpop.f32.mrb[0].mxu0
    %v1116 = vadd.f32 %v196, %v1115
    %v1117 = vpop.f32.mrb[0].mxu0
    %1118 = vmatprep.mubr.bf16.mxu0 0
    %1119 = vmatmul.mubr.bf16.gmra.mrb[0].mxu0 %v511
    %v1120 = vpop.f32.mrb[0].mxu0
    %v1121 = vadd.f32 %v196, %v1120
    %v1122 = vpop.f32.mrb[0].mxu0
    %v1123 = vpop.f32.mrb[0].mxu0
    %v1124 = vadd.f32 %v196, %v1123
    %v1125 = vpop.f32.mrb[0].mxu0
    %1126 = vmatprep.mubr.bf16.mxu0 0
    %1127 = vmatmul.mubr.bf16.gmra.mrb[0].mxu0 %v512
    %v1128 = vpop.f32.mrb[0].mxu0
    %v1129 = vadd.f32 %v196, %v1128
    %v1130 = vpop.f32.mrb[0].mxu0
    %v1131 = vpop.f32.mrb[0].mxu0
    %v1132 = vadd.f32 %v196, %v1131
    %v1133 = vpop.f32.mrb[0].mxu0
    %1134 = vmatprep.mubr.bf16.mxu0 0
    %1135 = vmatmul.mubr.bf16.gmra.mrb[0].mxu0 %v513
    %v1136 = vpop.f32.mrb[0].mxu0
    %v1137 = vadd.f32 %v196, %v1136
    %v1138 = vpop.f32.mrb[0].mxu0
    %v1139 = vpop.f32.mrb[0].mxu0
    %v1140 = vadd.f32 %v196, %v1139
    %v1141 = vpop.f32.mrb[0].mxu0
    %1142 = vmatprep.mubr.bf16.mxu0 0
    %1143 = vmatmul.mubr.bf16.gmra.mrb[0].mxu0 %v514
    %v1144 = vpop.f32.mrb[0].mxu0
    %v1145 = vadd.f32 %v196, %v1144
    %v1146 = vpop.f32.mrb[0].mxu0
    %v1147 = vpop.f32.mrb[0].mxu0
    %v1148 = vadd.f32 %v196, %v1147
    %v1149 = vpop.f32.mrb[0].mxu0
    %1150 = vmatprep.mubr.bf16.mxu0 0
    %1151 = vmatmul.mubr.bf16.gmra.mrb[0].mxu0 %v515
    %v1152 = vpop.f32.mrb[0].mxu0
    %v1153 = vadd.f32 %v196, %v1152
    %v1154 = vpop.f32.mrb[0].mxu0
    %v1155 = vpop.f32.mrb[0].mxu0
    %v1156 = vadd.f32 %v196, %v1155
    %v1157 = vpop.f32.mrb[0].mxu0
    %1158 = vmatprep.mubr.bf16.mxu0 0
    %1159 = vmatmul.mubr.bf16.gmra.mrb[0].mxu0 %v516
    %v1160 = vpop.f32.mrb[0].mxu0
    %v1161 = vadd.f32 %v196, %v1160
    %v1162 = vpop.f32.mrb[0].mxu0
    %v1163 = vpop.f32.mrb[0].mxu0
    %v1164 = vadd.f32 %v196, %v1163
    %v1165 = vpop.f32.mrb[0].mxu0
    %1166 = vmatprep.mubr.bf16.mxu0 0
    %1167 = vmatmul.mubr.bf16.gmra.mrb[0].mxu0 %v517
    %v1168 = vpop.f32.mrb[0].mxu0
    %v1169 = vadd.f32 %v196, %v1168
    %v1170 = vpop.f32.mrb[0].mxu0
    %v1171 = vpop.f32.mrb[0].mxu0
    %v1172 = vadd.f32 %v196, %v1171
    %v1173 = vpop.f32.mrb[0].mxu0
    %1174 = vdwg.mxu0
    %v1175 = vmul.f32 %v665, 0.5
    %v1176 = vmul.f32 %v668, 0.5
    %v1177 = vmul.f32 %v673, 0.5
    %v1178 = vmul.f32 %v676, 0.5
    %v1179 = vmul.f32 %v681, 0.5
    %v1180 = vmul.f32 %v684, 0.5
    %v1181 = vmul.f32 %v689, 0.5
    %v1182 = vmul.f32 %v692, 0.5
    %v1183 = vmul.f32 %v697, 0.5
    %v1184 = vmul.f32 %v700, 0.5
    %v1185 = vmul.f32 %v705, 0.5
    %v1186 = vmul.f32 %v708, 0.5
    %v1187 = vmul.f32 %v713, 0.5
    %v1188 = vmul.f32 %v716, 0.5
    %v1189 = vmul.f32 %v721, 0.5
    %v1190 = vmul.f32 %v724, 0.5
    %v1191 = vmul.f32 %v729, 0.5
    %v1192 = vmul.f32 %v732, 0.5
    %v1193 = vmul.f32 %v737, 0.5
    %v1194 = vmul.f32 %v740, 0.5
    %v1195 = vmul.f32 %v745, 0.5
    %v1196 = vmul.f32 %v748, 0.5
    %v1197 = vmul.f32 %v753, 0.5
    %v1198 = vmul.f32 %v756, 0.5
    %v1199 = vmul.f32 %v761, 0.5
    %v1200 = vmul.f32 %v764, 0.5
    %v1201 = vmul.f32 %v769, 0.5
    %v1202 = vmul.f32 %v772, 0.5
    %v1203 = vmul.f32 %v777, 0.5
    %v1204 = vmul.f32 %v780, 0.5
    %v1205 = vmul.f32 %v785, 0.5
    %v1206 = vmul.f32 %v788, 0.5
    %v1207 = vmul.f32 %v793, 0.5
    %v1208 = vmul.f32 %v796, 0.5
    %v1209 = vmul.f32 %v801, 0.5
    %v1210 = vmul.f32 %v804, 0.5
    %v1211 = vmul.f32 %v809, 0.5
    %v1212 = vmul.f32 %v812, 0.5
    %v1213 = vmul.f32 %v817, 0.5
    %v1214 = vmul.f32 %v820, 0.5
    %v1215 = vmul.f32 %v825, 0.5
    %v1216 = vmul.f32 %v828, 0.5
    %v1217 = vmul.f32 %v833, 0.5
    %v1218 = vmul.f32 %v836, 0.5
    %v1219 = vmul.f32 %v841, 0.5
    %v1220 = vmul.f32 %v844, 0.5
    %v1221 = vmul.f32 %v849, 0.5
    %v1222 = vmul.f32 %v852, 0.5
    %v1223 = vmul.f32 %v857, 0.5
    %v1224 = vmul.f32 %v860, 0.5
    %v1225 = vmul.f32 %v865, 0.5
    %v1226 = vmul.f32 %v868, 0.5
    %v1227 = vmul.f32 %v873, 0.5
    %v1228 = vmul.f32 %v876, 0.5
    %v1229 = vmul.f32 %v881, 0.5
    %v1230 = vmul.f32 %v884, 0.5
    %v1231 = vmul.f32 %v889, 0.5
    %v1232 = vmul.f32 %v892, 0.5
    %v1233 = vmul.f32 %v897, 0.5
    %v1234 = vmul.f32 %v900, 0.5
    %v1235 = vmul.f32 %v905, 0.5
    %v1236 = vmul.f32 %v908, 0.5
    %v1237 = vmul.f32 %v913, 0.5
    %v1238 = vmul.f32 %v916, 0.5
    %v1239 = vmul.f32 %v921, 0.5
    %v1240 = vmul.f32 %v924, 0.5
    %v1241 = vmul.f32 %v929, 0.5
    %v1242 = vmul.f32 %v932, 0.5
    %v1243 = vmul.f32 %v937, 0.5
    %v1244 = vmul.f32 %v940, 0.5
    %v1245 = vmul.f32 %v945, 0.5
    %v1246 = vmul.f32 %v948, 0.5
    %v1247 = vmul.f32 %v953, 0.5
    %v1248 = vmul.f32 %v956, 0.5
    %v1249 = vmul.f32 %v961, 0.5
    %v1250 = vmul.f32 %v964, 0.5
    %v1251 = vmul.f32 %v969, 0.5
    %v1252 = vmul.f32 %v972, 0.5
    %v1253 = vmul.f32 %v977, 0.5
    %v1254 = vmul.f32 %v980, 0.5
    %v1255 = vmul.f32 %v985, 0.5
    %v1256 = vmul.f32 %v988, 0.5
    %v1257 = vmul.f32 %v993, 0.5
    %v1258 = vmul.f32 %v996, 0.5
    %v1259 = vmul.f32 %v1001, 0.5
    %v1260 = vmul.f32 %v1004, 0.5
    %v1261 = vmul.f32 %v1009, 0.5
    %v1262 = vmul.f32 %v1012, 0.5
    %v1263 = vmul.f32 %v1017, 0.5
    %v1264 = vmul.f32 %v1020, 0.5
    %v1265 = vmul.f32 %v1025, 0.5
    %v1266 = vmul.f32 %v1028, 0.5
    %v1267 = vmul.f32 %v1033, 0.5
    %v1268 = vmul.f32 %v1036, 0.5
    %v1269 = vmul.f32 %v1041, 0.5
    %v1270 = vmul.f32 %v1044, 0.5
    %v1271 = vmul.f32 %v1049, 0.5
    %v1272 = vmul.f32 %v1052, 0.5
    %v1273 = vmul.f32 %v1057, 0.5
    %v1274 = vmul.f32 %v1060, 0.5
    %v1275 = vmul.f32 %v1065, 0.5
    %v1276 = vmul.f32 %v1068, 0.5
    %v1277 = vmul.f32 %v1073, 0.5
    %v1278 = vmul.f32 %v1076, 0.5
    %v1279 = vmul.f32 %v1081, 0.5
    %v1280 = vmul.f32 %v1084, 0.5
    %v1281 = vmul.f32 %v1089, 0.5
    %v1282 = vmul.f32 %v1092, 0.5
    %v1283 = vmul.f32 %v1097, 0.5
    %v1284 = vmul.f32 %v1100, 0.5
    %v1285 = vmul.f32 %v1105, 0.5
    %v1286 = vmul.f32 %v1108, 0.5
    %v1287 = vmul.f32 %v1113, 0.5
    %v1288 = vmul.f32 %v1116, 0.5
    %v1289 = vmul.f32 %v1121, 0.5
    %v1290 = vmul.f32 %v1124, 0.5
    %v1291 = vmul.f32 %v1129, 0.5
    %v1292 = vmul.f32 %v1132, 0.5
    %v1293 = vmul.f32 %v1137, 0.5
    %v1294 = vmul.f32 %v1140, 0.5
    %v1295 = vmul.f32 %v1145, 0.5
    %v1296 = vmul.f32 %v1148, 0.5
    %v1297 = vmul.f32 %v1153, 0.5
    %v1298 = vmul.f32 %v1156, 0.5
    %v1299 = vmul.f32 %v1161, 0.5
    %v1300 = vmul.f32 %v1164, 0.5
    %v1301 = vmul.f32 %v1169, 0.5
    %v1302 = vmul.f32 %v1172, 0.5
    %v1303 = vmul.f32 %v665, %v665
    %v1304 = vmul.f32 %v668, %v668
    %v1305 = vmul.f32 %v673, %v673
    %v1306 = vmul.f32 %v676, %v676
    %v1307 = vmul.f32 %v681, %v681
    %v1308 = vmul.f32 %v684, %v684
    %v1309 = vmul.f32 %v689, %v689
    %v1310 = vmul.f32 %v692, %v692
    %v1311 = vmul.f32 %v697, %v697
    %v1312 = vmul.f32 %v700, %v700
    %v1313 = vmul.f32 %v705, %v705
    %v1314 = vmul.f32 %v708, %v708
    %v1315 = vmul.f32 %v713, %v713
    %v1316 = vmul.f32 %v716, %v716
    %v1317 = vmul.f32 %v721, %v721
    %v1318 = vmul.f32 %v724, %v724
    %v1319 = vmul.f32 %v729, %v729
    %v1320 = vmul.f32 %v732, %v732
    %v1321 = vmul.f32 %v737, %v737
    %v1322 = vmul.f32 %v740, %v740
    %v1323 = vmul.f32 %v745, %v745
    %v1324 = vmul.f32 %v748, %v748
    %v1325 = vmul.f32 %v753, %v753
    %v1326 = vmul.f32 %v756, %v756
    %v1327 = vmul.f32 %v761, %v761
    %v1328 = vmul.f32 %v764, %v764
    %v1329 = vmul.f32 %v769, %v769
    %v1330 = vmul.f32 %v772, %v772
    %v1331 = vmul.f32 %v777, %v777
    %v1332 = vmul.f32 %v780, %v780
    %v1333 = vmul.f32 %v785, %v785
    %v1334 = vmul.f32 %v788, %v788
    %v1335 = vmul.f32 %v793, %v793
    %v1336 = vmul.f32 %v796, %v796
    %v1337 = vmul.f32 %v801, %v801
    %v1338 = vmul.f32 %v804, %v804
    %v1339 = vmul.f32 %v809, %v809
    %v1340 = vmul.f32 %v812, %v812
    %v1341 = vmul.f32 %v817, %v817
    %v1342 = vmul.f32 %v820, %v820
    %v1343 = vmul.f32 %v825, %v825
    %v1344 = vmul.f32 %v828, %v828
    %v1345 = vmul.f32 %v833, %v833
    %v1346 = vmul.f32 %v836, %v836
    %v1347 = vmul.f32 %v841, %v841
    %v1348 = vmul.f32 %v844, %v844
    %v1349 = vmul.f32 %v849, %v849
    %v1350 = vmul.f32 %v852, %v852
    %v1351 = vmul.f32 %v857, %v857
    %v1352 = vmul.f32 %v860, %v860
    %v1353 = vmul.f32 %v865, %v865
    %v1354 = vmul.f32 %v868, %v868
    %v1355 = vmul.f32 %v873, %v873
    %v1356 = vmul.f32 %v876, %v876
    %v1357 = vmul.f32 %v881, %v881
    %v1358 = vmul.f32 %v884, %v884
    %v1359 = vmul.f32 %v889, %v889
    %v1360 = vmul.f32 %v892, %v892
    %v1361 = vmul.f32 %v897, %v897
    %v1362 = vmul.f32 %v900, %v900
    %v1363 = vmul.f32 %v905, %v905
    %v1364 = vmul.f32 %v908, %v908
    %v1365 = vmul.f32 %v913, %v913
    %v1366 = vmul.f32 %v916, %v916
    %v1367 = vmul.f32 %v921, %v921
    %v1368 = vmul.f32 %v924, %v924
    %v1369 = vmul.f32 %v929, %v929
    %v1370 = vmul.f32 %v932, %v932
    %v1371 = vmul.f32 %v937, %v937
    %v1372 = vmul.f32 %v940, %v940
    %v1373 = vmul.f32 %v945, %v945
    %v1374 = vmul.f32 %v948, %v948
    %v1375 = vmul.f32 %v953, %v953
    %v1376 = vmul.f32 %v956, %v956
    %v1377 = vmul.f32 %v961, %v961
    %v1378 = vmul.f32 %v964, %v964
    %v1379 = vmul.f32 %v969, %v969
    %v1380 = vmul.f32 %v972, %v972
    %v1381 = vmul.f32 %v977, %v977
    %v1382 = vmul.f32 %v980, %v980
    %v1383 = vmul.f32 %v985, %v985
    %v1384 = vmul.f32 %v988, %v988
    %v1385 = vmul.f32 %v993, %v993
    %v1386 = vmul.f32 %v996, %v996
    %v1387 = vmul.f32 %v1001, %v1001
    %v1388 = vmul.f32 %v1004, %v1004
    %v1389 = vmul.f32 %v1009, %v1009
    %v1390 = vmul.f32 %v1012, %v1012
    %v1391 = vmul.f32 %v1017, %v1017
    %v1392 = vmul.f32 %v1020, %v1020
    %v1393 = vmul.f32 %v1025, %v1025
    %v1394 = vmul.f32 %v1028, %v1028
    %v1395 = vmul.f32 %v1033, %v1033
    %v1396 = vmul.f32 %v1036, %v1036
    %v1397 = vmul.f32 %v1041, %v1041
    %v1398 = vmul.f32 %v1044, %v1044
    %v1399 = vmul.f32 %v1049, %v1049
    %v1400 = vmul.f32 %v1052, %v1052
    %v1401 = vmul.f32 %v1057, %v1057
    %v1402 = vmul.f32 %v1060, %v1060
    %v1403 = vmul.f32 %v1065, %v1065
    %v1404 = vmul.f32 %v1068, %v1068
    %v1405 = vmul.f32 %v1073, %v1073
    %v1406 = vmul.f32 %v1076, %v1076
    %v1407 = vmul.f32 %v1081, %v1081
    %v1408 = vmul.f32 %v1084, %v1084
    %v1409 = vmul.f32 %v1089, %v1089
    %v1410 = vmul.f32 %v1092, %v1092
    %v1411 = vmul.f32 %v1097, %v1097
    %v1412 = vmul.f32 %v1100, %v1100
    %v1413 = vmul.f32 %v1105, %v1105
    %v1414 = vmul.f32 %v1108, %v1108
    %v1415 = vmul.f32 %v1113, %v1113
    %v1416 = vmul.f32 %v1116, %v1116
    %v1417 = vmul.f32 %v1121, %v1121
    %v1418 = vmul.f32 %v1124, %v1124
    %v1419 = vmul.f32 %v1129, %v1129
    %v1420 = vmul.f32 %v1132, %v1132
    %v1421 = vmul.f32 %v1137, %v1137
    %v1422 = vmul.f32 %v1140, %v1140
    %v1423 = vmul.f32 %v1145, %v1145
    %v1424 = vmul.f32 %v1148, %v1148
    %v1425 = vmul.f32 %v1153, %v1153
    %v1426 = vmul.f32 %v1156, %v1156
    %v1427 = vmul.f32 %v1161, %v1161
    %v1428 = vmul.f32 %v1164, %v1164
    %v1429 = vmul.f32 %v1169, %v1169
    %v1430 = vmul.f32 %v1172, %v1172
    %v1431 = vmul.f32 %v1303, %v665
    %v1432 = vmul.f32 %v1304, %v668
    %v1433 = vmul.f32 %v1305, %v673
    %v1434 = vmul.f32 %v1306, %v676
    %v1435 = vmul.f32 %v1307, %v681
    %v1436 = vmul.f32 %v1308, %v684
    %v1437 = vmul.f32 %v1309, %v689
    %v1438 = vmul.f32 %v1310, %v692
    %v1439 = vmul.f32 %v1311, %v697
    %v1440 = vmul.f32 %v1312, %v700
    %v1441 = vmul.f32 %v1313, %v705
    %v1442 = vmul.f32 %v1314, %v708
    %v1443 = vmul.f32 %v1315, %v713
    %v1444 = vmul.f32 %v1316, %v716
    %v1445 = vmul.f32 %v1317, %v721
    %v1446 = vmul.f32 %v1318, %v724
    %v1447 = vmul.f32 %v1319, %v729
    %v1448 = vmul.f32 %v1320, %v732
    %v1449 = vmul.f32 %v1321, %v737
    %v1450 = vmul.f32 %v1322, %v740
    %v1451 = vmul.f32 %v1323, %v745
    %v1452 = vmul.f32 %v1324, %v748
    %v1453 = vmul.f32 %v1325, %v753
    %v1454 = vmul.f32 %v1326, %v756
    %v1455 = vmul.f32 %v1327, %v761
    %v1456 = vmul.f32 %v1328, %v764
    %v1457 = vmul.f32 %v1329, %v769
    %v1458 = vmul.f32 %v1330, %v772
    %v1459 = vmul.f32 %v1331, %v777
    %v1460 = vmul.f32 %v1332, %v780
    %v1461 = vmul.f32 %v1333, %v785
    %v1462 = vmul.f32 %v1334, %v788
    %v1463 = vmul.f32 %v1335, %v793
    %v1464 = vmul.f32 %v1336, %v796
    %v1465 = vmul.f32 %v1337, %v801
    %v1466 = vmul.f32 %v1338, %v804
    %v1467 = vmul.f32 %v1339, %v809
    %v1468 = vmul.f32 %v1340, %v812
    %v1469 = vmul.f32 %v1341, %v817
    %v1470 = vmul.f32 %v1342, %v820
    %v1471 = vmul.f32 %v1343, %v825
    %v1472 = vmul.f32 %v1344, %v828
    %v1473 = vmul.f32 %v1345, %v833
    %v1474 = vmul.f32 %v1346, %v836
    %v1475 = vmul.f32 %v1347, %v841
    %v1476 = vmul.f32 %v1348, %v844
    %v1477 = vmul.f32 %v1349, %v849
    %v1478 = vmul.f32 %v1350, %v852
    %v1479 = vmul.f32 %v1351, %v857
    %v1480 = vmul.f32 %v1352, %v860
    %v1481 = vmul.f32 %v1353, %v865
    %v1482 = vmul.f32 %v1354, %v868
    %v1483 = vmul.f32 %v1355, %v873
    %v1484 = vmul.f32 %v1356, %v876
    %v1485 = vmul.f32 %v1357, %v881
    %v1486 = vmul.f32 %v1358, %v884
    %v1487 = vmul.f32 %v1359, %v889
    %v1488 = vmul.f32 %v1360, %v892
    %v1489 = vmul.f32 %v1361, %v897
    %v1490 = vmul.f32 %v1362, %v900
    %v1491 = vmul.f32 %v1363, %v905
    %v1492 = vmul.f32 %v1364, %v908
    %v1493 = vmul.f32 %v1365, %v913
    %v1494 = vmul.f32 %v1366, %v916
    %v1495 = vmul.f32 %v1367, %v921
    %v1496 = vmul.f32 %v1368, %v924
    %v1497 = vmul.f32 %v1369, %v929
    %v1498 = vmul.f32 %v1370, %v932
    %v1499 = vmul.f32 %v1371, %v937
    %v1500 = vmul.f32 %v1372, %v940
    %v1501 = vmul.f32 %v1373, %v945
    %v1502 = vmul.f32 %v1374, %v948
    %v1503 = vmul.f32 %v1375, %v953
    %v1504 = vmul.f32 %v1376, %v956
    %v1505 = vmul.f32 %v1377, %v961
    %v1506 = vmul.f32 %v1378, %v964
    %v1507 = vmul.f32 %v1379, %v969
    %v1508 = vmul.f32 %v1380, %v972
    %v1509 = vmul.f32 %v1381, %v977
    %v1510 = vmul.f32 %v1382, %v980
    %v1511 = vmul.f32 %v1383, %v985
    %v1512 = vmul.f32 %v1384, %v988
    %v1513 = vmul.f32 %v1385, %v993
    %v1514 = vmul.f32 %v1386, %v996
    %v1515 = vmul.f32 %v1387, %v1001
    %v1516 = vmul.f32 %v1388, %v1004
    %v1517 = vmul.f32 %v1389, %v1009
    %v1518 = vmul.f32 %v1390, %v1012
    %v1519 = vmul.f32 %v1391, %v1017
    %v1520 = vmul.f32 %v1392, %v1020
    %v1521 = vmul.f32 %v1393, %v1025
    %v1522 = vmul.f32 %v1394, %v1028
    %v1523 = vmul.f32 %v1395, %v1033
    %v1524 = vmul.f32 %v1396, %v1036
    %v1525 = vmul.f32 %v1397, %v1041
    %v1526 = vmul.f32 %v1398, %v1044
    %v1527 = vmul.f32 %v1399, %v1049
    %v1528 = vmul.f32 %v1400, %v1052
    %v1529 = vmul.f32 %v1401, %v1057
    %v1530 = vmul.f32 %v1402, %v1060
    %v1531 = vmul.f32 %v1403, %v1065
    %v1532 = vmul.f32 %v1404, %v1068
    %v1533 = vmul.f32 %v1405, %v1073
    %v1534 = vmul.f32 %v1406, %v1076
    %v1535 = vmul.f32 %v1407, %v1081
    %v1536 = vmul.f32 %v1408, %v1084
    %v1537 = vmul.f32 %v1409, %v1089
    %v1538 = vmul.f32 %v1410, %v1092
    %v1539 = vmul.f32 %v1411, %v1097
    %v1540 = vmul.f32 %v1412, %v1100
    %v1541 = vmul.f32 %v1413, %v1105
    %v1542 = vmul.f32 %v1414, %v1108
    %v1543 = vmul.f32 %v1415, %v1113
    %v1544 = vmul.f32 %v1416, %v1116
    %v1545 = vmul.f32 %v1417, %v1121
    %v1546 = vmul.f32 %v1418, %v1124
    %v1547 = vmul.f32 %v1419, %v1129
    %v1548 = vmul.f32 %v1420, %v1132
    %v1549 = vmul.f32 %v1421, %v1137
    %v1550 = vmul.f32 %v1422, %v1140
    %v1551 = vmul.f32 %v1423, %v1145
    %v1552 = vmul.f32 %v1424, %v1148
    %v1553 = vmul.f32 %v1425, %v1153
    %v1554 = vmul.f32 %v1426, %v1156
    %v1555 = vmul.f32 %v1427, %v1161
    %v1556 = vmul.f32 %v1428, %v1164
    %v1557 = vmul.f32 %v1429, %v1169
    %v1558 = vmul.f32 %v1430, %v1172
    %v1559 = vmul.f32 %v1431, 0.044715
    %v1560 = vmul.f32 %v1432, 0.044715
    %v1561 = vmul.f32 %v1433, 0.044715
    %v1562 = vmul.f32 %v1434, 0.044715
    %v1563 = vmul.f32 %v1435, 0.044715
    %v1564 = vmul.f32 %v1436, 0.044715
    %v1565 = vmul.f32 %v1437, 0.044715
    %v1566 = vmul.f32 %v1438, 0.044715
    %v1567 = vmul.f32 %v1439, 0.044715
    %v1568 = vmul.f32 %v1440, 0.044715
    %v1569 = vmul.f32 %v1441, 0.044715
    %v1570 = vmul.f32 %v1442, 0.044715
    %v1571 = vmul.f32 %v1443, 0.044715
    %v1572 = vmul.f32 %v1444, 0.044715
    %v1573 = vmul.f32 %v1445, 0.044715
    %v1574 = vmul.f32 %v1446, 0.044715
    %v1575 = vmul.f32 %v1447, 0.044715
    %v1576 = vmul.f32 %v1448, 0.044715
    %v1577 = vmul.f32 %v1449, 0.044715
    %v1578 = vmul.f32 %v1450, 0.044715
    %v1579 = vmul.f32 %v1451, 0.044715
    %v1580 = vmul.f32 %v1452, 0.044715
    %v1581 = vmul.f32 %v1453, 0.044715
    %v1582 = vmul.f32 %v1454, 0.044715
    %v1583 = vmul.f32 %v1455, 0.044715
    %v1584 = vmul.f32 %v1456, 0.044715
    %v1585 = vmul.f32 %v1457, 0.044715
    %v1586 = vmul.f32 %v1458, 0.044715
    %v1587 = vmul.f32 %v1459, 0.044715
    %v1588 = vmul.f32 %v1460, 0.044715
    %v1589 = vmul.f32 %v1461, 0.044715
    %v1590 = vmul.f32 %v1462, 0.044715
    %v1591 = vmul.f32 %v1463, 0.044715
    %v1592 = vmul.f32 %v1464, 0.044715
    %v1593 = vmul.f32 %v1465, 0.044715
    %v1594 = vmul.f32 %v1466, 0.044715
    %v1595 = vmul.f32 %v1467, 0.044715
    %v1596 = vmul.f32 %v1468, 0.044715
    %v1597 = vmul.f32 %v1469, 0.044715
    %v1598 = vmul.f32 %v1470, 0.044715
    %v1599 = vmul.f32 %v1471, 0.044715
    %v1600 = vmul.f32 %v1472, 0.044715
    %v1601 = vmul.f32 %v1473, 0.044715
    %v1602 = vmul.f32 %v1474, 0.044715
    %v1603 = vmul.f32 %v1475, 0.044715
    %v1604 = vmul.f32 %v1476, 0.044715
    %v1605 = vmul.f32 %v1477, 0.044715
    %v1606 = vmul.f32 %v1478, 0.044715
    %v1607 = vmul.f32 %v1479, 0.044715
    %v1608 = vmul.f32 %v1480, 0.044715
    %v1609 = vmul.f32 %v1481, 0.044715
    %v1610 = vmul.f32 %v1482, 0.044715
    %v1611 = vmul.f32 %v1483, 0.044715
    %v1612 = vmul.f32 %v1484, 0.044715
    %v1613 = vmul.f32 %v1485, 0.044715
    %v1614 = vmul.f32 %v1486, 0.044715
    %v1615 = vmul.f32 %v1487, 0.044715
    %v1616 = vmul.f32 %v1488, 0.044715
    %v1617 = vmul.f32 %v1489, 0.044715
    %v1618 = vmul.f32 %v1490, 0.044715
    %v1619 = vmul.f32 %v1491, 0.044715
    %v1620 = vmul.f32 %v1492, 0.044715
    %v1621 = vmul.f32 %v1493, 0.044715
    %v1622 = vmul.f32 %v1494, 0.044715
    %v1623 = vmul.f32 %v1495, 0.044715
    %v1624 = vmul.f32 %v1496, 0.044715
    %v1625 = vmul.f32 %v1497, 0.044715
    %v1626 = vmul.f32 %v1498, 0.044715
    %v1627 = vmul.f32 %v1499, 0.044715
    %v1628 = vmul.f32 %v1500, 0.044715
    %v1629 = vmul.f32 %v1501, 0.044715
    %v1630 = vmul.f32 %v1502, 0.044715
    %v1631 = vmul.f32 %v1503, 0.044715
    %v1632 = vmul.f32 %v1504, 0.044715
    %v1633 = vmul.f32 %v1505, 0.044715
    %v1634 = vmul.f32 %v1506, 0.044715
    %v1635 = vmul.f32 %v1507, 0.044715
    %v1636 = vmul.f32 %v1508, 0.044715
    %v1637 = vmul.f32 %v1509, 0.044715
    %v1638 = vmul.f32 %v1510, 0.044715
    %v1639 = vmul.f32 %v1511, 0.044715
    %v1640 = vmul.f32 %v1512, 0.044715
    %v1641 = vmul.f32 %v1513, 0.044715
    %v1642 = vmul.f32 %v1514, 0.044715
    %v1643 = vmul.f32 %v1515, 0.044715
    %v1644 = vmul.f32 %v1516, 0.044715
    %v1645 = vmul.f32 %v1517, 0.044715
    %v1646 = vmul.f32 %v1518, 0.044715
    %v1647 = vmul.f32 %v1519, 0.044715
    %v1648 = vmul.f32 %v1520, 0.044715
    %v1649 = vmul.f32 %v1521, 0.044715
    %v1650 = vmul.f32 %v1522, 0.044715
    %v1651 = vmul.f32 %v1523, 0.044715
    %v1652 = vmul.f32 %v1524, 0.044715
    %v1653 = vmul.f32 %v1525, 0.044715
    %v1654 = vmul.f32 %v1526, 0.044715
    %v1655 = vmul.f32 %v1527, 0.044715
    %v1656 = vmul.f32 %v1528, 0.044715
    %v1657 = vmul.f32 %v1529, 0.044715
    %v1658 = vmul.f32 %v1530, 0.044715
    %v1659 = vmul.f32 %v1531, 0.044715
    %v1660 = vmul.f32 %v1532, 0.044715
    %v1661 = vmul.f32 %v1533, 0.044715
    %v1662 = vmul.f32 %v1534, 0.044715
    %v1663 = vmul.f32 %v1535, 0.044715
    %v1664 = vmul.f32 %v1536, 0.044715
    %v1665 = vmul.f32 %v1537, 0.044715
    %v1666 = vmul.f32 %v1538, 0.044715
    %v1667 = vmul.f32 %v1539, 0.044715
    %v1668 = vmul.f32 %v1540, 0.044715
    %v1669 = vmul.f32 %v1541, 0.044715
    %v1670 = vmul.f32 %v1542, 0.044715
    %v1671 = vmul.f32 %v1543, 0.044715
    %v1672 = vmul.f32 %v1544, 0.044715
    %v1673 = vmul.f32 %v1545, 0.044715
    %v1674 = vmul.f32 %v1546, 0.044715
    %v1675 = vmul.f32 %v1547, 0.044715
    %v1676 = vmul.f32 %v1548, 0.044715
    %v1677 = vmul.f32 %v1549, 0.044715
    %v1678 = vmul.f32 %v1550, 0.044715
    %v1679 = vmul.f32 %v1551, 0.044715
    %v1680 = vmul.f32 %v1552, 0.044715
    %v1681 = vmul.f32 %v1553, 0.044715
    %v1682 = vmul.f32 %v1554, 0.044715
    %v1683 = vmul.f32 %v1555, 0.044715
    %v1684 = vmul.f32 %v1556, 0.044715
    %v1685 = vmul.f32 %v1557, 0.044715
    %v1686 = vmul.f32 %v1558, 0.044715
    %v1687 = vadd.f32 %v665, %v1559
    %v1688 = vadd.f32 %v668, %v1560
    %v1689 = vadd.f32 %v673, %v1561
    %v1690 = vadd.f32 %v676, %v1562
    %v1691 = vadd.f32 %v681, %v1563
    %v1692 = vadd.f32 %v684, %v1564
    %v1693 = vadd.f32 %v689, %v1565
    %v1694 = vadd.f32 %v692, %v1566
    %v1695 = vadd.f32 %v697, %v1567
    %v1696 = vadd.f32 %v700, %v1568
    %v1697 = vadd.f32 %v705, %v1569
    %v1698 = vadd.f32 %v708, %v1570
    %v1699 = vadd.f32 %v713, %v1571
    %v1700 = vadd.f32 %v716, %v1572
    %v1701 = vadd.f32 %v721, %v1573
    %v1702 = vadd.f32 %v724, %v1574
    %v1703 = vadd.f32 %v729, %v1575
    %v1704 = vadd.f32 %v732, %v1576
    %v1705 = vadd.f32 %v737, %v1577
    %v1706 = vadd.f32 %v740, %v1578
    %v1707 = vadd.f32 %v745, %v1579
    %v1708 = vadd.f32 %v748, %v1580
    %v1709 = vadd.f32 %v753, %v1581
    %v1710 = vadd.f32 %v756, %v1582
    %v1711 = vadd.f32 %v761, %v1583
    %v1712 = vadd.f32 %v764, %v1584
    %v1713 = vadd.f32 %v769, %v1585
    %v1714 = vadd.f32 %v772, %v1586
    %v1715 = vadd.f32 %v777, %v1587
    %v1716 = vadd.f32 %v780, %v1588
    %v1717 = vadd.f32 %v785, %v1589
    %v1718 = vadd.f32 %v788, %v1590
    %v1719 = vadd.f32 %v793, %v1591
    %v1720 = vadd.f32 %v796, %v1592
    %v1721 = vadd.f32 %v801, %v1593
    %v1722 = vadd.f32 %v804, %v1594
    %v1723 = vadd.f32 %v809, %v1595
    %v1724 = vadd.f32 %v812, %v1596
    %v1725 = vadd.f32 %v817, %v1597
    %v1726 = vadd.f32 %v820, %v1598
    %v1727 = vadd.f32 %v825, %v1599
    %v1728 = vadd.f32 %v828, %v1600
    %v1729 = vadd.f32 %v833, %v1601
    %v1730 = vadd.f32 %v836, %v1602
    %v1731 = vadd.f32 %v841, %v1603
    %v1732 = vadd.f32 %v844, %v1604
    %v1733 = vadd.f32 %v849, %v1605
    %v1734 = vadd.f32 %v852, %v1606
    %v1735 = vadd.f32 %v857, %v1607
    %v1736 = vadd.f32 %v860, %v1608
    %v1737 = vadd.f32 %v865, %v1609
    %v1738 = vadd.f32 %v868, %v1610
    %v1739 = vadd.f32 %v873, %v1611
    %v1740 = vadd.f32 %v876, %v1612
    %v1741 = vadd.f32 %v881, %v1613
    %v1742 = vadd.f32 %v884, %v1614
    %v1743 = vadd.f32 %v889, %v1615
    %v1744 = vadd.f32 %v892, %v1616
    %v1745 = vadd.f32 %v897, %v1617
    %v1746 = vadd.f32 %v900, %v1618
    %v1747 = vadd.f32 %v905, %v1619
    %v1748 = vadd.f32 %v908, %v1620
    %v1749 = vadd.f32 %v913, %v1621
    %v1750 = vadd.f32 %v916, %v1622
    %v1751 = vadd.f32 %v921, %v1623
    %v1752 = vadd.f32 %v924, %v1624
    %v1753 = vadd.f32 %v929, %v1625
    %v1754 = vadd.f32 %v932, %v1626
    %v1755 = vadd.f32 %v937, %v1627
    %v1756 = vadd.f32 %v940, %v1628
    %v1757 = vadd.f32 %v945, %v1629
    %v1758 = vadd.f32 %v948, %v1630
    %v1759 = vadd.f32 %v953, %v1631
    %v1760 = vadd.f32 %v956, %v1632
    %v1761 = vadd.f32 %v961, %v1633
    %v1762 = vadd.f32 %v964, %v1634
    %v1763 = vadd.f32 %v969, %v1635
    %v1764 = vadd.f32 %v972, %v1636
    %v1765 = vadd.f32 %v977, %v1637
    %v1766 = vadd.f32 %v980, %v1638
    %v1767 = vadd.f32 %v985, %v1639
    %v1768 = vadd.f32 %v988, %v1640
    %v1769 = vadd.f32 %v993, %v1641
    %v1770 = vadd.f32 %v996, %v1642
    %v1771 = vadd.f32 %v1001, %v1643
    %v1772 = vadd.f32 %v1004, %v1644
    %v1773 = vadd.f32 %v1009, %v1645
    %v1774 = vadd.f32 %v1012, %v1646
    %v1775 = vadd.f32 %v1017, %v1647
    %v1776 = vadd.f32 %v1020, %v1648
    %v1777 = vadd.f32 %v1025, %v1649
    %v1778 = vadd.f32 %v1028, %v1650
    %v1779 = vadd.f32 %v1033, %v1651
    %v1780 = vadd.f32 %v1036, %v1652
    %v1781 = vadd.f32 %v1041, %v1653
    %v1782 = vadd.f32 %v1044, %v1654
    %v1783 = vadd.f32 %v1049, %v1655
    %v1784 = vadd.f32 %v1052, %v1656
    %v1785 = vadd.f32 %v1057, %v1657
    %v1786 = vadd.f32 %v1060, %v1658
    %v1787 = vadd.f32 %v1065, %v1659
    %v1788 = vadd.f32 %v1068, %v1660
    %v1789 = vadd.f32 %v1073, %v1661
    %v1790 = vadd.f32 %v1076, %v1662
    %v1791 = vadd.f32 %v1081, %v1663
    %v1792 = vadd.f32 %v1084, %v1664
    %v1793 = vadd.f32 %v1089, %v1665
    %v1794 = vadd.f32 %v1092, %v1666
    %v1795 = vadd.f32 %v1097, %v1667
    %v1796 = vadd.f32 %v1100, %v1668
    %v1797 = vadd.f32 %v1105, %v1669
    %v1798 = vadd.f32 %v1108, %v1670
    %v1799 = vadd.f32 %v1113, %v1671
    %v1800 = vadd.f32 %v1116, %v1672
    %v1801 = vadd.f32 %v1121, %v1673
    %v1802 = vadd.f32 %v1124, %v1674
    %v1803 = vadd.f32 %v1129, %v1675
    %v1804 = vadd.f32 %v1132, %v1676
    %v1805 = vadd.f32 %v1137, %v1677
    %v1806 = vadd.f32 %v1140, %v1678
    %v1807 = vadd.f32 %v1145, %v1679
    %v1808 = vadd.f32 %v1148, %v1680
    %v1809 = vadd.f32 %v1153, %v1681
    %v1810 = vadd.f32 %v1156, %v1682
    %v1811 = vadd.f32 %v1161, %v1683
    %v1812 = vadd.f32 %v1164, %v1684
    %v1813 = vadd.f32 %v1169, %v1685
    %v1814 = vadd.f32 %v1172, %v1686
    %v1815 = vmul.f32 %v1687, 0.7978846
    %v1816 = vmul.f32 %v1688, 0.7978846
    %v1817 = vmul.f32 %v1689, 0.7978846
    %v1818 = vmul.f32 %v1690, 0.7978846
    %v1819 = vmul.f32 %v1691, 0.7978846
    %v1820 = vmul.f32 %v1692, 0.7978846
    %v1821 = vmul.f32 %v1693, 0.7978846
    %v1822 = vmul.f32 %v1694, 0.7978846
    %v1823 = vmul.f32 %v1695, 0.7978846
    %v1824 = vmul.f32 %v1696, 0.7978846
    %v1825 = vmul.f32 %v1697, 0.7978846
    %v1826 = vmul.f32 %v1698, 0.7978846
    %v1827 = vmul.f32 %v1699, 0.7978846
    %v1828 = vmul.f32 %v1700, 0.7978846
    %v1829 = vmul.f32 %v1701, 0.7978846
    %v1830 = vmul.f32 %v1702, 0.7978846
    %v1831 = vmul.f32 %v1703, 0.7978846
    %v1832 = vmul.f32 %v1704, 0.7978846
    %v1833 = vmul.f32 %v1705, 0.7978846
    %v1834 = vmul.f32 %v1706, 0.7978846
    %v1835 = vmul.f32 %v1707, 0.7978846
    %v1836 = vmul.f32 %v1708, 0.7978846
    %v1837 = vmul.f32 %v1709, 0.7978846
    %v1838 = vmul.f32 %v1710, 0.7978846
    %v1839 = vmul.f32 %v1711, 0.7978846
    %v1840 = vmul.f32 %v1712, 0.7978846
    %v1841 = vmul.f32 %v1713, 0.7978846
    %v1842 = vmul.f32 %v1714, 0.7978846
    %v1843 = vmul.f32 %v1715, 0.7978846
    %v1844 = vmul.f32 %v1716, 0.7978846
    %v1845 = vmul.f32 %v1717, 0.7978846
    %v1846 = vmul.f32 %v1718, 0.7978846
    %v1847 = vmul.f32 %v1719, 0.7978846
    %v1848 = vmul.f32 %v1720, 0.7978846
    %v1849 = vmul.f32 %v1721, 0.7978846
    %v1850 = vmul.f32 %v1722, 0.7978846
    %v1851 = vmul.f32 %v1723, 0.7978846
    %v1852 = vmul.f32 %v1724, 0.7978846
    %v1853 = vmul.f32 %v1725, 0.7978846
    %v1854 = vmul.f32 %v1726, 0.7978846
    %v1855 = vmul.f32 %v1727, 0.7978846
    %v1856 = vmul.f32 %v1728, 0.7978846
    %v1857 = vmul.f32 %v1729, 0.7978846
    %v1858 = vmul.f32 %v1730, 0.7978846
    %v1859 = vmul.f32 %v1731, 0.7978846
    %v1860 = vmul.f32 %v1732, 0.7978846
    %v1861 = vmul.f32 %v1733, 0.7978846
    %v1862 = vmul.f32 %v1734, 0.7978846
    %v1863 = vmul.f32 %v1735, 0.7978846
    %v1864 = vmul.f32 %v1736, 0.7978846
    %v1865 = vmul.f32 %v1737, 0.7978846
    %v1866 = vmul.f32 %v1738, 0.7978846
    %v1867 = vmul.f32 %v1739, 0.7978846
    %v1868 = vmul.f32 %v1740, 0.7978846
    %v1869 = vmul.f32 %v1741, 0.7978846
    %v1870 = vmul.f32 %v1742, 0.7978846
    %v1871 = vmul.f32 %v1743, 0.7978846
    %v1872 = vmul.f32 %v1744, 0.7978846
    %v1873 = vmul.f32 %v1745, 0.7978846
    %v1874 = vmul.f32 %v1746, 0.7978846
    %v1875 = vmul.f32 %v1747, 0.7978846
    %v1876 = vmul.f32 %v1748, 0.7978846
    %v1877 = vmul.f32 %v1749, 0.7978846
    %v1878 = vmul.f32 %v1750, 0.7978846
    %v1879 = vmul.f32 %v1751, 0.7978846
    %v1880 = vmul.f32 %v1752, 0.7978846
    %v1881 = vmul.f32 %v1753, 0.7978846
    %v1882 = vmul.f32 %v1754, 0.7978846
    %v1883 = vmul.f32 %v1755, 0.7978846
    %v1884 = vmul.f32 %v1756, 0.7978846
    %v1885 = vmul.f32 %v1757, 0.7978846
    %v1886 = vmul.f32 %v1758, 0.7978846
    %v1887 = vmul.f32 %v1759, 0.7978846
    %v1888 = vmul.f32 %v1760, 0.7978846
    %v1889 = vmul.f32 %v1761, 0.7978846
    %v1890 = vmul.f32 %v1762, 0.7978846
    %v1891 = vmul.f32 %v1763, 0.7978846
    %v1892 = vmul.f32 %v1764, 0.7978846
    %v1893 = vmul.f32 %v1765, 0.7978846
    %v1894 = vmul.f32 %v1766, 0.7978846
    %v1895 = vmul.f32 %v1767, 0.7978846
    %v1896 = vmul.f32 %v1768, 0.7978846
    %v1897 = vmul.f32 %v1769, 0.7978846
    %v1898 = vmul.f32 %v1770, 0.7978846
    %v1899 = vmul.f32 %v1771, 0.7978846
    %v1900 = vmul.f32 %v1772, 0.7978846
    %v1901 = vmul.f32 %v1773, 0.7978846
    %v1902 = vmul.f32 %v1774, 0.7978846
    %v1903 = vmul.f32 %v1775, 0.7978846
    %v1904 = vmul.f32 %v1776, 0.7978846
    %v1905 = vmul.f32 %v1777, 0.7978846
    %v1906 = vmul.f32 %v1778, 0.7978846
    %v1907 = vmul.f32 %v1779, 0.7978846
    %v1908 = vmul.f32 %v1780, 0.7978846
    %v1909 = vmul.f32 %v1781, 0.7978846
    %v1910 = vmul.f32 %v1782, 0.7978846
    %v1911 = vmul.f32 %v1783, 0.7978846
    %v1912 = vmul.f32 %v1784, 0.7978846
    %v1913 = vmul.f32 %v1785, 0.7978846
    %v1914 = vmul.f32 %v1786, 0.7978846
    %v1915 = vmul.f32 %v1787, 0.7978846
    %v1916 = vmul.f32 %v1788, 0.7978846
    %v1917 = vmul.f32 %v1789, 0.7978846
    %v1918 = vmul.f32 %v1790, 0.7978846
    %v1919 = vmul.f32 %v1791, 0.7978846
    %v1920 = vmul.f32 %v1792, 0.7978846
    %v1921 = vmul.f32 %v1793, 0.7978846
    %v1922 = vmul.f32 %v1794, 0.7978846
    %v1923 = vmul.f32 %v1795, 0.7978846
    %v1924 = vmul.f32 %v1796, 0.7978846
    %v1925 = vmul.f32 %v1797, 0.7978846
    %v1926 = vmul.f32 %v1798, 0.7978846
    %v1927 = vmul.f32 %v1799, 0.7978846
    %v1928 = vmul.f32 %v1800, 0.7978846
    %v1929 = vmul.f32 %v1801, 0.7978846
    %v1930 = vmul.f32 %v1802, 0.7978846
    %v1931 = vmul.f32 %v1803, 0.7978846
    %v1932 = vmul.f32 %v1804, 0.7978846
    %v1933 = vmul.f32 %v1805, 0.7978846
    %v1934 = vmul.f32 %v1806, 0.7978846
    %v1935 = vmul.f32 %v1807, 0.7978846
    %v1936 = vmul.f32 %v1808, 0.7978846
    %v1937 = vmul.f32 %v1809, 0.7978846
    %v1938 = vmul.f32 %v1810, 0.7978846
    %v1939 = vmul.f32 %v1811, 0.7978846
    %v1940 = vmul.f32 %v1812, 0.7978846
    %v1941 = vmul.f32 %v1813, 0.7978846
    %v1942 = vmul.f32 %v1814, 0.7978846
    %v1943 = vtanh.pop %v1815
    %v1944 = vtanh.pop %v1816
    %v1945 = vtanh.pop %v1817
    %v1946 = vtanh.pop %v1818
    %v1947 = vtanh.pop %v1819
    %v1948 = vtanh.pop %v1820
    %v1949 = vtanh.pop %v1821
    %v1950 = vtanh.pop %v1822
    %v1951 = vtanh.pop %v1823
    %v1952 = vtanh.pop %v1824
    %v1953 = vtanh.pop %v1825
    %v1954 = vtanh.pop %v1826
    %v1955 = vtanh.pop %v1827
    %v1956 = vtanh.pop %v1828
    %v1957 = vtanh.pop %v1829
    %v1958 = vtanh.pop %v1830
    %v1959 = vtanh.pop %v1831
    %v1960 = vtanh.pop %v1832
    %v1961 = vtanh.pop %v1833
    %v1962 = vtanh.pop %v1834
    %v1963 = vtanh.pop %v1835
    %v1964 = vtanh.pop %v1836
    %v1965 = vtanh.pop %v1837
    %v1966 = vtanh.pop %v1838
    %v1967 = vtanh.pop %v1839
    %v1968 = vtanh.pop %v1840
    %v1969 = vtanh.pop %v1841
    %v1970 = vtanh.pop %v1842
    %v1971 = vtanh.pop %v1843
    %v1972 = vtanh.pop %v1844
    %v1973 = vtanh.pop %v1845
    %v1974 = vtanh.pop %v1846
    %v1975 = vtanh.pop %v1847
    %v1976 = vtanh.pop %v1848
    %v1977 = vtanh.pop %v1849
    %v1978 = vtanh.pop %v1850
    %v1979 = vtanh.pop %v1851
    %v1980 = vtanh.pop %v1852
    %v1981 = vtanh.pop %v1853
    %v1982 = vtanh.pop %v1854
    %v1983 = vtanh.pop %v1855
    %v1984 = vtanh.pop %v1856
    %v1985 = vtanh.pop %v1857
    %v1986 = vtanh.pop %v1858
    %v1987 = vtanh.pop %v1859
    %v1988 = vtanh.pop %v1860
    %v1989 = vtanh.pop %v1861
    %v1990 = vtanh.pop %v1862
    %v1991 = vtanh.pop %v1863
    %v1992 = vtanh.pop %v1864
    %v1993 = vtanh.pop %v1865
    %v1994 = vtanh.pop %v1866
    %v1995 = vtanh.pop %v1867
    %v1996 = vtanh.pop %v1868
    %v1997 = vtanh.pop %v1869
    %v1998 = vtanh.pop %v1870
    %v1999 = vtanh.pop %v1871
    %v2000 = vtanh.pop %v1872
    %v2001 = vtanh.pop %v1873
    %v2002 = vtanh.pop %v1874
    %v2003 = vtanh.pop %v1875
    %v2004 = vtanh.pop %v1876
    %v2005 = vtanh.pop %v1877
    %v2006 = vtanh.pop %v1878
    %v2007 = vtanh.pop %v1879
    %v2008 = vtanh.pop %v1880
    %v2009 = vtanh.pop %v1881
    %v2010 = vtanh.pop %v1882
    %v2011 = vtanh.pop %v1883
    %v2012 = vtanh.pop %v1884
    %v2013 = vtanh.pop %v1885
    %v2014 = vtanh.pop %v1886
    %v2015 = vtanh.pop %v1887
    %v2016 = vtanh.pop %v1888
    %v2017 = vtanh.pop %v1889
    %v2018 = vtanh.pop %v1890
    %v2019 = vtanh.pop %v1891
    %v2020 = vtanh.pop %v1892
    %v2021 = vtanh.pop %v1893
    %v2022 = vtanh.pop %v1894
    %v2023 = vtanh.pop %v1895
    %v2024 = vtanh.pop %v1896
    %v2025 = vtanh.pop %v1897
    %v2026 = vtanh.pop %v1898
    %v2027 = vtanh.pop %v1899
    %v2028 = vtanh.pop %v1900
    %v2029 = vtanh.pop %v1901
    %v2030 = vtanh.pop %v1902
    %v2031 = vtanh.pop %v1903
    %v2032 = vtanh.pop %v1904
    %v2033 = vtanh.pop %v1905
    %v2034 = vtanh.pop %v1906
    %v2035 = vtanh.pop %v1907
    %v2036 = vtanh.pop %v1908
    %v2037 = vtanh.pop %v1909
    %v2038 = vtanh.pop %v1910
    %v2039 = vtanh.pop %v1911
    %v2040 = vtanh.pop %v1912
    %v2041 = vtanh.pop %v1913
    %v2042 = vtanh.pop %v1914
    %v2043 = vtanh.pop %v1915
    %v2044 = vtanh.pop %v1916
    %v2045 = vtanh.pop %v1917
    %v2046 = vtanh.pop %v1918
    %v2047 = vtanh.pop %v1919
    %v2048 = vtanh.pop %v1920
    %v2049 = vtanh.pop %v1921
    %v2050 = vtanh.pop %v1922
    %v2051 = vtanh.pop %v1923
    %v2052 = vtanh.pop %v1924
    %v2053 = vtanh.pop %v1925
    %v2054 = vtanh.pop %v1926
    %v2055 = vtanh.pop %v1927
    %v2056 = vtanh.pop %v1928
    %v2057 = vtanh.pop %v1929
    %v2058 = vtanh.pop %v1930
    %v2059 = vtanh.pop %v1931
    %v2060 = vtanh.pop %v1932
    %v2061 = vtanh.pop %v1933
    %v2062 = vtanh.pop %v1934
    %v2063 = vtanh.pop %v1935
    %v2064 = vtanh.pop %v1936
    %v2065 = vtanh.pop %v1937
    %v2066 = vtanh.pop %v1938
    %v2067 = vtanh.pop %v1939
    %v2068 = vtanh.pop %v1940
    %v2069 = vtanh.pop %v1941
    %v2070 = vtanh.pop %v1942
    %v2071 = vadd.f32 %v1943, 1.0
    %v2072 = vadd.f32 %v1944, 1.0
    %v2073 = vadd.f32 %v1945, 1.0
    %v2074 = vadd.f32 %v1946, 1.0
    %v2075 = vadd.f32 %v1947, 1.0
    %v2076 = vadd.f32 %v1948, 1.0
    %v2077 = vadd.f32 %v1949, 1.0
    %v2078 = vadd.f32 %v1950, 1.0
    %v2079 = vadd.f32 %v1951, 1.0
    %v2080 = vadd.f32 %v1952, 1.0
    %v2081 = vadd.f32 %v1953, 1.0
    %v2082 = vadd.f32 %v1954, 1.0
    %v2083 = vadd.f32 %v1955, 1.0
    %v2084 = vadd.f32 %v1956, 1.0
    %v2085 = vadd.f32 %v1957, 1.0
    %v2086 = vadd.f32 %v1958, 1.0
    %v2087 = vadd.f32 %v1959, 1.0
    %v2088 = vadd.f32 %v1960, 1.0
    %v2089 = vadd.f32 %v1961, 1.0
    %v2090 = vadd.f32 %v1962, 1.0
    %v2091 = vadd.f32 %v1963, 1.0
    %v2092 = vadd.f32 %v1964, 1.0
    %v2093 = vadd.f32 %v1965, 1.0
    %v2094 = vadd.f32 %v1966, 1.0
    %v2095 = vadd.f32 %v1967, 1.0
    %v2096 = vadd.f32 %v1968, 1.0
    %v2097 = vadd.f32 %v1969, 1.0
    %v2098 = vadd.f32 %v1970, 1.0
    %v2099 = vadd.f32 %v1971, 1.0
    %v2100 = vadd.f32 %v1972, 1.0
    %v2101 = vadd.f32 %v1973, 1.0
    %v2102 = vadd.f32 %v1974, 1.0
    %v2103 = vadd.f32 %v1975, 1.0
    %v2104 = vadd.f32 %v1976, 1.0
    %v2105 = vadd.f32 %v1977, 1.0
    %v2106 = vadd.f32 %v1978, 1.0
    %v2107 = vadd.f32 %v1979, 1.0
    %v2108 = vadd.f32 %v1980, 1.0
    %v2109 = vadd.f32 %v1981, 1.0
    %v2110 = vadd.f32 %v1982, 1.0
    %v2111 = vadd.f32 %v1983, 1.0
    %v2112 = vadd.f32 %v1984, 1.0
    %v2113 = vadd.f32 %v1985, 1.0
    %v2114 = vadd.f32 %v1986, 1.0
    %v2115 = vadd.f32 %v1987, 1.0
    %v2116 = vadd.f32 %v1988, 1.0
    %v2117 = vadd.f32 %v1989, 1.0
    %v2118 = vadd.f32 %v1990, 1.0
    %v2119 = vadd.f32 %v1991, 1.0
    %v2120 = vadd.f32 %v1992, 1.0
    %v2121 = vadd.f32 %v1993, 1.0
    %v2122 = vadd.f32 %v1994, 1.0
    %v2123 = vadd.f32 %v1995, 1.0
    %v2124 = vadd.f32 %v1996, 1.0
    %v2125 = vadd.f32 %v1997, 1.0
    %v2126 = vadd.f32 %v1998, 1.0
    %v2127 = vadd.f32 %v1999, 1.0
    %v2128 = vadd.f32 %v2000, 1.0
    %v2129 = vadd.f32 %v2001, 1.0
    %v2130 = vadd.f32 %v2002, 1.0
    %v2131 = vadd.f32 %v2003, 1.0
    %v2132 = vadd.f32 %v2004, 1.0
    %v2133 = vadd.f32 %v2005, 1.0
    %v2134 = vadd.f32 %v2006, 1.0
    %v2135 = vadd.f32 %v2007, 1.0
    %v2136 = vadd.f32 %v2008, 1.0
    %v2137 = vadd.f32 %v2009, 1.0
    %v2138 = vadd.f32 %v2010, 1.0
    %v2139 = vadd.f32 %v2011, 1.0
    %v2140 = vadd.f32 %v2012, 1.0
    %v2141 = vadd.f32 %v2013, 1.0
    %v2142 = vadd.f32 %v2014, 1.0
    %v2143 = vadd.f32 %v2015, 1.0
    %v2144 = vadd.f32 %v2016, 1.0
    %v2145 = vadd.f32 %v2017, 1.0
    %v2146 = vadd.f32 %v2018, 1.0
    %v2147 = vadd.f32 %v2019, 1.0
    %v2148 = vadd.f32 %v2020, 1.0
    %v2149 = vadd.f32 %v2021, 1.0
    %v2150 = vadd.f32 %v2022, 1.0
    %v2151 = vadd.f32 %v2023, 1.0
    %v2152 = vadd.f32 %v2024, 1.0
    %v2153 = vadd.f32 %v2025, 1.0
    %v2154 = vadd.f32 %v2026, 1.0
    %v2155 = vadd.f32 %v2027, 1.0
    %v2156 = vadd.f32 %v2028, 1.0
    %v2157 = vadd.f32 %v2029, 1.0
    %v2158 = vadd.f32 %v2030, 1.0
    %v2159 = vadd.f32 %v2031, 1.0
    %v2160 = vadd.f32 %v2032, 1.0
    %v2161 = vadd.f32 %v2033, 1.0
    %v2162 = vadd.f32 %v2034, 1.0
    %v2163 = vadd.f32 %v2035, 1.0
    %v2164 = vadd.f32 %v2036, 1.0
    %v2165 = vadd.f32 %v2037, 1.0
    %v2166 = vadd.f32 %v2038, 1.0
    %v2167 = vadd.f32 %v2039, 1.0
    %v2168 = vadd.f32 %v2040, 1.0
    %v2169 = vadd.f32 %v2041, 1.0
    %v2170 = vadd.f32 %v2042, 1.0
    %v2171 = vadd.f32 %v2043, 1.0
    %v2172 = vadd.f32 %v2044, 1.0
    %v2173 = vadd.f32 %v2045, 1.0
    %v2174 = vadd.f32 %v2046, 1.0
    %v2175 = vadd.f32 %v2047, 1.0
    %v2176 = vadd.f32 %v2048, 1.0
    %v2177 = vadd.f32 %v2049, 1.0
    %v2178 = vadd.f32 %v2050, 1.0
    %v2179 = vadd.f32 %v2051, 1.0
    %v2180 = vadd.f32 %v2052, 1.0
    %v2181 = vadd.f32 %v2053, 1.0
    %v2182 = vadd.f32 %v2054, 1.0
    %v2183 = vadd.f32 %v2055, 1.0
    %v2184 = vadd.f32 %v2056, 1.0
    %v2185 = vadd.f32 %v2057, 1.0
    %v2186 = vadd.f32 %v2058, 1.0
    %v2187 = vadd.f32 %v2059, 1.0
    %v2188 = vadd.f32 %v2060, 1.0
    %v2189 = vadd.f32 %v2061, 1.0
    %v2190 = vadd.f32 %v2062, 1.0
    %v2191 = vadd.f32 %v2063, 1.0
    %v2192 = vadd.f32 %v2064, 1.0
    %v2193 = vadd.f32 %v2065, 1.0
    %v2194 = vadd.f32 %v2066, 1.0
    %v2195 = vadd.f32 %v2067, 1.0
    %v2196 = vadd.f32 %v2068, 1.0
    %v2197 = vadd.f32 %v2069, 1.0
    %v2198 = vadd.f32 %v2070, 1.0
    %v2199 = vmul.f32 %v1175, %v2071
    %v2200 = vmul.f32 %v1176, %v2072
    %v2201 = vmul.f32 %v1177, %v2073
    %v2202 = vmul.f32 %v1178, %v2074
    %v2203 = vmul.f32 %v1179, %v2075
    %v2204 = vmul.f32 %v1180, %v2076
    %v2205 = vmul.f32 %v1181, %v2077
    %v2206 = vmul.f32 %v1182, %v2078
    %v2207 = vmul.f32 %v1183, %v2079
    %v2208 = vmul.f32 %v1184, %v2080
    %v2209 = vmul.f32 %v1185, %v2081
    %v2210 = vmul.f32 %v1186, %v2082
    %v2211 = vmul.f32 %v1187, %v2083
    %v2212 = vmul.f32 %v1188, %v2084
    %v2213 = vmul.f32 %v1189, %v2085
    %v2214 = vmul.f32 %v1190, %v2086
    %v2215 = vmul.f32 %v1191, %v2087
    %v2216 = vmul.f32 %v1192, %v2088
    %v2217 = vmul.f32 %v1193, %v2089
    %v2218 = vmul.f32 %v1194, %v2090
    %v2219 = vmul.f32 %v1195, %v2091
    %v2220 = vmul.f32 %v1196, %v2092
    %v2221 = vmul.f32 %v1197, %v2093
    %v2222 = vmul.f32 %v1198, %v2094
    %v2223 = vmul.f32 %v1199, %v2095
    %v2224 = vmul.f32 %v1200, %v2096
    %v2225 = vmul.f32 %v1201, %v2097
    %v2226 = vmul.f32 %v1202, %v2098
    %v2227 = vmul.f32 %v1203, %v2099
    %v2228 = vmul.f32 %v1204, %v2100
    %v2229 = vmul.f32 %v1205, %v2101
    %v2230 = vmul.f32 %v1206, %v2102
    %v2231 = vmul.f32 %v1207, %v2103
    %v2232 = vmul.f32 %v1208, %v2104
    %v2233 = vmul.f32 %v1209, %v2105
    %v2234 = vmul.f32 %v1210, %v2106
    %v2235 = vmul.f32 %v1211, %v2107
    %v2236 = vmul.f32 %v1212, %v2108
    %v2237 = vmul.f32 %v1213, %v2109
    %v2238 = vmul.f32 %v1214, %v2110
    %v2239 = vmul.f32 %v1215, %v2111
    %v2240 = vmul.f32 %v1216, %v2112
    %v2241 = vmul.f32 %v1217, %v2113
    %v2242 = vmul.f32 %v1218, %v2114
    %v2243 = vmul.f32 %v1219, %v2115
    %v2244 = vmul.f32 %v1220, %v2116
    %v2245 = vmul.f32 %v1221, %v2117
    %v2246 = vmul.f32 %v1222, %v2118
    %v2247 = vmul.f32 %v1223, %v2119
    %v2248 = vmul.f32 %v1224, %v2120
    %v2249 = vmul.f32 %v1225, %v2121
    %v2250 = vmul.f32 %v1226, %v2122
    %v2251 = vmul.f32 %v1227, %v2123
    %v2252 = vmul.f32 %v1228, %v2124
    %v2253 = vmul.f32 %v1229, %v2125
    %v2254 = vmul.f32 %v1230, %v2126
    %v2255 = vmul.f32 %v1231, %v2127
    %v2256 = vmul.f32 %v1232, %v2128
    %v2257 = vmul.f32 %v1233, %v2129
    %v2258 = vmul.f32 %v1234, %v2130
    %v2259 = vmul.f32 %v1235, %v2131
    %v2260 = vmul.f32 %v1236, %v2132
    %v2261 = vmul.f32 %v1237, %v2133
    %v2262 = vmul.f32 %v1238, %v2134
    %v2263 = vmul.f32 %v1239, %v2135
    %v2264 = vmul.f32 %v1240, %v2136
    %v2265 = vmul.f32 %v1241, %v2137
    %v2266 = vmul.f32 %v1242, %v2138
    %v2267 = vmul.f32 %v1243, %v2139
    %v2268 = vmul.f32 %v1244, %v2140
    %v2269 = vmul.f32 %v1245, %v2141
    %v2270 = vmul.f32 %v1246, %v2142
    %v2271 = vmul.f32 %v1247, %v2143
    %v2272 = vmul.f32 %v1248, %v2144
    %v2273 = vmul.f32 %v1249, %v2145
    %v2274 = vmul.f32 %v1250, %v2146
    %v2275 = vmul.f32 %v1251, %v2147
    %v2276 = vmul.f32 %v1252, %v2148
    %v2277 = vmul.f32 %v1253, %v2149
    %v2278 = vmul.f32 %v1254, %v2150
    %v2279 = vmul.f32 %v1255, %v2151
    %v2280 = vmul.f32 %v1256, %v2152
    %v2281 = vmul.f32 %v1257, %v2153
    %v2282 = vmul.f32 %v1258, %v2154
    %v2283 = vmul.f32 %v1259, %v2155
    %v2284 = vmul.f32 %v1260, %v2156
    %v2285 = vmul.f32 %v1261, %v2157
    %v2286 = vmul.f32 %v1262, %v2158
    %v2287 = vmul.f32 %v1263, %v2159
    %v2288 = vmul.f32 %v1264, %v2160
    %v2289 = vmul.f32 %v1265, %v2161
    %v2290 = vmul.f32 %v1266, %v2162
    %v2291 = vmul.f32 %v1267, %v2163
    %v2292 = vmul.f32 %v1268, %v2164
    %v2293 = vmul.f32 %v1269, %v2165
    %v2294 = vmul.f32 %v1270, %v2166
    %v2295 = vmul.f32 %v1271, %v2167
    %v2296 = vmul.f32 %v1272, %v2168
    %v2297 = vmul.f32 %v1273, %v2169
    %v2298 = vmul.f32 %v1274, %v2170
    %v2299 = vmul.f32 %v1275, %v2171
    %v2300 = vmul.f32 %v1276, %v2172
    %v2301 = vmul.f32 %v1277, %v2173
    %v2302 = vmul.f32 %v1278, %v2174
    %v2303 = vmul.f32 %v1279, %v2175
    %v2304 = vmul.f32 %v1280, %v2176
    %v2305 = vmul.f32 %v1281, %v2177
    %v2306 = vmul.f32 %v1282, %v2178
    %v2307 = vmul.f32 %v1283, %v2179
    %v2308 = vmul.f32 %v1284, %v2180
    %v2309 = vmul.f32 %v1285, %v2181
    %v2310 = vmul.f32 %v1286, %v2182
    %v2311 = vmul.f32 %v1287, %v2183
    %v2312 = vmul.f32 %v1288, %v2184
    %v2313 = vmul.f32 %v1289, %v2185
    %v2314 = vmul.f32 %v1290, %v2186
    %v2315 = vmul.f32 %v1291, %v2187
    %v2316 = vmul.f32 %v1292, %v2188
    %v2317 = vmul.f32 %v1293, %v2189
    %v2318 = vmul.f32 %v1294, %v2190
    %v2319 = vmul.f32 %v1295, %v2191
    %v2320 = vmul.f32 %v1296, %v2192
    %v2321 = vmul.f32 %v1297, %v2193
    %v2322 = vmul.f32 %v1298, %v2194
    %v2323 = vmul.f32 %v1299, %v2195
    %v2324 = vmul.f32 %v1300, %v2196
    %v2325 = vmul.f32 %v1301, %v2197
    %v2326 = vmul.f32 %v1302, %v2198
    %v2327 = vpack.c.bf16 %v2200, %v2199
    %v2328 = vpack.c.bf16 %v2202, %v2201
    %v2329 = vpack.c.bf16 %v2204, %v2203
    %v2330 = vpack.c.bf16 %v2206, %v2205
    %v2331 = vpack.c.bf16 %v2208, %v2207
    %v2332 = vpack.c.bf16 %v2210, %v2209
    %v2333 = vpack.c.bf16 %v2212, %v2211
    %v2334 = vpack.c.bf16 %v2214, %v2213
    %v2335 = vpack.c.bf16 %v2216, %v2215
    %v2336 = vpack.c.bf16 %v2218, %v2217
    %v2337 = vpack.c.bf16 %v2220, %v2219
    %v2338 = vpack.c.bf16 %v2222, %v2221
    %v2339 = vpack.c.bf16 %v2224, %v2223
    %v2340 = vpack.c.bf16 %v2226, %v2225
    %v2341 = vpack.c.bf16 %v2228, %v2227
    %v2342 = vpack.c.bf16 %v2230, %v2229
    %v2343 = vpack.c.bf16 %v2232, %v2231
    %v2344 = vpack.c.bf16 %v2234, %v2233
    %v2345 = vpack.c.bf16 %v2236, %v2235
    %v2346 = vpack.c.bf16 %v2238, %v2237
    %v2347 = vpack.c.bf16 %v2240, %v2239
    %v2348 = vpack.c.bf16 %v2242, %v2241
    %v2349 = vpack.c.bf16 %v2244, %v2243
    %v2350 = vpack.c.bf16 %v2246, %v2245
    %v2351 = vpack.c.bf16 %v2248, %v2247
    %v2352 = vpack.c.bf16 %v2250, %v2249
    %v2353 = vpack.c.bf16 %v2252, %v2251
    %v2354 = vpack.c.bf16 %v2254, %v2253
    %v2355 = vpack.c.bf16 %v2256, %v2255
    %v2356 = vpack.c.bf16 %v2258, %v2257
    %v2357 = vpack.c.bf16 %v2260, %v2259
    %v2358 = vpack.c.bf16 %v2262, %v2261
    %v2359 = vpack.c.bf16 %v2264, %v2263
    %v2360 = vpack.c.bf16 %v2266, %v2265
    %v2361 = vpack.c.bf16 %v2268, %v2267
    %v2362 = vpack.c.bf16 %v2270, %v2269
    %v2363 = vpack.c.bf16 %v2272, %v2271
    %v2364 = vpack.c.bf16 %v2274, %v2273
    %v2365 = vpack.c.bf16 %v2276, %v2275
    %v2366 = vpack.c.bf16 %v2278, %v2277
    %v2367 = vpack.c.bf16 %v2280, %v2279
    %v2368 = vpack.c.bf16 %v2282, %v2281
    %v2369 = vpack.c.bf16 %v2284, %v2283
    %v2370 = vpack.c.bf16 %v2286, %v2285
    %v2371 = vpack.c.bf16 %v2288, %v2287
    %v2372 = vpack.c.bf16 %v2290, %v2289
    %v2373 = vpack.c.bf16 %v2292, %v2291
    %v2374 = vpack.c.bf16 %v2294, %v2293
    %v2375 = vpack.c.bf16 %v2296, %v2295
    %v2376 = vpack.c.bf16 %v2298, %v2297
    %v2377 = vpack.c.bf16 %v2300, %v2299
    %v2378 = vpack.c.bf16 %v2302, %v2301
    %v2379 = vpack.c.bf16 %v2304, %v2303
    %v2380 = vpack.c.bf16 %v2306, %v2305
    %v2381 = vpack.c.bf16 %v2308, %v2307
    %v2382 = vpack.c.bf16 %v2310, %v2309
    %v2383 = vpack.c.bf16 %v2312, %v2311
    %v2384 = vpack.c.bf16 %v2314, %v2313
    %v2385 = vpack.c.bf16 %v2316, %v2315
    %v2386 = vpack.c.bf16 %v2318, %v2317
    %v2387 = vpack.c.bf16 %v2320, %v2319
    %v2388 = vpack.c.bf16 %v2322, %v2321
    %v2389 = vpack.c.bf16 %v2324, %v2323
    %v2390 = vpack.c.bf16 %v2326, %v2325
    %v2391 = vld [vmem:[#allocation3] sm:$0xf]
    %v2392 = vld [vmem:[#allocation3 + $0x4] sm:$0xf]
    %v2393 = vld [vmem:[#allocation3 + $0x8] sm:$0xf]
    %v2394 = vld [vmem:[#allocation3 + $0xc] sm:$0xf]
    %v2395 = vld [vmem:[#allocation3 + $0x10] sm:$0xf]
    %v2396 = vld [vmem:[#allocation3 + $0x14] sm:$0xf]
    %v2397 = vld [vmem:[#allocation3 + $0x18] sm:$0xf]
    %v2398 = vld [vmem:[#allocation3 + $0x1c] sm:$0xf]
    %v2399 = vld [vmem:[#allocation3 + $0x20] sm:$0xf]
    %v2400 = vld [vmem:[#allocation3 + $0x24] sm:$0xf]
    %v2401 = vld [vmem:[#allocation3 + $0x28] sm:$0xf]
    %v2402 = vld [vmem:[#allocation3 + $0x2c] sm:$0xf]
    %v2403 = vld [vmem:[#allocation3 + $0x30] sm:$0xf]
    %v2404 = vld [vmem:[#allocation3 + $0x34] sm:$0xf]
    %v2405 = vld [vmem:[#allocation3 + $0x38] sm:$0xf]
    %v2406 = vld [vmem:[#allocation3 + $0x3c] sm:$0xf]
    %v2407 = vld [vmem:[%s5] sm:$0x1]
    %v2409 = vlaneseq
    %v2410 = vshrl.u32 %v2409, 7
    %v2411 = vsub.s32 0, %v2410
    %v2412 = vrot.slane %v2407, %v2411
    %v2430 = vunpack.c.l.b16 %v2391
    %v2431 = vunpack.c.l.b16 %v2392
    %v2432 = vunpack.c.l.b16 %v2393
    %v2433 = vunpack.c.l.b16 %v2394
    %v2434 = vunpack.c.l.b16 %v2395
    %v2435 = vunpack.c.l.b16 %v2396
    %v2436 = vunpack.c.l.b16 %v2397
    %v2437 = vunpack.c.l.b16 %v2398
    %v2438 = vunpack.c.l.b16 %v2399
    %v2439 = vunpack.c.l.b16 %v2400
    %v2440 = vunpack.c.l.b16 %v2401
    %v2441 = vunpack.c.l.b16 %v2402
    %v2442 = vunpack.c.l.b16 %v2403
    %v2443 = vunpack.c.l.b16 %v2404
    %v2444 = vunpack.c.l.b16 %v2405
    %v2445 = vunpack.c.l.b16 %v2406
    %v2446 = vpack.c.b16 %v2431, %v2430
    %v2447 = vpack.c.b16 %v2433, %v2432
    %v2448 = vpack.c.b16 %v2435, %v2434
    %v2449 = vpack.c.b16 %v2437, %v2436
    %v2450 = vpack.c.b16 %v2439, %v2438
    %v2451 = vpack.c.b16 %v2441, %v2440
    %v2452 = vpack.c.b16 %v2443, %v2442
    %v2453 = vpack.c.b16 %v2445, %v2444
    %2462 = vmatprep.subr.bf16.mxu0 0
    %2463 = vmatpush1.bf16.msra.mxu0 %v2446
    %2464 = vmatprep.subr.bf16.mxu0 0
    %2465 = vmatpush1.bf16.msra.mxu0 %v2447
    %2466 = vmatprep.subr.bf16.mxu0 0
    %2467 = vmatpush1.bf16.msra.mxu0 %v2448
    %2468 = vmatprep.subr.bf16.mxu0 0
    %2469 = vmatpush1.bf16.msra.mxu0 %v2449
    %2470 = vmatprep.subr.bf16.mxu0 0
    %2471 = vmatpush1.bf16.msra.mxu0 %v2450
    %2472 = vmatprep.subr.bf16.mxu0 0
    %2473 = vmatpush1.bf16.msra.mxu0 %v2451
    %2474 = vmatprep.subr.bf16.mxu0 0
    %2475 = vmatpush1.bf16.msra.mxu0 %v2452
    %2476 = vmatprep.subr.bf16.mxu0 0
    %2477 = vmatpush1.bf16.msra.mxu0 %v2453
    %2478 = vmatprep.subr.bf16.mxu0 0
    %2479 = vmatpush1.bf16.msra.mxu0 0
    %2480 = vmatprep.subr.bf16.mxu0 0
    %2481 = vmatpush1.bf16.msra.mxu0 0
    %2482 = vmatprep.subr.bf16.mxu0 0
    %2483 = vmatpush1.bf16.msra.mxu0 0
    %2484 = vmatprep.subr.bf16.mxu0 0
    %2485 = vmatpush1.bf16.msra.mxu0 0
    %2486 = vmatprep.subr.bf16.mxu0 0
    %2487 = vmatpush1.bf16.msra.mxu0 0
    %2488 = vmatprep.subr.bf16.mxu0 0
    %2489 = vmatpush1.bf16.msra.mxu0 0
    %2490 = vmatprep.subr.bf16.mxu0 0
    %2491 = vmatpush1.bf16.msra.mxu0 0
    %2492 = vmatprep.subr.bf16.mxu0 0
    %2493 = vmatpush1.bf16.msra.mxu0 0
    %2494 = vmatprep.mubr.bf16.mxu0 0
    %2495 = vmatmul.mubr.bf16.gmra.mrb[0].mxu0 %v2327
    %v2496 = vpop.f32.mrb[0].mxu0
    %v2497 = vadd.f32 %v2412, %v2496
    %v2498 = vpop.f32.mrb[0].mxu0
    %v2499 = vpop.f32.mrb[0].mxu0
    %v2500 = vadd.f32 %v2412, %v2499
    %v2501 = vpop.f32.mrb[0].mxu0
    %2502 = vmatprep.mubr.bf16.mxu0 0
    %2503 = vmatmul.mubr.bf16.gmra.mrb[0].mxu0 %v2328
    %v2504 = vpop.f32.mrb[0].mxu0
    %v2505 = vadd.f32 %v2412, %v2504
    %v2506 = vpop.f32.mrb[0].mxu0
    %v2507 = vpop.f32.mrb[0].mxu0
    %v2508 = vadd.f32 %v2412, %v2507
    %v2509 = vpop.f32.mrb[0].mxu0
    %2510 = vmatprep.mubr.bf16.mxu0 0
    %2511 = vmatmul.mubr.bf16.gmra.mrb[0].mxu0 %v2329
    %v2512 = vpop.f32.mrb[0].mxu0
    %v2513 = vadd.f32 %v2412, %v2512
    %v2514 = vpop.f32.mrb[0].mxu0
    %v2515 = vpop.f32.mrb[0].mxu0
    %v2516 = vadd.f32 %v2412, %v2515
    %v2517 = vpop.f32.mrb[0].mxu0
    %2518 = vmatprep.mubr.bf16.mxu0 0
    %2519 = vmatmul.mubr.bf16.gmra.mrb[0].mxu0 %v2330
    %v2520 = vpop.f32.mrb[0].mxu0
    %v2521 = vadd.f32 %v2412, %v2520
    %v2522 = vpop.f32.mrb[0].mxu0
    %v2523 = vpop.f32.mrb[0].mxu0
    %v2524 = vadd.f32 %v2412, %v2523
    %v2525 = vpop.f32.mrb[0].mxu0
    %2526 = vmatprep.mubr.bf16.mxu0 0
    %2527 = vmatmul.mubr.bf16.gmra.mrb[0].mxu0 %v2331
    %v2528 = vpop.f32.mrb[0].mxu0
    %v2529 = vadd.f32 %v2412, %v2528
    %v2530 = vpop.f32.mrb[0].mxu0
    %v2531 = vpop.f32.mrb[0].mxu0
    %v2532 = vadd.f32 %v2412, %v2531
    %v2533 = vpop.f32.mrb[0].mxu0
    %2534 = vmatprep.mubr.bf16.mxu0 0
    %2535 = vmatmul.mubr.bf16.gmra.mrb[0].mxu0 %v2332
    %v2536 = vpop.f32.mrb[0].mxu0
    %v2537 = vadd.f32 %v2412, %v2536
    %v2538 = vpop.f32.mrb[0].mxu0
    %v2539 = vpop.f32.mrb[0].mxu0
    %v2540 = vadd.f32 %v2412, %v2539
    %v2541 = vpop.f32.mrb[0].mxu0
    %2542 = vmatprep.mubr.bf16.mxu0 0
    %2543 = vmatmul.mubr.bf16.gmra.mrb[0].mxu0 %v2333
    %v2544 = vpop.f32.mrb[0].mxu0
    %v2545 = vadd.f32 %v2412, %v2544
    %v2546 = vpop.f32.mrb[0].mxu0
    %v2547 = vpop.f32.mrb[0].mxu0
    %v2548 = vadd.f32 %v2412, %v2547
    %v2549 = vpop.f32.mrb[0].mxu0
    %2550 = vmatprep.mubr.bf16.mxu0 0
    %2551 = vmatmul.mubr.bf16.gmra.mrb[0].mxu0 %v2334
    %v2552 = vpop.f32.mrb[0].mxu0
    %v2553 = vadd.f32 %v2412, %v2552
    %v2554 = vpop.f32.mrb[0].mxu0
    %v2555 = vpop.f32.mrb[0].mxu0
    %v2556 = vadd.f32 %v2412, %v2555
    %v2557 = vpop.f32.mrb[0].mxu0
    %2558 = vmatprep.mubr.bf16.mxu0 0
    %2559 = vmatmul.mubr.bf16.gmra.mrb[0].mxu0 %v2335
    %v2560 = vpop.f32.mrb[0].mxu0
    %v2561 = vadd.f32 %v2412, %v2560
    %v2562 = vpop.f32.mrb[0].mxu0
    %v2563 = vpop.f32.mrb[0].mxu0
    %v2564 = vadd.f32 %v2412, %v2563
    %v2565 = vpop.f32.mrb[0].mxu0
    %2566 = vmatprep.mubr.bf16.mxu0 0
    %2567 = vmatmul.mubr.bf16.gmra.mrb[0].mxu0 %v2336
    %v2568 = vpop.f32.mrb[0].mxu0
    %v2569 = vadd.f32 %v2412, %v2568
    %v2570 = vpop.f32.mrb[0].mxu0
    %v2571 = vpop.f32.mrb[0].mxu0
    %v2572 = vadd.f32 %v2412, %v2571
    %v2573 = vpop.f32.mrb[0].mxu0
    %2574 = vmatprep.mubr.bf16.mxu0 0
    %2575 = vmatmul.mubr.bf16.gmra.mrb[0].mxu0 %v2337
    %v2576 = vpop.f32.mrb[0].mxu0
    %v2577 = vadd.f32 %v2412, %v2576
    %v2578 = vpop.f32.mrb[0].mxu0
    %v2579 = vpop.f32.mrb[0].mxu0
    %v2580 = vadd.f32 %v2412, %v2579
    %v2581 = vpop.f32.mrb[0].mxu0
    %2582 = vmatprep.mubr.bf16.mxu0 0
    %2583 = vmatmul.mubr.bf16.gmra.mrb[0].mxu0 %v2338
    %v2584 = vpop.f32.mrb[0].mxu0
    %v2585 = vadd.f32 %v2412, %v2584
    %v2586 = vpop.f32.mrb[0].mxu0
    %v2587 = vpop.f32.mrb[0].mxu0
    %v2588 = vadd.f32 %v2412, %v2587
    %v2589 = vpop.f32.mrb[0].mxu0
    %2590 = vmatprep.mubr.bf16.mxu0 0
    %2591 = vmatmul.mubr.bf16.gmra.mrb[0].mxu0 %v2339
    %v2592 = vpop.f32.mrb[0].mxu0
    %v2593 = vadd.f32 %v2412, %v2592
    %v2594 = vpop.f32.mrb[0].mxu0
    %v2595 = vpop.f32.mrb[0].mxu0
    %v2596 = vadd.f32 %v2412, %v2595
    %v2597 = vpop.f32.mrb[0].mxu0
    %2598 = vmatprep.mubr.bf16.mxu0 0
    %2599 = vmatmul.mubr.bf16.gmra.mrb[0].mxu0 %v2340
    %v2600 = vpop.f32.mrb[0].mxu0
    %v2601 = vadd.f32 %v2412, %v2600
    %v2602 = vpop.f32.mrb[0].mxu0
    %v2603 = vpop.f32.mrb[0].mxu0
    %v2604 = vadd.f32 %v2412, %v2603
    %v2605 = vpop.f32.mrb[0].mxu0
    %2606 = vmatprep.mubr.bf16.mxu0 0
    %2607 = vmatmul.mubr.bf16.gmra.mrb[0].mxu0 %v2341
    %v2608 = vpop.f32.mrb[0].mxu0
    %v2609 = vadd.f32 %v2412, %v2608
    %v2610 = vpop.f32.mrb[0].mxu0
    %v2611 = vpop.f32.mrb[0].mxu0
    %v2612 = vadd.f32 %v2412, %v2611
    %v2613 = vpop.f32.mrb[0].mxu0
    %2614 = vmatprep.mubr.bf16.mxu0 0
    %2615 = vmatmul.mubr.bf16.gmra.mrb[0].mxu0 %v2342
    %v2616 = vpop.f32.mrb[0].mxu0
    %v2617 = vadd.f32 %v2412, %v2616
    %v2618 = vpop.f32.mrb[0].mxu0
    %v2619 = vpop.f32.mrb[0].mxu0
    %v2620 = vadd.f32 %v2412, %v2619
    %v2621 = vpop.f32.mrb[0].mxu0
    %2622 = vmatprep.mubr.bf16.mxu0 0
    %2623 = vmatmul.mubr.bf16.gmra.mrb[0].mxu0 %v2343
    %v2624 = vpop.f32.mrb[0].mxu0
    %v2625 = vadd.f32 %v2412, %v2624
    %v2626 = vpop.f32.mrb[0].mxu0
    %v2627 = vpop.f32.mrb[0].mxu0
    %v2628 = vadd.f32 %v2412, %v2627
    %v2629 = vpop.f32.mrb[0].mxu0
    %2630 = vmatprep.mubr.bf16.mxu0 0
    %2631 = vmatmul.mubr.bf16.gmra.mrb[0].mxu0 %v2344
    %v2632 = vpop.f32.mrb[0].mxu0
    %v2633 = vadd.f32 %v2412, %v2632
    %v2634 = vpop.f32.mrb[0].mxu0
    %v2635 = vpop.f32.mrb[0].mxu0
    %v2636 = vadd.f32 %v2412, %v2635
    %v2637 = vpop.f32.mrb[0].mxu0
    %2638 = vmatprep.mubr.bf16.mxu0 0
    %2639 = vmatmul.mubr.bf16.gmra.mrb[0].mxu0 %v2345
    %v2640 = vpop.f32.mrb[0].mxu0
    %v2641 = vadd.f32 %v2412, %v2640
    %v2642 = vpop.f32.mrb[0].mxu0
    %v2643 = vpop.f32.mrb[0].mxu0
    %v2644 = vadd.f32 %v2412, %v2643
    %v2645 = vpop.f32.mrb[0].mxu0
    %2646 = vmatprep.mubr.bf16.mxu0 0
    %2647 = vmatmul.mubr.bf16.gmra.mrb[0].mxu0 %v2346
    %v2648 = vpop.f32.mrb[0].mxu0
    %v2649 = vadd.f32 %v2412, %v2648
    %v2650 = vpop.f32.mrb[0].mxu0
    %v2651 = vpop.f32.mrb[0].mxu0
    %v2652 = vadd.f32 %v2412, %v2651
    %v2653 = vpop.f32.mrb[0].mxu0
    %2654 = vmatprep.mubr.bf16.mxu0 0
    %2655 = vmatmul.mubr.bf16.gmra.mrb[0].mxu0 %v2347
    %v2656 = vpop.f32.mrb[0].mxu0
    %v2657 = vadd.f32 %v2412, %v2656
    %v2658 = vpop.f32.mrb[0].mxu0
    %v2659 = vpop.f32.mrb[0].mxu0
    %v2660 = vadd.f32 %v2412, %v2659
    %v2661 = vpop.f32.mrb[0].mxu0
    %2662 = vmatprep.mubr.bf16.mxu0 0
    %2663 = vmatmul.mubr.bf16.gmra.mrb[0].mxu0 %v2348
    %v2664 = vpop.f32.mrb[0].mxu0
    %v2665 = vadd.f32 %v2412, %v2664
    %v2666 = vpop.f32.mrb[0].mxu0
    %v2667 = vpop.f32.mrb[0].mxu0
    %v2668 = vadd.f32 %v2412, %v2667
    %v2669 = vpop.f32.mrb[0].mxu0
    %2670 = vmatprep.mubr.bf16.mxu0 0
    %2671 = vmatmul.mubr.bf16.gmra.mrb[0].mxu0 %v2349
    %v2672 = vpop.f32.mrb[0].mxu0
    %v2673 = vadd.f32 %v2412, %v2672
    %v2674 = vpop.f32.mrb[0].mxu0
    %v2675 = vpop.f32.mrb[0].mxu0
    %v2676 = vadd.f32 %v2412, %v2675
    %v2677 = vpop.f32.mrb[0].mxu0
    %2678 = vmatprep.mubr.bf16.mxu0 0
    %2679 = vmatmul.mubr.bf16.gmra.mrb[0].mxu0 %v2350
    %v2680 = vpop.f32.mrb[0].mxu0
    %v2681 = vadd.f32 %v2412, %v2680
    %v2682 = vpop.f32.mrb[0].mxu0
    %v2683 = vpop.f32.mrb[0].mxu0
    %v2684 = vadd.f32 %v2412, %v2683
    %v2685 = vpop.f32.mrb[0].mxu0
    %2686 = vmatprep.mubr.bf16.mxu0 0
    %2687 = vmatmul.mubr.bf16.gmra.mrb[0].mxu0 %v2351
    %v2688 = vpop.f32.mrb[0].mxu0
    %v2689 = vadd.f32 %v2412, %v2688
    %v2690 = vpop.f32.mrb[0].mxu0
    %v2691 = vpop.f32.mrb[0].mxu0
    %v2692 = vadd.f32 %v2412, %v2691
    %v2693 = vpop.f32.mrb[0].mxu0
    %2694 = vmatprep.mubr.bf16.mxu0 0
    %2695 = vmatmul.mubr.bf16.gmra.mrb[0].mxu0 %v2352
    %v2696 = vpop.f32.mrb[0].mxu0
    %v2697 = vadd.f32 %v2412, %v2696
    %v2698 = vpop.f32.mrb[0].mxu0
    %v2699 = vpop.f32.mrb[0].mxu0
    %v2700 = vadd.f32 %v2412, %v2699
    %v2701 = vpop.f32.mrb[0].mxu0
    %2702 = vmatprep.mubr.bf16.mxu0 0
    %2703 = vmatmul.mubr.bf16.gmra.mrb[0].mxu0 %v2353
    %v2704 = vpop.f32.mrb[0].mxu0
    %v2705 = vadd.f32 %v2412, %v2704
    %v2706 = vpop.f32.mrb[0].mxu0
    %v2707 = vpop.f32.mrb[0].mxu0
    %v2708 = vadd.f32 %v2412, %v2707
    %v2709 = vpop.f32.mrb[0].mxu0
    %2710 = vmatprep.mubr.bf16.mxu0 0
    %2711 = vmatmul.mubr.bf16.gmra.mrb[0].mxu0 %v2354
    %v2712 = vpop.f32.mrb[0].mxu0
    %v2713 = vadd.f32 %v2412, %v2712
    %v2714 = vpop.f32.mrb[0].mxu0
    %v2715 = vpop.f32.mrb[0].mxu0
    %v2716 = vadd.f32 %v2412, %v2715
    %v2717 = vpop.f32.mrb[0].mxu0
    %2718 = vmatprep.mubr.bf16.mxu0 0
    %2719 = vmatmul.mubr.bf16.gmra.mrb[0].mxu0 %v2355
    %v2720 = vpop.f32.mrb[0].mxu0
    %v2721 = vadd.f32 %v2412, %v2720
    %v2722 = vpop.f32.mrb[0].mxu0
    %v2723 = vpop.f32.mrb[0].mxu0
    %v2724 = vadd.f32 %v2412, %v2723
    %v2725 = vpop.f32.mrb[0].mxu0
    %2726 = vmatprep.mubr.bf16.mxu0 0
    %2727 = vmatmul.mubr.bf16.gmra.mrb[0].mxu0 %v2356
    %v2728 = vpop.f32.mrb[0].mxu0
    %v2729 = vadd.f32 %v2412, %v2728
    %v2730 = vpop.f32.mrb[0].mxu0
    %v2731 = vpop.f32.mrb[0].mxu0
    %v2732 = vadd.f32 %v2412, %v2731
    %v2733 = vpop.f32.mrb[0].mxu0
    %2734 = vmatprep.mubr.bf16.mxu0 0
    %2735 = vmatmul.mubr.bf16.gmra.mrb[0].mxu0 %v2357
    %v2736 = vpop.f32.mrb[0].mxu0
    %v2737 = vadd.f32 %v2412, %v2736
    %v2738 = vpop.f32.mrb[0].mxu0
    %v2739 = vpop.f32.mrb[0].mxu0
    %v2740 = vadd.f32 %v2412, %v2739
    %v2741 = vpop.f32.mrb[0].mxu0
    %2742 = vmatprep.mubr.bf16.mxu0 0
    %2743 = vmatmul.mubr.bf16.gmra.mrb[0].mxu0 %v2358
    %v2744 = vpop.f32.mrb[0].mxu0
    %v2745 = vadd.f32 %v2412, %v2744
    %v2746 = vpop.f32.mrb[0].mxu0
    %v2747 = vpop.f32.mrb[0].mxu0
    %v2748 = vadd.f32 %v2412, %v2747
    %v2749 = vpop.f32.mrb[0].mxu0
    %2750 = vmatprep.mubr.bf16.mxu0 0
    %2751 = vmatmul.mubr.bf16.gmra.mrb[0].mxu0 %v2359
    %v2752 = vpop.f32.mrb[0].mxu0
    %v2753 = vadd.f32 %v2412, %v2752
    %v2754 = vpop.f32.mrb[0].mxu0
    %v2755 = vpop.f32.mrb[0].mxu0
    %v2756 = vadd.f32 %v2412, %v2755
    %v2757 = vpop.f32.mrb[0].mxu0
    %2758 = vmatprep.mubr.bf16.mxu0 0
    %2759 = vmatmul.mubr.bf16.gmra.mrb[0].mxu0 %v2360
    %v2760 = vpop.f32.mrb[0].mxu0
    %v2761 = vadd.f32 %v2412, %v2760
    %v2762 = vpop.f32.mrb[0].mxu0
    %v2763 = vpop.f32.mrb[0].mxu0
    %v2764 = vadd.f32 %v2412, %v2763
    %v2765 = vpop.f32.mrb[0].mxu0
    %2766 = vmatprep.mubr.bf16.mxu0 0
    %2767 = vmatmul.mubr.bf16.gmra.mrb[0].mxu0 %v2361
    %v2768 = vpop.f32.mrb[0].mxu0
    %v2769 = vadd.f32 %v2412, %v2768
    %v2770 = vpop.f32.mrb[0].mxu0
    %v2771 = vpop.f32.mrb[0].mxu0
    %v2772 = vadd.f32 %v2412, %v2771
    %v2773 = vpop.f32.mrb[0].mxu0
    %2774 = vmatprep.mubr.bf16.mxu0 0
    %2775 = vmatmul.mubr.bf16.gmra.mrb[0].mxu0 %v2362
    %v2776 = vpop.f32.mrb[0].mxu0
    %v2777 = vadd.f32 %v2412, %v2776
    %v2778 = vpop.f32.mrb[0].mxu0
    %v2779 = vpop.f32.mrb[0].mxu0
    %v2780 = vadd.f32 %v2412, %v2779
    %v2781 = vpop.f32.mrb[0].mxu0
    %2782 = vmatprep.mubr.bf16.mxu0 0
    %2783 = vmatmul.mubr.bf16.gmra.mrb[0].mxu0 %v2363
    %v2784 = vpop.f32.mrb[0].mxu0
    %v2785 = vadd.f32 %v2412, %v2784
    %v2786 = vpop.f32.mrb[0].mxu0
    %v2787 = vpop.f32.mrb[0].mxu0
    %v2788 = vadd.f32 %v2412, %v2787
    %v2789 = vpop.f32.mrb[0].mxu0
    %2790 = vmatprep.mubr.bf16.mxu0 0
    %2791 = vmatmul.mubr.bf16.gmra.mrb[0].mxu0 %v2364
    %v2792 = vpop.f32.mrb[0].mxu0
    %v2793 = vadd.f32 %v2412, %v2792
    %v2794 = vpop.f32.mrb[0].mxu0
    %v2795 = vpop.f32.mrb[0].mxu0
    %v2796 = vadd.f32 %v2412, %v2795
    %v2797 = vpop.f32.mrb[0].mxu0
    %2798 = vmatprep.mubr.bf16.mxu0 0
    %2799 = vmatmul.mubr.bf16.gmra.mrb[0].mxu0 %v2365
    %v2800 = vpop.f32.mrb[0].mxu0
    %v2801 = vadd.f32 %v2412, %v2800
    %v2802 = vpop.f32.mrb[0].mxu0
    %v2803 = vpop.f32.mrb[0].mxu0
    %v2804 = vadd.f32 %v2412, %v2803
    %v2805 = vpop.f32.mrb[0].mxu0
    %2806 = vmatprep.mubr.bf16.mxu0 0
    %2807 = vmatmul.mubr.bf16.gmra.mrb[0].mxu0 %v2366
    %v2808 = vpop.f32.mrb[0].mxu0
    %v2809 = vadd.f32 %v2412, %v2808
    %v2810 = vpop.f32.mrb[0].mxu0
    %v2811 = vpop.f32.mrb[0].mxu0
    %v2812 = vadd.f32 %v2412, %v2811
    %v2813 = vpop.f32.mrb[0].mxu0
    %2814 = vmatprep.mubr.bf16.mxu0 0
    %2815 = vmatmul.mubr.bf16.gmra.mrb[0].mxu0 %v2367
    %v2816 = vpop.f32.mrb[0].mxu0
    %v2817 = vadd.f32 %v2412, %v2816
    %v2818 = vpop.f32.mrb[0].mxu0
    %v2819 = vpop.f32.mrb[0].mxu0
    %v2820 = vadd.f32 %v2412, %v2819
    %v2821 = vpop.f32.mrb[0].mxu0
    %2822 = vmatprep.mubr.bf16.mxu0 0
    %2823 = vmatmul.mubr.bf16.gmra.mrb[0].mxu0 %v2368
    %v2824 = vpop.f32.mrb[0].mxu0
    %v2825 = vadd.f32 %v2412, %v2824
    %v2826 = vpop.f32.mrb[0].mxu0
    %v2827 = vpop.f32.mrb[0].mxu0
    %v2828 = vadd.f32 %v2412, %v2827
    %v2829 = vpop.f32.mrb[0].mxu0
    %2830 = vmatprep.mubr.bf16.mxu0 0
    %2831 = vmatmul.mubr.bf16.gmra.mrb[0].mxu0 %v2369
    %v2832 = vpop.f32.mrb[0].mxu0
    %v2833 = vadd.f32 %v2412, %v2832
    %v2834 = vpop.f32.mrb[0].mxu0
    %v2835 = vpop.f32.mrb[0].mxu0
    %v2836 = vadd.f32 %v2412, %v2835
    %v2837 = vpop.f32.mrb[0].mxu0
    %2838 = vmatprep.mubr.bf16.mxu0 0
    %2839 = vmatmul.mubr.bf16.gmra.mrb[0].mxu0 %v2370
    %v2840 = vpop.f32.mrb[0].mxu0
    %v2841 = vadd.f32 %v2412, %v2840
    %v2842 = vpop.f32.mrb[0].mxu0
    %v2843 = vpop.f32.mrb[0].mxu0
    %v2844 = vadd.f32 %v2412, %v2843
    %v2845 = vpop.f32.mrb[0].mxu0
    %2846 = vmatprep.mubr.bf16.mxu0 0
    %2847 = vmatmul.mubr.bf16.gmra.mrb[0].mxu0 %v2371
    %v2848 = vpop.f32.mrb[0].mxu0
    %v2849 = vadd.f32 %v2412, %v2848
    %v2850 = vpop.f32.mrb[0].mxu0
    %v2851 = vpop.f32.mrb[0].mxu0
    %v2852 = vadd.f32 %v2412, %v2851
    %v2853 = vpop.f32.mrb[0].mxu0
    %2854 = vmatprep.mubr.bf16.mxu0 0
    %2855 = vmatmul.mubr.bf16.gmra.mrb[0].mxu0 %v2372
    %v2856 = vpop.f32.mrb[0].mxu0
    %v2857 = vadd.f32 %v2412, %v2856
    %v2858 = vpop.f32.mrb[0].mxu0
    %v2859 = vpop.f32.mrb[0].mxu0
    %v2860 = vadd.f32 %v2412, %v2859
    %v2861 = vpop.f32.mrb[0].mxu0
    %2862 = vmatprep.mubr.bf16.mxu0 0
    %2863 = vmatmul.mubr.bf16.gmra.mrb[0].mxu0 %v2373
    %v2864 = vpop.f32.mrb[0].mxu0
    %v2865 = vadd.f32 %v2412, %v2864
    %v2866 = vpop.f32.mrb[0].mxu0
    %v2867 = vpop.f32.mrb[0].mxu0
    %v2868 = vadd.f32 %v2412, %v2867
    %v2869 = vpop.f32.mrb[0].mxu0
    %2870 = vmatprep.mubr.bf16.mxu0 0
    %2871 = vmatmul.mubr.bf16.gmra.mrb[0].mxu0 %v2374
    %v2872 = vpop.f32.mrb[0].mxu0
    %v2873 = vadd.f32 %v2412, %v2872
    %v2874 = vpop.f32.mrb[0].mxu0
    %v2875 = vpop.f32.mrb[0].mxu0
    %v2876 = vadd.f32 %v2412, %v2875
    %v2877 = vpop.f32.mrb[0].mxu0
    %2878 = vmatprep.mubr.bf16.mxu0 0
    %2879 = vmatmul.mubr.bf16.gmra.mrb[0].mxu0 %v2375
    %v2880 = vpop.f32.mrb[0].mxu0
    %v2881 = vadd.f32 %v2412, %v2880
    %v2882 = vpop.f32.mrb[0].mxu0
    %v2883 = vpop.f32.mrb[0].mxu0
    %v2884 = vadd.f32 %v2412, %v2883
    %v2885 = vpop.f32.mrb[0].mxu0
    %2886 = vmatprep.mubr.bf16.mxu0 0
    %2887 = vmatmul.mubr.bf16.gmra.mrb[0].mxu0 %v2376
    %v2888 = vpop.f32.mrb[0].mxu0
    %v2889 = vadd.f32 %v2412, %v2888
    %v2890 = vpop.f32.mrb[0].mxu0
    %v2891 = vpop.f32.mrb[0].mxu0
    %v2892 = vadd.f32 %v2412, %v2891
    %v2893 = vpop.f32.mrb[0].mxu0
    %2894 = vmatprep.mubr.bf16.mxu0 0
    %2895 = vmatmul.mubr.bf16.gmra.mrb[0].mxu0 %v2377
    %v2896 = vpop.f32.mrb[0].mxu0
    %v2897 = vadd.f32 %v2412, %v2896
    %v2898 = vpop.f32.mrb[0].mxu0
    %v2899 = vpop.f32.mrb[0].mxu0
    %v2900 = vadd.f32 %v2412, %v2899
    %v2901 = vpop.f32.mrb[0].mxu0
    %2902 = vmatprep.mubr.bf16.mxu0 0
    %2903 = vmatmul.mubr.bf16.gmra.mrb[0].mxu0 %v2378
    %v2904 = vpop.f32.mrb[0].mxu0
    %v2905 = vadd.f32 %v2412, %v2904
    %v2906 = vpop.f32.mrb[0].mxu0
    %v2907 = vpop.f32.mrb[0].mxu0
    %v2908 = vadd.f32 %v2412, %v2907
    %v2909 = vpop.f32.mrb[0].mxu0
    %2910 = vmatprep.mubr.bf16.mxu0 0
    %2911 = vmatmul.mubr.bf16.gmra.mrb[0].mxu0 %v2379
    %v2912 = vpop.f32.mrb[0].mxu0
    %v2913 = vadd.f32 %v2412, %v2912
    %v2914 = vpop.f32.mrb[0].mxu0
    %v2915 = vpop.f32.mrb[0].mxu0
    %v2916 = vadd.f32 %v2412, %v2915
    %v2917 = vpop.f32.mrb[0].mxu0
    %2918 = vmatprep.mubr.bf16.mxu0 0
    %2919 = vmatmul.mubr.bf16.gmra.mrb[0].mxu0 %v2380
    %v2920 = vpop.f32.mrb[0].mxu0
    %v2921 = vadd.f32 %v2412, %v2920
    %v2922 = vpop.f32.mrb[0].mxu0
    %v2923 = vpop.f32.mrb[0].mxu0
    %v2924 = vadd.f32 %v2412, %v2923
    %v2925 = vpop.f32.mrb[0].mxu0
    %2926 = vmatprep.mubr.bf16.mxu0 0
    %2927 = vmatmul.mubr.bf16.gmra.mrb[0].mxu0 %v2381
    %v2928 = vpop.f32.mrb[0].mxu0
    %v2929 = vadd.f32 %v2412, %v2928
    %v2930 = vpop.f32.mrb[0].mxu0
    %v2931 = vpop.f32.mrb[0].mxu0
    %v2932 = vadd.f32 %v2412, %v2931
    %v2933 = vpop.f32.mrb[0].mxu0
    %2934 = vmatprep.mubr.bf16.mxu0 0
    %2935 = vmatmul.mubr.bf16.gmra.mrb[0].mxu0 %v2382
    %v2936 = vpop.f32.mrb[0].mxu0
    %v2937 = vadd.f32 %v2412, %v2936
    %v2938 = vpop.f32.mrb[0].mxu0
    %v2939 = vpop.f32.mrb[0].mxu0
    %v2940 = vadd.f32 %v2412, %v2939
    %v2941 = vpop.f32.mrb[0].mxu0
    %2942 = vmatprep.mubr.bf16.mxu0 0
    %2943 = vmatmul.mubr.bf16.gmra.mrb[0].mxu0 %v2383
    %v2944 = vpop.f32.mrb[0].mxu0
    %v2945 = vadd.f32 %v2412, %v2944
    %v2946 = vpop.f32.mrb[0].mxu0
    %v2947 = vpop.f32.mrb[0].mxu0
    %v2948 = vadd.f32 %v2412, %v2947
    %v2949 = vpop.f32.mrb[0].mxu0
    %2950 = vmatprep.mubr.bf16.mxu0 0
    %2951 = vmatmul.mubr.bf16.gmra.mrb[0].mxu0 %v2384
    %v2952 = vpop.f32.mrb[0].mxu0
    %v2953 = vadd.f32 %v2412, %v2952
    %v2954 = vpop.f32.mrb[0].mxu0
    %v2955 = vpop.f32.mrb[0].mxu0
    %v2956 = vadd.f32 %v2412, %v2955
    %v2957 = vpop.f32.mrb[0].mxu0
    %2958 = vmatprep.mubr.bf16.mxu0 0
    %2959 = vmatmul.mubr.bf16.gmra.mrb[0].mxu0 %v2385
    %v2960 = vpop.f32.mrb[0].mxu0
    %v2961 = vadd.f32 %v2412, %v2960
    %v2962 = vpop.f32.mrb[0].mxu0
    %v2963 = vpop.f32.mrb[0].mxu0
    %v2964 = vadd.f32 %v2412, %v2963
    %v2965 = vpop.f32.mrb[0].mxu0
    %2966 = vmatprep.mubr.bf16.mxu0 0
    %2967 = vmatmul.mubr.bf16.gmra.mrb[0].mxu0 %v2386
    %v2968 = vpop.f32.mrb[0].mxu0
    %v2969 = vadd.f32 %v2412, %v2968
    %v2970 = vpop.f32.mrb[0].mxu0
    %v2971 = vpop.f32.mrb[0].mxu0
    %v2972 = vadd.f32 %v2412, %v2971
    %v2973 = vpop.f32.mrb[0].mxu0
    %2974 = vmatprep.mubr.bf16.mxu0 0
    %2975 = vmatmul.mubr.bf16.gmra.mrb[0].mxu0 %v2387
    %v2976 = vpop.f32.mrb[0].mxu0
    %v2977 = vadd.f32 %v2412, %v2976
    %v2978 = vpop.f32.mrb[0].mxu0
    %v2979 = vpop.f32.mrb[0].mxu0
    %v2980 = vadd.f32 %v2412, %v2979
    %v2981 = vpop.f32.mrb[0].mxu0
    %2982 = vmatprep.mubr.bf16.mxu0 0
    %2983 = vmatmul.mubr.bf16.gmra.mrb[0].mxu0 %v2388
    %v2984 = vpop.f32.mrb[0].mxu0
    %v2985 = vadd.f32 %v2412, %v2984
    %v2986 = vpop.f32.mrb[0].mxu0
    %v2987 = vpop.f32.mrb[0].mxu0
    %v2988 = vadd.f32 %v2412, %v2987
    %v2989 = vpop.f32.mrb[0].mxu0
    %2990 = vmatprep.mubr.bf16.mxu0 0
    %2991 = vmatmul.mubr.bf16.gmra.mrb[0].mxu0 %v2389
    %v2992 = vpop.f32.mrb[0].mxu0
    %v2993 = vadd.f32 %v2412, %v2992
    %v2994 = vpop.f32.mrb[0].mxu0
    %v2995 = vpop.f32.mrb[0].mxu0
    %v2996 = vadd.f32 %v2412, %v2995
    %v2997 = vpop.f32.mrb[0].mxu0
    %2998 = vmatprep.mubr.bf16.mxu0 0
    %2999 = vmatmul.mubr.bf16.gmra.mrb[0].mxu0 %v2390
    %v3000 = vpop.f32.mrb[0].mxu0
    %v3001 = vadd.f32 %v2412, %v3000
    %v3002 = vpop.f32.mrb[0].mxu0
    %v3003 = vpop.f32.mrb[0].mxu0
    %v3004 = vadd.f32 %v2412, %v3003
    %v3005 = vpop.f32.mrb[0].mxu0
    %3006 = vdwg.mxu0
    %v3007 = vmul.f32 %v2497, 0.5
    %v3008 = vmul.f32 %v2500, 0.5
    %v3009 = vmul.f32 %v2505, 0.5
    %v3010 = vmul.f32 %v2508, 0.5
    %v3011 = vmul.f32 %v2513, 0.5
    %v3012 = vmul.f32 %v2516, 0.5
    %v3013 = vmul.f32 %v2521, 0.5
    %v3014 = vmul.f32 %v2524, 0.5
    %v3015 = vmul.f32 %v2529, 0.5
    %v3016 = vmul.f32 %v2532, 0.5
    %v3017 = vmul.f32 %v2537, 0.5
    %v3018 = vmul.f32 %v2540, 0.5
    %v3019 = vmul.f32 %v2545, 0.5
    %v3020 = vmul.f32 %v2548, 0.5
    %v3021 = vmul.f32 %v2553, 0.5
    %v3022 = vmul.f32 %v2556, 0.5
    %v3023 = vmul.f32 %v2561, 0.5
    %v3024 = vmul.f32 %v2564, 0.5
    %v3025 = vmul.f32 %v2569, 0.5
    %v3026 = vmul.f32 %v2572, 0.5
    %v3027 = vmul.f32 %v2577, 0.5
    %v3028 = vmul.f32 %v2580, 0.5
    %v3029 = vmul.f32 %v2585, 0.5
    %v3030 = vmul.f32 %v2588, 0.5
    %v3031 = vmul.f32 %v2593, 0.5
    %v3032 = vmul.f32 %v2596, 0.5
    %v3033 = vmul.f32 %v2601, 0.5
    %v3034 = vmul.f32 %v2604, 0.5
    %v3035 = vmul.f32 %v2609, 0.5
    %v3036 = vmul.f32 %v2612, 0.5
    %v3037 = vmul.f32 %v2617, 0.5
    %v3038 = vmul.f32 %v2620, 0.5
    %v3039 = vmul.f32 %v2625, 0.5
    %v3040 = vmul.f32 %v2628, 0.5
    %v3041 = vmul.f32 %v2633, 0.5
    %v3042 = vmul.f32 %v2636, 0.5
    %v3043 = vmul.f32 %v2641, 0.5
    %v3044 = vmul.f32 %v2644, 0.5
    %v3045 = vmul.f32 %v2649, 0.5
    %v3046 = vmul.f32 %v2652, 0.5
    %v3047 = vmul.f32 %v2657, 0.5
    %v3048 = vmul.f32 %v2660, 0.5
    %v3049 = vmul.f32 %v2665, 0.5
    %v3050 = vmul.f32 %v2668, 0.5
    %v3051 = vmul.f32 %v2673, 0.5
    %v3052 = vmul.f32 %v2676, 0.5
    %v3053 = vmul.f32 %v2681, 0.5
    %v3054 = vmul.f32 %v2684, 0.5
    %v3055 = vmul.f32 %v2689, 0.5
    %v3056 = vmul.f32 %v2692, 0.5
    %v3057 = vmul.f32 %v2697, 0.5
    %v3058 = vmul.f32 %v2700, 0.5
    %v3059 = vmul.f32 %v2705, 0.5
    %v3060 = vmul.f32 %v2708, 0.5
    %v3061 = vmul.f32 %v2713, 0.5
    %v3062 = vmul.f32 %v2716, 0.5
    %v3063 = vmul.f32 %v2721, 0.5
    %v3064 = vmul.f32 %v2724, 0.5
    %v3065 = vmul.f32 %v2729, 0.5
    %v3066 = vmul.f32 %v2732, 0.5
    %v3067 = vmul.f32 %v2737, 0.5
    %v3068 = vmul.f32 %v2740, 0.5
    %v3069 = vmul.f32 %v2745, 0.5
    %v3070 = vmul.f32 %v2748, 0.5
    %v3071 = vmul.f32 %v2753, 0.5
    %v3072 = vmul.f32 %v2756, 0.5
    %v3073 = vmul.f32 %v2761, 0.5
    %v3074 = vmul.f32 %v2764, 0.5
    %v3075 = vmul.f32 %v2769, 0.5
    %v3076 = vmul.f32 %v2772, 0.5
    %v3077 = vmul.f32 %v2777, 0.5
    %v3078 = vmul.f32 %v2780, 0.5
    %v3079 = vmul.f32 %v2785, 0.5
    %v3080 = vmul.f32 %v2788, 0.5
    %v3081 = vmul.f32 %v2793, 0.5
    %v3082 = vmul.f32 %v2796, 0.5
    %v3083 = vmul.f32 %v2801, 0.5
    %v3084 = vmul.f32 %v2804, 0.5
    %v3085 = vmul.f32 %v2809, 0.5
    %v3086 = vmul.f32 %v2812, 0.5
    %v3087 = vmul.f32 %v2817, 0.5
    %v3088 = vmul.f32 %v2820, 0.5
    %v3089 = vmul.f32 %v2825, 0.5
    %v3090 = vmul.f32 %v2828, 0.5
    %v3091 = vmul.f32 %v2833, 0.5
    %v3092 = vmul.f32 %v2836, 0.5
    %v3093 = vmul.f32 %v2841, 0.5
    %v3094 = vmul.f32 %v2844, 0.5
    %v3095 = vmul.f32 %v2849, 0.5
    %v3096 = vmul.f32 %v2852, 0.5
    %v3097 = vmul.f32 %v2857, 0.5
    %v3098 = vmul.f32 %v2860, 0.5
    %v3099 = vmul.f32 %v2865, 0.5
    %v3100 = vmul.f32 %v2868, 0.5
    %v3101 = vmul.f32 %v2873, 0.5
    %v3102 = vmul.f32 %v2876, 0.5
    %v3103 = vmul.f32 %v2881, 0.5
    %v3104 = vmul.f32 %v2884, 0.5
    %v3105 = vmul.f32 %v2889, 0.5
    %v3106 = vmul.f32 %v2892, 0.5
    %v3107 = vmul.f32 %v2897, 0.5
    %v3108 = vmul.f32 %v2900, 0.5
    %v3109 = vmul.f32 %v2905, 0.5
    %v3110 = vmul.f32 %v2908, 0.5
    %v3111 = vmul.f32 %v2913, 0.5
    %v3112 = vmul.f32 %v2916, 0.5
    %v3113 = vmul.f32 %v2921, 0.5
    %v3114 = vmul.f32 %v2924, 0.5
    %v3115 = vmul.f32 %v2929, 0.5
    %v3116 = vmul.f32 %v2932, 0.5
    %v3117 = vmul.f32 %v2937, 0.5
    %v3118 = vmul.f32 %v2940, 0.5
    %v3119 = vmul.f32 %v2945, 0.5
    %v3120 = vmul.f32 %v2948, 0.5
    %v3121 = vmul.f32 %v2953, 0.5
    %v3122 = vmul.f32 %v2956, 0.5
    %v3123 = vmul.f32 %v2961, 0.5
    %v3124 = vmul.f32 %v2964, 0.5
    %v3125 = vmul.f32 %v2969, 0.5
    %v3126 = vmul.f32 %v2972, 0.5
    %v3127 = vmul.f32 %v2977, 0.5
    %v3128 = vmul.f32 %v2980, 0.5
    %v3129 = vmul.f32 %v2985, 0.5
    %v3130 = vmul.f32 %v2988, 0.5
    %v3131 = vmul.f32 %v2993, 0.5
    %v3132 = vmul.f32 %v2996, 0.5
    %v3133 = vmul.f32 %v3001, 0.5
    %v3134 = vmul.f32 %v3004, 0.5
    %v3135 = vmul.f32 %v2497, %v2497
    %v3136 = vmul.f32 %v2500, %v2500
    %v3137 = vmul.f32 %v2505, %v2505
    %v3138 = vmul.f32 %v2508, %v2508
    %v3139 = vmul.f32 %v2513, %v2513
    %v3140 = vmul.f32 %v2516, %v2516
    %v3141 = vmul.f32 %v2521, %v2521
    %v3142 = vmul.f32 %v2524, %v2524
    %v3143 = vmul.f32 %v2529, %v2529
    %v3144 = vmul.f32 %v2532, %v2532
    %v3145 = vmul.f32 %v2537, %v2537
    %v3146 = vmul.f32 %v2540, %v2540
    %v3147 = vmul.f32 %v2545, %v2545
    %v3148 = vmul.f32 %v2548, %v2548
    %v3149 = vmul.f32 %v2553, %v2553
    %v3150 = vmul.f32 %v2556, %v2556
    %v3151 = vmul.f32 %v2561, %v2561
    %v3152 = vmul.f32 %v2564, %v2564
    %v3153 = vmul.f32 %v2569, %v2569
    %v3154 = vmul.f32 %v2572, %v2572
    %v3155 = vmul.f32 %v2577, %v2577
    %v3156 = vmul.f32 %v2580, %v2580
    %v3157 = vmul.f32 %v2585, %v2585
    %v3158 = vmul.f32 %v2588, %v2588
    %v3159 = vmul.f32 %v2593, %v2593
    %v3160 = vmul.f32 %v2596, %v2596
    %v3161 = vmul.f32 %v2601, %v2601
    %v3162 = vmul.f32 %v2604, %v2604
    %v3163 = vmul.f32 %v2609, %v2609
    %v3164 = vmul.f32 %v2612, %v2612
    %v3165 = vmul.f32 %v2617, %v2617
    %v3166 = vmul.f32 %v2620, %v2620
    %v3167 = vmul.f32 %v2625, %v2625
    %v3168 = vmul.f32 %v2628, %v2628
    %v3169 = vmul.f32 %v2633, %v2633
    %v3170 = vmul.f32 %v2636, %v2636
    %v3171 = vmul.f32 %v2641, %v2641
    %v3172 = vmul.f32 %v2644, %v2644
    %v3173 = vmul.f32 %v2649, %v2649
    %v3174 = vmul.f32 %v2652, %v2652
    %v3175 = vmul.f32 %v2657, %v2657
    %v3176 = vmul.f32 %v2660, %v2660
    %v3177 = vmul.f32 %v2665, %v2665
    %v3178 = vmul.f32 %v2668, %v2668
    %v3179 = vmul.f32 %v2673, %v2673
    %v3180 = vmul.f32 %v2676, %v2676
    %v3181 = vmul.f32 %v2681, %v2681
    %v3182 = vmul.f32 %v2684, %v2684
    %v3183 = vmul.f32 %v2689, %v2689
    %v3184 = vmul.f32 %v2692, %v2692
    %v3185 = vmul.f32 %v2697, %v2697
    %v3186 = vmul.f32 %v2700, %v2700
    %v3187 = vmul.f32 %v2705, %v2705
    %v3188 = vmul.f32 %v2708, %v2708
    %v3189 = vmul.f32 %v2713, %v2713
    %v3190 = vmul.f32 %v2716, %v2716
    %v3191 = vmul.f32 %v2721, %v2721
    %v3192 = vmul.f32 %v2724, %v2724
    %v3193 = vmul.f32 %v2729, %v2729
    %v3194 = vmul.f32 %v2732, %v2732
    %v3195 = vmul.f32 %v2737, %v2737
    %v3196 = vmul.f32 %v2740, %v2740
    %v3197 = vmul.f32 %v2745, %v2745
    %v3198 = vmul.f32 %v2748, %v2748
    %v3199 = vmul.f32 %v2753, %v2753
    %v3200 = vmul.f32 %v2756, %v2756
    %v3201 = vmul.f32 %v2761, %v2761
    %v3202 = vmul.f32 %v2764, %v2764
    %v3203 = vmul.f32 %v2769, %v2769
    %v3204 = vmul.f32 %v2772, %v2772
    %v3205 = vmul.f32 %v2777, %v2777
    %v3206 = vmul.f32 %v2780, %v2780
    %v3207 = vmul.f32 %v2785, %v2785
    %v3208 = vmul.f32 %v2788, %v2788
    %v3209 = vmul.f32 %v2793, %v2793
    %v3210 = vmul.f32 %v2796, %v2796
    %v3211 = vmul.f32 %v2801, %v2801
    %v3212 = vmul.f32 %v2804, %v2804
    %v3213 = vmul.f32 %v2809, %v2809
    %v3214 = vmul.f32 %v2812, %v2812
    %v3215 = vmul.f32 %v2817, %v2817
    %v3216 = vmul.f32 %v2820, %v2820
    %v3217 = vmul.f32 %v2825, %v2825
    %v3218 = vmul.f32 %v2828, %v2828
    %v3219 = vmul.f32 %v2833, %v2833
    %v3220 = vmul.f32 %v2836, %v2836
    %v3221 = vmul.f32 %v2841, %v2841
    %v3222 = vmul.f32 %v2844, %v2844
    %v3223 = vmul.f32 %v2849, %v2849
    %v3224 = vmul.f32 %v2852, %v2852
    %v3225 = vmul.f32 %v2857, %v2857
    %v3226 = vmul.f32 %v2860, %v2860
    %v3227 = vmul.f32 %v2865, %v2865
    %v3228 = vmul.f32 %v2868, %v2868
    %v3229 = vmul.f32 %v2873, %v2873
    %v3230 = vmul.f32 %v2876, %v2876
    %v3231 = vmul.f32 %v2881, %v2881
    %v3232 = vmul.f32 %v2884, %v2884
    %v3233 = vmul.f32 %v2889, %v2889
    %v3234 = vmul.f32 %v2892, %v2892
    %v3235 = vmul.f32 %v2897, %v2897
    %v3236 = vmul.f32 %v2900, %v2900
    %v3237 = vmul.f32 %v2905, %v2905
    %v3238 = vmul.f32 %v2908, %v2908
    %v3239 = vmul.f32 %v2913, %v2913
    %v3240 = vmul.f32 %v2916, %v2916
    %v3241 = vmul.f32 %v2921, %v2921
    %v3242 = vmul.f32 %v2924, %v2924
    %v3243 = vmul.f32 %v2929, %v2929
    %v3244 = vmul.f32 %v2932, %v2932
    %v3245 = vmul.f32 %v2937, %v2937
    %v3246 = vmul.f32 %v2940, %v2940
    %v3247 = vmul.f32 %v2945, %v2945
    %v3248 = vmul.f32 %v2948, %v2948
    %v3249 = vmul.f32 %v2953, %v2953
    %v3250 = vmul.f32 %v2956, %v2956
    %v3251 = vmul.f32 %v2961, %v2961
    %v3252 = vmul.f32 %v2964, %v2964
    %v3253 = vmul.f32 %v2969, %v2969
    %v3254 = vmul.f32 %v2972, %v2972
    %v3255 = vmul.f32 %v2977, %v2977
    %v3256 = vmul.f32 %v2980, %v2980
    %v3257 = vmul.f32 %v2985, %v2985
    %v3258 = vmul.f32 %v2988, %v2988
    %v3259 = vmul.f32 %v2993, %v2993
    %v3260 = vmul.f32 %v2996, %v2996
    %v3261 = vmul.f32 %v3001, %v3001
    %v3262 = vmul.f32 %v3004, %v3004
    %v3263 = vmul.f32 %v3135, %v2497
    %v3264 = vmul.f32 %v3136, %v2500
    %v3265 = vmul.f32 %v3137, %v2505
    %v3266 = vmul.f32 %v3138, %v2508
    %v3267 = vmul.f32 %v3139, %v2513
    %v3268 = vmul.f32 %v3140, %v2516
    %v3269 = vmul.f32 %v3141, %v2521
    %v3270 = vmul.f32 %v3142, %v2524
    %v3271 = vmul.f32 %v3143, %v2529
    %v3272 = vmul.f32 %v3144, %v2532
    %v3273 = vmul.f32 %v3145, %v2537
    %v3274 = vmul.f32 %v3146, %v2540
    %v3275 = vmul.f32 %v3147, %v2545
    %v3276 = vmul.f32 %v3148, %v2548
    %v3277 = vmul.f32 %v3149, %v2553
    %v3278 = vmul.f32 %v3150, %v2556
    %v3279 = vmul.f32 %v3151, %v2561
    %v3280 = vmul.f32 %v3152, %v2564
    %v3281 = vmul.f32 %v3153, %v2569
    %v3282 = vmul.f32 %v3154, %v2572
    %v3283 = vmul.f32 %v3155, %v2577
    %v3284 = vmul.f32 %v3156, %v2580
    %v3285 = vmul.f32 %v3157, %v2585
    %v3286 = vmul.f32 %v3158, %v2588
    %v3287 = vmul.f32 %v3159, %v2593
    %v3288 = vmul.f32 %v3160, %v2596
    %v3289 = vmul.f32 %v3161, %v2601
    %v3290 = vmul.f32 %v3162, %v2604
    %v3291 = vmul.f32 %v3163, %v2609
    %v3292 = vmul.f32 %v3164, %v2612
    %v3293 = vmul.f32 %v3165, %v2617
    %v3294 = vmul.f32 %v3166, %v2620
    %v3295 = vmul.f32 %v3167, %v2625
    %v3296 = vmul.f32 %v3168, %v2628
    %v3297 = vmul.f32 %v3169, %v2633
    %v3298 = vmul.f32 %v3170, %v2636
    %v3299 = vmul.f32 %v3171, %v2641
    %v3300 = vmul.f32 %v3172, %v2644
    %v3301 = vmul.f32 %v3173, %v2649
    %v3302 = vmul.f32 %v3174, %v2652
    %v3303 = vmul.f32 %v3175, %v2657
    %v3304 = vmul.f32 %v3176, %v2660
    %v3305 = vmul.f32 %v3177, %v2665
    %v3306 = vmul.f32 %v3178, %v2668
    %v3307 = vmul.f32 %v3179, %v2673
    %v3308 = vmul.f32 %v3180, %v2676
    %v3309 = vmul.f32 %v3181, %v2681
    %v3310 = vmul.f32 %v3182, %v2684
    %v3311 = vmul.f32 %v3183, %v2689
    %v3312 = vmul.f32 %v3184, %v2692
    %v3313 = vmul.f32 %v3185, %v2697
    %v3314 = vmul.f32 %v3186, %v2700
    %v3315 = vmul.f32 %v3187, %v2705
    %v3316 = vmul.f32 %v3188, %v2708
    %v3317 = vmul.f32 %v3189, %v2713
    %v3318 = vmul.f32 %v3190, %v2716
    %v3319 = vmul.f32 %v3191, %v2721
    %v3320 = vmul.f32 %v3192, %v2724
    %v3321 = vmul.f32 %v3193, %v2729
    %v3322 = vmul.f32 %v3194, %v2732
    %v3323 = vmul.f32 %v3195, %v2737
    %v3324 = vmul.f32 %v3196, %v2740
    %v3325 = vmul.f32 %v3197, %v2745
    %v3326 = vmul.f32 %v3198, %v2748
    %v3327 = vmul.f32 %v3199, %v2753
    %v3328 = vmul.f32 %v3200, %v2756
    %v3329 = vmul.f32 %v3201, %v2761
    %v3330 = vmul.f32 %v3202, %v2764
    %v3331 = vmul.f32 %v3203, %v2769
    %v3332 = vmul.f32 %v3204, %v2772
    %v3333 = vmul.f32 %v3205, %v2777
    %v3334 = vmul.f32 %v3206, %v2780
    %v3335 = vmul.f32 %v3207, %v2785
    %v3336 = vmul.f32 %v3208, %v2788
    %v3337 = vmul.f32 %v3209, %v2793
    %v3338 = vmul.f32 %v3210, %v2796
    %v3339 = vmul.f32 %v3211, %v2801
    %v3340 = vmul.f32 %v3212, %v2804
    %v3341 = vmul.f32 %v3213, %v2809
    %v3342 = vmul.f32 %v3214, %v2812
    %v3343 = vmul.f32 %v3215, %v2817
    %v3344 = vmul.f32 %v3216, %v2820
    %v3345 = vmul.f32 %v3217, %v2825
    %v3346 = vmul.f32 %v3218, %v2828
    %v3347 = vmul.f32 %v3219, %v2833
    %v3348 = vmul.f32 %v3220, %v2836
    %v3349 = vmul.f32 %v3221, %v2841
    %v3350 = vmul.f32 %v3222, %v2844
    %v3351 = vmul.f32 %v3223, %v2849
    %v3352 = vmul.f32 %v3224, %v2852
    %v3353 = vmul.f32 %v3225, %v2857
    %v3354 = vmul.f32 %v3226, %v2860
    %v3355 = vmul.f32 %v3227, %v2865
    %v3356 = vmul.f32 %v3228, %v2868
    %v3357 = vmul.f32 %v3229, %v2873
    %v3358 = vmul.f32 %v3230, %v2876
    %v3359 = vmul.f32 %v3231, %v2881
    %v3360 = vmul.f32 %v3232, %v2884
    %v3361 = vmul.f32 %v3233, %v2889
    %v3362 = vmul.f32 %v3234, %v2892
    %v3363 = vmul.f32 %v3235, %v2897
    %v3364 = vmul.f32 %v3236, %v2900
    %v3365 = vmul.f32 %v3237, %v2905
    %v3366 = vmul.f32 %v3238, %v2908
    %v3367 = vmul.f32 %v3239, %v2913
    %v3368 = vmul.f32 %v3240, %v2916
    %v3369 = vmul.f32 %v3241, %v2921
    %v3370 = vmul.f32 %v3242, %v2924
    %v3371 = vmul.f32 %v3243, %v2929
    %v3372 = vmul.f32 %v3244, %v2932
    %v3373 = vmul.f32 %v3245, %v2937
    %v3374 = vmul.f32 %v3246, %v2940
    %v3375 = vmul.f32 %v3247, %v2945
    %v3376 = vmul.f32 %v3248, %v2948
    %v3377 = vmul.f32 %v3249, %v2953
    %v3378 = vmul.f32 %v3250, %v2956
    %v3379 = vmul.f32 %v3251, %v2961
    %v3380 = vmul.f32 %v3252, %v2964
    %v3381 = vmul.f32 %v3253, %v2969
    %v3382 = vmul.f32 %v3254, %v2972
    %v3383 = vmul.f32 %v3255, %v2977
    %v3384 = vmul.f32 %v3256, %v2980
    %v3385 = vmul.f32 %v3257, %v2985
    %v3386 = vmul.f32 %v3258, %v2988
    %v3387 = vmul.f32 %v3259, %v2993
    %v3388 = vmul.f32 %v3260, %v2996
    %v3389 = vmul.f32 %v3261, %v3001
    %v3390 = vmul.f32 %v3262, %v3004
    %v3391 = vmul.f32 %v3263, 0.044715
    %v3392 = vmul.f32 %v3264, 0.044715
    %v3393 = vmul.f32 %v3265, 0.044715
    %v3394 = vmul.f32 %v3266, 0.044715
    %v3395 = vmul.f32 %v3267, 0.044715
    %v3396 = vmul.f32 %v3268, 0.044715
    %v3397 = vmul.f32 %v3269, 0.044715
    %v3398 = vmul.f32 %v3270, 0.044715
    %v3399 = vmul.f32 %v3271, 0.044715
    %v3400 = vmul.f32 %v3272, 0.044715
    %v3401 = vmul.f32 %v3273, 0.044715
    %v3402 = vmul.f32 %v3274, 0.044715
    %v3403 = vmul.f32 %v3275, 0.044715
    %v3404 = vmul.f32 %v3276, 0.044715
    %v3405 = vmul.f32 %v3277, 0.044715
    %v3406 = vmul.f32 %v3278, 0.044715
    %v3407 = vmul.f32 %v3279, 0.044715
    %v3408 = vmul.f32 %v3280, 0.044715
    %v3409 = vmul.f32 %v3281, 0.044715
    %v3410 = vmul.f32 %v3282, 0.044715
    %v3411 = vmul.f32 %v3283, 0.044715
    %v3412 = vmul.f32 %v3284, 0.044715
    %v3413 = vmul.f32 %v3285, 0.044715
    %v3414 = vmul.f32 %v3286, 0.044715
    %v3415 = vmul.f32 %v3287, 0.044715
    %v3416 = vmul.f32 %v3288, 0.044715
    %v3417 = vmul.f32 %v3289, 0.044715
    %v3418 = vmul.f32 %v3290, 0.044715
    %v3419 = vmul.f32 %v3291, 0.044715
    %v3420 = vmul.f32 %v3292, 0.044715
    %v3421 = vmul.f32 %v3293, 0.044715
    %v3422 = vmul.f32 %v3294, 0.044715
    %v3423 = vmul.f32 %v3295, 0.044715
    %v3424 = vmul.f32 %v3296, 0.044715
    %v3425 = vmul.f32 %v3297, 0.044715
    %v3426 = vmul.f32 %v3298, 0.044715
    %v3427 = vmul.f32 %v3299, 0.044715
    %v3428 = vmul.f32 %v3300, 0.044715
    %v3429 = vmul.f32 %v3301, 0.044715
    %v3430 = vmul.f32 %v3302, 0.044715
    %v3431 = vmul.f32 %v3303, 0.044715
    %v3432 = vmul.f32 %v3304, 0.044715
    %v3433 = vmul.f32 %v3305, 0.044715
    %v3434 = vmul.f32 %v3306, 0.044715
    %v3435 = vmul.f32 %v3307, 0.044715
    %v3436 = vmul.f32 %v3308, 0.044715
    %v3437 = vmul.f32 %v3309, 0.044715
    %v3438 = vmul.f32 %v3310, 0.044715
    %v3439 = vmul.f32 %v3311, 0.044715
    %v3440 = vmul.f32 %v3312, 0.044715
    %v3441 = vmul.f32 %v3313, 0.044715
    %v3442 = vmul.f32 %v3314, 0.044715
    %v3443 = vmul.f32 %v3315, 0.044715
    %v3444 = vmul.f32 %v3316, 0.044715
    %v3445 = vmul.f32 %v3317, 0.044715
    %v3446 = vmul.f32 %v3318, 0.044715
    %v3447 = vmul.f32 %v3319, 0.044715
    %v3448 = vmul.f32 %v3320, 0.044715
    %v3449 = vmul.f32 %v3321, 0.044715
    %v3450 = vmul.f32 %v3322, 0.044715
    %v3451 = vmul.f32 %v3323, 0.044715
    %v3452 = vmul.f32 %v3324, 0.044715
    %v3453 = vmul.f32 %v3325, 0.044715
    %v3454 = vmul.f32 %v3326, 0.044715
    %v3455 = vmul.f32 %v3327, 0.044715
    %v3456 = vmul.f32 %v3328, 0.044715
    %v3457 = vmul.f32 %v3329, 0.044715
    %v3458 = vmul.f32 %v3330, 0.044715
    %v3459 = vmul.f32 %v3331, 0.044715
    %v3460 = vmul.f32 %v3332, 0.044715
    %v3461 = vmul.f32 %v3333, 0.044715
    %v3462 = vmul.f32 %v3334, 0.044715
    %v3463 = vmul.f32 %v3335, 0.044715
    %v3464 = vmul.f32 %v3336, 0.044715
    %v3465 = vmul.f32 %v3337, 0.044715
    %v3466 = vmul.f32 %v3338, 0.044715
    %v3467 = vmul.f32 %v3339, 0.044715
    %v3468 = vmul.f32 %v3340, 0.044715
    %v3469 = vmul.f32 %v3341, 0.044715
    %v3470 = vmul.f32 %v3342, 0.044715
    %v3471 = vmul.f32 %v3343, 0.044715
    %v3472 = vmul.f32 %v3344, 0.044715
    %v3473 = vmul.f32 %v3345, 0.044715
    %v3474 = vmul.f32 %v3346, 0.044715
    %v3475 = vmul.f32 %v3347, 0.044715
    %v3476 = vmul.f32 %v3348, 0.044715
    %v3477 = vmul.f32 %v3349, 0.044715
    %v3478 = vmul.f32 %v3350, 0.044715
    %v3479 = vmul.f32 %v3351, 0.044715
    %v3480 = vmul.f32 %v3352, 0.044715
    %v3481 = vmul.f32 %v3353, 0.044715
    %v3482 = vmul.f32 %v3354, 0.044715
    %v3483 = vmul.f32 %v3355, 0.044715
    %v3484 = vmul.f32 %v3356, 0.044715
    %v3485 = vmul.f32 %v3357, 0.044715
    %v3486 = vmul.f32 %v3358, 0.044715
    %v3487 = vmul.f32 %v3359, 0.044715
    %v3488 = vmul.f32 %v3360, 0.044715
    %v3489 = vmul.f32 %v3361, 0.044715
    %v3490 = vmul.f32 %v3362, 0.044715
    %v3491 = vmul.f32 %v3363, 0.044715
    %v3492 = vmul.f32 %v3364, 0.044715
    %v3493 = vmul.f32 %v3365, 0.044715
    %v3494 = vmul.f32 %v3366, 0.044715
    %v3495 = vmul.f32 %v3367, 0.044715
    %v3496 = vmul.f32 %v3368, 0.044715
    %v3497 = vmul.f32 %v3369, 0.044715
    %v3498 = vmul.f32 %v3370, 0.044715
    %v3499 = vmul.f32 %v3371, 0.044715
    %v3500 = vmul.f32 %v3372, 0.044715
    %v3501 = vmul.f32 %v3373, 0.044715
    %v3502 = vmul.f32 %v3374, 0.044715
    %v3503 = vmul.f32 %v3375, 0.044715
    %v3504 = vmul.f32 %v3376, 0.044715
    %v3505 = vmul.f32 %v3377, 0.044715
    %v3506 = vmul.f32 %v3378, 0.044715
    %v3507 = vmul.f32 %v3379, 0.044715
    %v3508 = vmul.f32 %v3380, 0.044715
    %v3509 = vmul.f32 %v3381, 0.044715
    %v3510 = vmul.f32 %v3382, 0.044715
    %v3511 = vmul.f32 %v3383, 0.044715
    %v3512 = vmul.f32 %v3384, 0.044715
    %v3513 = vmul.f32 %v3385, 0.044715
    %v3514 = vmul.f32 %v3386, 0.044715
    %v3515 = vmul.f32 %v3387, 0.044715
    %v3516 = vmul.f32 %v3388, 0.044715
    %v3517 = vmul.f32 %v3389, 0.044715
    %v3518 = vmul.f32 %v3390, 0.044715
    %v3519 = vadd.f32 %v2497, %v3391
    %v3520 = vadd.f32 %v2500, %v3392
    %v3521 = vadd.f32 %v2505, %v3393
    %v3522 = vadd.f32 %v2508, %v3394
    %v3523 = vadd.f32 %v2513, %v3395
    %v3524 = vadd.f32 %v2516, %v3396
    %v3525 = vadd.f32 %v2521, %v3397
    %v3526 = vadd.f32 %v2524, %v3398
    %v3527 = vadd.f32 %v2529, %v3399
    %v3528 = vadd.f32 %v2532, %v3400
    %v3529 = vadd.f32 %v2537, %v3401
    %v3530 = vadd.f32 %v2540, %v3402
    %v3531 = vadd.f32 %v2545, %v3403
    %v3532 = vadd.f32 %v2548, %v3404
    %v3533 = vadd.f32 %v2553, %v3405
    %v3534 = vadd.f32 %v2556, %v3406
    %v3535 = vadd.f32 %v2561, %v3407
    %v3536 = vadd.f32 %v2564, %v3408
    %v3537 = vadd.f32 %v2569, %v3409
    %v3538 = vadd.f32 %v2572, %v3410
    %v3539 = vadd.f32 %v2577, %v3411
    %v3540 = vadd.f32 %v2580, %v3412
    %v3541 = vadd.f32 %v2585, %v3413
    %v3542 = vadd.f32 %v2588, %v3414
    %v3543 = vadd.f32 %v2593, %v3415
    %v3544 = vadd.f32 %v2596, %v3416
    %v3545 = vadd.f32 %v2601, %v3417
    %v3546 = vadd.f32 %v2604, %v3418
    %v3547 = vadd.f32 %v2609, %v3419
    %v3548 = vadd.f32 %v2612, %v3420
    %v3549 = vadd.f32 %v2617, %v3421
    %v3550 = vadd.f32 %v2620, %v3422
    %v3551 = vadd.f32 %v2625, %v3423
    %v3552 = vadd.f32 %v2628, %v3424
    %v3553 = vadd.f32 %v2633, %v3425
    %v3554 = vadd.f32 %v2636, %v3426
    %v3555 = vadd.f32 %v2641, %v3427
    %v3556 = vadd.f32 %v2644, %v3428
    %v3557 = vadd.f32 %v2649, %v3429
    %v3558 = vadd.f32 %v2652, %v3430
    %v3559 = vadd.f32 %v2657, %v3431
    %v3560 = vadd.f32 %v2660, %v3432
    %v3561 = vadd.f32 %v2665, %v3433
    %v3562 = vadd.f32 %v2668, %v3434
    %v3563 = vadd.f32 %v2673, %v3435
    %v3564 = vadd.f32 %v2676, %v3436
    %v3565 = vadd.f32 %v2681, %v3437
    %v3566 = vadd.f32 %v2684, %v3438
    %v3567 = vadd.f32 %v2689, %v3439
    %v3568 = vadd.f32 %v2692, %v3440
    %v3569 = vadd.f32 %v2697, %v3441
    %v3570 = vadd.f32 %v2700, %v3442
    %v3571 = vadd.f32 %v2705, %v3443
    %v3572 = vadd.f32 %v2708, %v3444
    %v3573 = vadd.f32 %v2713, %v3445
    %v3574 = vadd.f32 %v2716, %v3446
    %v3575 = vadd.f32 %v2721, %v3447
    %v3576 = vadd.f32 %v2724, %v3448
    %v3577 = vadd.f32 %v2729, %v3449
    %v3578 = vadd.f32 %v2732, %v3450
    %v3579 = vadd.f32 %v2737, %v3451
    %v3580 = vadd.f32 %v2740, %v3452
    %v3581 = vadd.f32 %v2745, %v3453
    %v3582 = vadd.f32 %v2748, %v3454
    %v3583 = vadd.f32 %v2753, %v3455
    %v3584 = vadd.f32 %v2756, %v3456
    %v3585 = vadd.f32 %v2761, %v3457
    %v3586 = vadd.f32 %v2764, %v3458
    %v3587 = vadd.f32 %v2769, %v3459
    %v3588 = vadd.f32 %v2772, %v3460
    %v3589 = vadd.f32 %v2777, %v3461
    %v3590 = vadd.f32 %v2780, %v3462
    %v3591 = vadd.f32 %v2785, %v3463
    %v3592 = vadd.f32 %v2788, %v3464
    %v3593 = vadd.f32 %v2793, %v3465
    %v3594 = vadd.f32 %v2796, %v3466
    %v3595 = vadd.f32 %v2801, %v3467
    %v3596 = vadd.f32 %v2804, %v3468
    %v3597 = vadd.f32 %v2809, %v3469
    %v3598 = vadd.f32 %v2812, %v3470
    %v3599 = vadd.f32 %v2817, %v3471
    %v3600 = vadd.f32 %v2820, %v3472
    %v3601 = vadd.f32 %v2825, %v3473
    %v3602 = vadd.f32 %v2828, %v3474
    %v3603 = vadd.f32 %v2833, %v3475
    %v3604 = vadd.f32 %v2836, %v3476
    %v3605 = vadd.f32 %v2841, %v3477
    %v3606 = vadd.f32 %v2844, %v3478
    %v3607 = vadd.f32 %v2849, %v3479
    %v3608 = vadd.f32 %v2852, %v3480
    %v3609 = vadd.f32 %v2857, %v3481
    %v3610 = vadd.f32 %v2860, %v3482
    %v3611 = vadd.f32 %v2865, %v3483
    %v3612 = vadd.f32 %v2868, %v3484
    %v3613 = vadd.f32 %v2873, %v3485
    %v3614 = vadd.f32 %v2876, %v3486
    %v3615 = vadd.f32 %v2881, %v3487
    %v3616 = vadd.f32 %v2884, %v3488
    %v3617 = vadd.f32 %v2889, %v3489
    %v3618 = vadd.f32 %v2892, %v3490
    %v3619 = vadd.f32 %v2897, %v3491
    %v3620 = vadd.f32 %v2900, %v3492
    %v3621 = vadd.f32 %v2905, %v3493
    %v3622 = vadd.f32 %v2908, %v3494
    %v3623 = vadd.f32 %v2913, %v3495
    %v3624 = vadd.f32 %v2916, %v3496
    %v3625 = vadd.f32 %v2921, %v3497
    %v3626 = vadd.f32 %v2924, %v3498
    %v3627 = vadd.f32 %v2929, %v3499
    %v3628 = vadd.f32 %v2932, %v3500
    %v3629 = vadd.f32 %v2937, %v3501
    %v3630 = vadd.f32 %v2940, %v3502
    %v3631 = vadd.f32 %v2945, %v3503
    %v3632 = vadd.f32 %v2948, %v3504
    %v3633 = vadd.f32 %v2953, %v3505
    %v3634 = vadd.f32 %v2956, %v3506
    %v3635 = vadd.f32 %v2961, %v3507
    %v3636 = vadd.f32 %v2964, %v3508
    %v3637 = vadd.f32 %v2969, %v3509
    %v3638 = vadd.f32 %v2972, %v3510
    %v3639 = vadd.f32 %v2977, %v3511
    %v3640 = vadd.f32 %v2980, %v3512
    %v3641 = vadd.f32 %v2985, %v3513
    %v3642 = vadd.f32 %v2988, %v3514
    %v3643 = vadd.f32 %v2993, %v3515
    %v3644 = vadd.f32 %v2996, %v3516
    %v3645 = vadd.f32 %v3001, %v3517
    %v3646 = vadd.f32 %v3004, %v3518
    %v3647 = vmul.f32 %v3519, 0.7978846
    %v3648 = vmul.f32 %v3520, 0.7978846
    %v3649 = vmul.f32 %v3521, 0.7978846
    %v3650 = vmul.f32 %v3522, 0.7978846
    %v3651 = vmul.f32 %v3523, 0.7978846
    %v3652 = vmul.f32 %v3524, 0.7978846
    %v3653 = vmul.f32 %v3525, 0.7978846
    %v3654 = vmul.f32 %v3526, 0.7978846
    %v3655 = vmul.f32 %v3527, 0.7978846
    %v3656 = vmul.f32 %v3528, 0.7978846
    %v3657 = vmul.f32 %v3529, 0.7978846
    %v3658 = vmul.f32 %v3530, 0.7978846
    %v3659 = vmul.f32 %v3531, 0.7978846
    %v3660 = vmul.f32 %v3532, 0.7978846
    %v3661 = vmul.f32 %v3533, 0.7978846
    %v3662 = vmul.f32 %v3534, 0.7978846
    %v3663 = vmul.f32 %v3535, 0.7978846
    %v3664 = vmul.f32 %v3536, 0.7978846
    %v3665 = vmul.f32 %v3537, 0.7978846
    %v3666 = vmul.f32 %v3538, 0.7978846
    %v3667 = vmul.f32 %v3539, 0.7978846
    %v3668 = vmul.f32 %v3540, 0.7978846
    %v3669 = vmul.f32 %v3541, 0.7978846
    %v3670 = vmul.f32 %v3542, 0.7978846
    %v3671 = vmul.f32 %v3543, 0.7978846
    %v3672 = vmul.f32 %v3544, 0.7978846
    %v3673 = vmul.f32 %v3545, 0.7978846
    %v3674 = vmul.f32 %v3546, 0.7978846
    %v3675 = vmul.f32 %v3547, 0.7978846
    %v3676 = vmul.f32 %v3548, 0.7978846
    %v3677 = vmul.f32 %v3549, 0.7978846
    %v3678 = vmul.f32 %v3550, 0.7978846
    %v3679 = vmul.f32 %v3551, 0.7978846
    %v3680 = vmul.f32 %v3552, 0.7978846
    %v3681 = vmul.f32 %v3553, 0.7978846
    %v3682 = vmul.f32 %v3554, 0.7978846
    %v3683 = vmul.f32 %v3555, 0.7978846
    %v3684 = vmul.f32 %v3556, 0.7978846
    %v3685 = vmul.f32 %v3557, 0.7978846
    %v3686 = vmul.f32 %v3558, 0.7978846
    %v3687 = vmul.f32 %v3559, 0.7978846
    %v3688 = vmul.f32 %v3560, 0.7978846
    %v3689 = vmul.f32 %v3561, 0.7978846
    %v3690 = vmul.f32 %v3562, 0.7978846
    %v3691 = vmul.f32 %v3563, 0.7978846
    %v3692 = vmul.f32 %v3564, 0.7978846
    %v3693 = vmul.f32 %v3565, 0.7978846
    %v3694 = vmul.f32 %v3566, 0.7978846
    %v3695 = vmul.f32 %v3567, 0.7978846
    %v3696 = vmul.f32 %v3568, 0.7978846
    %v3697 = vmul.f32 %v3569, 0.7978846
    %v3698 = vmul.f32 %v3570, 0.7978846
    %v3699 = vmul.f32 %v3571, 0.7978846
    %v3700 = vmul.f32 %v3572, 0.7978846
    %v3701 = vmul.f32 %v3573, 0.7978846
    %v3702 = vmul.f32 %v3574, 0.7978846
    %v3703 = vmul.f32 %v3575, 0.7978846
    %v3704 = vmul.f32 %v3576, 0.7978846
    %v3705 = vmul.f32 %v3577, 0.7978846
    %v3706 = vmul.f32 %v3578, 0.7978846
    %v3707 = vmul.f32 %v3579, 0.7978846
    %v3708 = vmul.f32 %v3580, 0.7978846
    %v3709 = vmul.f32 %v3581, 0.7978846
    %v3710 = vmul.f32 %v3582, 0.7978846
    %v3711 = vmul.f32 %v3583, 0.7978846
    %v3712 = vmul.f32 %v3584, 0.7978846
    %v3713 = vmul.f32 %v3585, 0.7978846
    %v3714 = vmul.f32 %v3586, 0.7978846
    %v3715 = vmul.f32 %v3587, 0.7978846
    %v3716 = vmul.f32 %v3588, 0.7978846
    %v3717 = vmul.f32 %v3589, 0.7978846
    %v3718 = vmul.f32 %v3590, 0.7978846
    %v3719 = vmul.f32 %v3591, 0.7978846
    %v3720 = vmul.f32 %v3592, 0.7978846
    %v3721 = vmul.f32 %v3593, 0.7978846
    %v3722 = vmul.f32 %v3594, 0.7978846
    %v3723 = vmul.f32 %v3595, 0.7978846
    %v3724 = vmul.f32 %v3596, 0.7978846
    %v3725 = vmul.f32 %v3597, 0.7978846
    %v3726 = vmul.f32 %v3598, 0.7978846
    %v3727 = vmul.f32 %v3599, 0.7978846
    %v3728 = vmul.f32 %v3600, 0.7978846
    %v3729 = vmul.f32 %v3601, 0.7978846
    %v3730 = vmul.f32 %v3602, 0.7978846
    %v3731 = vmul.f32 %v3603, 0.7978846
    %v3732 = vmul.f32 %v3604, 0.7978846
    %v3733 = vmul.f32 %v3605, 0.7978846
    %v3734 = vmul.f32 %v3606, 0.7978846
    %v3735 = vmul.f32 %v3607, 0.7978846
    %v3736 = vmul.f32 %v3608, 0.7978846
    %v3737 = vmul.f32 %v3609, 0.7978846
    %v3738 = vmul.f32 %v3610, 0.7978846
    %v3739 = vmul.f32 %v3611, 0.7978846
    %v3740 = vmul.f32 %v3612, 0.7978846
    %v3741 = vmul.f32 %v3613, 0.7978846
    %v3742 = vmul.f32 %v3614, 0.7978846
    %v3743 = vmul.f32 %v3615, 0.7978846
    %v3744 = vmul.f32 %v3616, 0.7978846
    %v3745 = vmul.f32 %v3617, 0.7978846
    %v3746 = vmul.f32 %v3618, 0.7978846
    %v3747 = vmul.f32 %v3619, 0.7978846
    %v3748 = vmul.f32 %v3620, 0.7978846
    %v3749 = vmul.f32 %v3621, 0.7978846
    %v3750 = vmul.f32 %v3622, 0.7978846
    %v3751 = vmul.f32 %v3623, 0.7978846
    %v3752 = vmul.f32 %v3624, 0.7978846
    %v3753 = vmul.f32 %v3625, 0.7978846
    %v3754 = vmul.f32 %v3626, 0.7978846
    %v3755 = vmul.f32 %v3627, 0.7978846
    %v3756 = vmul.f32 %v3628, 0.7978846
    %v3757 = vmul.f32 %v3629, 0.7978846
    %v3758 = vmul.f32 %v3630, 0.7978846
    %v3759 = vmul.f32 %v3631, 0.7978846
    %v3760 = vmul.f32 %v3632, 0.7978846
    %v3761 = vmul.f32 %v3633, 0.7978846
    %v3762 = vmul.f32 %v3634, 0.7978846
    %v3763 = vmul.f32 %v3635, 0.7978846
    %v3764 = vmul.f32 %v3636, 0.7978846
    %v3765 = vmul.f32 %v3637, 0.7978846
    %v3766 = vmul.f32 %v3638, 0.7978846
    %v3767 = vmul.f32 %v3639, 0.7978846
    %v3768 = vmul.f32 %v3640, 0.7978846
    %v3769 = vmul.f32 %v3641, 0.7978846
    %v3770 = vmul.f32 %v3642, 0.7978846
    %v3771 = vmul.f32 %v3643, 0.7978846
    %v3772 = vmul.f32 %v3644, 0.7978846
    %v3773 = vmul.f32 %v3645, 0.7978846
    %v3774 = vmul.f32 %v3646, 0.7978846
    %v3775 = vtanh.pop %v3647
    %v3776 = vtanh.pop %v3648
    %v3777 = vtanh.pop %v3649
    %v3778 = vtanh.pop %v3650
    %v3779 = vtanh.pop %v3651
    %v3780 = vtanh.pop %v3652
    %v3781 = vtanh.pop %v3653
    %v3782 = vtanh.pop %v3654
    %v3783 = vtanh.pop %v3655
    %v3784 = vtanh.pop %v3656
    %v3785 = vtanh.pop %v3657
    %v3786 = vtanh.pop %v3658
    %v3787 = vtanh.pop %v3659
    %v3788 = vtanh.pop %v3660
    %v3789 = vtanh.pop %v3661
    %v3790 = vtanh.pop %v3662
    %v3791 = vtanh.pop %v3663
    %v3792 = vtanh.pop %v3664
    %v3793 = vtanh.pop %v3665
    %v3794 = vtanh.pop %v3666
    %v3795 = vtanh.pop %v3667
    %v3796 = vtanh.pop %v3668
    %v3797 = vtanh.pop %v3669
    %v3798 = vtanh.pop %v3670
    %v3799 = vtanh.pop %v3671
    %v3800 = vtanh.pop %v3672
    %v3801 = vtanh.pop %v3673
    %v3802 = vtanh.pop %v3674
    %v3803 = vtanh.pop %v3675
    %v3804 = vtanh.pop %v3676
    %v3805 = vtanh.pop %v3677
    %v3806 = vtanh.pop %v3678
    %v3807 = vtanh.pop %v3679
    %v3808 = vtanh.pop %v3680
    %v3809 = vtanh.pop %v3681
    %v3810 = vtanh.pop %v3682
    %v3811 = vtanh.pop %v3683
    %v3812 = vtanh.pop %v3684
    %v3813 = vtanh.pop %v3685
    %v3814 = vtanh.pop %v3686
    %v3815 = vtanh.pop %v3687
    %v3816 = vtanh.pop %v3688
    %v3817 = vtanh.pop %v3689
    %v3818 = vtanh.pop %v3690
    %v3819 = vtanh.pop %v3691
    %v3820 = vtanh.pop %v3692
    %v3821 = vtanh.pop %v3693
    %v3822 = vtanh.pop %v3694
    %v3823 = vtanh.pop %v3695
    %v3824 = vtanh.pop %v3696
    %v3825 = vtanh.pop %v3697
    %v3826 = vtanh.pop %v3698
    %v3827 = vtanh.pop %v3699
    %v3828 = vtanh.pop %v3700
    %v3829 = vtanh.pop %v3701
    %v3830 = vtanh.pop %v3702
    %v3831 = vtanh.pop %v3703
    %v3832 = vtanh.pop %v3704
    %v3833 = vtanh.pop %v3705
    %v3834 = vtanh.pop %v3706
    %v3835 = vtanh.pop %v3707
    %v3836 = vtanh.pop %v3708
    %v3837 = vtanh.pop %v3709
    %v3838 = vtanh.pop %v3710
    %v3839 = vtanh.pop %v3711
    %v3840 = vtanh.pop %v3712
    %v3841 = vtanh.pop %v3713
    %v3842 = vtanh.pop %v3714
    %v3843 = vtanh.pop %v3715
    %v3844 = vtanh.pop %v3716
    %v3845 = vtanh.pop %v3717
    %v3846 = vtanh.pop %v3718
    %v3847 = vtanh.pop %v3719
    %v3848 = vtanh.pop %v3720
    %v3849 = vtanh.pop %v3721
    %v3850 = vtanh.pop %v3722
    %v3851 = vtanh.pop %v3723
    %v3852 = vtanh.pop %v3724
    %v3853 = vtanh.pop %v3725
    %v3854 = vtanh.pop %v3726
    %v3855 = vtanh.pop %v3727
    %v3856 = vtanh.pop %v3728
    %v3857 = vtanh.pop %v3729
    %v3858 = vtanh.pop %v3730
    %v3859 = vtanh.pop %v3731
    %v3860 = vtanh.pop %v3732
    %v3861 = vtanh.pop %v3733
    %v3862 = vtanh.pop %v3734
    %v3863 = vtanh.pop %v3735
    %v3864 = vtanh.pop %v3736
    %v3865 = vtanh.pop %v3737
    %v3866 = vtanh.pop %v3738
    %v3867 = vtanh.pop %v3739
    %v3868 = vtanh.pop %v3740
    %v3869 = vtanh.pop %v3741
    %v3870 = vtanh.pop %v3742
    %v3871 = vtanh.pop %v3743
    %v3872 = vtanh.pop %v3744
    %v3873 = vtanh.pop %v3745
    %v3874 = vtanh.pop %v3746
    %v3875 = vtanh.pop %v3747
    %v3876 = vtanh.pop %v3748
    %v3877 = vtanh.pop %v3749
    %v3878 = vtanh.pop %v3750
    %v3879 = vtanh.pop %v3751
    %v3880 = vtanh.pop %v3752
    %v3881 = vtanh.pop %v3753
    %v3882 = vtanh.pop %v3754
    %v3883 = vtanh.pop %v3755
    %v3884 = vtanh.pop %v3756
    %v3885 = vtanh.pop %v3757
    %v3886 = vtanh.pop %v3758
    %v3887 = vtanh.pop %v3759
    %v3888 = vtanh.pop %v3760
    %v3889 = vtanh.pop %v3761
    %v3890 = vtanh.pop %v3762
    %v3891 = vtanh.pop %v3763
    %v3892 = vtanh.pop %v3764
    %v3893 = vtanh.pop %v3765
    %v3894 = vtanh.pop %v3766
    %v3895 = vtanh.pop %v3767
    %v3896 = vtanh.pop %v3768
    %v3897 = vtanh.pop %v3769
    %v3898 = vtanh.pop %v3770
    %v3899 = vtanh.pop %v3771
    %v3900 = vtanh.pop %v3772
    %v3901 = vtanh.pop %v3773
    %v3902 = vtanh.pop %v3774
    %v3903 = vadd.f32 %v3775, 1.0
    %v3904 = vadd.f32 %v3776, 1.0
    %v3905 = vadd.f32 %v3777, 1.0
    %v3906 = vadd.f32 %v3778, 1.0
    %v3907 = vadd.f32 %v3779, 1.0
    %v3908 = vadd.f32 %v3780, 1.0
    %v3909 = vadd.f32 %v3781, 1.0
    %v3910 = vadd.f32 %v3782, 1.0
    %v3911 = vadd.f32 %v3783, 1.0
    %v3912 = vadd.f32 %v3784, 1.0
    %v3913 = vadd.f32 %v3785, 1.0
    %v3914 = vadd.f32 %v3786, 1.0
    %v3915 = vadd.f32 %v3787, 1.0
    %v3916 = vadd.f32 %v3788, 1.0
    %v3917 = vadd.f32 %v3789, 1.0
    %v3918 = vadd.f32 %v3790, 1.0
    %v3919 = vadd.f32 %v3791, 1.0
    %v3920 = vadd.f32 %v3792, 1.0
    %v3921 = vadd.f32 %v3793, 1.0
    %v3922 = vadd.f32 %v3794, 1.0
    %v3923 = vadd.f32 %v3795, 1.0
    %v3924 = vadd.f32 %v3796, 1.0
    %v3925 = vadd.f32 %v3797, 1.0
    %v3926 = vadd.f32 %v3798, 1.0
    %v3927 = vadd.f32 %v3799, 1.0
    %v3928 = vadd.f32 %v3800, 1.0
    %v3929 = vadd.f32 %v3801, 1.0
    %v3930 = vadd.f32 %v3802, 1.0
    %v3931 = vadd.f32 %v3803, 1.0
    %v3932 = vadd.f32 %v3804, 1.0
    %v3933 = vadd.f32 %v3805, 1.0
    %v3934 = vadd.f32 %v3806, 1.0
    %v3935 = vadd.f32 %v3807, 1.0
    %v3936 = vadd.f32 %v3808, 1.0
    %v3937 = vadd.f32 %v3809, 1.0
    %v3938 = vadd.f32 %v3810, 1.0
    %v3939 = vadd.f32 %v3811, 1.0
    %v3940 = vadd.f32 %v3812, 1.0
    %v3941 = vadd.f32 %v3813, 1.0
    %v3942 = vadd.f32 %v3814, 1.0
    %v3943 = vadd.f32 %v3815, 1.0
    %v3944 = vadd.f32 %v3816, 1.0
    %v3945 = vadd.f32 %v3817, 1.0
    %v3946 = vadd.f32 %v3818, 1.0
    %v3947 = vadd.f32 %v3819, 1.0
    %v3948 = vadd.f32 %v3820, 1.0
    %v3949 = vadd.f32 %v3821, 1.0
    %v3950 = vadd.f32 %v3822, 1.0
    %v3951 = vadd.f32 %v3823, 1.0
    %v3952 = vadd.f32 %v3824, 1.0
    %v3953 = vadd.f32 %v3825, 1.0
    %v3954 = vadd.f32 %v3826, 1.0
    %v3955 = vadd.f32 %v3827, 1.0
    %v3956 = vadd.f32 %v3828, 1.0
    %v3957 = vadd.f32 %v3829, 1.0
    %v3958 = vadd.f32 %v3830, 1.0
    %v3959 = vadd.f32 %v3831, 1.0
    %v3960 = vadd.f32 %v3832, 1.0
    %v3961 = vadd.f32 %v3833, 1.0
    %v3962 = vadd.f32 %v3834, 1.0
    %v3963 = vadd.f32 %v3835, 1.0
    %v3964 = vadd.f32 %v3836, 1.0
    %v3965 = vadd.f32 %v3837, 1.0
    %v3966 = vadd.f32 %v3838, 1.0
    %v3967 = vadd.f32 %v3839, 1.0
    %v3968 = vadd.f32 %v3840, 1.0
    %v3969 = vadd.f32 %v3841, 1.0
    %v3970 = vadd.f32 %v3842, 1.0
    %v3971 = vadd.f32 %v3843, 1.0
    %v3972 = vadd.f32 %v3844, 1.0
    %v3973 = vadd.f32 %v3845, 1.0
    %v3974 = vadd.f32 %v3846, 1.0
    %v3975 = vadd.f32 %v3847, 1.0
    %v3976 = vadd.f32 %v3848, 1.0
    %v3977 = vadd.f32 %v3849, 1.0
    %v3978 = vadd.f32 %v3850, 1.0
    %v3979 = vadd.f32 %v3851, 1.0
    %v3980 = vadd.f32 %v3852, 1.0
    %v3981 = vadd.f32 %v3853, 1.0
    %v3982 = vadd.f32 %v3854, 1.0
    %v3983 = vadd.f32 %v3855, 1.0
    %v3984 = vadd.f32 %v3856, 1.0
    %v3985 = vadd.f32 %v3857, 1.0
    %v3986 = vadd.f32 %v3858, 1.0
    %v3987 = vadd.f32 %v3859, 1.0
    %v3988 = vadd.f32 %v3860, 1.0
    %v3989 = vadd.f32 %v3861, 1.0
    %v3990 = vadd.f32 %v3862, 1.0
    %v3991 = vadd.f32 %v3863, 1.0
    %v3992 = vadd.f32 %v3864, 1.0
    %v3993 = vadd.f32 %v3865, 1.0
    %v3994 = vadd.f32 %v3866, 1.0
    %v3995 = vadd.f32 %v3867, 1.0
    %v3996 = vadd.f32 %v3868, 1.0
    %v3997 = vadd.f32 %v3869, 1.0
    %v3998 = vadd.f32 %v3870, 1.0
    %v3999 = vadd.f32 %v3871, 1.0
    %v4000 = vadd.f32 %v3872, 1.0
    %v4001 = vadd.f32 %v3873, 1.0
    %v4002 = vadd.f32 %v3874, 1.0
    %v4003 = vadd.f32 %v3875, 1.0
    %v4004 = vadd.f32 %v3876, 1.0
    %v4005 = vadd.f32 %v3877, 1.0
    %v4006 = vadd.f32 %v3878, 1.0
    %v4007 = vadd.f32 %v3879, 1.0
    %v4008 = vadd.f32 %v3880, 1.0
    %v4009 = vadd.f32 %v3881, 1.0
    %v4010 = vadd.f32 %v3882, 1.0
    %v4011 = vadd.f32 %v3883, 1.0
    %v4012 = vadd.f32 %v3884, 1.0
    %v4013 = vadd.f32 %v3885, 1.0
    %v4014 = vadd.f32 %v3886, 1.0
    %v4015 = vadd.f32 %v3887, 1.0
    %v4016 = vadd.f32 %v3888, 1.0
    %v4017 = vadd.f32 %v3889, 1.0
    %v4018 = vadd.f32 %v3890, 1.0
    %v4019 = vadd.f32 %v3891, 1.0
    %v4020 = vadd.f32 %v3892, 1.0
    %v4021 = vadd.f32 %v3893, 1.0
    %v4022 = vadd.f32 %v3894, 1.0
    %v4023 = vadd.f32 %v3895, 1.0
    %v4024 = vadd.f32 %v3896, 1.0
    %v4025 = vadd.f32 %v3897, 1.0
    %v4026 = vadd.f32 %v3898, 1.0
    %v4027 = vadd.f32 %v3899, 1.0
    %v4028 = vadd.f32 %v3900, 1.0
    %v4029 = vadd.f32 %v3901, 1.0
    %v4030 = vadd.f32 %v3902, 1.0
    %v4031 = vmul.f32 %v3007, %v3903
    %v4032 = vmul.f32 %v3008, %v3904
    %v4033 = vmul.f32 %v3009, %v3905
    %v4034 = vmul.f32 %v3010, %v3906
    %v4035 = vmul.f32 %v3011, %v3907
    %v4036 = vmul.f32 %v3012, %v3908
    %v4037 = vmul.f32 %v3013, %v3909
    %v4038 = vmul.f32 %v3014, %v3910
    %v4039 = vmul.f32 %v3015, %v3911
    %v4040 = vmul.f32 %v3016, %v3912
    %v4041 = vmul.f32 %v3017, %v3913
    %v4042 = vmul.f32 %v3018, %v3914
    %v4043 = vmul.f32 %v3019, %v3915
    %v4044 = vmul.f32 %v3020, %v3916
    %v4045 = vmul.f32 %v3021, %v3917
    %v4046 = vmul.f32 %v3022, %v3918
    %v4047 = vmul.f32 %v3023, %v3919
    %v4048 = vmul.f32 %v3024, %v3920
    %v4049 = vmul.f32 %v3025, %v3921
    %v4050 = vmul.f32 %v3026, %v3922
    %v4051 = vmul.f32 %v3027, %v3923
    %v4052 = vmul.f32 %v3028, %v3924
    %v4053 = vmul.f32 %v3029, %v3925
    %v4054 = vmul.f32 %v3030, %v3926
    %v4055 = vmul.f32 %v3031, %v3927
    %v4056 = vmul.f32 %v3032, %v3928
    %v4057 = vmul.f32 %v3033, %v3929
    %v4058 = vmul.f32 %v3034, %v3930
    %v4059 = vmul.f32 %v3035, %v3931
    %v4060 = vmul.f32 %v3036, %v3932
    %v4061 = vmul.f32 %v3037, %v3933
    %v4062 = vmul.f32 %v3038, %v3934
    %v4063 = vmul.f32 %v3039, %v3935
    %v4064 = vmul.f32 %v3040, %v3936
    %v4065 = vmul.f32 %v3041, %v3937
    %v4066 = vmul.f32 %v3042, %v3938
    %v4067 = vmul.f32 %v3043, %v3939
    %v4068 = vmul.f32 %v3044, %v3940
    %v4069 = vmul.f32 %v3045, %v3941
    %v4070 = vmul.f32 %v3046, %v3942
    %v4071 = vmul.f32 %v3047, %v3943
    %v4072 = vmul.f32 %v3048, %v3944
    %v4073 = vmul.f32 %v3049, %v3945
    %v4074 = vmul.f32 %v3050, %v3946
    %v4075 = vmul.f32 %v3051, %v3947
    %v4076 = vmul.f32 %v3052, %v3948
    %v4077 = vmul.f32 %v3053, %v3949
    %v4078 = vmul.f32 %v3054, %v3950
    %v4079 = vmul.f32 %v3055, %v3951
    %v4080 = vmul.f32 %v3056, %v3952
    %v4081 = vmul.f32 %v3057, %v3953
    %v4082 = vmul.f32 %v3058, %v3954
    %v4083 = vmul.f32 %v3059, %v3955
    %v4084 = vmul.f32 %v3060, %v3956
    %v4085 = vmul.f32 %v3061, %v3957
    %v4086 = vmul.f32 %v3062, %v3958
    %v4087 = vmul.f32 %v3063, %v3959
    %v4088 = vmul.f32 %v3064, %v3960
    %v4089 = vmul.f32 %v3065, %v3961
    %v4090 = vmul.f32 %v3066, %v3962
    %v4091 = vmul.f32 %v3067, %v3963
    %v4092 = vmul.f32 %v3068, %v3964
    %v4093 = vmul.f32 %v3069, %v3965
    %v4094 = vmul.f32 %v3070, %v3966
    %v4095 = vmul.f32 %v3071, %v3967
    %v4096 = vmul.f32 %v3072, %v3968
    %v4097 = vmul.f32 %v3073, %v3969
    %v4098 = vmul.f32 %v3074, %v3970
    %v4099 = vmul.f32 %v3075, %v3971
    %v4100 = vmul.f32 %v3076, %v3972
    %v4101 = vmul.f32 %v3077, %v3973
    %v4102 = vmul.f32 %v3078, %v3974
    %v4103 = vmul.f32 %v3079, %v3975
    %v4104 = vmul.f32 %v3080, %v3976
    %v4105 = vmul.f32 %v3081, %v3977
    %v4106 = vmul.f32 %v3082, %v3978
    %v4107 = vmul.f32 %v3083, %v3979
    %v4108 = vmul.f32 %v3084, %v3980
    %v4109 = vmul.f32 %v3085, %v3981
    %v4110 = vmul.f32 %v3086, %v3982
    %v4111 = vmul.f32 %v3087, %v3983
    %v4112 = vmul.f32 %v3088, %v3984
    %v4113 = vmul.f32 %v3089, %v3985
    %v4114 = vmul.f32 %v3090, %v3986
    %v4115 = vmul.f32 %v3091, %v3987
    %v4116 = vmul.f32 %v3092, %v3988
    %v4117 = vmul.f32 %v3093, %v3989
    %v4118 = vmul.f32 %v3094, %v3990
    %v4119 = vmul.f32 %v3095, %v3991
    %v4120 = vmul.f32 %v3096, %v3992
    %v4121 = vmul.f32 %v3097, %v3993
    %v4122 = vmul.f32 %v3098, %v3994
    %v4123 = vmul.f32 %v3099, %v3995
    %v4124 = vmul.f32 %v3100, %v3996
    %v4125 = vmul.f32 %v3101, %v3997
    %v4126 = vmul.f32 %v3102, %v3998
    %v4127 = vmul.f32 %v3103, %v3999
    %v4128 = vmul.f32 %v3104, %v4000
    %v4129 = vmul.f32 %v3105, %v4001
    %v4130 = vmul.f32 %v3106, %v4002
    %v4131 = vmul.f32 %v3107, %v4003
    %v4132 = vmul.f32 %v3108, %v4004
    %v4133 = vmul.f32 %v3109, %v4005
    %v4134 = vmul.f32 %v3110, %v4006
    %v4135 = vmul.f32 %v3111, %v4007
    %v4136 = vmul.f32 %v3112, %v4008
    %v4137 = vmul.f32 %v3113, %v4009
    %v4138 = vmul.f32 %v3114, %v4010
    %v4139 = vmul.f32 %v3115, %v4011
    %v4140 = vmul.f32 %v3116, %v4012
    %v4141 = vmul.f32 %v3117, %v4013
    %v4142 = vmul.f32 %v3118, %v4014
    %v4143 = vmul.f32 %v3119, %v4015
    %v4144 = vmul.f32 %v3120, %v4016
    %v4145 = vmul.f32 %v3121, %v4017
    %v4146 = vmul.f32 %v3122, %v4018
    %v4147 = vmul.f32 %v3123, %v4019
    %v4148 = vmul.f32 %v3124, %v4020
    %v4149 = vmul.f32 %v3125, %v4021
    %v4150 = vmul.f32 %v3126, %v4022
    %v4151 = vmul.f32 %v3127, %v4023
    %v4152 = vmul.f32 %v3128, %v4024
    %v4153 = vmul.f32 %v3129, %v4025
    %v4154 = vmul.f32 %v3130, %v4026
    %v4155 = vmul.f32 %v3131, %v4027
    %v4156 = vmul.f32 %v3132, %v4028
    %v4157 = vmul.f32 %v3133, %v4029
    %v4158 = vmul.f32 %v3134, %v4030
    %v4159 = vpack.c.bf16 %v4032, %v4031
    %v4160 = vpack.c.bf16 %v4034, %v4033
    %v4161 = vpack.c.bf16 %v4036, %v4035
    %v4162 = vpack.c.bf16 %v4038, %v4037
    %v4163 = vpack.c.bf16 %v4040, %v4039
    %v4164 = vpack.c.bf16 %v4042, %v4041
    %v4165 = vpack.c.bf16 %v4044, %v4043
    %v4166 = vpack.c.bf16 %v4046, %v4045
    %v4167 = vpack.c.bf16 %v4048, %v4047
    %v4168 = vpack.c.bf16 %v4050, %v4049
    %v4169 = vpack.c.bf16 %v4052, %v4051
    %v4170 = vpack.c.bf16 %v4054, %v4053
    %v4171 = vpack.c.bf16 %v4056, %v4055
    %v4172 = vpack.c.bf16 %v4058, %v4057
    %v4173 = vpack.c.bf16 %v4060, %v4059
    %v4174 = vpack.c.bf16 %v4062, %v4061
    %v4175 = vpack.c.bf16 %v4064, %v4063
    %v4176 = vpack.c.bf16 %v4066, %v4065
    %v4177 = vpack.c.bf16 %v4068, %v4067
    %v4178 = vpack.c.bf16 %v4070, %v4069
    %v4179 = vpack.c.bf16 %v4072, %v4071
    %v4180 = vpack.c.bf16 %v4074, %v4073
    %v4181 = vpack.c.bf16 %v4076, %v4075
    %v4182 = vpack.c.bf16 %v4078, %v4077
    %v4183 = vpack.c.bf16 %v4080, %v4079
    %v4184 = vpack.c.bf16 %v4082, %v4081
    %v4185 = vpack.c.bf16 %v4084, %v4083
    %v4186 = vpack.c.bf16 %v4086, %v4085
    %v4187 = vpack.c.bf16 %v4088, %v4087
    %v4188 = vpack.c.bf16 %v4090, %v4089
    %v4189 = vpack.c.bf16 %v4092, %v4091
    %v4190 = vpack.c.bf16 %v4094, %v4093
    %v4191 = vpack.c.bf16 %v4096, %v4095
    %v4192 = vpack.c.bf16 %v4098, %v4097
    %v4193 = vpack.c.bf16 %v4100, %v4099
    %v4194 = vpack.c.bf16 %v4102, %v4101
    %v4195 = vpack.c.bf16 %v4104, %v4103
    %v4196 = vpack.c.bf16 %v4106, %v4105
    %v4197 = vpack.c.bf16 %v4108, %v4107
    %v4198 = vpack.c.bf16 %v4110, %v4109
    %v4199 = vpack.c.bf16 %v4112, %v4111
    %v4200 = vpack.c.bf16 %v4114, %v4113
    %v4201 = vpack.c.bf16 %v4116, %v4115
    %v4202 = vpack.c.bf16 %v4118, %v4117
    %v4203 = vpack.c.bf16 %v4120, %v4119
    %v4204 = vpack.c.bf16 %v4122, %v4121
    %v4205 = vpack.c.bf16 %v4124, %v4123
    %v4206 = vpack.c.bf16 %v4126, %v4125
    %v4207 = vpack.c.bf16 %v4128, %v4127
    %v4208 = vpack.c.bf16 %v4130, %v4129
    %v4209 = vpack.c.bf16 %v4132, %v4131
    %v4210 = vpack.c.bf16 %v4134, %v4133
    %v4211 = vpack.c.bf16 %v4136, %v4135
    %v4212 = vpack.c.bf16 %v4138, %v4137
    %v4213 = vpack.c.bf16 %v4140, %v4139
    %v4214 = vpack.c.bf16 %v4142, %v4141
    %v4215 = vpack.c.bf16 %v4144, %v4143
    %v4216 = vpack.c.bf16 %v4146, %v4145
    %v4217 = vpack.c.bf16 %v4148, %v4147
    %v4218 = vpack.c.bf16 %v4150, %v4149
    %v4219 = vpack.c.bf16 %v4152, %v4151
    %v4220 = vpack.c.bf16 %v4154, %v4153
    %v4221 = vpack.c.bf16 %v4156, %v4155
    %v4222 = vpack.c.bf16 %v4158, %v4157
    %v4223 = vld [vmem:[%s6] sm:$0xf]
    %v4224 = vld [vmem:[%s6 + $0x4] sm:$0xf]
    %v4225 = vld [vmem:[%s6 + $0x8] sm:$0xf]
    %v4226 = vld [vmem:[%s6 + $0xc] sm:$0xf]
    %v4227 = vld [vmem:[%s6 + $0x10] sm:$0xf]
    %v4228 = vld [vmem:[%s6 + $0x14] sm:$0xf]
    %v4229 = vld [vmem:[%s6 + $0x18] sm:$0xf]
    %v4230 = vld [vmem:[%s6 + $0x1c] sm:$0xf]
    %v4231 = vld [vmem:[%s6 + $0x20] sm:$0xf]
    %v4232 = vld [vmem:[%s6 + $0x24] sm:$0xf]
    %v4233 = vld [vmem:[%s6 + $0x28] sm:$0xf]
    %v4234 = vld [vmem:[%s6 + $0x2c] sm:$0xf]
    %v4235 = vld [vmem:[%s6 + $0x30] sm:$0xf]
    %v4236 = vld [vmem:[%s6 + $0x34] sm:$0xf]
    %v4237 = vld [vmem:[%s6 + $0x38] sm:$0xf]
    %v4238 = vld [vmem:[%s6 + $0x3c] sm:$0xf]
    %v4239 = vld [vmem:[#allocation2] sm:$0x1]
    %v4241 = vlaneseq
    %v4242 = vshrl.u32 %v4241, 7
    %v4243 = vsub.s32 0, %v4242
    %v4244 = vrot.slane %v4239, %v4243
    %v4262 = vunpack.c.l.b16 %v4223
    %v4263 = vunpack.c.l.b16 %v4224
    %v4264 = vunpack.c.l.b16 %v4225
    %v4265 = vunpack.c.l.b16 %v4226
    %v4266 = vunpack.c.l.b16 %v4227
    %v4267 = vunpack.c.l.b16 %v4228
    %v4268 = vunpack.c.l.b16 %v4229
    %v4269 = vunpack.c.l.b16 %v4230
    %v4270 = vunpack.c.l.b16 %v4231
    %v4271 = vunpack.c.l.b16 %v4232
    %v4272 = vunpack.c.l.b16 %v4233
    %v4273 = vunpack.c.l.b16 %v4234
    %v4274 = vunpack.c.l.b16 %v4235
    %v4275 = vunpack.c.l.b16 %v4236
    %v4276 = vunpack.c.l.b16 %v4237
    %v4277 = vunpack.c.l.b16 %v4238
    %v4278 = vpack.c.b16 %v4263, %v4262
    %v4279 = vpack.c.b16 %v4265, %v4264
    %v4280 = vpack.c.b16 %v4267, %v4266
    %v4281 = vpack.c.b16 %v4269, %v4268
    %v4282 = vpack.c.b16 %v4271, %v4270
    %v4283 = vpack.c.b16 %v4273, %v4272
    %v4284 = vpack.c.b16 %v4275, %v4274
    %v4285 = vpack.c.b16 %v4277, %v4276
    %4294 = vmatprep.subr.bf16.mxu0 0
    %4295 = vmatpush1.bf16.msra.mxu0 %v4278
    %4296 = vmatprep.subr.bf16.mxu0 0
    %4297 = vmatpush1.bf16.msra.mxu0 %v4279
    %4298 = vmatprep.subr.bf16.mxu0 0
    %4299 = vmatpush1.bf16.msra.mxu0 %v4280
    %4300 = vmatprep.subr.bf16.mxu0 0
    %4301 = vmatpush1.bf16.msra.mxu0 %v4281
    %4302 = vmatprep.subr.bf16.mxu0 0
    %4303 = vmatpush1.bf16.msra.mxu0 %v4282
    %4304 = vmatprep.subr.bf16.mxu0 0
    %4305 = vmatpush1.bf16.msra.mxu0 %v4283
    %4306 = vmatprep.subr.bf16.mxu0 0
    %4307 = vmatpush1.bf16.msra.mxu0 %v4284
    %4308 = vmatprep.subr.bf16.mxu0 0
    %4309 = vmatpush1.bf16.msra.mxu0 %v4285
    %4310 = vmatprep.subr.bf16.mxu0 0
    %4311 = vmatpush1.bf16.msra.mxu0 0
    %4312 = vmatprep.subr.bf16.mxu0 0
    %4313 = vmatpush1.bf16.msra.mxu0 0
    %4314 = vmatprep.subr.bf16.mxu0 0
    %4315 = vmatpush1.bf16.msra.mxu0 0
    %4316 = vmatprep.subr.bf16.mxu0 0
    %4317 = vmatpush1.bf16.msra.mxu0 0
    %4318 = vmatprep.subr.bf16.mxu0 0
    %4319 = vmatpush1.bf16.msra.mxu0 0
    %4320 = vmatprep.subr.bf16.mxu0 0
    %4321 = vmatpush1.bf16.msra.mxu0 0
    %4322 = vmatprep.subr.bf16.mxu0 0
    %4323 = vmatpush1.bf16.msra.mxu0 0
    %4324 = vmatprep.subr.bf16.mxu0 0
    %4325 = vmatpush1.bf16.msra.mxu0 0
    %4326 = vmatprep.mubr.bf16.mxu0 0
    %4327 = vmatmul.mubr.bf16.gmra.mrb[0].mxu0 %v4159
    %v4328 = vpop.f32.mrb[0].mxu0
    %v4329 = vadd.f32 %v4244, %v4328
    %v4330 = vpop.f32.mrb[0].mxu0
    %v4331 = vpop.f32.mrb[0].mxu0
    %v4332 = vadd.f32 %v4244, %v4331
    %v4333 = vpop.f32.mrb[0].mxu0
    %4334 = vmatprep.mubr.bf16.mxu0 0
    %4335 = vmatmul.mubr.bf16.gmra.mrb[0].mxu0 %v4160
    %v4336 = vpop.f32.mrb[0].mxu0
    %v4337 = vadd.f32 %v4244, %v4336
    %v4338 = vpop.f32.mrb[0].mxu0
    %v4339 = vpop.f32.mrb[0].mxu0
    %v4340 = vadd.f32 %v4244, %v4339
    %v4341 = vpop.f32.mrb[0].mxu0
    %4342 = vmatprep.mubr.bf16.mxu0 0
    %4343 = vmatmul.mubr.bf16.gmra.mrb[0].mxu0 %v4161
    %v4344 = vpop.f32.mrb[0].mxu0
    %v4345 = vadd.f32 %v4244, %v4344
    %v4346 = vpop.f32.mrb[0].mxu0
    %v4347 = vpop.f32.mrb[0].mxu0
    %v4348 = vadd.f32 %v4244, %v4347
    %v4349 = vpop.f32.mrb[0].mxu0
    %4350 = vmatprep.mubr.bf16.mxu0 0
    %4351 = vmatmul.mubr.bf16.gmra.mrb[0].mxu0 %v4162
    %v4352 = vpop.f32.mrb[0].mxu0
    %v4353 = vadd.f32 %v4244, %v4352
    %v4354 = vpop.f32.mrb[0].mxu0
    %v4355 = vpop.f32.mrb[0].mxu0
    %v4356 = vadd.f32 %v4244, %v4355
    %v4357 = vpop.f32.mrb[0].mxu0
    %4358 = vmatprep.mubr.bf16.mxu0 0
    %4359 = vmatmul.mubr.bf16.gmra.mrb[0].mxu0 %v4163
    %v4360 = vpop.f32.mrb[0].mxu0
    %v4361 = vadd.f32 %v4244, %v4360
    %v4362 = vpop.f32.mrb[0].mxu0
    %v4363 = vpop.f32.mrb[0].mxu0
    %v4364 = vadd.f32 %v4244, %v4363
    %v4365 = vpop.f32.mrb[0].mxu0
    %4366 = vmatprep.mubr.bf16.mxu0 0
    %4367 = vmatmul.mubr.bf16.gmra.mrb[0].mxu0 %v4164
    %v4368 = vpop.f32.mrb[0].mxu0
    %v4369 = vadd.f32 %v4244, %v4368
    %v4370 = vpop.f32.mrb[0].mxu0
    %v4371 = vpop.f32.mrb[0].mxu0
    %v4372 = vadd.f32 %v4244, %v4371
    %v4373 = vpop.f32.mrb[0].mxu0
    %4374 = vmatprep.mubr.bf16.mxu0 0
    %4375 = vmatmul.mubr.bf16.gmra.mrb[0].mxu0 %v4165
    %v4376 = vpop.f32.mrb[0].mxu0
    %v4377 = vadd.f32 %v4244, %v4376
    %v4378 = vpop.f32.mrb[0].mxu0
    %v4379 = vpop.f32.mrb[0].mxu0
    %v4380 = vadd.f32 %v4244, %v4379
    %v4381 = vpop.f32.mrb[0].mxu0
    %4382 = vmatprep.mubr.bf16.mxu0 0
    %4383 = vmatmul.mubr.bf16.gmra.mrb[0].mxu0 %v4166
    %v4384 = vpop.f32.mrb[0].mxu0
    %v4385 = vadd.f32 %v4244, %v4384
    %v4386 = vpop.f32.mrb[0].mxu0
    %v4387 = vpop.f32.mrb[0].mxu0
    %v4388 = vadd.f32 %v4244, %v4387
    %v4389 = vpop.f32.mrb[0].mxu0
    %4390 = vmatprep.mubr.bf16.mxu0 0
    %4391 = vmatmul.mubr.bf16.gmra.mrb[0].mxu0 %v4167
    %v4392 = vpop.f32.mrb[0].mxu0
    %v4393 = vadd.f32 %v4244, %v4392
    %v4394 = vpop.f32.mrb[0].mxu0
    %v4395 = vpop.f32.mrb[0].mxu0
    %v4396 = vadd.f32 %v4244, %v4395
    %v4397 = vpop.f32.mrb[0].mxu0
    %4398 = vmatprep.mubr.bf16.mxu0 0
    %4399 = vmatmul.mubr.bf16.gmra.mrb[0].mxu0 %v4168
    %v4400 = vpop.f32.mrb[0].mxu0
    %v4401 = vadd.f32 %v4244, %v4400
    %v4402 = vpop.f32.mrb[0].mxu0
    %v4403 = vpop.f32.mrb[0].mxu0
    %v4404 = vadd.f32 %v4244, %v4403
    %v4405 = vpop.f32.mrb[0].mxu0
    %4406 = vmatprep.mubr.bf16.mxu0 0
    %4407 = vmatmul.mubr.bf16.gmra.mrb[0].mxu0 %v4169
    %v4408 = vpop.f32.mrb[0].mxu0
    %v4409 = vadd.f32 %v4244, %v4408
    %v4410 = vpop.f32.mrb[0].mxu0
    %v4411 = vpop.f32.mrb[0].mxu0
    %v4412 = vadd.f32 %v4244, %v4411
    %v4413 = vpop.f32.mrb[0].mxu0
    %4414 = vmatprep.mubr.bf16.mxu0 0
    %4415 = vmatmul.mubr.bf16.gmra.mrb[0].mxu0 %v4170
    %v4416 = vpop.f32.mrb[0].mxu0
    %v4417 = vadd.f32 %v4244, %v4416
    %v4418 = vpop.f32.mrb[0].mxu0
    %v4419 = vpop.f32.mrb[0].mxu0
    %v4420 = vadd.f32 %v4244, %v4419
    %v4421 = vpop.f32.mrb[0].mxu0
    %4422 = vmatprep.mubr.bf16.mxu0 0
    %4423 = vmatmul.mubr.bf16.gmra.mrb[0].mxu0 %v4171
    %v4424 = vpop.f32.mrb[0].mxu0
    %v4425 = vadd.f32 %v4244, %v4424
    %v4426 = vpop.f32.mrb[0].mxu0
    %v4427 = vpop.f32.mrb[0].mxu0
    %v4428 = vadd.f32 %v4244, %v4427
    %v4429 = vpop.f32.mrb[0].mxu0
    %4430 = vmatprep.mubr.bf16.mxu0 0
    %4431 = vmatmul.mubr.bf16.gmra.mrb[0].mxu0 %v4172
    %v4432 = vpop.f32.mrb[0].mxu0
    %v4433 = vadd.f32 %v4244, %v4432
    %v4434 = vpop.f32.mrb[0].mxu0
    %v4435 = vpop.f32.mrb[0].mxu0
    %v4436 = vadd.f32 %v4244, %v4435
    %v4437 = vpop.f32.mrb[0].mxu0
    %4438 = vmatprep.mubr.bf16.mxu0 0
    %4439 = vmatmul.mubr.bf16.gmra.mrb[0].mxu0 %v4173
    %v4440 = vpop.f32.mrb[0].mxu0
    %v4441 = vadd.f32 %v4244, %v4440
    %v4442 = vpop.f32.mrb[0].mxu0
    %v4443 = vpop.f32.mrb[0].mxu0
    %v4444 = vadd.f32 %v4244, %v4443
    %v4445 = vpop.f32.mrb[0].mxu0
    %4446 = vmatprep.mubr.bf16.mxu0 0
    %4447 = vmatmul.mubr.bf16.gmra.mrb[0].mxu0 %v4174
    %v4448 = vpop.f32.mrb[0].mxu0
    %v4449 = vadd.f32 %v4244, %v4448
    %v4450 = vpop.f32.mrb[0].mxu0
    %v4451 = vpop.f32.mrb[0].mxu0
    %v4452 = vadd.f32 %v4244, %v4451
    %v4453 = vpop.f32.mrb[0].mxu0
    %4454 = vmatprep.mubr.bf16.mxu0 0
    %4455 = vmatmul.mubr.bf16.gmra.mrb[0].mxu0 %v4175
    %v4456 = vpop.f32.mrb[0].mxu0
    %v4457 = vadd.f32 %v4244, %v4456
    %v4458 = vpop.f32.mrb[0].mxu0
    %v4459 = vpop.f32.mrb[0].mxu0
    %v4460 = vadd.f32 %v4244, %v4459
    %v4461 = vpop.f32.mrb[0].mxu0
    %4462 = vmatprep.mubr.bf16.mxu0 0
    %4463 = vmatmul.mubr.bf16.gmra.mrb[0].mxu0 %v4176
    %v4464 = vpop.f32.mrb[0].mxu0
    %v4465 = vadd.f32 %v4244, %v4464
    %v4466 = vpop.f32.mrb[0].mxu0
    %v4467 = vpop.f32.mrb[0].mxu0
    %v4468 = vadd.f32 %v4244, %v4467
    %v4469 = vpop.f32.mrb[0].mxu0
    %4470 = vmatprep.mubr.bf16.mxu0 0
    %4471 = vmatmul.mubr.bf16.gmra.mrb[0].mxu0 %v4177
    %v4472 = vpop.f32.mrb[0].mxu0
    %v4473 = vadd.f32 %v4244, %v4472
    %v4474 = vpop.f32.mrb[0].mxu0
    %v4475 = vpop.f32.mrb[0].mxu0
    %v4476 = vadd.f32 %v4244, %v4475
    %v4477 = vpop.f32.mrb[0].mxu0
    %4478 = vmatprep.mubr.bf16.mxu0 0
    %4479 = vmatmul.mubr.bf16.gmra.mrb[0].mxu0 %v4178
    %v4480 = vpop.f32.mrb[0].mxu0
    %v4481 = vadd.f32 %v4244, %v4480
    %v4482 = vpop.f32.mrb[0].mxu0
    %v4483 = vpop.f32.mrb[0].mxu0
    %v4484 = vadd.f32 %v4244, %v4483
    %v4485 = vpop.f32.mrb[0].mxu0
    %4486 = vmatprep.mubr.bf16.mxu0 0
    %4487 = vmatmul.mubr.bf16.gmra.mrb[0].mxu0 %v4179
    %v4488 = vpop.f32.mrb[0].mxu0
    %v4489 = vadd.f32 %v4244, %v4488
    %v4490 = vpop.f32.mrb[0].mxu0
    %v4491 = vpop.f32.mrb[0].mxu0
    %v4492 = vadd.f32 %v4244, %v4491
    %v4493 = vpop.f32.mrb[0].mxu0
    %4494 = vmatprep.mubr.bf16.mxu0 0
    %4495 = vmatmul.mubr.bf16.gmra.mrb[0].mxu0 %v4180
    %v4496 = vpop.f32.mrb[0].mxu0
    %v4497 = vadd.f32 %v4244, %v4496
    %v4498 = vpop.f32.mrb[0].mxu0
    %v4499 = vpop.f32.mrb[0].mxu0
    %v4500 = vadd.f32 %v4244, %v4499
    %v4501 = vpop.f32.mrb[0].mxu0
    %4502 = vmatprep.mubr.bf16.mxu0 0
    %4503 = vmatmul.mubr.bf16.gmra.mrb[0].mxu0 %v4181
    %v4504 = vpop.f32.mrb[0].mxu0
    %v4505 = vadd.f32 %v4244, %v4504
    %v4506 = vpop.f32.mrb[0].mxu0
    %v4507 = vpop.f32.mrb[0].mxu0
    %v4508 = vadd.f32 %v4244, %v4507
    %v4509 = vpop.f32.mrb[0].mxu0
    %4510 = vmatprep.mubr.bf16.mxu0 0
    %4511 = vmatmul.mubr.bf16.gmra.mrb[0].mxu0 %v4182
    %v4512 = vpop.f32.mrb[0].mxu0
    %v4513 = vadd.f32 %v4244, %v4512
    %v4514 = vpop.f32.mrb[0].mxu0
    %v4515 = vpop.f32.mrb[0].mxu0
    %v4516 = vadd.f32 %v4244, %v4515
    %v4517 = vpop.f32.mrb[0].mxu0
    %4518 = vmatprep.mubr.bf16.mxu0 0
    %4519 = vmatmul.mubr.bf16.gmra.mrb[0].mxu0 %v4183
    %v4520 = vpop.f32.mrb[0].mxu0
    %v4521 = vadd.f32 %v4244, %v4520
    %v4522 = vpop.f32.mrb[0].mxu0
    %v4523 = vpop.f32.mrb[0].mxu0
    %v4524 = vadd.f32 %v4244, %v4523
    %v4525 = vpop.f32.mrb[0].mxu0
    %4526 = vmatprep.mubr.bf16.mxu0 0
    %4527 = vmatmul.mubr.bf16.gmra.mrb[0].mxu0 %v4184
    %v4528 = vpop.f32.mrb[0].mxu0
    %v4529 = vadd.f32 %v4244, %v4528
    %v4530 = vpop.f32.mrb[0].mxu0
    %v4531 = vpop.f32.mrb[0].mxu0
    %v4532 = vadd.f32 %v4244, %v4531
    %v4533 = vpop.f32.mrb[0].mxu0
    %4534 = vmatprep.mubr.bf16.mxu0 0
    %4535 = vmatmul.mubr.bf16.gmra.mrb[0].mxu0 %v4185
    %v4536 = vpop.f32.mrb[0].mxu0
    %v4537 = vadd.f32 %v4244, %v4536
    %v4538 = vpop.f32.mrb[0].mxu0
    %v4539 = vpop.f32.mrb[0].mxu0
    %v4540 = vadd.f32 %v4244, %v4539
    %v4541 = vpop.f32.mrb[0].mxu0
    %4542 = vmatprep.mubr.bf16.mxu0 0
    %4543 = vmatmul.mubr.bf16.gmra.mrb[0].mxu0 %v4186
    %v4544 = vpop.f32.mrb[0].mxu0
    %v4545 = vadd.f32 %v4244, %v4544
    %v4546 = vpop.f32.mrb[0].mxu0
    %v4547 = vpop.f32.mrb[0].mxu0
    %v4548 = vadd.f32 %v4244, %v4547
    %v4549 = vpop.f32.mrb[0].mxu0
    %4550 = vmatprep.mubr.bf16.mxu0 0
    %4551 = vmatmul.mubr.bf16.gmra.mrb[0].mxu0 %v4187
    %v4552 = vpop.f32.mrb[0].mxu0
    %v4553 = vadd.f32 %v4244, %v4552
    %v4554 = vpop.f32.mrb[0].mxu0
    %v4555 = vpop.f32.mrb[0].mxu0
    %v4556 = vadd.f32 %v4244, %v4555
    %v4557 = vpop.f32.mrb[0].mxu0
    %4558 = vmatprep.mubr.bf16.mxu0 0
    %4559 = vmatmul.mubr.bf16.gmra.mrb[0].mxu0 %v4188
    %v4560 = vpop.f32.mrb[0].mxu0
    %v4561 = vadd.f32 %v4244, %v4560
    %v4562 = vpop.f32.mrb[0].mxu0
    %v4563 = vpop.f32.mrb[0].mxu0
    %v4564 = vadd.f32 %v4244, %v4563
    %v4565 = vpop.f32.mrb[0].mxu0
    %4566 = vmatprep.mubr.bf16.mxu0 0
    %4567 = vmatmul.mubr.bf16.gmra.mrb[0].mxu0 %v4189
    %v4568 = vpop.f32.mrb[0].mxu0
    %v4569 = vadd.f32 %v4244, %v4568
    %v4570 = vpop.f32.mrb[0].mxu0
    %v4571 = vpop.f32.mrb[0].mxu0
    %v4572 = vadd.f32 %v4244, %v4571
    %v4573 = vpop.f32.mrb[0].mxu0
    %4574 = vmatprep.mubr.bf16.mxu0 0
    %4575 = vmatmul.mubr.bf16.gmra.mrb[0].mxu0 %v4190
    %v4576 = vpop.f32.mrb[0].mxu0
    %v4577 = vadd.f32 %v4244, %v4576
    %v4578 = vpop.f32.mrb[0].mxu0
    %v4579 = vpop.f32.mrb[0].mxu0
    %v4580 = vadd.f32 %v4244, %v4579
    %v4581 = vpop.f32.mrb[0].mxu0
    %4582 = vmatprep.mubr.bf16.mxu0 0
    %4583 = vmatmul.mubr.bf16.gmra.mrb[0].mxu0 %v4191
    %v4584 = vpop.f32.mrb[0].mxu0
    %v4585 = vadd.f32 %v4244, %v4584
    %v4586 = vpop.f32.mrb[0].mxu0
    %v4587 = vpop.f32.mrb[0].mxu0
    %v4588 = vadd.f32 %v4244, %v4587
    %v4589 = vpop.f32.mrb[0].mxu0
    %4590 = vmatprep.mubr.bf16.mxu0 0
    %4591 = vmatmul.mubr.bf16.gmra.mrb[0].mxu0 %v4192
    %v4592 = vpop.f32.mrb[0].mxu0
    %v4593 = vadd.f32 %v4244, %v4592
    %v4594 = vpop.f32.mrb[0].mxu0
    %v4595 = vpop.f32.mrb[0].mxu0
    %v4596 = vadd.f32 %v4244, %v4595
    %v4597 = vpop.f32.mrb[0].mxu0
    %4598 = vmatprep.mubr.bf16.mxu0 0
    %4599 = vmatmul.mubr.bf16.gmra.mrb[0].mxu0 %v4193
    %v4600 = vpop.f32.mrb[0].mxu0
    %v4601 = vadd.f32 %v4244, %v4600
    %v4602 = vpop.f32.mrb[0].mxu0
    %v4603 = vpop.f32.mrb[0].mxu0
    %v4604 = vadd.f32 %v4244, %v4603
    %v4605 = vpop.f32.mrb[0].mxu0
    %4606 = vmatprep.mubr.bf16.mxu0 0
    %4607 = vmatmul.mubr.bf16.gmra.mrb[0].mxu0 %v4194
    %v4608 = vpop.f32.mrb[0].mxu0
    %v4609 = vadd.f32 %v4244, %v4608
    %v4610 = vpop.f32.mrb[0].mxu0
    %v4611 = vpop.f32.mrb[0].mxu0
    %v4612 = vadd.f32 %v4244, %v4611
    %v4613 = vpop.f32.mrb[0].mxu0
    %4614 = vmatprep.mubr.bf16.mxu0 0
    %4615 = vmatmul.mubr.bf16.gmra.mrb[0].mxu0 %v4195
    %v4616 = vpop.f32.mrb[0].mxu0
    %v4617 = vadd.f32 %v4244, %v4616
    %v4618 = vpop.f32.mrb[0].mxu0
    %v4619 = vpop.f32.mrb[0].mxu0
    %v4620 = vadd.f32 %v4244, %v4619
    %v4621 = vpop.f32.mrb[0].mxu0
    %4622 = vmatprep.mubr.bf16.mxu0 0
    %4623 = vmatmul.mubr.bf16.gmra.mrb[0].mxu0 %v4196
    %v4624 = vpop.f32.mrb[0].mxu0
    %v4625 = vadd.f32 %v4244, %v4624
    %v4626 = vpop.f32.mrb[0].mxu0
    %v4627 = vpop.f32.mrb[0].mxu0
    %v4628 = vadd.f32 %v4244, %v4627
    %v4629 = vpop.f32.mrb[0].mxu0
    %4630 = vmatprep.mubr.bf16.mxu0 0
    %4631 = vmatmul.mubr.bf16.gmra.mrb[0].mxu0 %v4197
    %v4632 = vpop.f32.mrb[0].mxu0
    %v4633 = vadd.f32 %v4244, %v4632
    %v4634 = vpop.f32.mrb[0].mxu0
    %v4635 = vpop.f32.mrb[0].mxu0
    %v4636 = vadd.f32 %v4244, %v4635
    %v4637 = vpop.f32.mrb[0].mxu0
    %4638 = vmatprep.mubr.bf16.mxu0 0
    %4639 = vmatmul.mubr.bf16.gmra.mrb[0].mxu0 %v4198
    %v4640 = vpop.f32.mrb[0].mxu0
    %v4641 = vadd.f32 %v4244, %v4640
    %v4642 = vpop.f32.mrb[0].mxu0
    %v4643 = vpop.f32.mrb[0].mxu0
    %v4644 = vadd.f32 %v4244, %v4643
    %v4645 = vpop.f32.mrb[0].mxu0
    %4646 = vmatprep.mubr.bf16.mxu0 0
    %4647 = vmatmul.mubr.bf16.gmra.mrb[0].mxu0 %v4199
    %v4648 = vpop.f32.mrb[0].mxu0
    %v4649 = vadd.f32 %v4244, %v4648
    %v4650 = vpop.f32.mrb[0].mxu0
    %v4651 = vpop.f32.mrb[0].mxu0
    %v4652 = vadd.f32 %v4244, %v4651
    %v4653 = vpop.f32.mrb[0].mxu0
    %4654 = vmatprep.mubr.bf16.mxu0 0
    %4655 = vmatmul.mubr.bf16.gmra.mrb[0].mxu0 %v4200
    %v4656 = vpop.f32.mrb[0].mxu0
    %v4657 = vadd.f32 %v4244, %v4656
    %v4658 = vpop.f32.mrb[0].mxu0
    %v4659 = vpop.f32.mrb[0].mxu0
    %v4660 = vadd.f32 %v4244, %v4659
    %v4661 = vpop.f32.mrb[0].mxu0
    %4662 = vmatprep.mubr.bf16.mxu0 0
    %4663 = vmatmul.mubr.bf16.gmra.mrb[0].mxu0 %v4201
    %v4664 = vpop.f32.mrb[0].mxu0
    %v4665 = vadd.f32 %v4244, %v4664
    %v4666 = vpop.f32.mrb[0].mxu0
    %v4667 = vpop.f32.mrb[0].mxu0
    %v4668 = vadd.f32 %v4244, %v4667
    %v4669 = vpop.f32.mrb[0].mxu0
    %4670 = vmatprep.mubr.bf16.mxu0 0
    %4671 = vmatmul.mubr.bf16.gmra.mrb[0].mxu0 %v4202
    %v4672 = vpop.f32.mrb[0].mxu0
    %v4673 = vadd.f32 %v4244, %v4672
    %v4674 = vpop.f32.mrb[0].mxu0
    %v4675 = vpop.f32.mrb[0].mxu0
    %v4676 = vadd.f32 %v4244, %v4675
    %v4677 = vpop.f32.mrb[0].mxu0
    %4678 = vmatprep.mubr.bf16.mxu0 0
    %4679 = vmatmul.mubr.bf16.gmra.mrb[0].mxu0 %v4203
    %v4680 = vpop.f32.mrb[0].mxu0
    %v4681 = vadd.f32 %v4244, %v4680
    %v4682 = vpop.f32.mrb[0].mxu0
    %v4683 = vpop.f32.mrb[0].mxu0
    %v4684 = vadd.f32 %v4244, %v4683
    %v4685 = vpop.f32.mrb[0].mxu0
    %4686 = vmatprep.mubr.bf16.mxu0 0
    %4687 = vmatmul.mubr.bf16.gmra.mrb[0].mxu0 %v4204
    %v4688 = vpop.f32.mrb[0].mxu0
    %v4689 = vadd.f32 %v4244, %v4688
    %v4690 = vpop.f32.mrb[0].mxu0
    %v4691 = vpop.f32.mrb[0].mxu0
    %v4692 = vadd.f32 %v4244, %v4691
    %v4693 = vpop.f32.mrb[0].mxu0
    %4694 = vmatprep.mubr.bf16.mxu0 0
    %4695 = vmatmul.mubr.bf16.gmra.mrb[0].mxu0 %v4205
    %v4696 = vpop.f32.mrb[0].mxu0
    %v4697 = vadd.f32 %v4244, %v4696
    %v4698 = vpop.f32.mrb[0].mxu0
    %v4699 = vpop.f32.mrb[0].mxu0
    %v4700 = vadd.f32 %v4244, %v4699
    %v4701 = vpop.f32.mrb[0].mxu0
    %4702 = vmatprep.mubr.bf16.mxu0 0
    %4703 = vmatmul.mubr.bf16.gmra.mrb[0].mxu0 %v4206
    %v4704 = vpop.f32.mrb[0].mxu0
    %v4705 = vadd.f32 %v4244, %v4704
    %v4706 = vpop.f32.mrb[0].mxu0
    %v4707 = vpop.f32.mrb[0].mxu0
    %v4708 = vadd.f32 %v4244, %v4707
    %v4709 = vpop.f32.mrb[0].mxu0
    %4710 = vmatprep.mubr.bf16.mxu0 0
    %4711 = vmatmul.mubr.bf16.gmra.mrb[0].mxu0 %v4207
    %v4712 = vpop.f32.mrb[0].mxu0
    %v4713 = vadd.f32 %v4244, %v4712
    %v4714 = vpop.f32.mrb[0].mxu0
    %v4715 = vpop.f32.mrb[0].mxu0
    %v4716 = vadd.f32 %v4244, %v4715
    %v4717 = vpop.f32.mrb[0].mxu0
    %4718 = vmatprep.mubr.bf16.mxu0 0
    %4719 = vmatmul.mubr.bf16.gmra.mrb[0].mxu0 %v4208
    %v4720 = vpop.f32.mrb[0].mxu0
    %v4721 = vadd.f32 %v4244, %v4720
    %v4722 = vpop.f32.mrb[0].mxu0
    %v4723 = vpop.f32.mrb[0].mxu0
    %v4724 = vadd.f32 %v4244, %v4723
    %v4725 = vpop.f32.mrb[0].mxu0
    %4726 = vmatprep.mubr.bf16.mxu0 0
    %4727 = vmatmul.mubr.bf16.gmra.mrb[0].mxu0 %v4209
    %v4728 = vpop.f32.mrb[0].mxu0
    %v4729 = vadd.f32 %v4244, %v4728
    %v4730 = vpop.f32.mrb[0].mxu0
    %v4731 = vpop.f32.mrb[0].mxu0
    %v4732 = vadd.f32 %v4244, %v4731
    %v4733 = vpop.f32.mrb[0].mxu0
    %4734 = vmatprep.mubr.bf16.mxu0 0
    %4735 = vmatmul.mubr.bf16.gmra.mrb[0].mxu0 %v4210
    %v4736 = vpop.f32.mrb[0].mxu0
    %v4737 = vadd.f32 %v4244, %v4736
    %v4738 = vpop.f32.mrb[0].mxu0
    %v4739 = vpop.f32.mrb[0].mxu0
    %v4740 = vadd.f32 %v4244, %v4739
    %v4741 = vpop.f32.mrb[0].mxu0
    %4742 = vmatprep.mubr.bf16.mxu0 0
    %4743 = vmatmul.mubr.bf16.gmra.mrb[0].mxu0 %v4211
    %v4744 = vpop.f32.mrb[0].mxu0
    %v4745 = vadd.f32 %v4244, %v4744
    %v4746 = vpop.f32.mrb[0].mxu0
    %v4747 = vpop.f32.mrb[0].mxu0
    %v4748 = vadd.f32 %v4244, %v4747
    %v4749 = vpop.f32.mrb[0].mxu0
    %4750 = vmatprep.mubr.bf16.mxu0 0
    %4751 = vmatmul.mubr.bf16.gmra.mrb[0].mxu0 %v4212
    %v4752 = vpop.f32.mrb[0].mxu0
    %v4753 = vadd.f32 %v4244, %v4752
    %v4754 = vpop.f32.mrb[0].mxu0
    %v4755 = vpop.f32.mrb[0].mxu0
    %v4756 = vadd.f32 %v4244, %v4755
    %v4757 = vpop.f32.mrb[0].mxu0
    %4758 = vmatprep.mubr.bf16.mxu0 0
    %4759 = vmatmul.mubr.bf16.gmra.mrb[0].mxu0 %v4213
    %v4760 = vpop.f32.mrb[0].mxu0
    %v4761 = vadd.f32 %v4244, %v4760
    %v4762 = vpop.f32.mrb[0].mxu0
    %v4763 = vpop.f32.mrb[0].mxu0
    %v4764 = vadd.f32 %v4244, %v4763
    %v4765 = vpop.f32.mrb[0].mxu0
    %4766 = vmatprep.mubr.bf16.mxu0 0
    %4767 = vmatmul.mubr.bf16.gmra.mrb[0].mxu0 %v4214
    %v4768 = vpop.f32.mrb[0].mxu0
    %v4769 = vadd.f32 %v4244, %v4768
    %v4770 = vpop.f32.mrb[0].mxu0
    %v4771 = vpop.f32.mrb[0].mxu0
    %v4772 = vadd.f32 %v4244, %v4771
    %v4773 = vpop.f32.mrb[0].mxu0
    %4774 = vmatprep.mubr.bf16.mxu0 0
    %4775 = vmatmul.mubr.bf16.gmra.mrb[0].mxu0 %v4215
    %v4776 = vpop.f32.mrb[0].mxu0
    %v4777 = vadd.f32 %v4244, %v4776
    %v4778 = vpop.f32.mrb[0].mxu0
    %v4779 = vpop.f32.mrb[0].mxu0
    %v4780 = vadd.f32 %v4244, %v4779
    %v4781 = vpop.f32.mrb[0].mxu0
    %4782 = vmatprep.mubr.bf16.mxu0 0
    %4783 = vmatmul.mubr.bf16.gmra.mrb[0].mxu0 %v4216
    %v4784 = vpop.f32.mrb[0].mxu0
    %v4785 = vadd.f32 %v4244, %v4784
    %v4786 = vpop.f32.mrb[0].mxu0
    %v4787 = vpop.f32.mrb[0].mxu0
    %v4788 = vadd.f32 %v4244, %v4787
    %v4789 = vpop.f32.mrb[0].mxu0
    %4790 = vmatprep.mubr.bf16.mxu0 0
    %4791 = vmatmul.mubr.bf16.gmra.mrb[0].mxu0 %v4217
    %v4792 = vpop.f32.mrb[0].mxu0
    %v4793 = vadd.f32 %v4244, %v4792
    %v4794 = vpop.f32.mrb[0].mxu0
    %v4795 = vpop.f32.mrb[0].mxu0
    %v4796 = vadd.f32 %v4244, %v4795
    %v4797 = vpop.f32.mrb[0].mxu0
    %4798 = vmatprep.mubr.bf16.mxu0 0
    %4799 = vmatmul.mubr.bf16.gmra.mrb[0].mxu0 %v4218
    %v4800 = vpop.f32.mrb[0].mxu0
    %v4801 = vadd.f32 %v4244, %v4800
    %v4802 = vpop.f32.mrb[0].mxu0
    %v4803 = vpop.f32.mrb[0].mxu0
    %v4804 = vadd.f32 %v4244, %v4803
    %v4805 = vpop.f32.mrb[0].mxu0
    %4806 = vmatprep.mubr.bf16.mxu0 0
    %4807 = vmatmul.mubr.bf16.gmra.mrb[0].mxu0 %v4219
    %v4808 = vpop.f32.mrb[0].mxu0
    %v4809 = vadd.f32 %v4244, %v4808
    %v4810 = vpop.f32.mrb[0].mxu0
    %v4811 = vpop.f32.mrb[0].mxu0
    %v4812 = vadd.f32 %v4244, %v4811
    %v4813 = vpop.f32.mrb[0].mxu0
    %4814 = vmatprep.mubr.bf16.mxu0 0
    %4815 = vmatmul.mubr.bf16.gmra.mrb[0].mxu0 %v4220
    %v4816 = vpop.f32.mrb[0].mxu0
    %v4817 = vadd.f32 %v4244, %v4816
    %v4818 = vpop.f32.mrb[0].mxu0
    %v4819 = vpop.f32.mrb[0].mxu0
    %v4820 = vadd.f32 %v4244, %v4819
    %v4821 = vpop.f32.mrb[0].mxu0
    %4822 = vmatprep.mubr.bf16.mxu0 0
    %4823 = vmatmul.mubr.bf16.gmra.mrb[0].mxu0 %v4221
    %v4824 = vpop.f32.mrb[0].mxu0
    %v4825 = vadd.f32 %v4244, %v4824
    %v4826 = vpop.f32.mrb[0].mxu0
    %v4827 = vpop.f32.mrb[0].mxu0
    %v4828 = vadd.f32 %v4244, %v4827
    %v4829 = vpop.f32.mrb[0].mxu0
    %4830 = vmatprep.mubr.bf16.mxu0 0
    %4831 = vmatmul.mubr.bf16.gmra.mrb[0].mxu0 %v4222
    %v4832 = vpop.f32.mrb[0].mxu0
    %v4833 = vadd.f32 %v4244, %v4832
    %v4834 = vpop.f32.mrb[0].mxu0
    %v4835 = vpop.f32.mrb[0].mxu0
    %v4836 = vadd.f32 %v4244, %v4835
    %v4837 = vpop.f32.mrb[0].mxu0
    %4838 = vdwg.mxu0
    %v4839 = vld [vmem:[%s1] sm:$0xf]
    %v4840 = vld [vmem:[%s1 + $0x4] sm:$0xf]
    %v4841 = vld [vmem:[%s1 + $0x8] sm:$0xf]
    %v4842 = vld [vmem:[%s1 + $0xc] sm:$0xf]
    %v4843 = vld [vmem:[%s1 + $0x10] sm:$0xf]
    %v4844 = vld [vmem:[%s1 + $0x14] sm:$0xf]
    %v4845 = vld [vmem:[%s1 + $0x18] sm:$0xf]
    %v4846 = vld [vmem:[%s1 + $0x1c] sm:$0xf]
    %v4847 = vld [vmem:[%s1 + $0x20] sm:$0xf]
    %v4848 = vld [vmem:[%s1 + $0x24] sm:$0xf]
    %v4849 = vld [vmem:[%s1 + $0x28] sm:$0xf]
    %v4850 = vld [vmem:[%s1 + $0x2c] sm:$0xf]
    %v4851 = vld [vmem:[%s1 + $0x30] sm:$0xf]
    %v4852 = vld [vmem:[%s1 + $0x34] sm:$0xf]
    %v4853 = vld [vmem:[%s1 + $0x38] sm:$0xf]
    %v4854 = vld [vmem:[%s1 + $0x3c] sm:$0xf]
    %v4855 = vld [vmem:[%s1 + $0x40] sm:$0xf]
    %v4856 = vld [vmem:[%s1 + $0x44] sm:$0xf]
    %v4857 = vld [vmem:[%s1 + $0x48] sm:$0xf]
    %v4858 = vld [vmem:[%s1 + $0x4c] sm:$0xf]
    %v4859 = vld [vmem:[%s1 + $0x50] sm:$0xf]
    %v4860 = vld [vmem:[%s1 + $0x54] sm:$0xf]
    %v4861 = vld [vmem:[%s1 + $0x58] sm:$0xf]
    %v4862 = vld [vmem:[%s1 + $0x5c] sm:$0xf]
    %v4863 = vld [vmem:[%s1 + $0x60] sm:$0xf]
    %v4864 = vld [vmem:[%s1 + $0x64] sm:$0xf]
    %v4865 = vld [vmem:[%s1 + $0x68] sm:$0xf]
    %v4866 = vld [vmem:[%s1 + $0x6c] sm:$0xf]
    %v4867 = vld [vmem:[%s1 + $0x70] sm:$0xf]
    %v4868 = vld [vmem:[%s1 + $0x74] sm:$0xf]
    %v4869 = vld [vmem:[%s1 + $0x78] sm:$0xf]
    %v4870 = vld [vmem:[%s1 + $0x7c] sm:$0xf]
    %v4871 = vld [vmem:[%s1 + $0x80] sm:$0xf]
    %v4872 = vld [vmem:[%s1 + $0x84] sm:$0xf]
    %v4873 = vld [vmem:[%s1 + $0x88] sm:$0xf]
    %v4874 = vld [vmem:[%s1 + $0x8c] sm:$0xf]
    %v4875 = vld [vmem:[%s1 + $0x90] sm:$0xf]
    %v4876 = vld [vmem:[%s1 + $0x94] sm:$0xf]
    %v4877 = vld [vmem:[%s1 + $0x98] sm:$0xf]
    %v4878 = vld [vmem:[%s1 + $0x9c] sm:$0xf]
    %v4879 = vld [vmem:[%s1 + $0xa0] sm:$0xf]
    %v4880 = vld [vmem:[%s1 + $0xa4] sm:$0xf]
    %v4881 = vld [vmem:[%s1 + $0xa8] sm:$0xf]
    %v4882 = vld [vmem:[%s1 + $0xac] sm:$0xf]
    %v4883 = vld [vmem:[%s1 + $0xb0] sm:$0xf]
    %v4884 = vld [vmem:[%s1 + $0xb4] sm:$0xf]
    %v4885 = vld [vmem:[%s1 + $0xb8] sm:$0xf]
    %v4886 = vld [vmem:[%s1 + $0xbc] sm:$0xf]
    %v4887 = vld [vmem:[%s1 + $0xc0] sm:$0xf]
    %v4888 = vld [vmem:[%s1 + $0xc4] sm:$0xf]
    %v4889 = vld [vmem:[%s1 + $0xc8] sm:$0xf]
    %v4890 = vld [vmem:[%s1 + $0xcc] sm:$0xf]
    %v4891 = vld [vmem:[%s1 + $0xd0] sm:$0xf]
    %v4892 = vld [vmem:[%s1 + $0xd4] sm:$0xf]
    %v4893 = vld [vmem:[%s1 + $0xd8] sm:$0xf]
    %v4894 = vld [vmem:[%s1 + $0xdc] sm:$0xf]
    %v4895 = vld [vmem:[%s1 + $0xe0] sm:$0xf]
    %v4896 = vld [vmem:[%s1 + $0xe4] sm:$0xf]
    %v4897 = vld [vmem:[%s1 + $0xe8] sm:$0xf]
    %v4898 = vld [vmem:[%s1 + $0xec] sm:$0xf]
    %v4899 = vld [vmem:[%s1 + $0xf0] sm:$0xf]
    %v4900 = vld [vmem:[%s1 + $0xf4] sm:$0xf]
    %v4901 = vld [vmem:[%s1 + $0xf8] sm:$0xf]
    %v4902 = vld [vmem:[%s1 + $0xfc] sm:$0xf]
    %v4903 = vld [vmem:[%s1 + $0x100] sm:$0xf]
    %v4904 = vld [vmem:[%s1 + $0x104] sm:$0xf]
    %v4905 = vld [vmem:[%s1 + $0x108] sm:$0xf]
    %v4906 = vld [vmem:[%s1 + $0x10c] sm:$0xf]
    %v4907 = vld [vmem:[%s1 + $0x110] sm:$0xf]
    %v4908 = vld [vmem:[%s1 + $0x114] sm:$0xf]
    %v4909 = vld [vmem:[%s1 + $0x118] sm:$0xf]
    %v4910 = vld [vmem:[%s1 + $0x11c] sm:$0xf]
    %v4911 = vld [vmem:[%s1 + $0x120] sm:$0xf]
    %v4912 = vld [vmem:[%s1 + $0x124] sm:$0xf]
    %v4913 = vld [vmem:[%s1 + $0x128] sm:$0xf]
    %v4914 = vld [vmem:[%s1 + $0x12c] sm:$0xf]
    %v4915 = vld [vmem:[%s1 + $0x130] sm:$0xf]
    %v4916 = vld [vmem:[%s1 + $0x134] sm:$0xf]
    %v4917 = vld [vmem:[%s1 + $0x138] sm:$0xf]
    %v4918 = vld [vmem:[%s1 + $0x13c] sm:$0xf]
    %v4919 = vld [vmem:[%s1 + $0x140] sm:$0xf]
    %v4920 = vld [vmem:[%s1 + $0x144] sm:$0xf]
    %v4921 = vld [vmem:[%s1 + $0x148] sm:$0xf]
    %v4922 = vld [vmem:[%s1 + $0x14c] sm:$0xf]
    %v4923 = vld [vmem:[%s1 + $0x150] sm:$0xf]
    %v4924 = vld [vmem:[%s1 + $0x154] sm:$0xf]
    %v4925 = vld [vmem:[%s1 + $0x158] sm:$0xf]
    %v4926 = vld [vmem:[%s1 + $0x15c] sm:$0xf]
    %v4927 = vld [vmem:[%s1 + $0x160] sm:$0xf]
    %v4928 = vld [vmem:[%s1 + $0x164] sm:$0xf]
    %v4929 = vld [vmem:[%s1 + $0x168] sm:$0xf]
    %v4930 = vld [vmem:[%s1 + $0x16c] sm:$0xf]
    %v4931 = vld [vmem:[%s1 + $0x170] sm:$0xf]
    %v4932 = vld [vmem:[%s1 + $0x174] sm:$0xf]
    %v4933 = vld [vmem:[%s1 + $0x178] sm:$0xf]
    %v4934 = vld [vmem:[%s1 + $0x17c] sm:$0xf]
    %v4935 = vld [vmem:[%s1 + $0x180] sm:$0xf]
    %v4936 = vld [vmem:[%s1 + $0x184] sm:$0xf]
    %v4937 = vld [vmem:[%s1 + $0x188] sm:$0xf]
    %v4938 = vld [vmem:[%s1 + $0x18c] sm:$0xf]
    %v4939 = vld [vmem:[%s1 + $0x190] sm:$0xf]
    %v4940 = vld [vmem:[%s1 + $0x194] sm:$0xf]
    %v4941 = vld [vmem:[%s1 + $0x198] sm:$0xf]
    %v4942 = vld [vmem:[%s1 + $0x19c] sm:$0xf]
    %v4943 = vld [vmem:[%s1 + $0x1a0] sm:$0xf]
    %v4944 = vld [vmem:[%s1 + $0x1a4] sm:$0xf]
    %v4945 = vld [vmem:[%s1 + $0x1a8] sm:$0xf]
    %v4946 = vld [vmem:[%s1 + $0x1ac] sm:$0xf]
    %v4947 = vld [vmem:[%s1 + $0x1b0] sm:$0xf]
    %v4948 = vld [vmem:[%s1 + $0x1b4] sm:$0xf]
    %v4949 = vld [vmem:[%s1 + $0x1b8] sm:$0xf]
    %v4950 = vld [vmem:[%s1 + $0x1bc] sm:$0xf]
    %v4951 = vld [vmem:[%s1 + $0x1c0] sm:$0xf]
    %v4952 = vld [vmem:[%s1 + $0x1c4] sm:$0xf]
    %v4953 = vld [vmem:[%s1 + $0x1c8] sm:$0xf]
    %v4954 = vld [vmem:[%s1 + $0x1cc] sm:$0xf]
    %v4955 = vld [vmem:[%s1 + $0x1d0] sm:$0xf]
    %v4956 = vld [vmem:[%s1 + $0x1d4] sm:$0xf]
    %v4957 = vld [vmem:[%s1 + $0x1d8] sm:$0xf]
    %v4958 = vld [vmem:[%s1 + $0x1dc] sm:$0xf]
    %v4959 = vld [vmem:[%s1 + $0x1e0] sm:$0xf]
    %v4960 = vld [vmem:[%s1 + $0x1e4] sm:$0xf]
    %v4961 = vld [vmem:[%s1 + $0x1e8] sm:$0xf]
    %v4962 = vld [vmem:[%s1 + $0x1ec] sm:$0xf]
    %v4963 = vld [vmem:[%s1 + $0x1f0] sm:$0xf]
    %v4964 = vld [vmem:[%s1 + $0x1f4] sm:$0xf]
    %v4965 = vld [vmem:[%s1 + $0x1f8] sm:$0xf]
    %v4966 = vld [vmem:[%s1 + $0x1fc] sm:$0xf]
    %v4967 = vunpack.c.l.bf16 %v4839
    %v4968 = vunpack.c.l.bf16 %v4840
    %v4969 = vunpack.c.l.bf16 %v4841
    %v4970 = vunpack.c.l.bf16 %v4842
    %v4971 = vunpack.c.l.bf16 %v4843
    %v4972 = vunpack.c.l.bf16 %v4844
    %v4973 = vunpack.c.l.bf16 %v4845
    %v4974 = vunpack.c.l.bf16 %v4846
    %v4975 = vunpack.c.l.bf16 %v4847
    %v4976 = vunpack.c.l.bf16 %v4848
    %v4977 = vunpack.c.l.bf16 %v4849
    %v4978 = vunpack.c.l.bf16 %v4850
    %v4979 = vunpack.c.l.bf16 %v4851
    %v4980 = vunpack.c.l.bf16 %v4852
    %v4981 = vunpack.c.l.bf16 %v4853
    %v4982 = vunpack.c.l.bf16 %v4854
    %v4983 = vunpack.c.l.bf16 %v4855
    %v4984 = vunpack.c.l.bf16 %v4856
    %v4985 = vunpack.c.l.bf16 %v4857
    %v4986 = vunpack.c.l.bf16 %v4858
    %v4987 = vunpack.c.l.bf16 %v4859
    %v4988 = vunpack.c.l.bf16 %v4860
    %v4989 = vunpack.c.l.bf16 %v4861
    %v4990 = vunpack.c.l.bf16 %v4862
    %v4991 = vunpack.c.l.bf16 %v4863
    %v4992 = vunpack.c.l.bf16 %v4864
    %v4993 = vunpack.c.l.bf16 %v4865
    %v4994 = vunpack.c.l.bf16 %v4866
    %v4995 = vunpack.c.l.bf16 %v4867
    %v4996 = vunpack.c.l.bf16 %v4868
    %v4997 = vunpack.c.l.bf16 %v4869
    %v4998 = vunpack.c.l.bf16 %v4870
    %v4999 = vunpack.c.l.bf16 %v4871
    %v5000 = vunpack.c.l.bf16 %v4872
    %v5001 = vunpack.c.l.bf16 %v4873
    %v5002 = vunpack.c.l.bf16 %v4874
    %v5003 = vunpack.c.l.bf16 %v4875
    %v5004 = vunpack.c.l.bf16 %v4876
    %v5005 = vunpack.c.l.bf16 %v4877
    %v5006 = vunpack.c.l.bf16 %v4878
    %v5007 = vunpack.c.l.bf16 %v4879
    %v5008 = vunpack.c.l.bf16 %v4880
    %v5009 = vunpack.c.l.bf16 %v4881
    %v5010 = vunpack.c.l.bf16 %v4882
    %v5011 = vunpack.c.l.bf16 %v4883
    %v5012 = vunpack.c.l.bf16 %v4884
    %v5013 = vunpack.c.l.bf16 %v4885
    %v5014 = vunpack.c.l.bf16 %v4886
    %v5015 = vunpack.c.l.bf16 %v4887
    %v5016 = vunpack.c.l.bf16 %v4888
    %v5017 = vunpack.c.l.bf16 %v4889
    %v5018 = vunpack.c.l.bf16 %v4890
    %v5019 = vunpack.c.l.bf16 %v4891
    %v5020 = vunpack.c.l.bf16 %v4892
    %v5021 = vunpack.c.l.bf16 %v4893
    %v5022 = vunpack.c.l.bf16 %v4894
    %v5023 = vunpack.c.l.bf16 %v4895
    %v5024 = vunpack.c.l.bf16 %v4896
    %v5025 = vunpack.c.l.bf16 %v4897
    %v5026 = vunpack.c.l.bf16 %v4898
    %v5027 = vunpack.c.l.bf16 %v4899
    %v5028 = vunpack.c.l.bf16 %v4900
    %v5029 = vunpack.c.l.bf16 %v4901
    %v5030 = vunpack.c.l.bf16 %v4902
    %v5031 = vunpack.c.l.bf16 %v4903
    %v5032 = vunpack.c.l.bf16 %v4904
    %v5033 = vunpack.c.l.bf16 %v4905
    %v5034 = vunpack.c.l.bf16 %v4906
    %v5035 = vunpack.c.l.bf16 %v4907
    %v5036 = vunpack.c.l.bf16 %v4908
    %v5037 = vunpack.c.l.bf16 %v4909
    %v5038 = vunpack.c.l.bf16 %v4910
    %v5039 = vunpack.c.l.bf16 %v4911
    %v5040 = vunpack.c.l.bf16 %v4912
    %v5041 = vunpack.c.l.bf16 %v4913
    %v5042 = vunpack.c.l.bf16 %v4914
    %v5043 = vunpack.c.l.bf16 %v4915
    %v5044 = vunpack.c.l.bf16 %v4916
    %v5045 = vunpack.c.l.bf16 %v4917
    %v5046 = vunpack.c.l.bf16 %v4918
    %v5047 = vunpack.c.l.bf16 %v4919
    %v5048 = vunpack.c.l.bf16 %v4920
    %v5049 = vunpack.c.l.bf16 %v4921
    %v5050 = vunpack.c.l.bf16 %v4922
    %v5051 = vunpack.c.l.bf16 %v4923
    %v5052 = vunpack.c.l.bf16 %v4924
    %v5053 = vunpack.c.l.bf16 %v4925
    %v5054 = vunpack.c.l.bf16 %v4926
    %v5055 = vunpack.c.l.bf16 %v4927
    %v5056 = vunpack.c.l.bf16 %v4928
    %v5057 = vunpack.c.l.bf16 %v4929
    %v5058 = vunpack.c.l.bf16 %v4930
    %v5059 = vunpack.c.l.bf16 %v4931
    %v5060 = vunpack.c.l.bf16 %v4932
    %v5061 = vunpack.c.l.bf16 %v4933
    %v5062 = vunpack.c.l.bf16 %v4934
    %v5063 = vunpack.c.l.bf16 %v4935
    %v5064 = vunpack.c.l.bf16 %v4936
    %v5065 = vunpack.c.l.bf16 %v4937
    %v5066 = vunpack.c.l.bf16 %v4938
    %v5067 = vunpack.c.l.bf16 %v4939
    %v5068 = vunpack.c.l.bf16 %v4940
    %v5069 = vunpack.c.l.bf16 %v4941
    %v5070 = vunpack.c.l.bf16 %v4942
    %v5071 = vunpack.c.l.bf16 %v4943
    %v5072 = vunpack.c.l.bf16 %v4944
    %v5073 = vunpack.c.l.bf16 %v4945
    %v5074 = vunpack.c.l.bf16 %v4946
    %v5075 = vunpack.c.l.bf16 %v4947
    %v5076 = vunpack.c.l.bf16 %v4948
    %v5077 = vunpack.c.l.bf16 %v4949
    %v5078 = vunpack.c.l.bf16 %v4950
    %v5079 = vunpack.c.l.bf16 %v4951
    %v5080 = vunpack.c.l.bf16 %v4952
    %v5081 = vunpack.c.l.bf16 %v4953
    %v5082 = vunpack.c.l.bf16 %v4954
    %v5083 = vunpack.c.l.bf16 %v4955
    %v5084 = vunpack.c.l.bf16 %v4956
    %v5085 = vunpack.c.l.bf16 %v4957
    %v5086 = vunpack.c.l.bf16 %v4958
    %v5087 = vunpack.c.l.bf16 %v4959
    %v5088 = vunpack.c.l.bf16 %v4960
    %v5089 = vunpack.c.l.bf16 %v4961
    %v5090 = vunpack.c.l.bf16 %v4962
    %v5091 = vunpack.c.l.bf16 %v4963
    %v5092 = vunpack.c.l.bf16 %v4964
    %v5093 = vunpack.c.l.bf16 %v4965
    %v5094 = vunpack.c.l.bf16 %v4966
    %v5095 = vmul.f32 %v4967, %v4967
    %v5096 = vmul.f32 %v4968, %v4968
    %v5097 = vmul.f32 %v4969, %v4969
    %v5098 = vmul.f32 %v4970, %v4970
    %v5099 = vmul.f32 %v4971, %v4971
    %v5100 = vmul.f32 %v4972, %v4972
    %v5101 = vmul.f32 %v4973, %v4973
    %v5102 = vmul.f32 %v4974, %v4974
    %v5103 = vmul.f32 %v4975, %v4975
    %v5104 = vmul.f32 %v4976, %v4976
    %v5105 = vmul.f32 %v4977, %v4977
    %v5106 = vmul.f32 %v4978, %v4978
    %v5107 = vmul.f32 %v4979, %v4979
    %v5108 = vmul.f32 %v4980, %v4980
    %v5109 = vmul.f32 %v4981, %v4981
    %v5110 = vmul.f32 %v4982, %v4982
    %v5111 = vmul.f32 %v4983, %v4983
    %v5112 = vmul.f32 %v4984, %v4984
    %v5113 = vmul.f32 %v4985, %v4985
    %v5114 = vmul.f32 %v4986, %v4986
    %v5115 = vmul.f32 %v4987, %v4987
    %v5116 = vmul.f32 %v4988, %v4988
    %v5117 = vmul.f32 %v4989, %v4989
    %v5118 = vmul.f32 %v4990, %v4990
    %v5119 = vmul.f32 %v4991, %v4991
    %v5120 = vmul.f32 %v4992, %v4992
    %v5121 = vmul.f32 %v4993, %v4993
    %v5122 = vmul.f32 %v4994, %v4994
    %v5123 = vmul.f32 %v4995, %v4995
    %v5124 = vmul.f32 %v4996, %v4996
    %v5125 = vmul.f32 %v4997, %v4997
    %v5126 = vmul.f32 %v4998, %v4998
    %v5127 = vmul.f32 %v4999, %v4999
    %v5128 = vmul.f32 %v5000, %v5000
    %v5129 = vmul.f32 %v5001, %v5001
    %v5130 = vmul.f32 %v5002, %v5002
    %v5131 = vmul.f32 %v5003, %v5003
    %v5132 = vmul.f32 %v5004, %v5004
    %v5133 = vmul.f32 %v5005, %v5005
    %v5134 = vmul.f32 %v5006, %v5006
    %v5135 = vmul.f32 %v5007, %v5007
    %v5136 = vmul.f32 %v5008, %v5008
    %v5137 = vmul.f32 %v5009, %v5009
    %v5138 = vmul.f32 %v5010, %v5010
    %v5139 = vmul.f32 %v5011, %v5011
    %v5140 = vmul.f32 %v5012, %v5012
    %v5141 = vmul.f32 %v5013, %v5013
    %v5142 = vmul.f32 %v5014, %v5014
    %v5143 = vmul.f32 %v5015, %v5015
    %v5144 = vmul.f32 %v5016, %v5016
    %v5145 = vmul.f32 %v5017, %v5017
    %v5146 = vmul.f32 %v5018, %v5018
    %v5147 = vmul.f32 %v5019, %v5019
    %v5148 = vmul.f32 %v5020, %v5020
    %v5149 = vmul.f32 %v5021, %v5021
    %v5150 = vmul.f32 %v5022, %v5022
    %v5151 = vmul.f32 %v5023, %v5023
    %v5152 = vmul.f32 %v5024, %v5024
    %v5153 = vmul.f32 %v5025, %v5025
    %v5154 = vmul.f32 %v5026, %v5026
    %v5155 = vmul.f32 %v5027, %v5027
    %v5156 = vmul.f32 %v5028, %v5028
    %v5157 = vmul.f32 %v5029, %v5029
    %v5158 = vmul.f32 %v5030, %v5030
    %v5159 = vmul.f32 %v5031, %v5031
    %v5160 = vmul.f32 %v5032, %v5032
    %v5161 = vmul.f32 %v5033, %v5033
    %v5162 = vmul.f32 %v5034, %v5034
    %v5163 = vmul.f32 %v5035, %v5035
    %v5164 = vmul.f32 %v5036, %v5036
    %v5165 = vmul.f32 %v5037, %v5037
    %v5166 = vmul.f32 %v5038, %v5038
    %v5167 = vmul.f32 %v5039, %v5039
    %v5168 = vmul.f32 %v5040, %v5040
    %v5169 = vmul.f32 %v5041, %v5041
    %v5170 = vmul.f32 %v5042, %v5042
    %v5171 = vmul.f32 %v5043, %v5043
    %v5172 = vmul.f32 %v5044, %v5044
    %v5173 = vmul.f32 %v5045, %v5045
    %v5174 = vmul.f32 %v5046, %v5046
    %v5175 = vmul.f32 %v5047, %v5047
    %v5176 = vmul.f32 %v5048, %v5048
    %v5177 = vmul.f32 %v5049, %v5049
    %v5178 = vmul.f32 %v5050, %v5050
    %v5179 = vmul.f32 %v5051, %v5051
    %v5180 = vmul.f32 %v5052, %v5052
    %v5181 = vmul.f32 %v5053, %v5053
    %v5182 = vmul.f32 %v5054, %v5054
    %v5183 = vmul.f32 %v5055, %v5055
    %v5184 = vmul.f32 %v5056, %v5056
    %v5185 = vmul.f32 %v5057, %v5057
    %v5186 = vmul.f32 %v5058, %v5058
    %v5187 = vmul.f32 %v5059, %v5059
    %v5188 = vmul.f32 %v5060, %v5060
    %v5189 = vmul.f32 %v5061, %v5061
    %v5190 = vmul.f32 %v5062, %v5062
    %v5191 = vmul.f32 %v5063, %v5063
    %v5192 = vmul.f32 %v5064, %v5064
    %v5193 = vmul.f32 %v5065, %v5065
    %v5194 = vmul.f32 %v5066, %v5066
    %v5195 = vmul.f32 %v5067, %v5067
    %v5196 = vmul.f32 %v5068, %v5068
    %v5197 = vmul.f32 %v5069, %v5069
    %v5198 = vmul.f32 %v5070, %v5070
    %v5199 = vmul.f32 %v5071, %v5071
    %v5200 = vmul.f32 %v5072, %v5072
    %v5201 = vmul.f32 %v5073, %v5073
    %v5202 = vmul.f32 %v5074, %v5074
    %v5203 = vmul.f32 %v5075, %v5075
    %v5204 = vmul.f32 %v5076, %v5076
    %v5205 = vmul.f32 %v5077, %v5077
    %v5206 = vmul.f32 %v5078, %v5078
    %v5207 = vmul.f32 %v5079, %v5079
    %v5208 = vmul.f32 %v5080, %v5080
    %v5209 = vmul.f32 %v5081, %v5081
    %v5210 = vmul.f32 %v5082, %v5082
    %v5211 = vmul.f32 %v5083, %v5083
    %v5212 = vmul.f32 %v5084, %v5084
    %v5213 = vmul.f32 %v5085, %v5085
    %v5214 = vmul.f32 %v5086, %v5086
    %v5215 = vmul.f32 %v5087, %v5087
    %v5216 = vmul.f32 %v5088, %v5088
    %v5217 = vmul.f32 %v5089, %v5089
    %v5218 = vmul.f32 %v5090, %v5090
    %v5219 = vmul.f32 %v5091, %v5091
    %v5220 = vmul.f32 %v5092, %v5092
    %v5221 = vmul.f32 %v5093, %v5093
    %v5222 = vmul.f32 %v5094, %v5094
    %v5223 = vmul.f32 %v4967, %v4329
    %v5224 = vmul.f32 %v4968, %v4332
    %v5225 = vmul.f32 %v4969, %v4337
    %v5226 = vmul.f32 %v4970, %v4340
    %v5227 = vmul.f32 %v4971, %v4345
    %v5228 = vmul.f32 %v4972, %v4348
    %v5229 = vmul.f32 %v4973, %v4353
    %v5230 = vmul.f32 %v4974, %v4356
    %v5231 = vmul.f32 %v4975, %v4361
    %v5232 = vmul.f32 %v4976, %v4364
    %v5233 = vmul.f32 %v4977, %v4369
    %v5234 = vmul.f32 %v4978, %v4372
    %v5235 = vmul.f32 %v4979, %v4377
    %v5236 = vmul.f32 %v4980, %v4380
    %v5237 = vmul.f32 %v4981, %v4385
    %v5238 = vmul.f32 %v4982, %v4388
    %v5239 = vmul.f32 %v4983, %v4393
    %v5240 = vmul.f32 %v4984, %v4396
    %v5241 = vmul.f32 %v4985, %v4401
    %v5242 = vmul.f32 %v4986, %v4404
    %v5243 = vmul.f32 %v4987, %v4409
    %v5244 = vmul.f32 %v4988, %v4412
    %v5245 = vmul.f32 %v4989, %v4417
    %v5246 = vmul.f32 %v4990, %v4420
    %v5247 = vmul.f32 %v4991, %v4425
    %v5248 = vmul.f32 %v4992, %v4428
    %v5249 = vmul.f32 %v4993, %v4433
    %v5250 = vmul.f32 %v4994, %v4436
    %v5251 = vmul.f32 %v4995, %v4441
    %v5252 = vmul.f32 %v4996, %v4444
    %v5253 = vmul.f32 %v4997, %v4449
    %v5254 = vmul.f32 %v4998, %v4452
    %v5255 = vmul.f32 %v4999, %v4457
    %v5256 = vmul.f32 %v5000, %v4460
    %v5257 = vmul.f32 %v5001, %v4465
    %v5258 = vmul.f32 %v5002, %v4468
    %v5259 = vmul.f32 %v5003, %v4473
    %v5260 = vmul.f32 %v5004, %v4476
    %v5261 = vmul.f32 %v5005, %v4481
    %v5262 = vmul.f32 %v5006, %v4484
    %v5263 = vmul.f32 %v5007, %v4489
    %v5264 = vmul.f32 %v5008, %v4492
    %v5265 = vmul.f32 %v5009, %v4497
    %v5266 = vmul.f32 %v5010, %v4500
    %v5267 = vmul.f32 %v5011, %v4505
    %v5268 = vmul.f32 %v5012, %v4508
    %v5269 = vmul.f32 %v5013, %v4513
    %v5270 = vmul.f32 %v5014, %v4516
    %v5271 = vmul.f32 %v5015, %v4521
    %v5272 = vmul.f32 %v5016, %v4524
    %v5273 = vmul.f32 %v5017, %v4529
    %v5274 = vmul.f32 %v5018, %v4532
    %v5275 = vmul.f32 %v5019, %v4537
    %v5276 = vmul.f32 %v5020, %v4540
    %v5277 = vmul.f32 %v5021, %v4545
    %v5278 = vmul.f32 %v5022, %v4548
    %v5279 = vmul.f32 %v5023, %v4553
    %v5280 = vmul.f32 %v5024, %v4556
    %v5281 = vmul.f32 %v5025, %v4561
    %v5282 = vmul.f32 %v5026, %v4564
    %v5283 = vmul.f32 %v5027, %v4569
    %v5284 = vmul.f32 %v5028, %v4572
    %v5285 = vmul.f32 %v5029, %v4577
    %v5286 = vmul.f32 %v5030, %v4580
    %v5287 = vmul.f32 %v5031, %v4585
    %v5288 = vmul.f32 %v5032, %v4588
    %v5289 = vmul.f32 %v5033, %v4593
    %v5290 = vmul.f32 %v5034, %v4596
    %v5291 = vmul.f32 %v5035, %v4601
    %v5292 = vmul.f32 %v5036, %v4604
    %v5293 = vmul.f32 %v5037, %v4609
    %v5294 = vmul.f32 %v5038, %v4612
    %v5295 = vmul.f32 %v5039, %v4617
    %v5296 = vmul.f32 %v5040, %v4620
    %v5297 = vmul.f32 %v5041, %v4625
    %v5298 = vmul.f32 %v5042, %v4628
    %v5299 = vmul.f32 %v5043, %v4633
    %v5300 = vmul.f32 %v5044, %v4636
    %v5301 = vmul.f32 %v5045, %v4641
    %v5302 = vmul.f32 %v5046, %v4644
    %v5303 = vmul.f32 %v5047, %v4649
    %v5304 = vmul.f32 %v5048, %v4652
    %v5305 = vmul.f32 %v5049, %v4657
    %v5306 = vmul.f32 %v5050, %v4660
    %v5307 = vmul.f32 %v5051, %v4665
    %v5308 = vmul.f32 %v5052, %v4668
    %v5309 = vmul.f32 %v5053, %v4673
    %v5310 = vmul.f32 %v5054, %v4676
    %v5311 = vmul.f32 %v5055, %v4681
    %v5312 = vmul.f32 %v5056, %v4684
    %v5313 = vmul.f32 %v5057, %v4689
    %v5314 = vmul.f32 %v5058, %v4692
    %v5315 = vmul.f32 %v5059, %v4697
    %v5316 = vmul.f32 %v5060, %v4700
    %v5317 = vmul.f32 %v5061, %v4705
    %v5318 = vmul.f32 %v5062, %v4708
    %v5319 = vmul.f32 %v5063, %v4713
    %v5320 = vmul.f32 %v5064, %v4716
    %v5321 = vmul.f32 %v5065, %v4721
    %v5322 = vmul.f32 %v5066, %v4724
    %v5323 = vmul.f32 %v5067, %v4729
    %v5324 = vmul.f32 %v5068, %v4732
    %v5325 = vmul.f32 %v5069, %v4737
    %v5326 = vmul.f32 %v5070, %v4740
    %v5327 = vmul.f32 %v5071, %v4745
    %v5328 = vmul.f32 %v5072, %v4748
    %v5329 = vmul.f32 %v5073, %v4753
    %v5330 = vmul.f32 %v5074, %v4756
    %v5331 = vmul.f32 %v5075, %v4761
    %v5332 = vmul.f32 %v5076, %v4764
    %v5333 = vmul.f32 %v5077, %v4769
    %v5334 = vmul.f32 %v5078, %v4772
    %v5335 = vmul.f32 %v5079, %v4777
    %v5336 = vmul.f32 %v5080, %v4780
    %v5337 = vmul.f32 %v5081, %v4785
    %v5338 = vmul.f32 %v5082, %v4788
    %v5339 = vmul.f32 %v5083, %v4793
    %v5340 = vmul.f32 %v5084, %v4796
    %v5341 = vmul.f32 %v5085, %v4801
    %v5342 = vmul.f32 %v5086, %v4804
    %v5343 = vmul.f32 %v5087, %v4809
    %v5344 = vmul.f32 %v5088, %v4812
    %v5345 = vmul.f32 %v5089, %v4817
    %v5346 = vmul.f32 %v5090, %v4820
    %v5347 = vmul.f32 %v5091, %v4825
    %v5348 = vmul.f32 %v5092, %v4828
    %v5349 = vmul.f32 %v5093, %v4833
    %v5350 = vmul.f32 %v5094, %v4836
    %v5351 = vmax.f32 %v5223, 0.0
    %v5352 = vmax.f32 %v5224, 0.0
    %v5353 = vmax.f32 %v5225, 0.0
    %v5354 = vmax.f32 %v5226, 0.0
    %v5355 = vmax.f32 %v5227, 0.0
    %v5356 = vmax.f32 %v5228, 0.0
    %v5357 = vmax.f32 %v5229, 0.0
    %v5358 = vmax.f32 %v5230, 0.0
    %v5359 = vmax.f32 %v5231, 0.0
    %v5360 = vmax.f32 %v5232, 0.0
    %v5361 = vmax.f32 %v5233, 0.0
    %v5362 = vmax.f32 %v5234, 0.0
    %v5363 = vmax.f32 %v5235, 0.0
    %v5364 = vmax.f32 %v5236, 0.0
    %v5365 = vmax.f32 %v5237, 0.0
    %v5366 = vmax.f32 %v5238, 0.0
    %v5367 = vmax.f32 %v5239, 0.0
    %v5368 = vmax.f32 %v5240, 0.0
    %v5369 = vmax.f32 %v5241, 0.0
    %v5370 = vmax.f32 %v5242, 0.0
    %v5371 = vmax.f32 %v5243, 0.0
    %v5372 = vmax.f32 %v5244, 0.0
    %v5373 = vmax.f32 %v5245, 0.0
    %v5374 = vmax.f32 %v5246, 0.0
    %v5375 = vmax.f32 %v5247, 0.0
    %v5376 = vmax.f32 %v5248, 0.0
    %v5377 = vmax.f32 %v5249, 0.0
    %v5378 = vmax.f32 %v5250, 0.0
    %v5379 = vmax.f32 %v5251, 0.0
    %v5380 = vmax.f32 %v5252, 0.0
    %v5381 = vmax.f32 %v5253, 0.0
    %v5382 = vmax.f32 %v5254, 0.0
    %v5383 = vmax.f32 %v5255, 0.0
    %v5384 = vmax.f32 %v5256, 0.0
    %v5385 = vmax.f32 %v5257, 0.0
    %v5386 = vmax.f32 %v5258, 0.0
    %v5387 = vmax.f32 %v5259, 0.0
    %v5388 = vmax.f32 %v5260, 0.0
    %v5389 = vmax.f32 %v5261, 0.0
    %v5390 = vmax.f32 %v5262, 0.0
    %v5391 = vmax.f32 %v5263, 0.0
    %v5392 = vmax.f32 %v5264, 0.0
    %v5393 = vmax.f32 %v5265, 0.0
    %v5394 = vmax.f32 %v5266, 0.0
    %v5395 = vmax.f32 %v5267, 0.0
    %v5396 = vmax.f32 %v5268, 0.0
    %v5397 = vmax.f32 %v5269, 0.0
    %v5398 = vmax.f32 %v5270, 0.0
    %v5399 = vmax.f32 %v5271, 0.0
    %v5400 = vmax.f32 %v5272, 0.0
    %v5401 = vmax.f32 %v5273, 0.0
    %v5402 = vmax.f32 %v5274, 0.0
    %v5403 = vmax.f32 %v5275, 0.0
    %v5404 = vmax.f32 %v5276, 0.0
    %v5405 = vmax.f32 %v5277, 0.0
    %v5406 = vmax.f32 %v5278, 0.0
    %v5407 = vmax.f32 %v5279, 0.0
    %v5408 = vmax.f32 %v5280, 0.0
    %v5409 = vmax.f32 %v5281, 0.0
    %v5410 = vmax.f32 %v5282, 0.0
    %v5411 = vmax.f32 %v5283, 0.0
    %v5412 = vmax.f32 %v5284, 0.0
    %v5413 = vmax.f32 %v5285, 0.0
    %v5414 = vmax.f32 %v5286, 0.0
    %v5415 = vmax.f32 %v5287, 0.0
    %v5416 = vmax.f32 %v5288, 0.0
    %v5417 = vmax.f32 %v5289, 0.0
    %v5418 = vmax.f32 %v5290, 0.0
    %v5419 = vmax.f32 %v5291, 0.0
    %v5420 = vmax.f32 %v5292, 0.0
    %v5421 = vmax.f32 %v5293, 0.0
    %v5422 = vmax.f32 %v5294, 0.0
    %v5423 = vmax.f32 %v5295, 0.0
    %v5424 = vmax.f32 %v5296, 0.0
    %v5425 = vmax.f32 %v5297, 0.0
    %v5426 = vmax.f32 %v5298, 0.0
    %v5427 = vmax.f32 %v5299, 0.0
    %v5428 = vmax.f32 %v5300, 0.0
    %v5429 = vmax.f32 %v5301, 0.0
    %v5430 = vmax.f32 %v5302, 0.0
    %v5431 = vmax.f32 %v5303, 0.0
    %v5432 = vmax.f32 %v5304, 0.0
    %v5433 = vmax.f32 %v5305, 0.0
    %v5434 = vmax.f32 %v5306, 0.0
    %v5435 = vmax.f32 %v5307, 0.0
    %v5436 = vmax.f32 %v5308, 0.0
    %v5437 = vmax.f32 %v5309, 0.0
    %v5438 = vmax.f32 %v5310, 0.0
    %v5439 = vmax.f32 %v5311, 0.0
    %v5440 = vmax.f32 %v5312, 0.0
    %v5441 = vmax.f32 %v5313, 0.0
    %v5442 = vmax.f32 %v5314, 0.0
    %v5443 = vmax.f32 %v5315, 0.0
    %v5444 = vmax.f32 %v5316, 0.0
    %v5445 = vmax.f32 %v5317, 0.0
    %v5446 = vmax.f32 %v5318, 0.0
    %v5447 = vmax.f32 %v5319, 0.0
    %v5448 = vmax.f32 %v5320, 0.0
    %v5449 = vmax.f32 %v5321, 0.0
    %v5450 = vmax.f32 %v5322, 0.0
    %v5451 = vmax.f32 %v5323, 0.0
    %v5452 = vmax.f32 %v5324, 0.0
    %v5453 = vmax.f32 %v5325, 0.0
    %v5454 = vmax.f32 %v5326, 0.0
    %v5455 = vmax.f32 %v5327, 0.0
    %v5456 = vmax.f32 %v5328, 0.0
    %v5457 = vmax.f32 %v5329, 0.0
    %v5458 = vmax.f32 %v5330, 0.0
    %v5459 = vmax.f32 %v5331, 0.0
    %v5460 = vmax.f32 %v5332, 0.0
    %v5461 = vmax.f32 %v5333, 0.0
    %v5462 = vmax.f32 %v5334, 0.0
    %v5463 = vmax.f32 %v5335, 0.0
    %v5464 = vmax.f32 %v5336, 0.0
    %v5465 = vmax.f32 %v5337, 0.0
    %v5466 = vmax.f32 %v5338, 0.0
    %v5467 = vmax.f32 %v5339, 0.0
    %v5468 = vmax.f32 %v5340, 0.0
    %v5469 = vmax.f32 %v5341, 0.0
    %v5470 = vmax.f32 %v5342, 0.0
    %v5471 = vmax.f32 %v5343, 0.0
    %v5472 = vmax.f32 %v5344, 0.0
    %v5473 = vmax.f32 %v5345, 0.0
    %v5474 = vmax.f32 %v5346, 0.0
    %v5475 = vmax.f32 %v5347, 0.0
    %v5476 = vmax.f32 %v5348, 0.0
    %v5477 = vmax.f32 %v5349, 0.0
    %v5478 = vmax.f32 %v5350, 0.0
    %v5479 = vand.u32 2147483647, %v5223
    %v5480 = vand.u32 2147483647, %v5224
    %v5481 = vand.u32 2147483647, %v5225
    %v5482 = vand.u32 2147483647, %v5226
    %v5483 = vand.u32 2147483647, %v5227
    %v5484 = vand.u32 2147483647, %v5228
    %v5485 = vand.u32 2147483647, %v5229
    %v5486 = vand.u32 2147483647, %v5230
    %v5487 = vand.u32 2147483647, %v5231
    %v5488 = vand.u32 2147483647, %v5232
    %v5489 = vand.u32 2147483647, %v5233
    %v5490 = vand.u32 2147483647, %v5234
    %v5491 = vand.u32 2147483647, %v5235
    %v5492 = vand.u32 2147483647, %v5236
    %v5493 = vand.u32 2147483647, %v5237
    %v5494 = vand.u32 2147483647, %v5238
    %v5495 = vand.u32 2147483647, %v5239
    %v5496 = vand.u32 2147483647, %v5240
    %v5497 = vand.u32 2147483647, %v5241
    %v5498 = vand.u32 2147483647, %v5242
    %v5499 = vand.u32 2147483647, %v5243
    %v5500 = vand.u32 2147483647, %v5244
    %v5501 = vand.u32 2147483647, %v5245
    %v5502 = vand.u32 2147483647, %v5246
    %v5503 = vand.u32 2147483647, %v5247
    %v5504 = vand.u32 2147483647, %v5248
    %v5505 = vand.u32 2147483647, %v5249
    %v5506 = vand.u32 2147483647, %v5250
    %v5507 = vand.u32 2147483647, %v5251
    %v5508 = vand.u32 2147483647, %v5252
    %v5509 = vand.u32 2147483647, %v5253
    %v5510 = vand.u32 2147483647, %v5254
    %v5511 = vand.u32 2147483647, %v5255
    %v5512 = vand.u32 2147483647, %v5256
    %v5513 = vand.u32 2147483647, %v5257
    %v5514 = vand.u32 2147483647, %v5258
    %v5515 = vand.u32 2147483647, %v5259
    %v5516 = vand.u32 2147483647, %v5260
    %v5517 = vand.u32 2147483647, %v5261
    %v5518 = vand.u32 2147483647, %v5262
    %v5519 = vand.u32 2147483647, %v5263
    %v5520 = vand.u32 2147483647, %v5264
    %v5521 = vand.u32 2147483647, %v5265
    %v5522 = vand.u32 2147483647, %v5266
    %v5523 = vand.u32 2147483647, %v5267
    %v5524 = vand.u32 2147483647, %v5268
    %v5525 = vand.u32 2147483647, %v5269
    %v5526 = vand.u32 2147483647, %v5270
    %v5527 = vand.u32 2147483647, %v5271
    %v5528 = vand.u32 2147483647, %v5272
    %v5529 = vand.u32 2147483647, %v5273
    %v5530 = vand.u32 2147483647, %v5274
    %v5531 = vand.u32 2147483647, %v5275
    %v5532 = vand.u32 2147483647, %v5276
    %v5533 = vand.u32 2147483647, %v5277
    %v5534 = vand.u32 2147483647, %v5278
    %v5535 = vand.u32 2147483647, %v5279
    %v5536 = vand.u32 2147483647, %v5280
    %v5537 = vand.u32 2147483647, %v5281
    %v5538 = vand.u32 2147483647, %v5282
    %v5539 = vand.u32 2147483647, %v5283
    %v5540 = vand.u32 2147483647, %v5284
    %v5541 = vand.u32 2147483647, %v5285
    %v5542 = vand.u32 2147483647, %v5286
    %v5543 = vand.u32 2147483647, %v5287
    %v5544 = vand.u32 2147483647, %v5288
    %v5545 = vand.u32 2147483647, %v5289
    %v5546 = vand.u32 2147483647, %v5290
    %v5547 = vand.u32 2147483647, %v5291
    %v5548 = vand.u32 2147483647, %v5292
    %v5549 = vand.u32 2147483647, %v5293
    %v5550 = vand.u32 2147483647, %v5294
    %v5551 = vand.u32 2147483647, %v5295
    %v5552 = vand.u32 2147483647, %v5296
    %v5553 = vand.u32 2147483647, %v5297
    %v5554 = vand.u32 2147483647, %v5298
    %v5555 = vand.u32 2147483647, %v5299
    %v5556 = vand.u32 2147483647, %v5300
    %v5557 = vand.u32 2147483647, %v5301
    %v5558 = vand.u32 2147483647, %v5302
    %v5559 = vand.u32 2147483647, %v5303
    %v5560 = vand.u32 2147483647, %v5304
    %v5561 = vand.u32 2147483647, %v5305
    %v5562 = vand.u32 2147483647, %v5306
    %v5563 = vand.u32 2147483647, %v5307
    %v5564 = vand.u32 2147483647, %v5308
    %v5565 = vand.u32 2147483647, %v5309
    %v5566 = vand.u32 2147483647, %v5310
    %v5567 = vand.u32 2147483647, %v5311
    %v5568 = vand.u32 2147483647, %v5312
    %v5569 = vand.u32 2147483647, %v5313
    %v5570 = vand.u32 2147483647, %v5314
    %v5571 = vand.u32 2147483647, %v5315
    %v5572 = vand.u32 2147483647, %v5316
    %v5573 = vand.u32 2147483647, %v5317
    %v5574 = vand.u32 2147483647, %v5318
    %v5575 = vand.u32 2147483647, %v5319
    %v5576 = vand.u32 2147483647, %v5320
    %v5577 = vand.u32 2147483647, %v5321
    %v5578 = vand.u32 2147483647, %v5322
    %v5579 = vand.u32 2147483647, %v5323
    %v5580 = vand.u32 2147483647, %v5324
    %v5581 = vand.u32 2147483647, %v5325
    %v5582 = vand.u32 2147483647, %v5326
    %v5583 = vand.u32 2147483647, %v5327
    %v5584 = vand.u32 2147483647, %v5328
    %v5585 = vand.u32 2147483647, %v5329
    %v5586 = vand.u32 2147483647, %v5330
    %v5587 = vand.u32 2147483647, %v5331
    %v5588 = vand.u32 2147483647, %v5332
    %v5589 = vand.u32 2147483647, %v5333
    %v5590 = vand.u32 2147483647, %v5334
    %v5591 = vand.u32 2147483647, %v5335
    %v5592 = vand.u32 2147483647, %v5336
    %v5593 = vand.u32 2147483647, %v5337
    %v5594 = vand.u32 2147483647, %v5338
    %v5595 = vand.u32 2147483647, %v5339
    %v5596 = vand.u32 2147483647, %v5340
    %v5597 = vand.u32 2147483647, %v5341
    %v5598 = vand.u32 2147483647, %v5342
    %v5599 = vand.u32 2147483647, %v5343
    %v5600 = vand.u32 2147483647, %v5344
    %v5601 = vand.u32 2147483647, %v5345
    %v5602 = vand.u32 2147483647, %v5346
    %v5603 = vand.u32 2147483647, %v5347
    %v5604 = vand.u32 2147483647, %v5348
    %v5605 = vand.u32 2147483647, %v5349
    %v5606 = vand.u32 2147483647, %v5350
    %v5607 = vsub.f32 0.0, %v5479
    %v5608 = vsub.f32 0.0, %v5480
    %v5609 = vsub.f32 0.0, %v5481
    %v5610 = vsub.f32 0.0, %v5482
    %v5611 = vsub.f32 0.0, %v5483
    %v5612 = vsub.f32 0.0, %v5484
    %v5613 = vsub.f32 0.0, %v5485
    %v5614 = vsub.f32 0.0, %v5486
    %v5615 = vsub.f32 0.0, %v5487
    %v5616 = vsub.f32 0.0, %v5488
    %v5617 = vsub.f32 0.0, %v5489
    %v5618 = vsub.f32 0.0, %v5490
    %v5619 = vsub.f32 0.0, %v5491
    %v5620 = vsub.f32 0.0, %v5492
    %v5621 = vsub.f32 0.0, %v5493
    %v5622 = vsub.f32 0.0, %v5494
    %v5623 = vsub.f32 0.0, %v5495
    %v5624 = vsub.f32 0.0, %v5496
    %v5625 = vsub.f32 0.0, %v5497
    %v5626 = vsub.f32 0.0, %v5498
    %v5627 = vsub.f32 0.0, %v5499
    %v5628 = vsub.f32 0.0, %v5500
    %v5629 = vsub.f32 0.0, %v5501
    %v5630 = vsub.f32 0.0, %v5502
    %v5631 = vsub.f32 0.0, %v5503
    %v5632 = vsub.f32 0.0, %v5504
    %v5633 = vsub.f32 0.0, %v5505
    %v5634 = vsub.f32 0.0, %v5506
    %v5635 = vsub.f32 0.0, %v5507
    %v5636 = vsub.f32 0.0, %v5508
    %v5637 = vsub.f32 0.0, %v5509
    %v5638 = vsub.f32 0.0, %v5510
    %v5639 = vsub.f32 0.0, %v5511
    %v5640 = vsub.f32 0.0, %v5512
    %v5641 = vsub.f32 0.0, %v5513
    %v5642 = vsub.f32 0.0, %v5514
    %v5643 = vsub.f32 0.0, %v5515
    %v5644 = vsub.f32 0.0, %v5516
    %v5645 = vsub.f32 0.0, %v5517
    %v5646 = vsub.f32 0.0, %v5518
    %v5647 = vsub.f32 0.0, %v5519
    %v5648 = vsub.f32 0.0, %v5520
    %v5649 = vsub.f32 0.0, %v5521
    %v5650 = vsub.f32 0.0, %v5522
    %v5651 = vsub.f32 0.0, %v5523
    %v5652 = vsub.f32 0.0, %v5524
    %v5653 = vsub.f32 0.0, %v5525
    %v5654 = vsub.f32 0.0, %v5526
    %v5655 = vsub.f32 0.0, %v5527
    %v5656 = vsub.f32 0.0, %v5528
    %v5657 = vsub.f32 0.0, %v5529
    %v5658 = vsub.f32 0.0, %v5530
    %v5659 = vsub.f32 0.0, %v5531
    %v5660 = vsub.f32 0.0, %v5532
    %v5661 = vsub.f32 0.0, %v5533
    %v5662 = vsub.f32 0.0, %v5534
    %v5663 = vsub.f32 0.0, %v5535
    %v5664 = vsub.f32 0.0, %v5536
    %v5665 = vsub.f32 0.0, %v5537
    %v5666 = vsub.f32 0.0, %v5538
    %v5667 = vsub.f32 0.0, %v5539
    %v5668 = vsub.f32 0.0, %v5540
    %v5669 = vsub.f32 0.0, %v5541
    %v5670 = vsub.f32 0.0, %v5542
    %v5671 = vsub.f32 0.0, %v5543
    %v5672 = vsub.f32 0.0, %v5544
    %v5673 = vsub.f32 0.0, %v5545
    %v5674 = vsub.f32 0.0, %v5546
    %v5675 = vsub.f32 0.0, %v5547
    %v5676 = vsub.f32 0.0, %v5548
    %v5677 = vsub.f32 0.0, %v5549
    %v5678 = vsub.f32 0.0, %v5550
    %v5679 = vsub.f32 0.0, %v5551
    %v5680 = vsub.f32 0.0, %v5552
    %v5681 = vsub.f32 0.0, %v5553
    %v5682 = vsub.f32 0.0, %v5554
    %v5683 = vsub.f32 0.0, %v5555
    %v5684 = vsub.f32 0.0, %v5556
    %v5685 = vsub.f32 0.0, %v5557
    %v5686 = vsub.f32 0.0, %v5558
    %v5687 = vsub.f32 0.0, %v5559
    %v5688 = vsub.f32 0.0, %v5560
    %v5689 = vsub.f32 0.0, %v5561
    %v5690 = vsub.f32 0.0, %v5562
    %v5691 = vsub.f32 0.0, %v5563
    %v5692 = vsub.f32 0.0, %v5564
    %v5693 = vsub.f32 0.0, %v5565
    %v5694 = vsub.f32 0.0, %v5566
    %v5695 = vsub.f32 0.0, %v5567
    %v5696 = vsub.f32 0.0, %v5568
    %v5697 = vsub.f32 0.0, %v5569
    %v5698 = vsub.f32 0.0, %v5570
    %v5699 = vsub.f32 0.0, %v5571
    %v5700 = vsub.f32 0.0, %v5572
    %v5701 = vsub.f32 0.0, %v5573
    %v5702 = vsub.f32 0.0, %v5574
    %v5703 = vsub.f32 0.0, %v5575
    %v5704 = vsub.f32 0.0, %v5576
    %v5705 = vsub.f32 0.0, %v5577
    %v5706 = vsub.f32 0.0, %v5578
    %v5707 = vsub.f32 0.0, %v5579
    %v5708 = vsub.f32 0.0, %v5580
    %v5709 = vsub.f32 0.0, %v5581
    %v5710 = vsub.f32 0.0, %v5582
    %v5711 = vsub.f32 0.0, %v5583
    %v5712 = vsub.f32 0.0, %v5584
    %v5713 = vsub.f32 0.0, %v5585
    %v5714 = vsub.f32 0.0, %v5586
    %v5715 = vsub.f32 0.0, %v5587
    %v5716 = vsub.f32 0.0, %v5588
    %v5717 = vsub.f32 0.0, %v5589
    %v5718 = vsub.f32 0.0, %v5590
    %v5719 = vsub.f32 0.0, %v5591
    %v5720 = vsub.f32 0.0, %v5592
    %v5721 = vsub.f32 0.0, %v5593
    %v5722 = vsub.f32 0.0, %v5594
    %v5723 = vsub.f32 0.0, %v5595
    %v5724 = vsub.f32 0.0, %v5596
    %v5725 = vsub.f32 0.0, %v5597
    %v5726 = vsub.f32 0.0, %v5598
    %v5727 = vsub.f32 0.0, %v5599
    %v5728 = vsub.f32 0.0, %v5600
    %v5729 = vsub.f32 0.0, %v5601
    %v5730 = vsub.f32 0.0, %v5602
    %v5731 = vsub.f32 0.0, %v5603
    %v5732 = vsub.f32 0.0, %v5604
    %v5733 = vsub.f32 0.0, %v5605
    %v5734 = vsub.f32 0.0, %v5606
    %v5735 = vmul.f32 %v5607, 1.442695
    %v5736 = vpow.pop %v5735
    %v5737 = vmul.f32 %v5608, 1.442695
    %v5738 = vpow.pop %v5737
    %v5739 = vmul.f32 %v5609, 1.442695
    %v5740 = vpow.pop %v5739
    %v5741 = vmul.f32 %v5610, 1.442695
    %v5742 = vpow.pop %v5741
    %v5743 = vmul.f32 %v5611, 1.442695
    %v5744 = vpow.pop %v5743
    %v5745 = vmul.f32 %v5612, 1.442695
    %v5746 = vpow.pop %v5745
    %v5747 = vmul.f32 %v5613, 1.442695
    %v5748 = vpow.pop %v5747
    %v5749 = vmul.f32 %v5614, 1.442695
    %v5750 = vpow.pop %v5749
    %v5751 = vmul.f32 %v5615, 1.442695
    %v5752 = vpow.pop %v5751
    %v5753 = vmul.f32 %v5616, 1.442695
    %v5754 = vpow.pop %v5753
    %v5755 = vmul.f32 %v5617, 1.442695
    %v5756 = vpow.pop %v5755
    %v5757 = vmul.f32 %v5618, 1.442695
    %v5758 = vpow.pop %v5757
    %v5759 = vmul.f32 %v5619, 1.442695
    %v5760 = vpow.pop %v5759
    %v5761 = vmul.f32 %v5620, 1.442695
    %v5762 = vpow.pop %v5761
    %v5763 = vmul.f32 %v5621, 1.442695
    %v5764 = vpow.pop %v5763
    %v5765 = vmul.f32 %v5622, 1.442695
    %v5766 = vpow.pop %v5765
    %v5767 = vmul.f32 %v5623, 1.442695
    %v5768 = vpow.pop %v5767
    %v5769 = vmul.f32 %v5624, 1.442695
    %v5770 = vpow.pop %v5769
    %v5771 = vmul.f32 %v5625, 1.442695
    %v5772 = vpow.pop %v5771
    %v5773 = vmul.f32 %v5626, 1.442695
    %v5774 = vpow.pop %v5773
    %v5775 = vmul.f32 %v5627, 1.442695
    %v5776 = vpow.pop %v5775
    %v5777 = vmul.f32 %v5628, 1.442695
    %v5778 = vpow.pop %v5777
    %v5779 = vmul.f32 %v5629, 1.442695
    %v5780 = vpow.pop %v5779
    %v5781 = vmul.f32 %v5630, 1.442695
    %v5782 = vpow.pop %v5781
    %v5783 = vmul.f32 %v5631, 1.442695
    %v5784 = vpow.pop %v5783
    %v5785 = vmul.f32 %v5632, 1.442695
    %v5786 = vpow.pop %v5785
    %v5787 = vmul.f32 %v5633, 1.442695
    %v5788 = vpow.pop %v5787
    %v5789 = vmul.f32 %v5634, 1.442695
    %v5790 = vpow.pop %v5789
    %v5791 = vmul.f32 %v5635, 1.442695
    %v5792 = vpow.pop %v5791
    %v5793 = vmul.f32 %v5636, 1.442695
    %v5794 = vpow.pop %v5793
    %v5795 = vmul.f32 %v5637, 1.442695
    %v5796 = vpow.pop %v5795
    %v5797 = vmul.f32 %v5638, 1.442695
    %v5798 = vpow.pop %v5797
    %v5799 = vmul.f32 %v5639, 1.442695
    %v5800 = vpow.pop %v5799
    %v5801 = vmul.f32 %v5640, 1.442695
    %v5802 = vpow.pop %v5801
    %v5803 = vmul.f32 %v5641, 1.442695
    %v5804 = vpow.pop %v5803
    %v5805 = vmul.f32 %v5642, 1.442695
    %v5806 = vpow.pop %v5805
    %v5807 = vmul.f32 %v5643, 1.442695
    %v5808 = vpow.pop %v5807
    %v5809 = vmul.f32 %v5644, 1.442695
    %v5810 = vpow.pop %v5809
    %v5811 = vmul.f32 %v5645, 1.442695
    %v5812 = vpow.pop %v5811
    %v5813 = vmul.f32 %v5646, 1.442695
    %v5814 = vpow.pop %v5813
    %v5815 = vmul.f32 %v5647, 1.442695
    %v5816 = vpow.pop %v5815
    %v5817 = vmul.f32 %v5648, 1.442695
    %v5818 = vpow.pop %v5817
    %v5819 = vmul.f32 %v5649, 1.442695
    %v5820 = vpow.pop %v5819
    %v5821 = vmul.f32 %v5650, 1.442695
    %v5822 = vpow.pop %v5821
    %v5823 = vmul.f32 %v5651, 1.442695
    %v5824 = vpow.pop %v5823
    %v5825 = vmul.f32 %v5652, 1.442695
    %v5826 = vpow.pop %v5825
    %v5827 = vmul.f32 %v5653, 1.442695
    %v5828 = vpow.pop %v5827
    %v5829 = vmul.f32 %v5654, 1.442695
    %v5830 = vpow.pop %v5829
    %v5831 = vmul.f32 %v5655, 1.442695
    %v5832 = vpow.pop %v5831
    %v5833 = vmul.f32 %v5656, 1.442695
    %v5834 = vpow.pop %v5833
    %v5835 = vmul.f32 %v5657, 1.442695
    %v5836 = vpow.pop %v5835
    %v5837 = vmul.f32 %v5658, 1.442695
    %v5838 = vpow.pop %v5837
    %v5839 = vmul.f32 %v5659, 1.442695
    %v5840 = vpow.pop %v5839
    %v5841 = vmul.f32 %v5660, 1.442695
    %v5842 = vpow.pop %v5841
    %v5843 = vmul.f32 %v5661, 1.442695
    %v5844 = vpow.pop %v5843
    %v5845 = vmul.f32 %v5662, 1.442695
    %v5846 = vpow.pop %v5845
    %v5847 = vmul.f32 %v5663, 1.442695
    %v5848 = vpow.pop %v5847
    %v5849 = vmul.f32 %v5664, 1.442695
    %v5850 = vpow.pop %v5849
    %v5851 = vmul.f32 %v5665, 1.442695
    %v5852 = vpow.pop %v5851
    %v5853 = vmul.f32 %v5666, 1.442695
    %v5854 = vpow.pop %v5853
    %v5855 = vmul.f32 %v5667, 1.442695
    %v5856 = vpow.pop %v5855
    %v5857 = vmul.f32 %v5668, 1.442695
    %v5858 = vpow.pop %v5857
    %v5859 = vmul.f32 %v5669, 1.442695
    %v5860 = vpow.pop %v5859
    %v5861 = vmul.f32 %v5670, 1.442695
    %v5862 = vpow.pop %v5861
    %v5863 = vmul.f32 %v5671, 1.442695
    %v5864 = vpow.pop %v5863
    %v5865 = vmul.f32 %v5672, 1.442695
    %v5866 = vpow.pop %v5865
    %v5867 = vmul.f32 %v5673, 1.442695
    %v5868 = vpow.pop %v5867
    %v5869 = vmul.f32 %v5674, 1.442695
    %v5870 = vpow.pop %v5869
    %v5871 = vmul.f32 %v5675, 1.442695
    %v5872 = vpow.pop %v5871
    %v5873 = vmul.f32 %v5676, 1.442695
    %v5874 = vpow.pop %v5873
    %v5875 = vmul.f32 %v5677, 1.442695
    %v5876 = vpow.pop %v5875
    %v5877 = vmul.f32 %v5678, 1.442695
    %v5878 = vpow.pop %v5877
    %v5879 = vmul.f32 %v5679, 1.442695
    %v5880 = vpow.pop %v5879
    %v5881 = vmul.f32 %v5680, 1.442695
    %v5882 = vpow.pop %v5881
    %v5883 = vmul.f32 %v5681, 1.442695
    %v5884 = vpow.pop %v5883
    %v5885 = vmul.f32 %v5682, 1.442695
    %v5886 = vpow.pop %v5885
    %v5887 = vmul.f32 %v5683, 1.442695
    %v5888 = vpow.pop %v5887
    %v5889 = vmul.f32 %v5684, 1.442695
    %v5890 = vpow.pop %v5889
    %v5891 = vmul.f32 %v5685, 1.442695
    %v5892 = vpow.pop %v5891
    %v5893 = vmul.f32 %v5686, 1.442695
    %v5894 = vpow.pop %v5893
    %v5895 = vmul.f32 %v5687, 1.442695
    %v5896 = vpow.pop %v5895
    %v5897 = vmul.f32 %v5688, 1.442695
    %v5898 = vpow.pop %v5897
    %v5899 = vmul.f32 %v5689, 1.442695
    %v5900 = vpow.pop %v5899
    %v5901 = vmul.f32 %v5690, 1.442695
    %v5902 = vpow.pop %v5901
    %v5903 = vmul.f32 %v5691, 1.442695
    %v5904 = vpow.pop %v5903
    %v5905 = vmul.f32 %v5692, 1.442695
    %v5906 = vpow.pop %v5905
    %v5907 = vmul.f32 %v5693, 1.442695
    %v5908 = vpow.pop %v5907
    %v5909 = vmul.f32 %v5694, 1.442695
    %v5910 = vpow.pop %v5909
    %v5911 = vmul.f32 %v5695, 1.442695
    %v5912 = vpow.pop %v5911
    %v5913 = vmul.f32 %v5696, 1.442695
    %v5914 = vpow.pop %v5913
    %v5915 = vmul.f32 %v5697, 1.442695
    %v5916 = vpow.pop %v5915
    %v5917 = vmul.f32 %v5698, 1.442695
    %v5918 = vpow.pop %v5917
    %v5919 = vmul.f32 %v5699, 1.442695
    %v5920 = vpow.pop %v5919
    %v5921 = vmul.f32 %v5700, 1.442695
    %v5922 = vpow.pop %v5921
    %v5923 = vmul.f32 %v5701, 1.442695
    %v5924 = vpow.pop %v5923
    %v5925 = vmul.f32 %v5702, 1.442695
    %v5926 = vpow.pop %v5925
    %v5927 = vmul.f32 %v5703, 1.442695
    %v5928 = vpow.pop %v5927
    %v5929 = vmul.f32 %v5704, 1.442695
    %v5930 = vpow.pop %v5929
    %v5931 = vmul.f32 %v5705, 1.442695
    %v5932 = vpow.pop %v5931
    %v5933 = vmul.f32 %v5706, 1.442695
    %v5934 = vpow.pop %v5933
    %v5935 = vmul.f32 %v5707, 1.442695
    %v5936 = vpow.pop %v5935
    %v5937 = vmul.f32 %v5708, 1.442695
    %v5938 = vpow.pop %v5937
    %v5939 = vmul.f32 %v5709, 1.442695
    %v5940 = vpow.pop %v5939
    %v5941 = vmul.f32 %v5710, 1.442695
    %v5942 = vpow.pop %v5941
    %v5943 = vmul.f32 %v5711, 1.442695
    %v5944 = vpow.pop %v5943
    %v5945 = vmul.f32 %v5712, 1.442695
    %v5946 = vpow.pop %v5945
    %v5947 = vmul.f32 %v5713, 1.442695
    %v5948 = vpow.pop %v5947
    %v5949 = vmul.f32 %v5714, 1.442695
    %v5950 = vpow.pop %v5949
    %v5951 = vmul.f32 %v5715, 1.442695
    %v5952 = vpow.pop %v5951
    %v5953 = vmul.f32 %v5716, 1.442695
    %v5954 = vpow.pop %v5953
    %v5955 = vmul.f32 %v5717, 1.442695
    %v5956 = vpow.pop %v5955
    %v5957 = vmul.f32 %v5718, 1.442695
    %v5958 = vpow.pop %v5957
    %v5959 = vmul.f32 %v5719, 1.442695
    %v5960 = vpow.pop %v5959
    %v5961 = vmul.f32 %v5720, 1.442695
    %v5962 = vpow.pop %v5961
    %v5963 = vmul.f32 %v5721, 1.442695
    %v5964 = vpow.pop %v5963
    %v5965 = vmul.f32 %v5722, 1.442695
    %v5966 = vpow.pop %v5965
    %v5967 = vmul.f32 %v5723, 1.442695
    %v5968 = vpow.pop %v5967
    %v5969 = vmul.f32 %v5724, 1.442695
    %v5970 = vpow.pop %v5969
    %v5971 = vmul.f32 %v5725, 1.442695
    %v5972 = vpow.pop %v5971
    %v5973 = vmul.f32 %v5726, 1.442695
    %v5974 = vpow.pop %v5973
    %v5975 = vmul.f32 %v5727, 1.442695
    %v5976 = vpow.pop %v5975
    %v5977 = vmul.f32 %v5728, 1.442695
    %v5978 = vpow.pop %v5977
    %v5979 = vmul.f32 %v5729, 1.442695
    %v5980 = vpow.pop %v5979
    %v5981 = vmul.f32 %v5730, 1.442695
    %v5982 = vpow.pop %v5981
    %v5983 = vmul.f32 %v5731, 1.442695
    %v5984 = vpow.pop %v5983
    %v5985 = vmul.f32 %v5732, 1.442695
    %v5986 = vpow.pop %v5985
    %v5987 = vmul.f32 %v5733, 1.442695
    %v5988 = vpow.pop %v5987
    %v5989 = vmul.f32 %v5734, 1.442695
    %v5990 = vpow.pop %v5989
    %v5991 = vadd.f32 %v5736, 1.0
    %v5992 = vadd.f32 %v5738, 1.0
    %v5993 = vadd.f32 %v5740, 1.0
    %v5994 = vadd.f32 %v5742, 1.0
    %v5995 = vadd.f32 %v5744, 1.0
    %v5996 = vadd.f32 %v5746, 1.0
    %v5997 = vadd.f32 %v5748, 1.0
    %v5998 = vadd.f32 %v5750, 1.0
    %v5999 = vadd.f32 %v5752, 1.0
    %v6000 = vadd.f32 %v5754, 1.0
    %v6001 = vadd.f32 %v5756, 1.0
    %v6002 = vadd.f32 %v5758, 1.0
    %v6003 = vadd.f32 %v5760, 1.0
    %v6004 = vadd.f32 %v5762, 1.0
    %v6005 = vadd.f32 %v5764, 1.0
    %v6006 = vadd.f32 %v5766, 1.0
    %v6007 = vadd.f32 %v5768, 1.0
    %v6008 = vadd.f32 %v5770, 1.0
    %v6009 = vadd.f32 %v5772, 1.0
    %v6010 = vadd.f32 %v5774, 1.0
    %v6011 = vadd.f32 %v5776, 1.0
    %v6012 = vadd.f32 %v5778, 1.0
    %v6013 = vadd.f32 %v5780, 1.0
    %v6014 = vadd.f32 %v5782, 1.0
    %v6015 = vadd.f32 %v5784, 1.0
    %v6016 = vadd.f32 %v5786, 1.0
    %v6017 = vadd.f32 %v5788, 1.0
    %v6018 = vadd.f32 %v5790, 1.0
    %v6019 = vadd.f32 %v5792, 1.0
    %v6020 = vadd.f32 %v5794, 1.0
    %v6021 = vadd.f32 %v5796, 1.0
    %v6022 = vadd.f32 %v5798, 1.0
    %v6023 = vadd.f32 %v5800, 1.0
    %v6024 = vadd.f32 %v5802, 1.0
    %v6025 = vadd.f32 %v5804, 1.0
    %v6026 = vadd.f32 %v5806, 1.0
    %v6027 = vadd.f32 %v5808, 1.0
    %v6028 = vadd.f32 %v5810, 1.0
    %v6029 = vadd.f32 %v5812, 1.0
    %v6030 = vadd.f32 %v5814, 1.0
    %v6031 = vadd.f32 %v5816, 1.0
    %v6032 = vadd.f32 %v5818, 1.0
    %v6033 = vadd.f32 %v5820, 1.0
    %v6034 = vadd.f32 %v5822, 1.0
    %v6035 = vadd.f32 %v5824, 1.0
    %v6036 = vadd.f32 %v5826, 1.0
    %v6037 = vadd.f32 %v5828, 1.0
    %v6038 = vadd.f32 %v5830, 1.0
    %v6039 = vadd.f32 %v5832, 1.0
    %v6040 = vadd.f32 %v5834, 1.0
    %v6041 = vadd.f32 %v5836, 1.0
    %v6042 = vadd.f32 %v5838, 1.0
    %v6043 = vadd.f32 %v5840, 1.0
    %v6044 = vadd.f32 %v5842, 1.0
    %v6045 = vadd.f32 %v5844, 1.0
    %v6046 = vadd.f32 %v5846, 1.0
    %v6047 = vadd.f32 %v5848, 1.0
    %v6048 = vadd.f32 %v5850, 1.0
    %v6049 = vadd.f32 %v5852, 1.0
    %v6050 = vadd.f32 %v5854, 1.0
    %v6051 = vadd.f32 %v5856, 1.0
    %v6052 = vadd.f32 %v5858, 1.0
    %v6053 = vadd.f32 %v5860, 1.0
    %v6054 = vadd.f32 %v5862, 1.0
    %v6055 = vadd.f32 %v5864, 1.0
    %v6056 = vadd.f32 %v5866, 1.0
    %v6057 = vadd.f32 %v5868, 1.0
    %v6058 = vadd.f32 %v5870, 1.0
    %v6059 = vadd.f32 %v5872, 1.0
    %v6060 = vadd.f32 %v5874, 1.0
    %v6061 = vadd.f32 %v5876, 1.0
    %v6062 = vadd.f32 %v5878, 1.0
    %v6063 = vadd.f32 %v5880, 1.0
    %v6064 = vadd.f32 %v5882, 1.0
    %v6065 = vadd.f32 %v5884, 1.0
    %v6066 = vadd.f32 %v5886, 1.0
    %v6067 = vadd.f32 %v5888, 1.0
    %v6068 = vadd.f32 %v5890, 1.0
    %v6069 = vadd.f32 %v5892, 1.0
    %v6070 = vadd.f32 %v5894, 1.0
    %v6071 = vadd.f32 %v5896, 1.0
    %v6072 = vadd.f32 %v5898, 1.0
    %v6073 = vadd.f32 %v5900, 1.0
    %v6074 = vadd.f32 %v5902, 1.0
    %v6075 = vadd.f32 %v5904, 1.0
    %v6076 = vadd.f32 %v5906, 1.0
    %v6077 = vadd.f32 %v5908, 1.0
    %v6078 = vadd.f32 %v5910, 1.0
    %v6079 = vadd.f32 %v5912, 1.0
    %v6080 = vadd.f32 %v5914, 1.0
    %v6081 = vadd.f32 %v5916, 1.0
    %v6082 = vadd.f32 %v5918, 1.0
    %v6083 = vadd.f32 %v5920, 1.0
    %v6084 = vadd.f32 %v5922, 1.0
    %v6085 = vadd.f32 %v5924, 1.0
    %v6086 = vadd.f32 %v5926, 1.0
    %v6087 = vadd.f32 %v5928, 1.0
    %v6088 = vadd.f32 %v5930, 1.0
    %v6089 = vadd.f32 %v5932, 1.0
    %v6090 = vadd.f32 %v5934, 1.0
    %v6091 = vadd.f32 %v5936, 1.0
    %v6092 = vadd.f32 %v5938, 1.0
    %v6093 = vadd.f32 %v5940, 1.0
    %v6094 = vadd.f32 %v5942, 1.0
    %v6095 = vadd.f32 %v5944, 1.0
    %v6096 = vadd.f32 %v5946, 1.0
    %v6097 = vadd.f32 %v5948, 1.0
    %v6098 = vadd.f32 %v5950, 1.0
    %v6099 = vadd.f32 %v5952, 1.0
    %v6100 = vadd.f32 %v5954, 1.0
    %v6101 = vadd.f32 %v5956, 1.0
    %v6102 = vadd.f32 %v5958, 1.0
    %v6103 = vadd.f32 %v5960, 1.0
    %v6104 = vadd.f32 %v5962, 1.0
    %v6105 = vadd.f32 %v5964, 1.0
    %v6106 = vadd.f32 %v5966, 1.0
    %v6107 = vadd.f32 %v5968, 1.0
    %v6108 = vadd.f32 %v5970, 1.0
    %v6109 = vadd.f32 %v5972, 1.0
    %v6110 = vadd.f32 %v5974, 1.0
    %v6111 = vadd.f32 %v5976, 1.0
    %v6112 = vadd.f32 %v5978, 1.0
    %v6113 = vadd.f32 %v5980, 1.0
    %v6114 = vadd.f32 %v5982, 1.0
    %v6115 = vadd.f32 %v5984, 1.0
    %v6116 = vadd.f32 %v5986, 1.0
    %v6117 = vadd.f32 %v5988, 1.0
    %v6118 = vadd.f32 %v5990, 1.0
    %v6119 = vlog2.pop %v5991
    %v6120 = vmul.f32 %v6119, 0.6931472
    %v6121 = vlog2.pop %v5992
    %v6122 = vmul.f32 %v6121, 0.6931472
    %v6123 = vlog2.pop %v5993
    %v6124 = vmul.f32 %v6123, 0.6931472
    %v6125 = vlog2.pop %v5994
    %v6126 = vmul.f32 %v6125, 0.6931472
    %v6127 = vlog2.pop %v5995
    %v6128 = vmul.f32 %v6127, 0.6931472
    %v6129 = vlog2.pop %v5996
    %v6130 = vmul.f32 %v6129, 0.6931472
    %v6131 = vlog2.pop %v5997
    %v6132 = vmul.f32 %v6131, 0.6931472
    %v6133 = vlog2.pop %v5998
    %v6134 = vmul.f32 %v6133, 0.6931472
    %v6135 = vlog2.pop %v5999
    %v6136 = vmul.f32 %v6135, 0.6931472
    %v6137 = vlog2.pop %v6000
    %v6138 = vmul.f32 %v6137, 0.6931472
    %v6139 = vlog2.pop %v6001
    %v6140 = vmul.f32 %v6139, 0.6931472
    %v6141 = vlog2.pop %v6002
    %v6142 = vmul.f32 %v6141, 0.6931472
    %v6143 = vlog2.pop %v6003
    %v6144 = vmul.f32 %v6143, 0.6931472
    %v6145 = vlog2.pop %v6004
    %v6146 = vmul.f32 %v6145, 0.6931472
    %v6147 = vlog2.pop %v6005
    %v6148 = vmul.f32 %v6147, 0.6931472
    %v6149 = vlog2.pop %v6006
    %v6150 = vmul.f32 %v6149, 0.6931472
    %v6151 = vlog2.pop %v6007
    %v6152 = vmul.f32 %v6151, 0.6931472
    %v6153 = vlog2.pop %v6008
    %v6154 = vmul.f32 %v6153, 0.6931472
    %v6155 = vlog2.pop %v6009
    %v6156 = vmul.f32 %v6155, 0.6931472
    %v6157 = vlog2.pop %v6010
    %v6158 = vmul.f32 %v6157, 0.6931472
    %v6159 = vlog2.pop %v6011
    %v6160 = vmul.f32 %v6159, 0.6931472
    %v6161 = vlog2.pop %v6012
    %v6162 = vmul.f32 %v6161, 0.6931472
    %v6163 = vlog2.pop %v6013
    %v6164 = vmul.f32 %v6163, 0.6931472
    %v6165 = vlog2.pop %v6014
    %v6166 = vmul.f32 %v6165, 0.6931472
    %v6167 = vlog2.pop %v6015
    %v6168 = vmul.f32 %v6167, 0.6931472
    %v6169 = vlog2.pop %v6016
    %v6170 = vmul.f32 %v6169, 0.6931472
    %v6171 = vlog2.pop %v6017
    %v6172 = vmul.f32 %v6171, 0.6931472
    %v6173 = vlog2.pop %v6018
    %v6174 = vmul.f32 %v6173, 0.6931472
    %v6175 = vlog2.pop %v6019
    %v6176 = vmul.f32 %v6175, 0.6931472
    %v6177 = vlog2.pop %v6020
    %v6178 = vmul.f32 %v6177, 0.6931472
    %v6179 = vlog2.pop %v6021
    %v6180 = vmul.f32 %v6179, 0.6931472
    %v6181 = vlog2.pop %v6022
    %v6182 = vmul.f32 %v6181, 0.6931472
    %v6183 = vlog2.pop %v6023
    %v6184 = vmul.f32 %v6183, 0.6931472
    %v6185 = vlog2.pop %v6024
    %v6186 = vmul.f32 %v6185, 0.6931472
    %v6187 = vlog2.pop %v6025
    %v6188 = vmul.f32 %v6187, 0.6931472
    %v6189 = vlog2.pop %v6026
    %v6190 = vmul.f32 %v6189, 0.6931472
    %v6191 = vlog2.pop %v6027
    %v6192 = vmul.f32 %v6191, 0.6931472
    %v6193 = vlog2.pop %v6028
    %v6194 = vmul.f32 %v6193, 0.6931472
    %v6195 = vlog2.pop %v6029
    %v6196 = vmul.f32 %v6195, 0.6931472
    %v6197 = vlog2.pop %v6030
    %v6198 = vmul.f32 %v6197, 0.6931472
    %v6199 = vlog2.pop %v6031
    %v6200 = vmul.f32 %v6199, 0.6931472
    %v6201 = vlog2.pop %v6032
    %v6202 = vmul.f32 %v6201, 0.6931472
    %v6203 = vlog2.pop %v6033
    %v6204 = vmul.f32 %v6203, 0.6931472
    %v6205 = vlog2.pop %v6034
    %v6206 = vmul.f32 %v6205, 0.6931472
    %v6207 = vlog2.pop %v6035
    %v6208 = vmul.f32 %v6207, 0.6931472
    %v6209 = vlog2.pop %v6036
    %v6210 = vmul.f32 %v6209, 0.6931472
    %v6211 = vlog2.pop %v6037
    %v6212 = vmul.f32 %v6211, 0.6931472
    %v6213 = vlog2.pop %v6038
    %v6214 = vmul.f32 %v6213, 0.6931472
    %v6215 = vlog2.pop %v6039
    %v6216 = vmul.f32 %v6215, 0.6931472
    %v6217 = vlog2.pop %v6040
    %v6218 = vmul.f32 %v6217, 0.6931472
    %v6219 = vlog2.pop %v6041
    %v6220 = vmul.f32 %v6219, 0.6931472
    %v6221 = vlog2.pop %v6042
    %v6222 = vmul.f32 %v6221, 0.6931472
    %v6223 = vlog2.pop %v6043
    %v6224 = vmul.f32 %v6223, 0.6931472
    %v6225 = vlog2.pop %v6044
    %v6226 = vmul.f32 %v6225, 0.6931472
    %v6227 = vlog2.pop %v6045
    %v6228 = vmul.f32 %v6227, 0.6931472
    %v6229 = vlog2.pop %v6046
    %v6230 = vmul.f32 %v6229, 0.6931472
    %v6231 = vlog2.pop %v6047
    %v6232 = vmul.f32 %v6231, 0.6931472
    %v6233 = vlog2.pop %v6048
    %v6234 = vmul.f32 %v6233, 0.6931472
    %v6235 = vlog2.pop %v6049
    %v6236 = vmul.f32 %v6235, 0.6931472
    %v6237 = vlog2.pop %v6050
    %v6238 = vmul.f32 %v6237, 0.6931472
    %v6239 = vlog2.pop %v6051
    %v6240 = vmul.f32 %v6239, 0.6931472
    %v6241 = vlog2.pop %v6052
    %v6242 = vmul.f32 %v6241, 0.6931472
    %v6243 = vlog2.pop %v6053
    %v6244 = vmul.f32 %v6243, 0.6931472
    %v6245 = vlog2.pop %v6054
    %v6246 = vmul.f32 %v6245, 0.6931472
    %v6247 = vlog2.pop %v6055
    %v6248 = vmul.f32 %v6247, 0.6931472
    %v6249 = vlog2.pop %v6056
    %v6250 = vmul.f32 %v6249, 0.6931472
    %v6251 = vlog2.pop %v6057
    %v6252 = vmul.f32 %v6251, 0.6931472
    %v6253 = vlog2.pop %v6058
    %v6254 = vmul.f32 %v6253, 0.6931472
    %v6255 = vlog2.pop %v6059
    %v6256 = vmul.f32 %v6255, 0.6931472
    %v6257 = vlog2.pop %v6060
    %v6258 = vmul.f32 %v6257, 0.6931472
    %v6259 = vlog2.pop %v6061
    %v6260 = vmul.f32 %v6259, 0.6931472
    %v6261 = vlog2.pop %v6062
    %v6262 = vmul.f32 %v6261, 0.6931472
    %v6263 = vlog2.pop %v6063
    %v6264 = vmul.f32 %v6263, 0.6931472
    %v6265 = vlog2.pop %v6064
    %v6266 = vmul.f32 %v6265, 0.6931472
    %v6267 = vlog2.pop %v6065
    %v6268 = vmul.f32 %v6267, 0.6931472
    %v6269 = vlog2.pop %v6066
    %v6270 = vmul.f32 %v6269, 0.6931472
    %v6271 = vlog2.pop %v6067
    %v6272 = vmul.f32 %v6271, 0.6931472
    %v6273 = vlog2.pop %v6068
    %v6274 = vmul.f32 %v6273, 0.6931472
    %v6275 = vlog2.pop %v6069
    %v6276 = vmul.f32 %v6275, 0.6931472
    %v6277 = vlog2.pop %v6070
    %v6278 = vmul.f32 %v6277, 0.6931472
    %v6279 = vlog2.pop %v6071
    %v6280 = vmul.f32 %v6279, 0.6931472
    %v6281 = vlog2.pop %v6072
    %v6282 = vmul.f32 %v6281, 0.6931472
    %v6283 = vlog2.pop %v6073
    %v6284 = vmul.f32 %v6283, 0.6931472
    %v6285 = vlog2.pop %v6074
    %v6286 = vmul.f32 %v6285, 0.6931472
    %v6287 = vlog2.pop %v6075
    %v6288 = vmul.f32 %v6287, 0.6931472
    %v6289 = vlog2.pop %v6076
    %v6290 = vmul.f32 %v6289, 0.6931472
    %v6291 = vlog2.pop %v6077
    %v6292 = vmul.f32 %v6291, 0.6931472
    %v6293 = vlog2.pop %v6078
    %v6294 = vmul.f32 %v6293, 0.6931472
    %v6295 = vlog2.pop %v6079
    %v6296 = vmul.f32 %v6295, 0.6931472
    %v6297 = vlog2.pop %v6080
    %v6298 = vmul.f32 %v6297, 0.6931472
    %v6299 = vlog2.pop %v6081
    %v6300 = vmul.f32 %v6299, 0.6931472
    %v6301 = vlog2.pop %v6082
    %v6302 = vmul.f32 %v6301, 0.6931472
    %v6303 = vlog2.pop %v6083
    %v6304 = vmul.f32 %v6303, 0.6931472
    %v6305 = vlog2.pop %v6084
    %v6306 = vmul.f32 %v6305, 0.6931472
    %v6307 = vlog2.pop %v6085
    %v6308 = vmul.f32 %v6307, 0.6931472
    %v6309 = vlog2.pop %v6086
    %v6310 = vmul.f32 %v6309, 0.6931472
    %v6311 = vlog2.pop %v6087
    %v6312 = vmul.f32 %v6311, 0.6931472
    %v6313 = vlog2.pop %v6088
    %v6314 = vmul.f32 %v6313, 0.6931472
    %v6315 = vlog2.pop %v6089
    %v6316 = vmul.f32 %v6315, 0.6931472
    %v6317 = vlog2.pop %v6090
    %v6318 = vmul.f32 %v6317, 0.6931472
    %v6319 = vlog2.pop %v6091
    %v6320 = vmul.f32 %v6319, 0.6931472
    %v6321 = vlog2.pop %v6092
    %v6322 = vmul.f32 %v6321, 0.6931472
    %v6323 = vlog2.pop %v6093
    %v6324 = vmul.f32 %v6323, 0.6931472
    %v6325 = vlog2.pop %v6094
    %v6326 = vmul.f32 %v6325, 0.6931472
    %v6327 = vlog2.pop %v6095
    %v6328 = vmul.f32 %v6327, 0.6931472
    %v6329 = vlog2.pop %v6096
    %v6330 = vmul.f32 %v6329, 0.6931472
    %v6331 = vlog2.pop %v6097
    %v6332 = vmul.f32 %v6331, 0.6931472
    %v6333 = vlog2.pop %v6098
    %v6334 = vmul.f32 %v6333, 0.6931472
    %v6335 = vlog2.pop %v6099
    %v6336 = vmul.f32 %v6335, 0.6931472
    %v6337 = vlog2.pop %v6100
    %v6338 = vmul.f32 %v6337, 0.6931472
    %v6339 = vlog2.pop %v6101
    %v6340 = vmul.f32 %v6339, 0.6931472
    %v6341 = vlog2.pop %v6102
    %v6342 = vmul.f32 %v6341, 0.6931472
    %v6343 = vlog2.pop %v6103
    %v6344 = vmul.f32 %v6343, 0.6931472
    %v6345 = vlog2.pop %v6104
    %v6346 = vmul.f32 %v6345, 0.6931472
    %v6347 = vlog2.pop %v6105
    %v6348 = vmul.f32 %v6347, 0.6931472
    %v6349 = vlog2.pop %v6106
    %v6350 = vmul.f32 %v6349, 0.6931472
    %v6351 = vlog2.pop %v6107
    %v6352 = vmul.f32 %v6351, 0.6931472
    %v6353 = vlog2.pop %v6108
    %v6354 = vmul.f32 %v6353, 0.6931472
    %v6355 = vlog2.pop %v6109
    %v6356 = vmul.f32 %v6355, 0.6931472
    %v6357 = vlog2.pop %v6110
    %v6358 = vmul.f32 %v6357, 0.6931472
    %v6359 = vlog2.pop %v6111
    %v6360 = vmul.f32 %v6359, 0.6931472
    %v6361 = vlog2.pop %v6112
    %v6362 = vmul.f32 %v6361, 0.6931472
    %v6363 = vlog2.pop %v6113
    %v6364 = vmul.f32 %v6363, 0.6931472
    %v6365 = vlog2.pop %v6114
    %v6366 = vmul.f32 %v6365, 0.6931472
    %v6367 = vlog2.pop %v6115
    %v6368 = vmul.f32 %v6367, 0.6931472
    %v6369 = vlog2.pop %v6116
    %v6370 = vmul.f32 %v6369, 0.6931472
    %v6371 = vlog2.pop %v6117
    %v6372 = vmul.f32 %v6371, 0.6931472
    %v6373 = vlog2.pop %v6118
    %v6374 = vmul.f32 %v6373, 0.6931472
    %v6375 = vadd.f32 %v5351, %v6120
    %v6376 = vadd.f32 %v5352, %v6122
    %v6377 = vadd.f32 %v5353, %v6124
    %v6378 = vadd.f32 %v5354, %v6126
    %v6379 = vadd.f32 %v5355, %v6128
    %v6380 = vadd.f32 %v5356, %v6130
    %v6381 = vadd.f32 %v5357, %v6132
    %v6382 = vadd.f32 %v5358, %v6134
    %v6383 = vadd.f32 %v5359, %v6136
    %v6384 = vadd.f32 %v5360, %v6138
    %v6385 = vadd.f32 %v5361, %v6140
    %v6386 = vadd.f32 %v5362, %v6142
    %v6387 = vadd.f32 %v5363, %v6144
    %v6388 = vadd.f32 %v5364, %v6146
    %v6389 = vadd.f32 %v5365, %v6148
    %v6390 = vadd.f32 %v5366, %v6150
    %v6391 = vadd.f32 %v5367, %v6152
    %v6392 = vadd.f32 %v5368, %v6154
    %v6393 = vadd.f32 %v5369, %v6156
    %v6394 = vadd.f32 %v5370, %v6158
    %v6395 = vadd.f32 %v5371, %v6160
    %v6396 = vadd.f32 %v5372, %v6162
    %v6397 = vadd.f32 %v5373, %v6164
    %v6398 = vadd.f32 %v5374, %v6166
    %v6399 = vadd.f32 %v5375, %v6168
    %v6400 = vadd.f32 %v5376, %v6170
    %v6401 = vadd.f32 %v5377, %v6172
    %v6402 = vadd.f32 %v5378, %v6174
    %v6403 = vadd.f32 %v5379, %v6176
    %v6404 = vadd.f32 %v5380, %v6178
    %v6405 = vadd.f32 %v5381, %v6180
    %v6406 = vadd.f32 %v5382, %v6182
    %v6407 = vadd.f32 %v5383, %v6184
    %v6408 = vadd.f32 %v5384, %v6186
    %v6409 = vadd.f32 %v5385, %v6188
    %v6410 = vadd.f32 %v5386, %v6190
    %v6411 = vadd.f32 %v5387, %v6192
    %v6412 = vadd.f32 %v5388, %v6194
    %v6413 = vadd.f32 %v5389, %v6196
    %v6414 = vadd.f32 %v5390, %v6198
    %v6415 = vadd.f32 %v5391, %v6200
    %v6416 = vadd.f32 %v5392, %v6202
    %v6417 = vadd.f32 %v5393, %v6204
    %v6418 = vadd.f32 %v5394, %v6206
    %v6419 = vadd.f32 %v5395, %v6208
    %v6420 = vadd.f32 %v5396, %v6210
    %v6421 = vadd.f32 %v5397, %v6212
    %v6422 = vadd.f32 %v5398, %v6214
    %v6423 = vadd.f32 %v5399, %v6216
    %v6424 = vadd.f32 %v5400, %v6218
    %v6425 = vadd.f32 %v5401, %v6220
    %v6426 = vadd.f32 %v5402, %v6222
    %v6427 = vadd.f32 %v5403, %v6224
    %v6428 = vadd.f32 %v5404, %v6226
    %v6429 = vadd.f32 %v5405, %v6228
    %v6430 = vadd.f32 %v5406, %v6230
    %v6431 = vadd.f32 %v5407, %v6232
    %v6432 = vadd.f32 %v5408, %v6234
    %v6433 = vadd.f32 %v5409, %v6236
    %v6434 = vadd.f32 %v5410, %v6238
    %v6435 = vadd.f32 %v5411, %v6240
    %v6436 = vadd.f32 %v5412, %v6242
    %v6437 = vadd.f32 %v5413, %v6244
    %v6438 = vadd.f32 %v5414, %v6246
    %v6439 = vadd.f32 %v5415, %v6248
    %v6440 = vadd.f32 %v5416, %v6250
    %v6441 = vadd.f32 %v5417, %v6252
    %v6442 = vadd.f32 %v5418, %v6254
    %v6443 = vadd.f32 %v5419, %v6256
    %v6444 = vadd.f32 %v5420, %v6258
    %v6445 = vadd.f32 %v5421, %v6260
    %v6446 = vadd.f32 %v5422, %v6262
    %v6447 = vadd.f32 %v5423, %v6264
    %v6448 = vadd.f32 %v5424, %v6266
    %v6449 = vadd.f32 %v5425, %v6268
    %v6450 = vadd.f32 %v5426, %v6270
    %v6451 = vadd.f32 %v5427, %v6272
    %v6452 = vadd.f32 %v5428, %v6274
    %v6453 = vadd.f32 %v5429, %v6276
    %v6454 = vadd.f32 %v5430, %v6278
    %v6455 = vadd.f32 %v5431, %v6280
    %v6456 = vadd.f32 %v5432, %v6282
    %v6457 = vadd.f32 %v5433, %v6284
    %v6458 = vadd.f32 %v5434, %v6286
    %v6459 = vadd.f32 %v5435, %v6288
    %v6460 = vadd.f32 %v5436, %v6290
    %v6461 = vadd.f32 %v5437, %v6292
    %v6462 = vadd.f32 %v5438, %v6294
    %v6463 = vadd.f32 %v5439, %v6296
    %v6464 = vadd.f32 %v5440, %v6298
    %v6465 = vadd.f32 %v5441, %v6300
    %v6466 = vadd.f32 %v5442, %v6302
    %v6467 = vadd.f32 %v5443, %v6304
    %v6468 = vadd.f32 %v5444, %v6306
    %v6469 = vadd.f32 %v5445, %v6308
    %v6470 = vadd.f32 %v5446, %v6310
    %v6471 = vadd.f32 %v5447, %v6312
    %v6472 = vadd.f32 %v5448, %v6314
    %v6473 = vadd.f32 %v5449, %v6316
    %v6474 = vadd.f32 %v5450, %v6318
    %v6475 = vadd.f32 %v5451, %v6320
    %v6476 = vadd.f32 %v5452, %v6322
    %v6477 = vadd.f32 %v5453, %v6324
    %v6478 = vadd.f32 %v5454, %v6326
    %v6479 = vadd.f32 %v5455, %v6328
    %v6480 = vadd.f32 %v5456, %v6330
    %v6481 = vadd.f32 %v5457, %v6332
    %v6482 = vadd.f32 %v5458, %v6334
    %v6483 = vadd.f32 %v5459, %v6336
    %v6484 = vadd.f32 %v5460, %v6338
    %v6485 = vadd.f32 %v5461, %v6340
    %v6486 = vadd.f32 %v5462, %v6342
    %v6487 = vadd.f32 %v5463, %v6344
    %v6488 = vadd.f32 %v5464, %v6346
    %v6489 = vadd.f32 %v5465, %v6348
    %v6490 = vadd.f32 %v5466, %v6350
    %v6491 = vadd.f32 %v5467, %v6352
    %v6492 = vadd.f32 %v5468, %v6354
    %v6493 = vadd.f32 %v5469, %v6356
    %v6494 = vadd.f32 %v5470, %v6358
    %v6495 = vadd.f32 %v5471, %v6360
    %v6496 = vadd.f32 %v5472, %v6362
    %v6497 = vadd.f32 %v5473, %v6364
    %v6498 = vadd.f32 %v5474, %v6366
    %v6499 = vadd.f32 %v5475, %v6368
    %v6500 = vadd.f32 %v5476, %v6370
    %v6501 = vadd.f32 %v5477, %v6372
    %v6502 = vadd.f32 %v5478, %v6374
    %vm6503 = vcmp.gt.f32.partialorder %v4329, 0.0
    %vm6504 = vcmp.gt.f32.partialorder %v4332, 0.0
    %vm6505 = vcmp.gt.f32.partialorder %v4337, 0.0
    %vm6506 = vcmp.gt.f32.partialorder %v4340, 0.0
    %vm6507 = vcmp.gt.f32.partialorder %v4345, 0.0
    %vm6508 = vcmp.gt.f32.partialorder %v4348, 0.0
    %vm6509 = vcmp.gt.f32.partialorder %v4353, 0.0
    %vm6510 = vcmp.gt.f32.partialorder %v4356, 0.0
    %vm6511 = vcmp.gt.f32.partialorder %v4361, 0.0
    %vm6512 = vcmp.gt.f32.partialorder %v4364, 0.0
    %vm6513 = vcmp.gt.f32.partialorder %v4369, 0.0
    %vm6514 = vcmp.gt.f32.partialorder %v4372, 0.0
    %vm6515 = vcmp.gt.f32.partialorder %v4377, 0.0
    %vm6516 = vcmp.gt.f32.partialorder %v4380, 0.0
    %vm6517 = vcmp.gt.f32.partialorder %v4385, 0.0
    %vm6518 = vcmp.gt.f32.partialorder %v4388, 0.0
    %vm6519 = vcmp.gt.f32.partialorder %v4393, 0.0
    %vm6520 = vcmp.gt.f32.partialorder %v4396, 0.0
    %vm6521 = vcmp.gt.f32.partialorder %v4401, 0.0
    %vm6522 = vcmp.gt.f32.partialorder %v4404, 0.0
    %vm6523 = vcmp.gt.f32.partialorder %v4409, 0.0
    %vm6524 = vcmp.gt.f32.partialorder %v4412, 0.0
    %vm6525 = vcmp.gt.f32.partialorder %v4417, 0.0
    %vm6526 = vcmp.gt.f32.partialorder %v4420, 0.0
    %vm6527 = vcmp.gt.f32.partialorder %v4425, 0.0
    %vm6528 = vcmp.gt.f32.partialorder %v4428, 0.0
    %vm6529 = vcmp.gt.f32.partialorder %v4433, 0.0
    %vm6530 = vcmp.gt.f32.partialorder %v4436, 0.0
    %vm6531 = vcmp.gt.f32.partialorder %v4441, 0.0
    %vm6532 = vcmp.gt.f32.partialorder %v4444, 0.0
    %vm6533 = vcmp.gt.f32.partialorder %v4449, 0.0
    %vm6534 = vcmp.gt.f32.partialorder %v4452, 0.0
    %vm6535 = vcmp.gt.f32.partialorder %v4457, 0.0
    %vm6536 = vcmp.gt.f32.partialorder %v4460, 0.0
    %vm6537 = vcmp.gt.f32.partialorder %v4465, 0.0
    %vm6538 = vcmp.gt.f32.partialorder %v4468, 0.0
    %vm6539 = vcmp.gt.f32.partialorder %v4473, 0.0
    %vm6540 = vcmp.gt.f32.partialorder %v4476, 0.0
    %vm6541 = vcmp.gt.f32.partialorder %v4481, 0.0
    %vm6542 = vcmp.gt.f32.partialorder %v4484, 0.0
    %vm6543 = vcmp.gt.f32.partialorder %v4489, 0.0
    %vm6544 = vcmp.gt.f32.partialorder %v4492, 0.0
    %vm6545 = vcmp.gt.f32.partialorder %v4497, 0.0
    %vm6546 = vcmp.gt.f32.partialorder %v4500, 0.0
    %vm6547 = vcmp.gt.f32.partialorder %v4505, 0.0
    %vm6548 = vcmp.gt.f32.partialorder %v4508, 0.0
    %vm6549 = vcmp.gt.f32.partialorder %v4513, 0.0
    %vm6550 = vcmp.gt.f32.partialorder %v4516, 0.0
    %vm6551 = vcmp.gt.f32.partialorder %v4521, 0.0
    %vm6552 = vcmp.gt.f32.partialorder %v4524, 0.0
    %vm6553 = vcmp.gt.f32.partialorder %v4529, 0.0
    %vm6554 = vcmp.gt.f32.partialorder %v4532, 0.0
    %vm6555 = vcmp.gt.f32.partialorder %v4537, 0.0
    %vm6556 = vcmp.gt.f32.partialorder %v4540, 0.0
    %vm6557 = vcmp.gt.f32.partialorder %v4545, 0.0
    %vm6558 = vcmp.gt.f32.partialorder %v4548, 0.0
    %vm6559 = vcmp.gt.f32.partialorder %v4553, 0.0
    %vm6560 = vcmp.gt.f32.partialorder %v4556, 0.0
    %vm6561 = vcmp.gt.f32.partialorder %v4561, 0.0
    %vm6562 = vcmp.gt.f32.partialorder %v4564, 0.0
    %vm6563 = vcmp.gt.f32.partialorder %v4569, 0.0
    %vm6564 = vcmp.gt.f32.partialorder %v4572, 0.0
    %vm6565 = vcmp.gt.f32.partialorder %v4577, 0.0
    %vm6566 = vcmp.gt.f32.partialorder %v4580, 0.0
    %vm6567 = vcmp.gt.f32.partialorder %v4585, 0.0
    %vm6568 = vcmp.gt.f32.partialorder %v4588, 0.0
    %vm6569 = vcmp.gt.f32.partialorder %v4593, 0.0
    %vm6570 = vcmp.gt.f32.partialorder %v4596, 0.0
    %vm6571 = vcmp.gt.f32.partialorder %v4601, 0.0
    %vm6572 = vcmp.gt.f32.partialorder %v4604, 0.0
    %vm6573 = vcmp.gt.f32.partialorder %v4609, 0.0
    %vm6574 = vcmp.gt.f32.partialorder %v4612, 0.0
    %vm6575 = vcmp.gt.f32.partialorder %v4617, 0.0
    %vm6576 = vcmp.gt.f32.partialorder %v4620, 0.0
    %vm6577 = vcmp.gt.f32.partialorder %v4625, 0.0
    %vm6578 = vcmp.gt.f32.partialorder %v4628, 0.0
    %vm6579 = vcmp.gt.f32.partialorder %v4633, 0.0
    %vm6580 = vcmp.gt.f32.partialorder %v4636, 0.0
    %vm6581 = vcmp.gt.f32.partialorder %v4641, 0.0
    %vm6582 = vcmp.gt.f32.partialorder %v4644, 0.0
    %vm6583 = vcmp.gt.f32.partialorder %v4649, 0.0
    %vm6584 = vcmp.gt.f32.partialorder %v4652, 0.0
    %vm6585 = vcmp.gt.f32.partialorder %v4657, 0.0
    %vm6586 = vcmp.gt.f32.partialorder %v4660, 0.0
    %vm6587 = vcmp.gt.f32.partialorder %v4665, 0.0
    %vm6588 = vcmp.gt.f32.partialorder %v4668, 0.0
    %vm6589 = vcmp.gt.f32.partialorder %v4673, 0.0
    %vm6590 = vcmp.gt.f32.partialorder %v4676, 0.0
    %vm6591 = vcmp.gt.f32.partialorder %v4681, 0.0
    %vm6592 = vcmp.gt.f32.partialorder %v4684, 0.0
    %vm6593 = vcmp.gt.f32.partialorder %v4689, 0.0
    %vm6594 = vcmp.gt.f32.partialorder %v4692, 0.0
    %vm6595 = vcmp.gt.f32.partialorder %v4697, 0.0
    %vm6596 = vcmp.gt.f32.partialorder %v4700, 0.0
    %vm6597 = vcmp.gt.f32.partialorder %v4705, 0.0
    %vm6598 = vcmp.gt.f32.partialorder %v4708, 0.0
    %vm6599 = vcmp.gt.f32.partialorder %v4713, 0.0
    %vm6600 = vcmp.gt.f32.partialorder %v4716, 0.0
    %vm6601 = vcmp.gt.f32.partialorder %v4721, 0.0
    %vm6602 = vcmp.gt.f32.partialorder %v4724, 0.0
    %vm6603 = vcmp.gt.f32.partialorder %v4729, 0.0
    %vm6604 = vcmp.gt.f32.partialorder %v4732, 0.0
    %vm6605 = vcmp.gt.f32.partialorder %v4737, 0.0
    %vm6606 = vcmp.gt.f32.partialorder %v4740, 0.0
    %vm6607 = vcmp.gt.f32.partialorder %v4745, 0.0
    %vm6608 = vcmp.gt.f32.partialorder %v4748, 0.0
    %vm6609 = vcmp.gt.f32.partialorder %v4753, 0.0
    %vm6610 = vcmp.gt.f32.partialorder %v4756, 0.0
    %vm6611 = vcmp.gt.f32.partialorder %v4761, 0.0
    %vm6612 = vcmp.gt.f32.partialorder %v4764, 0.0
    %vm6613 = vcmp.gt.f32.partialorder %v4769, 0.0
    %vm6614 = vcmp.gt.f32.partialorder %v4772, 0.0
    %vm6615 = vcmp.gt.f32.partialorder %v4777, 0.0
    %vm6616 = vcmp.gt.f32.partialorder %v4780, 0.0
    %vm6617 = vcmp.gt.f32.partialorder %v4785, 0.0
    %vm6618 = vcmp.gt.f32.partialorder %v4788, 0.0
    %vm6619 = vcmp.gt.f32.partialorder %v4793, 0.0
    %vm6620 = vcmp.gt.f32.partialorder %v4796, 0.0
    %vm6621 = vcmp.gt.f32.partialorder %v4801, 0.0
    %vm6622 = vcmp.gt.f32.partialorder %v4804, 0.0
    %vm6623 = vcmp.gt.f32.partialorder %v4809, 0.0
    %vm6624 = vcmp.gt.f32.partialorder %v4812, 0.0
    %vm6625 = vcmp.gt.f32.partialorder %v4817, 0.0
    %vm6626 = vcmp.gt.f32.partialorder %v4820, 0.0
    %vm6627 = vcmp.gt.f32.partialorder %v4825, 0.0
    %vm6628 = vcmp.gt.f32.partialorder %v4828, 0.0
    %vm6629 = vcmp.gt.f32.partialorder %v4833, 0.0
    %vm6630 = vcmp.gt.f32.partialorder %v4836, 0.0
    %v6631 = vsel %vm6503, 1.0, -1.0
    %v6632 = vsel %vm6504, 1.0, -1.0
    %v6633 = vsel %vm6505, 1.0, -1.0
    %v6634 = vsel %vm6506, 1.0, -1.0
    %v6635 = vsel %vm6507, 1.0, -1.0
    %v6636 = vsel %vm6508, 1.0, -1.0
    %v6637 = vsel %vm6509, 1.0, -1.0
    %v6638 = vsel %vm6510, 1.0, -1.0
    %v6639 = vsel %vm6511, 1.0, -1.0
    %v6640 = vsel %vm6512, 1.0, -1.0
    %v6641 = vsel %vm6513, 1.0, -1.0
    %v6642 = vsel %vm6514, 1.0, -1.0
    %v6643 = vsel %vm6515, 1.0, -1.0
    %v6644 = vsel %vm6516, 1.0, -1.0
    %v6645 = vsel %vm6517, 1.0, -1.0
    %v6646 = vsel %vm6518, 1.0, -1.0
    %v6647 = vsel %vm6519, 1.0, -1.0
    %v6648 = vsel %vm6520, 1.0, -1.0
    %v6649 = vsel %vm6521, 1.0, -1.0
    %v6650 = vsel %vm6522, 1.0, -1.0
    %v6651 = vsel %vm6523, 1.0, -1.0
    %v6652 = vsel %vm6524, 1.0, -1.0
    %v6653 = vsel %vm6525, 1.0, -1.0
    %v6654 = vsel %vm6526, 1.0, -1.0
    %v6655 = vsel %vm6527, 1.0, -1.0
    %v6656 = vsel %vm6528, 1.0, -1.0
    %v6657 = vsel %vm6529, 1.0, -1.0
    %v6658 = vsel %vm6530, 1.0, -1.0
    %v6659 = vsel %vm6531, 1.0, -1.0
    %v6660 = vsel %vm6532, 1.0, -1.0
    %v6661 = vsel %vm6533, 1.0, -1.0
    %v6662 = vsel %vm6534, 1.0, -1.0
    %v6663 = vsel %vm6535, 1.0, -1.0
    %v6664 = vsel %vm6536, 1.0, -1.0
    %v6665 = vsel %vm6537, 1.0, -1.0
    %v6666 = vsel %vm6538, 1.0, -1.0
    %v6667 = vsel %vm6539, 1.0, -1.0
    %v6668 = vsel %vm6540, 1.0, -1.0
    %v6669 = vsel %vm6541, 1.0, -1.0
    %v6670 = vsel %vm6542, 1.0, -1.0
    %v6671 = vsel %vm6543, 1.0, -1.0
    %v6672 = vsel %vm6544, 1.0, -1.0
    %v6673 = vsel %vm6545, 1.0, -1.0
    %v6674 = vsel %vm6546, 1.0, -1.0
    %v6675 = vsel %vm6547, 1.0, -1.0
    %v6676 = vsel %vm6548, 1.0, -1.0
    %v6677 = vsel %vm6549, 1.0, -1.0
    %v6678 = vsel %vm6550, 1.0, -1.0
    %v6679 = vsel %vm6551, 1.0, -1.0
    %v6680 = vsel %vm6552, 1.0, -1.0
    %v6681 = vsel %vm6553, 1.0, -1.0
    %v6682 = vsel %vm6554, 1.0, -1.0
    %v6683 = vsel %vm6555, 1.0, -1.0
    %v6684 = vsel %vm6556, 1.0, -1.0
    %v6685 = vsel %vm6557, 1.0, -1.0
    %v6686 = vsel %vm6558, 1.0, -1.0
    %v6687 = vsel %vm6559, 1.0, -1.0
    %v6688 = vsel %vm6560, 1.0, -1.0
    %v6689 = vsel %vm6561, 1.0, -1.0
    %v6690 = vsel %vm6562, 1.0, -1.0
    %v6691 = vsel %vm6563, 1.0, -1.0
    %v6692 = vsel %vm6564, 1.0, -1.0
    %v6693 = vsel %vm6565, 1.0, -1.0
    %v6694 = vsel %vm6566, 1.0, -1.0
    %v6695 = vsel %vm6567, 1.0, -1.0
    %v6696 = vsel %vm6568, 1.0, -1.0
    %v6697 = vsel %vm6569, 1.0, -1.0
    %v6698 = vsel %vm6570, 1.0, -1.0
    %v6699 = vsel %vm6571, 1.0, -1.0
    %v6700 = vsel %vm6572, 1.0, -1.0
    %v6701 = vsel %vm6573, 1.0, -1.0
    %v6702 = vsel %vm6574, 1.0, -1.0
    %v6703 = vsel %vm6575, 1.0, -1.0
    %v6704 = vsel %vm6576, 1.0, -1.0
    %v6705 = vsel %vm6577, 1.0, -1.0
    %v6706 = vsel %vm6578, 1.0, -1.0
    %v6707 = vsel %vm6579, 1.0, -1.0
    %v6708 = vsel %vm6580, 1.0, -1.0
    %v6709 = vsel %vm6581, 1.0, -1.0
    %v6710 = vsel %vm6582, 1.0, -1.0
    %v6711 = vsel %vm6583, 1.0, -1.0
    %v6712 = vsel %vm6584, 1.0, -1.0
    %v6713 = vsel %vm6585, 1.0, -1.0
    %v6714 = vsel %vm6586, 1.0, -1.0
    %v6715 = vsel %vm6587, 1.0, -1.0
    %v6716 = vsel %vm6588, 1.0, -1.0
    %v6717 = vsel %vm6589, 1.0, -1.0
    %v6718 = vsel %vm6590, 1.0, -1.0
    %v6719 = vsel %vm6591, 1.0, -1.0
    %v6720 = vsel %vm6592, 1.0, -1.0
    %v6721 = vsel %vm6593, 1.0, -1.0
    %v6722 = vsel %vm6594, 1.0, -1.0
    %v6723 = vsel %vm6595, 1.0, -1.0
    %v6724 = vsel %vm6596, 1.0, -1.0
    %v6725 = vsel %vm6597, 1.0, -1.0
    %v6726 = vsel %vm6598, 1.0, -1.0
    %v6727 = vsel %vm6599, 1.0, -1.0
    %v6728 = vsel %vm6600, 1.0, -1.0
    %v6729 = vsel %vm6601, 1.0, -1.0
    %v6730 = vsel %vm6602, 1.0, -1.0
    %v6731 = vsel %vm6603, 1.0, -1.0
    %v6732 = vsel %vm6604, 1.0, -1.0
    %v6733 = vsel %vm6605, 1.0, -1.0
    %v6734 = vsel %vm6606, 1.0, -1.0
    %v6735 = vsel %vm6607, 1.0, -1.0
    %v6736 = vsel %vm6608, 1.0, -1.0
    %v6737 = vsel %vm6609, 1.0, -1.0
    %v6738 = vsel %vm6610, 1.0, -1.0
    %v6739 = vsel %vm6611, 1.0, -1.0
    %v6740 = vsel %vm6612, 1.0, -1.0
    %v6741 = vsel %vm6613, 1.0, -1.0
    %v6742 = vsel %vm6614, 1.0, -1.0
    %v6743 = vsel %vm6615, 1.0, -1.0
    %v6744 = vsel %vm6616, 1.0, -1.0
    %v6745 = vsel %vm6617, 1.0, -1.0
    %v6746 = vsel %vm6618, 1.0, -1.0
    %v6747 = vsel %vm6619, 1.0, -1.0
    %v6748 = vsel %vm6620, 1.0, -1.0
    %v6749 = vsel %vm6621, 1.0, -1.0
    %v6750 = vsel %vm6622, 1.0, -1.0
    %v6751 = vsel %vm6623, 1.0, -1.0
    %v6752 = vsel %vm6624, 1.0, -1.0
    %v6753 = vsel %vm6625, 1.0, -1.0
    %v6754 = vsel %vm6626, 1.0, -1.0
    %v6755 = vsel %vm6627, 1.0, -1.0
    %v6756 = vsel %vm6628, 1.0, -1.0
    %v6757 = vsel %vm6629, 1.0, -1.0
    %v6758 = vsel %vm6630, 1.0, -1.0
    %v6759 = vmul.f32 %v5095, %v6375
    %v6760 = vmul.f32 %v5096, %v6376
    %v6761 = vmul.f32 %v5097, %v6377
    %v6762 = vmul.f32 %v5098, %v6378
    %v6763 = vmul.f32 %v5099, %v6379
    %v6764 = vmul.f32 %v5100, %v6380
    %v6765 = vmul.f32 %v5101, %v6381
    %v6766 = vmul.f32 %v5102, %v6382
    %v6767 = vmul.f32 %v5103, %v6383
    %v6768 = vmul.f32 %v5104, %v6384
    %v6769 = vmul.f32 %v5105, %v6385
    %v6770 = vmul.f32 %v5106, %v6386
    %v6771 = vmul.f32 %v5107, %v6387
    %v6772 = vmul.f32 %v5108, %v6388
    %v6773 = vmul.f32 %v5109, %v6389
    %v6774 = vmul.f32 %v5110, %v6390
    %v6775 = vmul.f32 %v5111, %v6391
    %v6776 = vmul.f32 %v5112, %v6392
    %v6777 = vmul.f32 %v5113, %v6393
    %v6778 = vmul.f32 %v5114, %v6394
    %v6779 = vmul.f32 %v5115, %v6395
    %v6780 = vmul.f32 %v5116, %v6396
    %v6781 = vmul.f32 %v5117, %v6397
    %v6782 = vmul.f32 %v5118, %v6398
    %v6783 = vmul.f32 %v5119, %v6399
    %v6784 = vmul.f32 %v5120, %v6400
    %v6785 = vmul.f32 %v5121, %v6401
    %v6786 = vmul.f32 %v5122, %v6402
    %v6787 = vmul.f32 %v5123, %v6403
    %v6788 = vmul.f32 %v5124, %v6404
    %v6789 = vmul.f32 %v5125, %v6405
    %v6790 = vmul.f32 %v5126, %v6406
    %v6791 = vmul.f32 %v5127, %v6407
    %v6792 = vmul.f32 %v5128, %v6408
    %v6793 = vmul.f32 %v5129, %v6409
    %v6794 = vmul.f32 %v5130, %v6410
    %v6795 = vmul.f32 %v5131, %v6411
    %v6796 = vmul.f32 %v5132, %v6412
    %v6797 = vmul.f32 %v5133, %v6413
    %v6798 = vmul.f32 %v5134, %v6414
    %v6799 = vmul.f32 %v5135, %v6415
    %v6800 = vmul.f32 %v5136, %v6416
    %v6801 = vmul.f32 %v5137, %v6417
    %v6802 = vmul.f32 %v5138, %v6418
    %v6803 = vmul.f32 %v5139, %v6419
    %v6804 = vmul.f32 %v5140, %v6420
    %v6805 = vmul.f32 %v5141, %v6421
    %v6806 = vmul.f32 %v5142, %v6422
    %v6807 = vmul.f32 %v5143, %v6423
    %v6808 = vmul.f32 %v5144, %v6424
    %v6809 = vmul.f32 %v5145, %v6425
    %v6810 = vmul.f32 %v5146, %v6426
    %v6811 = vmul.f32 %v5147, %v6427
    %v6812 = vmul.f32 %v5148, %v6428
    %v6813 = vmul.f32 %v5149, %v6429
    %v6814 = vmul.f32 %v5150, %v6430
    %v6815 = vmul.f32 %v5151, %v6431
    %v6816 = vmul.f32 %v5152, %v6432
    %v6817 = vmul.f32 %v5153, %v6433
    %v6818 = vmul.f32 %v5154, %v6434
    %v6819 = vmul.f32 %v5155, %v6435
    %v6820 = vmul.f32 %v5156, %v6436
    %v6821 = vmul.f32 %v5157, %v6437
    %v6822 = vmul.f32 %v5158, %v6438
    %v6823 = vmul.f32 %v5159, %v6439
    %v6824 = vmul.f32 %v5160, %v6440
    %v6825 = vmul.f32 %v5161, %v6441
    %v6826 = vmul.f32 %v5162, %v6442
    %v6827 = vmul.f32 %v5163, %v6443
    %v6828 = vmul.f32 %v5164, %v6444
    %v6829 = vmul.f32 %v5165, %v6445
    %v6830 = vmul.f32 %v5166, %v6446
    %v6831 = vmul.f32 %v5167, %v6447
    %v6832 = vmul.f32 %v5168, %v6448
    %v6833 = vmul.f32 %v5169, %v6449
    %v6834 = vmul.f32 %v5170, %v6450
    %v6835 = vmul.f32 %v5171, %v6451
    %v6836 = vmul.f32 %v5172, %v6452
    %v6837 = vmul.f32 %v5173, %v6453
    %v6838 = vmul.f32 %v5174, %v6454
    %v6839 = vmul.f32 %v5175, %v6455
    %v6840 = vmul.f32 %v5176, %v6456
    %v6841 = vmul.f32 %v5177, %v6457
    %v6842 = vmul.f32 %v5178, %v6458
    %v6843 = vmul.f32 %v5179, %v6459
    %v6844 = vmul.f32 %v5180, %v6460
    %v6845 = vmul.f32 %v5181, %v6461
    %v6846 = vmul.f32 %v5182, %v6462
    %v6847 = vmul.f32 %v5183, %v6463
    %v6848 = vmul.f32 %v5184, %v6464
    %v6849 = vmul.f32 %v5185, %v6465
    %v6850 = vmul.f32 %v5186, %v6466
    %v6851 = vmul.f32 %v5187, %v6467
    %v6852 = vmul.f32 %v5188, %v6468
    %v6853 = vmul.f32 %v5189, %v6469
    %v6854 = vmul.f32 %v5190, %v6470
    %v6855 = vmul.f32 %v5191, %v6471
    %v6856 = vmul.f32 %v5192, %v6472
    %v6857 = vmul.f32 %v5193, %v6473
    %v6858 = vmul.f32 %v5194, %v6474
    %v6859 = vmul.f32 %v5195, %v6475
    %v6860 = vmul.f32 %v5196, %v6476
    %v6861 = vmul.f32 %v5197, %v6477
    %v6862 = vmul.f32 %v5198, %v6478
    %v6863 = vmul.f32 %v5199, %v6479
    %v6864 = vmul.f32 %v5200, %v6480
    %v6865 = vmul.f32 %v5201, %v6481
    %v6866 = vmul.f32 %v5202, %v6482
    %v6867 = vmul.f32 %v5203, %v6483
    %v6868 = vmul.f32 %v5204, %v6484
    %v6869 = vmul.f32 %v5205, %v6485
    %v6870 = vmul.f32 %v5206, %v6486
    %v6871 = vmul.f32 %v5207, %v6487
    %v6872 = vmul.f32 %v5208, %v6488
    %v6873 = vmul.f32 %v5209, %v6489
    %v6874 = vmul.f32 %v5210, %v6490
    %v6875 = vmul.f32 %v5211, %v6491
    %v6876 = vmul.f32 %v5212, %v6492
    %v6877 = vmul.f32 %v5213, %v6493
    %v6878 = vmul.f32 %v5214, %v6494
    %v6879 = vmul.f32 %v5215, %v6495
    %v6880 = vmul.f32 %v5216, %v6496
    %v6881 = vmul.f32 %v5217, %v6497
    %v6882 = vmul.f32 %v5218, %v6498
    %v6883 = vmul.f32 %v5219, %v6499
    %v6884 = vmul.f32 %v5220, %v6500
    %v6885 = vmul.f32 %v5221, %v6501
    %v6886 = vmul.f32 %v5222, %v6502
    %vm6887 = vcmask 7168
    %v6888 = vsel %vm6887, %v6759, 0.0
    %v6889 = vsel %vm6887, %v6760, 0.0
    %v6890 = vadd.f32 %v6888, %v6889
    %v6891 = vsel %vm6887, %v6761, 0.0
    %v6892 = vadd.f32 %v6890, %v6891
    %v6893 = vsel %vm6887, %v6762, 0.0
    %v6894 = vadd.f32 %v6892, %v6893
    %v6895 = vsel %vm6887, %v6763, 0.0
    %v6896 = vadd.f32 %v6894, %v6895
    %v6897 = vsel %vm6887, %v6764, 0.0
    %v6898 = vadd.f32 %v6896, %v6897
    %v6899 = vsel %vm6887, %v6765, 0.0
    %v6900 = vadd.f32 %v6898, %v6899
    %v6901 = vsel %vm6887, %v6766, 0.0
    %v6902 = vadd.f32 %v6900, %v6901
    %v6903 = vsel %vm6887, %v6767, 0.0
    %v6904 = vadd.f32 %v6902, %v6903
    %v6905 = vsel %vm6887, %v6768, 0.0
    %v6906 = vadd.f32 %v6904, %v6905
    %v6907 = vsel %vm6887, %v6769, 0.0
    %v6908 = vadd.f32 %v6906, %v6907
    %v6909 = vsel %vm6887, %v6770, 0.0
    %v6910 = vadd.f32 %v6908, %v6909
    %v6911 = vsel %vm6887, %v6771, 0.0
    %v6912 = vadd.f32 %v6910, %v6911
    %v6913 = vsel %vm6887, %v6772, 0.0
    %v6914 = vadd.f32 %v6912, %v6913
    %v6915 = vsel %vm6887, %v6773, 0.0
    %v6916 = vadd.f32 %v6914, %v6915
    %v6917 = vsel %vm6887, %v6774, 0.0
    %v6918 = vadd.f32 %v6916, %v6917
    %v6919 = vsel %vm6887, %v6775, 0.0
    %v6920 = vadd.f32 %v6918, %v6919
    %v6921 = vsel %vm6887, %v6776, 0.0
    %v6922 = vadd.f32 %v6920, %v6921
    %v6923 = vsel %vm6887, %v6777, 0.0
    %v6924 = vadd.f32 %v6922, %v6923
    %v6925 = vsel %vm6887, %v6778, 0.0
    %v6926 = vadd.f32 %v6924, %v6925
    %v6927 = vsel %vm6887, %v6779, 0.0
    %v6928 = vadd.f32 %v6926, %v6927
    %v6929 = vsel %vm6887, %v6780, 0.0
    %v6930 = vadd.f32 %v6928, %v6929
    %v6931 = vsel %vm6887, %v6781, 0.0
    %v6932 = vadd.f32 %v6930, %v6931
    %v6933 = vsel %vm6887, %v6782, 0.0
    %v6934 = vadd.f32 %v6932, %v6933
    %v6935 = vsel %vm6887, %v6783, 0.0
    %v6936 = vadd.f32 %v6934, %v6935
    %v6937 = vsel %vm6887, %v6784, 0.0
    %v6938 = vadd.f32 %v6936, %v6937
    %v6939 = vsel %vm6887, %v6785, 0.0
    %v6940 = vadd.f32 %v6938, %v6939
    %v6941 = vsel %vm6887, %v6786, 0.0
    %v6942 = vadd.f32 %v6940, %v6941
    %v6943 = vsel %vm6887, %v6787, 0.0
    %v6944 = vadd.f32 %v6942, %v6943
    %v6945 = vsel %vm6887, %v6788, 0.0
    %v6946 = vadd.f32 %v6944, %v6945
    %v6947 = vsel %vm6887, %v6789, 0.0
    %v6948 = vadd.f32 %v6946, %v6947
    %v6949 = vsel %vm6887, %v6790, 0.0
    %v6950 = vadd.f32 %v6948, %v6949
    %v6951 = vsel %vm6887, %v6791, 0.0
    %v6952 = vadd.f32 %v6950, %v6951
    %v6953 = vsel %vm6887, %v6792, 0.0
    %v6954 = vadd.f32 %v6952, %v6953
    %v6955 = vsel %vm6887, %v6793, 0.0
    %v6956 = vadd.f32 %v6954, %v6955
    %v6957 = vsel %vm6887, %v6794, 0.0
    %v6958 = vadd.f32 %v6956, %v6957
    %v6959 = vsel %vm6887, %v6795, 0.0
    %v6960 = vadd.f32 %v6958, %v6959
    %v6961 = vsel %vm6887, %v6796, 0.0
    %v6962 = vadd.f32 %v6960, %v6961
    %v6963 = vsel %vm6887, %v6797, 0.0
    %v6964 = vadd.f32 %v6962, %v6963
    %v6965 = vsel %vm6887, %v6798, 0.0
    %v6966 = vadd.f32 %v6964, %v6965
    %v6967 = vsel %vm6887, %v6799, 0.0
    %v6968 = vadd.f32 %v6966, %v6967
    %v6969 = vsel %vm6887, %v6800, 0.0
    %v6970 = vadd.f32 %v6968, %v6969
    %v6971 = vsel %vm6887, %v6801, 0.0
    %v6972 = vadd.f32 %v6970, %v6971
    %v6973 = vsel %vm6887, %v6802, 0.0
    %v6974 = vadd.f32 %v6972, %v6973
    %v6975 = vsel %vm6887, %v6803, 0.0
    %v6976 = vadd.f32 %v6974, %v6975
    %v6977 = vsel %vm6887, %v6804, 0.0
    %v6978 = vadd.f32 %v6976, %v6977
    %v6979 = vsel %vm6887, %v6805, 0.0
    %v6980 = vadd.f32 %v6978, %v6979
    %v6981 = vsel %vm6887, %v6806, 0.0
    %v6982 = vadd.f32 %v6980, %v6981
    %v6983 = vsel %vm6887, %v6807, 0.0
    %v6984 = vadd.f32 %v6982, %v6983
    %v6985 = vsel %vm6887, %v6808, 0.0
    %v6986 = vadd.f32 %v6984, %v6985
    %v6987 = vsel %vm6887, %v6809, 0.0
    %v6988 = vadd.f32 %v6986, %v6987
    %v6989 = vsel %vm6887, %v6810, 0.0
    %v6990 = vadd.f32 %v6988, %v6989
    %v6991 = vsel %vm6887, %v6811, 0.0
    %v6992 = vadd.f32 %v6990, %v6991
    %v6993 = vsel %vm6887, %v6812, 0.0
    %v6994 = vadd.f32 %v6992, %v6993
    %v6995 = vsel %vm6887, %v6813, 0.0
    %v6996 = vadd.f32 %v6994, %v6995
    %v6997 = vsel %vm6887, %v6814, 0.0
    %v6998 = vadd.f32 %v6996, %v6997
    %v6999 = vsel %vm6887, %v6815, 0.0
    %v7000 = vadd.f32 %v6998, %v6999
    %v7001 = vsel %vm6887, %v6816, 0.0
    %v7002 = vadd.f32 %v7000, %v7001
    %v7003 = vsel %vm6887, %v6817, 0.0
    %v7004 = vadd.f32 %v7002, %v7003
    %v7005 = vsel %vm6887, %v6818, 0.0
    %v7006 = vadd.f32 %v7004, %v7005
    %v7007 = vsel %vm6887, %v6819, 0.0
    %v7008 = vadd.f32 %v7006, %v7007
    %v7009 = vsel %vm6887, %v6820, 0.0
    %v7010 = vadd.f32 %v7008, %v7009
    %v7011 = vsel %vm6887, %v6821, 0.0
    %v7012 = vadd.f32 %v7010, %v7011
    %v7013 = vsel %vm6887, %v6822, 0.0
    %v7014 = vadd.f32 %v7012, %v7013
    %v7015 = vsel %vm6887, %v6823, 0.0
    %v7016 = vadd.f32 %v7014, %v7015
    %v7017 = vsel %vm6887, %v6824, 0.0
    %v7018 = vadd.f32 %v7016, %v7017
    %v7019 = vsel %vm6887, %v6825, 0.0
    %v7020 = vadd.f32 %v7018, %v7019
    %v7021 = vsel %vm6887, %v6826, 0.0
    %v7022 = vadd.f32 %v7020, %v7021
    %v7023 = vsel %vm6887, %v6827, 0.0
    %v7024 = vadd.f32 %v7022, %v7023
    %v7025 = vsel %vm6887, %v6828, 0.0
    %v7026 = vadd.f32 %v7024, %v7025
    %v7027 = vsel %vm6887, %v6829, 0.0
    %v7028 = vadd.f32 %v7026, %v7027
    %v7029 = vsel %vm6887, %v6830, 0.0
    %v7030 = vadd.f32 %v7028, %v7029
    %v7031 = vsel %vm6887, %v6831, 0.0
    %v7032 = vadd.f32 %v7030, %v7031
    %v7033 = vsel %vm6887, %v6832, 0.0
    %v7034 = vadd.f32 %v7032, %v7033
    %v7035 = vsel %vm6887, %v6833, 0.0
    %v7036 = vadd.f32 %v7034, %v7035
    %v7037 = vsel %vm6887, %v6834, 0.0
    %v7038 = vadd.f32 %v7036, %v7037
    %v7039 = vsel %vm6887, %v6835, 0.0
    %v7040 = vadd.f32 %v7038, %v7039
    %v7041 = vsel %vm6887, %v6836, 0.0
    %v7042 = vadd.f32 %v7040, %v7041
    %v7043 = vsel %vm6887, %v6837, 0.0
    %v7044 = vadd.f32 %v7042, %v7043
    %v7045 = vsel %vm6887, %v6838, 0.0
    %v7046 = vadd.f32 %v7044, %v7045
    %v7047 = vsel %vm6887, %v6839, 0.0
    %v7048 = vadd.f32 %v7046, %v7047
    %v7049 = vsel %vm6887, %v6840, 0.0
    %v7050 = vadd.f32 %v7048, %v7049
    %v7051 = vsel %vm6887, %v6841, 0.0
    %v7052 = vadd.f32 %v7050, %v7051
    %v7053 = vsel %vm6887, %v6842, 0.0
    %v7054 = vadd.f32 %v7052, %v7053
    %v7055 = vsel %vm6887, %v6843, 0.0
    %v7056 = vadd.f32 %v7054, %v7055
    %v7057 = vsel %vm6887, %v6844, 0.0
    %v7058 = vadd.f32 %v7056, %v7057
    %v7059 = vsel %vm6887, %v6845, 0.0
    %v7060 = vadd.f32 %v7058, %v7059
    %v7061 = vsel %vm6887, %v6846, 0.0
    %v7062 = vadd.f32 %v7060, %v7061
    %v7063 = vsel %vm6887, %v6847, 0.0
    %v7064 = vadd.f32 %v7062, %v7063
    %v7065 = vsel %vm6887, %v6848, 0.0
    %v7066 = vadd.f32 %v7064, %v7065
    %v7067 = vsel %vm6887, %v6849, 0.0
    %v7068 = vadd.f32 %v7066, %v7067
    %v7069 = vsel %vm6887, %v6850, 0.0
    %v7070 = vadd.f32 %v7068, %v7069
    %v7071 = vsel %vm6887, %v6851, 0.0
    %v7072 = vadd.f32 %v7070, %v7071
    %v7073 = vsel %vm6887, %v6852, 0.0
    %v7074 = vadd.f32 %v7072, %v7073
    %v7075 = vsel %vm6887, %v6853, 0.0
    %v7076 = vadd.f32 %v7074, %v7075
    %v7077 = vsel %vm6887, %v6854, 0.0
    %v7078 = vadd.f32 %v7076, %v7077
    %v7079 = vsel %vm6887, %v6855, 0.0
    %v7080 = vadd.f32 %v7078, %v7079
    %v7081 = vsel %vm6887, %v6856, 0.0
    %v7082 = vadd.f32 %v7080, %v7081
    %v7083 = vsel %vm6887, %v6857, 0.0
    %v7084 = vadd.f32 %v7082, %v7083
    %v7085 = vsel %vm6887, %v6858, 0.0
    %v7086 = vadd.f32 %v7084, %v7085
    %v7087 = vsel %vm6887, %v6859, 0.0
    %v7088 = vadd.f32 %v7086, %v7087
    %v7089 = vsel %vm6887, %v6860, 0.0
    %v7090 = vadd.f32 %v7088, %v7089
    %v7091 = vsel %vm6887, %v6861, 0.0
    %v7092 = vadd.f32 %v7090, %v7091
    %v7093 = vsel %vm6887, %v6862, 0.0
    %v7094 = vadd.f32 %v7092, %v7093
    %v7095 = vsel %vm6887, %v6863, 0.0
    %v7096 = vadd.f32 %v7094, %v7095
    %v7097 = vsel %vm6887, %v6864, 0.0
    %v7098 = vadd.f32 %v7096, %v7097
    %v7099 = vsel %vm6887, %v6865, 0.0
    %v7100 = vadd.f32 %v7098, %v7099
    %v7101 = vsel %vm6887, %v6866, 0.0
    %v7102 = vadd.f32 %v7100, %v7101
    %v7103 = vsel %vm6887, %v6867, 0.0
    %v7104 = vadd.f32 %v7102, %v7103
    %v7105 = vsel %vm6887, %v6868, 0.0
    %v7106 = vadd.f32 %v7104, %v7105
    %v7107 = vsel %vm6887, %v6869, 0.0
    %v7108 = vadd.f32 %v7106, %v7107
    %v7109 = vsel %vm6887, %v6870, 0.0
    %v7110 = vadd.f32 %v7108, %v7109
    %v7111 = vsel %vm6887, %v6871, 0.0
    %v7112 = vadd.f32 %v7110, %v7111
    %v7113 = vsel %vm6887, %v6872, 0.0
    %v7114 = vadd.f32 %v7112, %v7113
    %v7115 = vsel %vm6887, %v6873, 0.0
    %v7116 = vadd.f32 %v7114, %v7115
    %v7117 = vsel %vm6887, %v6874, 0.0
    %v7118 = vadd.f32 %v7116, %v7117
    %v7119 = vsel %vm6887, %v6875, 0.0
    %v7120 = vadd.f32 %v7118, %v7119
    %v7121 = vsel %vm6887, %v6876, 0.0
    %v7122 = vadd.f32 %v7120, %v7121
    %v7123 = vsel %vm6887, %v6877, 0.0
    %v7124 = vadd.f32 %v7122, %v7123
    %v7125 = vsel %vm6887, %v6878, 0.0
    %v7126 = vadd.f32 %v7124, %v7125
    %v7127 = vsel %vm6887, %v6879, 0.0
    %v7128 = vadd.f32 %v7126, %v7127
    %v7129 = vsel %vm6887, %v6880, 0.0
    %v7130 = vadd.f32 %v7128, %v7129
    %v7131 = vsel %vm6887, %v6881, 0.0
    %v7132 = vadd.f32 %v7130, %v7131
    %v7133 = vsel %vm6887, %v6882, 0.0
    %v7134 = vadd.f32 %v7132, %v7133
    %v7135 = vsel %vm6887, %v6883, 0.0
    %v7136 = vadd.f32 %v7134, %v7135
    %v7137 = vsel %vm6887, %v6884, 0.0
    %v7138 = vadd.f32 %v7136, %v7137
    %v7139 = vsel %vm6887, %v6885, 0.0
    %v7140 = vadd.f32 %v7138, %v7139
    %v7141 = vsel %vm6887, %v6886, 0.0
    %v7142 = vadd.f32 %v7140, %v7141
    %7143 = vadd.xlane.f32.xlu0 %v7142
    %v7144 = vpop.xlane.xlu0 %7143
    %v7145 = vrot.slane %v7144, 4
    %v7146 = vadd.f32 %v7144, %v7145
    %v7147 = vrot.slane %v7146, 2
    %v7148 = vadd.f32 %v7146, %v7147
    %v7149 = vrot.slane %v7148, 1
    %v7150 = vadd.f32 %v7148, %v7149
    %s7151 = vtos %v7150
    %v7152 = vsel %vm6887, %v5095, 0.0
    %v7153 = vsel %vm6887, %v5096, 0.0
    %v7154 = vadd.f32 %v7152, %v7153
    %v7155 = vsel %vm6887, %v5097, 0.0
    %v7156 = vadd.f32 %v7154, %v7155
    %v7157 = vsel %vm6887, %v5098, 0.0
    %v7158 = vadd.f32 %v7156, %v7157
    %v7159 = vsel %vm6887, %v5099, 0.0
    %v7160 = vadd.f32 %v7158, %v7159
    %v7161 = vsel %vm6887, %v5100, 0.0
    %v7162 = vadd.f32 %v7160, %v7161
    %v7163 = vsel %vm6887, %v5101, 0.0
    %v7164 = vadd.f32 %v7162, %v7163
    %v7165 = vsel %vm6887, %v5102, 0.0
    %v7166 = vadd.f32 %v7164, %v7165
    %v7167 = vsel %vm6887, %v5103, 0.0
    %v7168 = vadd.f32 %v7166, %v7167
    %v7169 = vsel %vm6887, %v5104, 0.0
    %v7170 = vadd.f32 %v7168, %v7169
    %v7171 = vsel %vm6887, %v5105, 0.0
    %v7172 = vadd.f32 %v7170, %v7171
    %v7173 = vsel %vm6887, %v5106, 0.0
    %v7174 = vadd.f32 %v7172, %v7173
    %v7175 = vsel %vm6887, %v5107, 0.0
    %v7176 = vadd.f32 %v7174, %v7175
    %v7177 = vsel %vm6887, %v5108, 0.0
    %v7178 = vadd.f32 %v7176, %v7177
    %v7179 = vsel %vm6887, %v5109, 0.0
    %v7180 = vadd.f32 %v7178, %v7179
    %v7181 = vsel %vm6887, %v5110, 0.0
    %v7182 = vadd.f32 %v7180, %v7181
    %v7183 = vsel %vm6887, %v5111, 0.0
    %v7184 = vadd.f32 %v7182, %v7183
    %v7185 = vsel %vm6887, %v5112, 0.0
    %v7186 = vadd.f32 %v7184, %v7185
    %v7187 = vsel %vm6887, %v5113, 0.0
    %v7188 = vadd.f32 %v7186, %v7187
    %v7189 = vsel %vm6887, %v5114, 0.0
    %v7190 = vadd.f32 %v7188, %v7189
    %v7191 = vsel %vm6887, %v5115, 0.0
    %v7192 = vadd.f32 %v7190, %v7191
    %v7193 = vsel %vm6887, %v5116, 0.0
    %v7194 = vadd.f32 %v7192, %v7193
    %v7195 = vsel %vm6887, %v5117, 0.0
    %v7196 = vadd.f32 %v7194, %v7195
    %v7197 = vsel %vm6887, %v5118, 0.0
    %v7198 = vadd.f32 %v7196, %v7197
    %v7199 = vsel %vm6887, %v5119, 0.0
    %v7200 = vadd.f32 %v7198, %v7199
    %v7201 = vsel %vm6887, %v5120, 0.0
    %v7202 = vadd.f32 %v7200, %v7201
    %v7203 = vsel %vm6887, %v5121, 0.0
    %v7204 = vadd.f32 %v7202, %v7203
    %v7205 = vsel %vm6887, %v5122, 0.0
    %v7206 = vadd.f32 %v7204, %v7205
    %v7207 = vsel %vm6887, %v5123, 0.0
    %v7208 = vadd.f32 %v7206, %v7207
    %v7209 = vsel %vm6887, %v5124, 0.0
    %v7210 = vadd.f32 %v7208, %v7209
    %v7211 = vsel %vm6887, %v5125, 0.0
    %v7212 = vadd.f32 %v7210, %v7211
    %v7213 = vsel %vm6887, %v5126, 0.0
    %v7214 = vadd.f32 %v7212, %v7213
    %v7215 = vsel %vm6887, %v5127, 0.0
    %v7216 = vadd.f32 %v7214, %v7215
    %v7217 = vsel %vm6887, %v5128, 0.0
    %v7218 = vadd.f32 %v7216, %v7217
    %v7219 = vsel %vm6887, %v5129, 0.0
    %v7220 = vadd.f32 %v7218, %v7219
    %v7221 = vsel %vm6887, %v5130, 0.0
    %v7222 = vadd.f32 %v7220, %v7221
    %v7223 = vsel %vm6887, %v5131, 0.0
    %v7224 = vadd.f32 %v7222, %v7223
    %v7225 = vsel %vm6887, %v5132, 0.0
    %v7226 = vadd.f32 %v7224, %v7225
    %v7227 = vsel %vm6887, %v5133, 0.0
    %v7228 = vadd.f32 %v7226, %v7227
    %v7229 = vsel %vm6887, %v5134, 0.0
    %v7230 = vadd.f32 %v7228, %v7229
    %v7231 = vsel %vm6887, %v5135, 0.0
    %v7232 = vadd.f32 %v7230, %v7231
    %v7233 = vsel %vm6887, %v5136, 0.0
    %v7234 = vadd.f32 %v7232, %v7233
    %v7235 = vsel %vm6887, %v5137, 0.0
    %v7236 = vadd.f32 %v7234, %v7235
    %v7237 = vsel %vm6887, %v5138, 0.0
    %v7238 = vadd.f32 %v7236, %v7237
    %v7239 = vsel %vm6887, %v5139, 0.0
    %v7240 = vadd.f32 %v7238, %v7239
    %v7241 = vsel %vm6887, %v5140, 0.0
    %v7242 = vadd.f32 %v7240, %v7241
    %v7243 = vsel %vm6887, %v5141, 0.0
    %v7244 = vadd.f32 %v7242, %v7243
    %v7245 = vsel %vm6887, %v5142, 0.0
    %v7246 = vadd.f32 %v7244, %v7245
    %v7247 = vsel %vm6887, %v5143, 0.0
    %v7248 = vadd.f32 %v7246, %v7247
    %v7249 = vsel %vm6887, %v5144, 0.0
    %v7250 = vadd.f32 %v7248, %v7249
    %v7251 = vsel %vm6887, %v5145, 0.0
    %v7252 = vadd.f32 %v7250, %v7251
    %v7253 = vsel %vm6887, %v5146, 0.0
    %v7254 = vadd.f32 %v7252, %v7253
    %v7255 = vsel %vm6887, %v5147, 0.0
    %v7256 = vadd.f32 %v7254, %v7255
    %v7257 = vsel %vm6887, %v5148, 0.0
    %v7258 = vadd.f32 %v7256, %v7257
    %v7259 = vsel %vm6887, %v5149, 0.0
    %v7260 = vadd.f32 %v7258, %v7259
    %v7261 = vsel %vm6887, %v5150, 0.0
    %v7262 = vadd.f32 %v7260, %v7261
    %v7263 = vsel %vm6887, %v5151, 0.0
    %v7264 = vadd.f32 %v7262, %v7263
    %v7265 = vsel %vm6887, %v5152, 0.0
    %v7266 = vadd.f32 %v7264, %v7265
    %v7267 = vsel %vm6887, %v5153, 0.0
    %v7268 = vadd.f32 %v7266, %v7267
    %v7269 = vsel %vm6887, %v5154, 0.0
    %v7270 = vadd.f32 %v7268, %v7269
    %v7271 = vsel %vm6887, %v5155, 0.0
    %v7272 = vadd.f32 %v7270, %v7271
    %v7273 = vsel %vm6887, %v5156, 0.0
    %v7274 = vadd.f32 %v7272, %v7273
    %v7275 = vsel %vm6887, %v5157, 0.0
    %v7276 = vadd.f32 %v7274, %v7275
    %v7277 = vsel %vm6887, %v5158, 0.0
    %v7278 = vadd.f32 %v7276, %v7277
    %v7279 = vsel %vm6887, %v5159, 0.0
    %v7280 = vadd.f32 %v7278, %v7279
    %v7281 = vsel %vm6887, %v5160, 0.0
    %v7282 = vadd.f32 %v7280, %v7281
    %v7283 = vsel %vm6887, %v5161, 0.0
    %v7284 = vadd.f32 %v7282, %v7283
    %v7285 = vsel %vm6887, %v5162, 0.0
    %v7286 = vadd.f32 %v7284, %v7285
    %v7287 = vsel %vm6887, %v5163, 0.0
    %v7288 = vadd.f32 %v7286, %v7287
    %v7289 = vsel %vm6887, %v5164, 0.0
    %v7290 = vadd.f32 %v7288, %v7289
    %v7291 = vsel %vm6887, %v5165, 0.0
    %v7292 = vadd.f32 %v7290, %v7291
    %v7293 = vsel %vm6887, %v5166, 0.0
    %v7294 = vadd.f32 %v7292, %v7293
    %v7295 = vsel %vm6887, %v5167, 0.0
    %v7296 = vadd.f32 %v7294, %v7295
    %v7297 = vsel %vm6887, %v5168, 0.0
    %v7298 = vadd.f32 %v7296, %v7297
    %v7299 = vsel %vm6887, %v5169, 0.0
    %v7300 = vadd.f32 %v7298, %v7299
    %v7301 = vsel %vm6887, %v5170, 0.0
    %v7302 = vadd.f32 %v7300, %v7301
    %v7303 = vsel %vm6887, %v5171, 0.0
    %v7304 = vadd.f32 %v7302, %v7303
    %v7305 = vsel %vm6887, %v5172, 0.0
    %v7306 = vadd.f32 %v7304, %v7305
    %v7307 = vsel %vm6887, %v5173, 0.0
    %v7308 = vadd.f32 %v7306, %v7307
    %v7309 = vsel %vm6887, %v5174, 0.0
    %v7310 = vadd.f32 %v7308, %v7309
    %v7311 = vsel %vm6887, %v5175, 0.0
    %v7312 = vadd.f32 %v7310, %v7311
    %v7313 = vsel %vm6887, %v5176, 0.0
    %v7314 = vadd.f32 %v7312, %v7313
    %v7315 = vsel %vm6887, %v5177, 0.0
    %v7316 = vadd.f32 %v7314, %v7315
    %v7317 = vsel %vm6887, %v5178, 0.0
    %v7318 = vadd.f32 %v7316, %v7317
    %v7319 = vsel %vm6887, %v5179, 0.0
    %v7320 = vadd.f32 %v7318, %v7319
    %v7321 = vsel %vm6887, %v5180, 0.0
    %v7322 = vadd.f32 %v7320, %v7321
    %v7323 = vsel %vm6887, %v5181, 0.0
    %v7324 = vadd.f32 %v7322, %v7323
    %v7325 = vsel %vm6887, %v5182, 0.0
    %v7326 = vadd.f32 %v7324, %v7325
    %v7327 = vsel %vm6887, %v5183, 0.0
    %v7328 = vadd.f32 %v7326, %v7327
    %v7329 = vsel %vm6887, %v5184, 0.0
    %v7330 = vadd.f32 %v7328, %v7329
    %v7331 = vsel %vm6887, %v5185, 0.0
    %v7332 = vadd.f32 %v7330, %v7331
    %v7333 = vsel %vm6887, %v5186, 0.0
    %v7334 = vadd.f32 %v7332, %v7333
    %v7335 = vsel %vm6887, %v5187, 0.0
    %v7336 = vadd.f32 %v7334, %v7335
    %v7337 = vsel %vm6887, %v5188, 0.0
    %v7338 = vadd.f32 %v7336, %v7337
    %v7339 = vsel %vm6887, %v5189, 0.0
    %v7340 = vadd.f32 %v7338, %v7339
    %v7341 = vsel %vm6887, %v5190, 0.0
    %v7342 = vadd.f32 %v7340, %v7341
    %v7343 = vsel %vm6887, %v5191, 0.0
    %v7344 = vadd.f32 %v7342, %v7343
    %v7345 = vsel %vm6887, %v5192, 0.0
    %v7346 = vadd.f32 %v7344, %v7345
    %v7347 = vsel %vm6887, %v5193, 0.0
    %v7348 = vadd.f32 %v7346, %v7347
    %v7349 = vsel %vm6887, %v5194, 0.0
    %v7350 = vadd.f32 %v7348, %v7349
    %v7351 = vsel %vm6887, %v5195, 0.0
    %v7352 = vadd.f32 %v7350, %v7351
    %v7353 = vsel %vm6887, %v5196, 0.0
    %v7354 = vadd.f32 %v7352, %v7353
    %v7355 = vsel %vm6887, %v5197, 0.0
    %v7356 = vadd.f32 %v7354, %v7355
    %v7357 = vsel %vm6887, %v5198, 0.0
    %v7358 = vadd.f32 %v7356, %v7357
    %v7359 = vsel %vm6887, %v5199, 0.0
    %v7360 = vadd.f32 %v7358, %v7359
    %v7361 = vsel %vm6887, %v5200, 0.0
    %v7362 = vadd.f32 %v7360, %v7361
    %v7363 = vsel %vm6887, %v5201, 0.0
    %v7364 = vadd.f32 %v7362, %v7363
    %v7365 = vsel %vm6887, %v5202, 0.0
    %v7366 = vadd.f32 %v7364, %v7365
    %v7367 = vsel %vm6887, %v5203, 0.0
    %v7368 = vadd.f32 %v7366, %v7367
    %v7369 = vsel %vm6887, %v5204, 0.0
    %v7370 = vadd.f32 %v7368, %v7369
    %v7371 = vsel %vm6887, %v5205, 0.0
    %v7372 = vadd.f32 %v7370, %v7371
    %v7373 = vsel %vm6887, %v5206, 0.0
    %v7374 = vadd.f32 %v7372, %v7373
    %v7375 = vsel %vm6887, %v5207, 0.0
    %v7376 = vadd.f32 %v7374, %v7375
    %v7377 = vsel %vm6887, %v5208, 0.0
    %v7378 = vadd.f32 %v7376, %v7377
    %v7379 = vsel %vm6887, %v5209, 0.0
    %v7380 = vadd.f32 %v7378, %v7379
    %v7381 = vsel %vm6887, %v5210, 0.0
    %v7382 = vadd.f32 %v7380, %v7381
    %v7383 = vsel %vm6887, %v5211, 0.0
    %v7384 = vadd.f32 %v7382, %v7383
    %v7385 = vsel %vm6887, %v5212, 0.0
    %v7386 = vadd.f32 %v7384, %v7385
    %v7387 = vsel %vm6887, %v5213, 0.0
    %v7388 = vadd.f32 %v7386, %v7387
    %v7389 = vsel %vm6887, %v5214, 0.0
    %v7390 = vadd.f32 %v7388, %v7389
    %v7391 = vsel %vm6887, %v5215, 0.0
    %v7392 = vadd.f32 %v7390, %v7391
    %v7393 = vsel %vm6887, %v5216, 0.0
    %v7394 = vadd.f32 %v7392, %v7393
    %v7395 = vsel %vm6887, %v5217, 0.0
    %v7396 = vadd.f32 %v7394, %v7395
    %v7397 = vsel %vm6887, %v5218, 0.0
    %v7398 = vadd.f32 %v7396, %v7397
    %v7399 = vsel %vm6887, %v5219, 0.0
    %v7400 = vadd.f32 %v7398, %v7399
    %v7401 = vsel %vm6887, %v5220, 0.0
    %v7402 = vadd.f32 %v7400, %v7401
    %v7403 = vsel %vm6887, %v5221, 0.0
    %v7404 = vadd.f32 %v7402, %v7403
    %v7405 = vsel %vm6887, %v5222, 0.0
    %v7406 = vadd.f32 %v7404, %v7405
    %7407 = vadd.xlane.f32.xlu0 %v7406
    %v7408 = vpop.xlane.xlu0 %7407
    %v7409 = vrot.slane %v7408, 4
    %v7410 = vadd.f32 %v7408, %v7409
    %v7411 = vrot.slane %v7410, 2
    %v7412 = vadd.f32 %v7410, %v7411
    %v7413 = vrot.slane %v7412, 1
    %v7414 = vadd.f32 %v7412, %v7413
    %s7415 = vtos %v7414
    %v7416 = vmul.f32 %v4967, %v6631
    %v7417 = vmul.f32 %v4968, %v6632
    %v7418 = vmul.f32 %v4969, %v6633
    %v7419 = vmul.f32 %v4970, %v6634
    %v7420 = vmul.f32 %v4971, %v6635
    %v7421 = vmul.f32 %v4972, %v6636
    %v7422 = vmul.f32 %v4973, %v6637
    %v7423 = vmul.f32 %v4974, %v6638
    %v7424 = vmul.f32 %v4975, %v6639
    %v7425 = vmul.f32 %v4976, %v6640
    %v7426 = vmul.f32 %v4977, %v6641
    %v7427 = vmul.f32 %v4978, %v6642
    %v7428 = vmul.f32 %v4979, %v6643
    %v7429 = vmul.f32 %v4980, %v6644
    %v7430 = vmul.f32 %v4981, %v6645
    %v7431 = vmul.f32 %v4982, %v6646
    %v7432 = vmul.f32 %v4983, %v6647
    %v7433 = vmul.f32 %v4984, %v6648
    %v7434 = vmul.f32 %v4985, %v6649
    %v7435 = vmul.f32 %v4986, %v6650
    %v7436 = vmul.f32 %v4987, %v6651
    %v7437 = vmul.f32 %v4988, %v6652
    %v7438 = vmul.f32 %v4989, %v6653
    %v7439 = vmul.f32 %v4990, %v6654
    %v7440 = vmul.f32 %v4991, %v6655
    %v7441 = vmul.f32 %v4992, %v6656
    %v7442 = vmul.f32 %v4993, %v6657
    %v7443 = vmul.f32 %v4994, %v6658
    %v7444 = vmul.f32 %v4995, %v6659
    %v7445 = vmul.f32 %v4996, %v6660
    %v7446 = vmul.f32 %v4997, %v6661
    %v7447 = vmul.f32 %v4998, %v6662
    %v7448 = vmul.f32 %v4999, %v6663
    %v7449 = vmul.f32 %v5000, %v6664
    %v7450 = vmul.f32 %v5001, %v6665
    %v7451 = vmul.f32 %v5002, %v6666
    %v7452 = vmul.f32 %v5003, %v6667
    %v7453 = vmul.f32 %v5004, %v6668
    %v7454 = vmul.f32 %v5005, %v6669
    %v7455 = vmul.f32 %v5006, %v6670
    %v7456 = vmul.f32 %v5007, %v6671
    %v7457 = vmul.f32 %v5008, %v6672
    %v7458 = vmul.f32 %v5009, %v6673
    %v7459 = vmul.f32 %v5010, %v6674
    %v7460 = vmul.f32 %v5011, %v6675
    %v7461 = vmul.f32 %v5012, %v6676
    %v7462 = vmul.f32 %v5013, %v6677
    %v7463 = vmul.f32 %v5014, %v6678
    %v7464 = vmul.f32 %v5015, %v6679
    %v7465 = vmul.f32 %v5016, %v6680
    %v7466 = vmul.f32 %v5017, %v6681
    %v7467 = vmul.f32 %v5018, %v6682
    %v7468 = vmul.f32 %v5019, %v6683
    %v7469 = vmul.f32 %v5020, %v6684
    %v7470 = vmul.f32 %v5021, %v6685
    %v7471 = vmul.f32 %v5022, %v6686
    %v7472 = vmul.f32 %v5023, %v6687
    %v7473 = vmul.f32 %v5024, %v6688
    %v7474 = vmul.f32 %v5025, %v6689
    %v7475 = vmul.f32 %v5026, %v6690
    %v7476 = vmul.f32 %v5027, %v6691
    %v7477 = vmul.f32 %v5028, %v6692
    %v7478 = vmul.f32 %v5029, %v6693
    %v7479 = vmul.f32 %v5030, %v6694
    %v7480 = vmul.f32 %v5031, %v6695
    %v7481 = vmul.f32 %v5032, %v6696
    %v7482 = vmul.f32 %v5033, %v6697
    %v7483 = vmul.f32 %v5034, %v6698
    %v7484 = vmul.f32 %v5035, %v6699
    %v7485 = vmul.f32 %v5036, %v6700
    %v7486 = vmul.f32 %v5037, %v6701
    %v7487 = vmul.f32 %v5038, %v6702
    %v7488 = vmul.f32 %v5039, %v6703
    %v7489 = vmul.f32 %v5040, %v6704
    %v7490 = vmul.f32 %v5041, %v6705
    %v7491 = vmul.f32 %v5042, %v6706
    %v7492 = vmul.f32 %v5043, %v6707
    %v7493 = vmul.f32 %v5044, %v6708
    %v7494 = vmul.f32 %v5045, %v6709
    %v7495 = vmul.f32 %v5046, %v6710
    %v7496 = vmul.f32 %v5047, %v6711
    %v7497 = vmul.f32 %v5048, %v6712
    %v7498 = vmul.f32 %v5049, %v6713
    %v7499 = vmul.f32 %v5050, %v6714
    %v7500 = vmul.f32 %v5051, %v6715
    %v7501 = vmul.f32 %v5052, %v6716
    %v7502 = vmul.f32 %v5053, %v6717
    %v7503 = vmul.f32 %v5054, %v6718
    %v7504 = vmul.f32 %v5055, %v6719
    %v7505 = vmul.f32 %v5056, %v6720
    %v7506 = vmul.f32 %v5057, %v6721
    %v7507 = vmul.f32 %v5058, %v6722
    %v7508 = vmul.f32 %v5059, %v6723
    %v7509 = vmul.f32 %v5060, %v6724
    %v7510 = vmul.f32 %v5061, %v6725
    %v7511 = vmul.f32 %v5062, %v6726
    %v7512 = vmul.f32 %v5063, %v6727
    %v7513 = vmul.f32 %v5064, %v6728
    %v7514 = vmul.f32 %v5065, %v6729
    %v7515 = vmul.f32 %v5066, %v6730
    %v7516 = vmul.f32 %v5067, %v6731
    %v7517 = vmul.f32 %v5068, %v6732
    %v7518 = vmul.f32 %v5069, %v6733
    %v7519 = vmul.f32 %v5070, %v6734
    %v7520 = vmul.f32 %v5071, %v6735
    %v7521 = vmul.f32 %v5072, %v6736
    %v7522 = vmul.f32 %v5073, %v6737
    %v7523 = vmul.f32 %v5074, %v6738
    %v7524 = vmul.f32 %v5075, %v6739
    %v7525 = vmul.f32 %v5076, %v6740
    %v7526 = vmul.f32 %v5077, %v6741
    %v7527 = vmul.f32 %v5078, %v6742
    %v7528 = vmul.f32 %v5079, %v6743
    %v7529 = vmul.f32 %v5080, %v6744
    %v7530 = vmul.f32 %v5081, %v6745
    %v7531 = vmul.f32 %v5082, %v6746
    %v7532 = vmul.f32 %v5083, %v6747
    %v7533 = vmul.f32 %v5084, %v6748
    %v7534 = vmul.f32 %v5085, %v6749
    %v7535 = vmul.f32 %v5086, %v6750
    %v7536 = vmul.f32 %v5087, %v6751
    %v7537 = vmul.f32 %v5088, %v6752
    %v7538 = vmul.f32 %v5089, %v6753
    %v7539 = vmul.f32 %v5090, %v6754
    %v7540 = vmul.f32 %v5091, %v6755
    %v7541 = vmul.f32 %v5092, %v6756
    %v7542 = vmul.f32 %v5093, %v6757
    %v7543 = vmul.f32 %v5094, %v6758
    %vm7544 = vcmp.lt.f32.partialorder %v7416, 0.0
    %vm7545 = vcmp.lt.f32.partialorder %v7417, 0.0
    %vm7546 = vcmp.lt.f32.partialorder %v7418, 0.0
    %vm7547 = vcmp.lt.f32.partialorder %v7419, 0.0
    %vm7548 = vcmp.lt.f32.partialorder %v7420, 0.0
    %vm7549 = vcmp.lt.f32.partialorder %v7421, 0.0
    %vm7550 = vcmp.lt.f32.partialorder %v7422, 0.0
    %vm7551 = vcmp.lt.f32.partialorder %v7423, 0.0
    %vm7552 = vcmp.lt.f32.partialorder %v7424, 0.0
    %vm7553 = vcmp.lt.f32.partialorder %v7425, 0.0
    %vm7554 = vcmp.lt.f32.partialorder %v7426, 0.0
    %vm7555 = vcmp.lt.f32.partialorder %v7427, 0.0
    %vm7556 = vcmp.lt.f32.partialorder %v7428, 0.0
    %vm7557 = vcmp.lt.f32.partialorder %v7429, 0.0
    %vm7558 = vcmp.lt.f32.partialorder %v7430, 0.0
    %vm7559 = vcmp.lt.f32.partialorder %v7431, 0.0
    %vm7560 = vcmp.lt.f32.partialorder %v7432, 0.0
    %vm7561 = vcmp.lt.f32.partialorder %v7433, 0.0
    %vm7562 = vcmp.lt.f32.partialorder %v7434, 0.0
    %vm7563 = vcmp.lt.f32.partialorder %v7435, 0.0
    %vm7564 = vcmp.lt.f32.partialorder %v7436, 0.0
    %vm7565 = vcmp.lt.f32.partialorder %v7437, 0.0
    %vm7566 = vcmp.lt.f32.partialorder %v7438, 0.0
    %vm7567 = vcmp.lt.f32.partialorder %v7439, 0.0
    %vm7568 = vcmp.lt.f32.partialorder %v7440, 0.0
    %vm7569 = vcmp.lt.f32.partialorder %v7441, 0.0
    %vm7570 = vcmp.lt.f32.partialorder %v7442, 0.0
    %vm7571 = vcmp.lt.f32.partialorder %v7443, 0.0
    %vm7572 = vcmp.lt.f32.partialorder %v7444, 0.0
    %vm7573 = vcmp.lt.f32.partialorder %v7445, 0.0
    %vm7574 = vcmp.lt.f32.partialorder %v7446, 0.0
    %vm7575 = vcmp.lt.f32.partialorder %v7447, 0.0
    %vm7576 = vcmp.lt.f32.partialorder %v7448, 0.0
    %vm7577 = vcmp.lt.f32.partialorder %v7449, 0.0
    %vm7578 = vcmp.lt.f32.partialorder %v7450, 0.0
    %vm7579 = vcmp.lt.f32.partialorder %v7451, 0.0
    %vm7580 = vcmp.lt.f32.partialorder %v7452, 0.0
    %vm7581 = vcmp.lt.f32.partialorder %v7453, 0.0
    %vm7582 = vcmp.lt.f32.partialorder %v7454, 0.0
    %vm7583 = vcmp.lt.f32.partialorder %v7455, 0.0
    %vm7584 = vcmp.lt.f32.partialorder %v7456, 0.0
    %vm7585 = vcmp.lt.f32.partialorder %v7457, 0.0
    %vm7586 = vcmp.lt.f32.partialorder %v7458, 0.0
    %vm7587 = vcmp.lt.f32.partialorder %v7459, 0.0
    %vm7588 = vcmp.lt.f32.partialorder %v7460, 0.0
    %vm7589 = vcmp.lt.f32.partialorder %v7461, 0.0
    %vm7590 = vcmp.lt.f32.partialorder %v7462, 0.0
    %vm7591 = vcmp.lt.f32.partialorder %v7463, 0.0
    %vm7592 = vcmp.lt.f32.partialorder %v7464, 0.0
    %vm7593 = vcmp.lt.f32.partialorder %v7465, 0.0
    %vm7594 = vcmp.lt.f32.partialorder %v7466, 0.0
    %vm7595 = vcmp.lt.f32.partialorder %v7467, 0.0
    %vm7596 = vcmp.lt.f32.partialorder %v7468, 0.0
    %vm7597 = vcmp.lt.f32.partialorder %v7469, 0.0
    %vm7598 = vcmp.lt.f32.partialorder %v7470, 0.0
    %vm7599 = vcmp.lt.f32.partialorder %v7471, 0.0
    %vm7600 = vcmp.lt.f32.partialorder %v7472, 0.0
    %vm7601 = vcmp.lt.f32.partialorder %v7473, 0.0
    %vm7602 = vcmp.lt.f32.partialorder %v7474, 0.0
    %vm7603 = vcmp.lt.f32.partialorder %v7475, 0.0
    %vm7604 = vcmp.lt.f32.partialorder %v7476, 0.0
    %vm7605 = vcmp.lt.f32.partialorder %v7477, 0.0
    %vm7606 = vcmp.lt.f32.partialorder %v7478, 0.0
    %vm7607 = vcmp.lt.f32.partialorder %v7479, 0.0
    %vm7608 = vcmp.lt.f32.partialorder %v7480, 0.0
    %vm7609 = vcmp.lt.f32.partialorder %v7481, 0.0
    %vm7610 = vcmp.lt.f32.partialorder %v7482, 0.0
    %vm7611 = vcmp.lt.f32.partialorder %v7483, 0.0
    %vm7612 = vcmp.lt.f32.partialorder %v7484, 0.0
    %vm7613 = vcmp.lt.f32.partialorder %v7485, 0.0
    %vm7614 = vcmp.lt.f32.partialorder %v7486, 0.0
    %vm7615 = vcmp.lt.f32.partialorder %v7487, 0.0
    %vm7616 = vcmp.lt.f32.partialorder %v7488, 0.0
    %vm7617 = vcmp.lt.f32.partialorder %v7489, 0.0
    %vm7618 = vcmp.lt.f32.partialorder %v7490, 0.0
    %vm7619 = vcmp.lt.f32.partialorder %v7491, 0.0
    %vm7620 = vcmp.lt.f32.partialorder %v7492, 0.0
    %vm7621 = vcmp.lt.f32.partialorder %v7493, 0.0
    %vm7622 = vcmp.lt.f32.partialorder %v7494, 0.0
    %vm7623 = vcmp.lt.f32.partialorder %v7495, 0.0
    %vm7624 = vcmp.lt.f32.partialorder %v7496, 0.0
    %vm7625 = vcmp.lt.f32.partialorder %v7497, 0.0
    %vm7626 = vcmp.lt.f32.partialorder %v7498, 0.0
    %vm7627 = vcmp.lt.f32.partialorder %v7499, 0.0
    %vm7628 = vcmp.lt.f32.partialorder %v7500, 0.0
    %vm7629 = vcmp.lt.f32.partialorder %v7501, 0.0
    %vm7630 = vcmp.lt.f32.partialorder %v7502, 0.0
    %vm7631 = vcmp.lt.f32.partialorder %v7503, 0.0
    %vm7632 = vcmp.lt.f32.partialorder %v7504, 0.0
    %vm7633 = vcmp.lt.f32.partialorder %v7505, 0.0
    %vm7634 = vcmp.lt.f32.partialorder %v7506, 0.0
    %vm7635 = vcmp.lt.f32.partialorder %v7507, 0.0
    %vm7636 = vcmp.lt.f32.partialorder %v7508, 0.0
    %vm7637 = vcmp.lt.f32.partialorder %v7509, 0.0
    %vm7638 = vcmp.lt.f32.partialorder %v7510, 0.0
    %vm7639 = vcmp.lt.f32.partialorder %v7511, 0.0
    %vm7640 = vcmp.lt.f32.partialorder %v7512, 0.0
    %vm7641 = vcmp.lt.f32.partialorder %v7513, 0.0
    %vm7642 = vcmp.lt.f32.partialorder %v7514, 0.0
    %vm7643 = vcmp.lt.f32.partialorder %v7515, 0.0
    %vm7644 = vcmp.lt.f32.partialorder %v7516, 0.0
    %vm7645 = vcmp.lt.f32.partialorder %v7517, 0.0
    %vm7646 = vcmp.lt.f32.partialorder %v7518, 0.0
    %vm7647 = vcmp.lt.f32.partialorder %v7519, 0.0
    %vm7648 = vcmp.lt.f32.partialorder %v7520, 0.0
    %vm7649 = vcmp.lt.f32.partialorder %v7521, 0.0
    %vm7650 = vcmp.lt.f32.partialorder %v7522, 0.0
    %vm7651 = vcmp.lt.f32.partialorder %v7523, 0.0
    %vm7652 = vcmp.lt.f32.partialorder %v7524, 0.0
    %vm7653 = vcmp.lt.f32.partialorder %v7525, 0.0
    %vm7654 = vcmp.lt.f32.partialorder %v7526, 0.0
    %vm7655 = vcmp.lt.f32.partialorder %v7527, 0.0
    %vm7656 = vcmp.lt.f32.partialorder %v7528, 0.0
    %vm7657 = vcmp.lt.f32.partialorder %v7529, 0.0
    %vm7658 = vcmp.lt.f32.partialorder %v7530, 0.0
    %vm7659 = vcmp.lt.f32.partialorder %v7531, 0.0
    %vm7660 = vcmp.lt.f32.partialorder %v7532, 0.0
    %vm7661 = vcmp.lt.f32.partialorder %v7533, 0.0
    %vm7662 = vcmp.lt.f32.partialorder %v7534, 0.0
    %vm7663 = vcmp.lt.f32.partialorder %v7535, 0.0
    %vm7664 = vcmp.lt.f32.partialorder %v7536, 0.0
    %vm7665 = vcmp.lt.f32.partialorder %v7537, 0.0
    %vm7666 = vcmp.lt.f32.partialorder %v7538, 0.0
    %vm7667 = vcmp.lt.f32.partialorder %v7539, 0.0
    %vm7668 = vcmp.lt.f32.partialorder %v7540, 0.0
    %vm7669 = vcmp.lt.f32.partialorder %v7541, 0.0
    %vm7670 = vcmp.lt.f32.partialorder %v7542, 0.0
    %vm7671 = vcmp.lt.f32.partialorder %v7543, 0.0
    %v7672 = vsel %vm7544, 1.0, 0.0
    %v7673 = vsel %vm7545, 1.0, 0.0
    %v7674 = vsel %vm7546, 1.0, 0.0
    %v7675 = vsel %vm7547, 1.0, 0.0
    %v7676 = vsel %vm7548, 1.0, 0.0
    %v7677 = vsel %vm7549, 1.0, 0.0
    %v7678 = vsel %vm7550, 1.0, 0.0
    %v7679 = vsel %vm7551, 1.0, 0.0
    %v7680 = vsel %vm7552, 1.0, 0.0
    %v7681 = vsel %vm7553, 1.0, 0.0
    %v7682 = vsel %vm7554, 1.0, 0.0
    %v7683 = vsel %vm7555, 1.0, 0.0
    %v7684 = vsel %vm7556, 1.0, 0.0
    %v7685 = vsel %vm7557, 1.0, 0.0
    %v7686 = vsel %vm7558, 1.0, 0.0
    %v7687 = vsel %vm7559, 1.0, 0.0
    %v7688 = vsel %vm7560, 1.0, 0.0
    %v7689 = vsel %vm7561, 1.0, 0.0
    %v7690 = vsel %vm7562, 1.0, 0.0
    %v7691 = vsel %vm7563, 1.0, 0.0
    %v7692 = vsel %vm7564, 1.0, 0.0
    %v7693 = vsel %vm7565, 1.0, 0.0
    %v7694 = vsel %vm7566, 1.0, 0.0
    %v7695 = vsel %vm7567, 1.0, 0.0
    %v7696 = vsel %vm7568, 1.0, 0.0
    %v7697 = vsel %vm7569, 1.0, 0.0
    %v7698 = vsel %vm7570, 1.0, 0.0
    %v7699 = vsel %vm7571, 1.0, 0.0
    %v7700 = vsel %vm7572, 1.0, 0.0
    %v7701 = vsel %vm7573, 1.0, 0.0
    %v7702 = vsel %vm7574, 1.0, 0.0
    %v7703 = vsel %vm7575, 1.0, 0.0
    %v7704 = vsel %vm7576, 1.0, 0.0
    %v7705 = vsel %vm7577, 1.0, 0.0
    %v7706 = vsel %vm7578, 1.0, 0.0
    %v7707 = vsel %vm7579, 1.0, 0.0
    %v7708 = vsel %vm7580, 1.0, 0.0
    %v7709 = vsel %vm7581, 1.0, 0.0
    %v7710 = vsel %vm7582, 1.0, 0.0
    %v7711 = vsel %vm7583, 1.0, 0.0
    %v7712 = vsel %vm7584, 1.0, 0.0
    %v7713 = vsel %vm7585, 1.0, 0.0
    %v7714 = vsel %vm7586, 1.0, 0.0
    %v7715 = vsel %vm7587, 1.0, 0.0
    %v7716 = vsel %vm7588, 1.0, 0.0
    %v7717 = vsel %vm7589, 1.0, 0.0
    %v7718 = vsel %vm7590, 1.0, 0.0
    %v7719 = vsel %vm7591, 1.0, 0.0
    %v7720 = vsel %vm7592, 1.0, 0.0
    %v7721 = vsel %vm7593, 1.0, 0.0
    %v7722 = vsel %vm7594, 1.0, 0.0
    %v7723 = vsel %vm7595, 1.0, 0.0
    %v7724 = vsel %vm7596, 1.0, 0.0
    %v7725 = vsel %vm7597, 1.0, 0.0
    %v7726 = vsel %vm7598, 1.0, 0.0
    %v7727 = vsel %vm7599, 1.0, 0.0
    %v7728 = vsel %vm7600, 1.0, 0.0
    %v7729 = vsel %vm7601, 1.0, 0.0
    %v7730 = vsel %vm7602, 1.0, 0.0
    %v7731 = vsel %vm7603, 1.0, 0.0
    %v7732 = vsel %vm7604, 1.0, 0.0
    %v7733 = vsel %vm7605, 1.0, 0.0
    %v7734 = vsel %vm7606, 1.0, 0.0
    %v7735 = vsel %vm7607, 1.0, 0.0
    %v7736 = vsel %vm7608, 1.0, 0.0
    %v7737 = vsel %vm7609, 1.0, 0.0
    %v7738 = vsel %vm7610, 1.0, 0.0
    %v7739 = vsel %vm7611, 1.0, 0.0
    %v7740 = vsel %vm7612, 1.0, 0.0
    %v7741 = vsel %vm7613, 1.0, 0.0
    %v7742 = vsel %vm7614, 1.0, 0.0
    %v7743 = vsel %vm7615, 1.0, 0.0
    %v7744 = vsel %vm7616, 1.0, 0.0
    %v7745 = vsel %vm7617, 1.0, 0.0
    %v7746 = vsel %vm7618, 1.0, 0.0
    %v7747 = vsel %vm7619, 1.0, 0.0
    %v7748 = vsel %vm7620, 1.0, 0.0
    %v7749 = vsel %vm7621, 1.0, 0.0
    %v7750 = vsel %vm7622, 1.0, 0.0
    %v7751 = vsel %vm7623, 1.0, 0.0
    %v7752 = vsel %vm7624, 1.0, 0.0
    %v7753 = vsel %vm7625, 1.0, 0.0
    %v7754 = vsel %vm7626, 1.0, 0.0
    %v7755 = vsel %vm7627, 1.0, 0.0
    %v7756 = vsel %vm7628, 1.0, 0.0
    %v7757 = vsel %vm7629, 1.0, 0.0
    %v7758 = vsel %vm7630, 1.0, 0.0
    %v7759 = vsel %vm7631, 1.0, 0.0
    %v7760 = vsel %vm7632, 1.0, 0.0
    %v7761 = vsel %vm7633, 1.0, 0.0
    %v7762 = vsel %vm7634, 1.0, 0.0
    %v7763 = vsel %vm7635, 1.0, 0.0
    %v7764 = vsel %vm7636, 1.0, 0.0
    %v7765 = vsel %vm7637, 1.0, 0.0
    %v7766 = vsel %vm7638, 1.0, 0.0
    %v7767 = vsel %vm7639, 1.0, 0.0
    %v7768 = vsel %vm7640, 1.0, 0.0
    %v7769 = vsel %vm7641, 1.0, 0.0
    %v7770 = vsel %vm7642, 1.0, 0.0
    %v7771 = vsel %vm7643, 1.0, 0.0
    %v7772 = vsel %vm7644, 1.0, 0.0
    %v7773 = vsel %vm7645, 1.0, 0.0
    %v7774 = vsel %vm7646, 1.0, 0.0
    %v7775 = vsel %vm7647, 1.0, 0.0
    %v7776 = vsel %vm7648, 1.0, 0.0
    %v7777 = vsel %vm7649, 1.0, 0.0
    %v7778 = vsel %vm7650, 1.0, 0.0
    %v7779 = vsel %vm7651, 1.0, 0.0
    %v7780 = vsel %vm7652, 1.0, 0.0
    %v7781 = vsel %vm7653, 1.0, 0.0
    %v7782 = vsel %vm7654, 1.0, 0.0
    %v7783 = vsel %vm7655, 1.0, 0.0
    %v7784 = vsel %vm7656, 1.0, 0.0
    %v7785 = vsel %vm7657, 1.0, 0.0
    %v7786 = vsel %vm7658, 1.0, 0.0
    %v7787 = vsel %vm7659, 1.0, 0.0
    %v7788 = vsel %vm7660, 1.0, 0.0
    %v7789 = vsel %vm7661, 1.0, 0.0
    %v7790 = vsel %vm7662, 1.0, 0.0
    %v7791 = vsel %vm7663, 1.0, 0.0
    %v7792 = vsel %vm7664, 1.0, 0.0
    %v7793 = vsel %vm7665, 1.0, 0.0
    %v7794 = vsel %vm7666, 1.0, 0.0
    %v7795 = vsel %vm7667, 1.0, 0.0
    %v7796 = vsel %vm7668, 1.0, 0.0
    %v7797 = vsel %vm7669, 1.0, 0.0
    %v7798 = vsel %vm7670, 1.0, 0.0
    %v7799 = vsel %vm7671, 1.0, 0.0
    %v7800 = vsel %vm6887, %v7672, 0.0
    %v7801 = vsel %vm6887, %v7673, 0.0
    %v7802 = vadd.f32 %v7800, %v7801
    %v7803 = vsel %vm6887, %v7674, 0.0
    %v7804 = vadd.f32 %v7802, %v7803
    %v7805 = vsel %vm6887, %v7675, 0.0
    %v7806 = vadd.f32 %v7804, %v7805
    %v7807 = vsel %vm6887, %v7676, 0.0
    %v7808 = vadd.f32 %v7806, %v7807
    %v7809 = vsel %vm6887, %v7677, 0.0
    %v7810 = vadd.f32 %v7808, %v7809
    %v7811 = vsel %vm6887, %v7678, 0.0
    %v7812 = vadd.f32 %v7810, %v7811
    %v7813 = vsel %vm6887, %v7679, 0.0
    %v7814 = vadd.f32 %v7812, %v7813
    %v7815 = vsel %vm6887, %v7680, 0.0
    %v7816 = vadd.f32 %v7814, %v7815
    %v7817 = vsel %vm6887, %v7681, 0.0
    %v7818 = vadd.f32 %v7816, %v7817
    %v7819 = vsel %vm6887, %v7682, 0.0
    %v7820 = vadd.f32 %v7818, %v7819
    %v7821 = vsel %vm6887, %v7683, 0.0
    %v7822 = vadd.f32 %v7820, %v7821
    %v7823 = vsel %vm6887, %v7684, 0.0
    %v7824 = vadd.f32 %v7822, %v7823
    %v7825 = vsel %vm6887, %v7685, 0.0
    %v7826 = vadd.f32 %v7824, %v7825
    %v7827 = vsel %vm6887, %v7686, 0.0
    %v7828 = vadd.f32 %v7826, %v7827
    %v7829 = vsel %vm6887, %v7687, 0.0
    %v7830 = vadd.f32 %v7828, %v7829
    %v7831 = vsel %vm6887, %v7688, 0.0
    %v7832 = vadd.f32 %v7830, %v7831
    %v7833 = vsel %vm6887, %v7689, 0.0
    %v7834 = vadd.f32 %v7832, %v7833
    %v7835 = vsel %vm6887, %v7690, 0.0
    %v7836 = vadd.f32 %v7834, %v7835
    %v7837 = vsel %vm6887, %v7691, 0.0
    %v7838 = vadd.f32 %v7836, %v7837
    %v7839 = vsel %vm6887, %v7692, 0.0
    %v7840 = vadd.f32 %v7838, %v7839
    %v7841 = vsel %vm6887, %v7693, 0.0
    %v7842 = vadd.f32 %v7840, %v7841
    %v7843 = vsel %vm6887, %v7694, 0.0
    %v7844 = vadd.f32 %v7842, %v7843
    %v7845 = vsel %vm6887, %v7695, 0.0
    %v7846 = vadd.f32 %v7844, %v7845
    %v7847 = vsel %vm6887, %v7696, 0.0
    %v7848 = vadd.f32 %v7846, %v7847
    %v7849 = vsel %vm6887, %v7697, 0.0
    %v7850 = vadd.f32 %v7848, %v7849
    %v7851 = vsel %vm6887, %v7698, 0.0
    %v7852 = vadd.f32 %v7850, %v7851
    %v7853 = vsel %vm6887, %v7699, 0.0
    %v7854 = vadd.f32 %v7852, %v7853
    %v7855 = vsel %vm6887, %v7700, 0.0
    %v7856 = vadd.f32 %v7854, %v7855
    %v7857 = vsel %vm6887, %v7701, 0.0
    %v7858 = vadd.f32 %v7856, %v7857
    %v7859 = vsel %vm6887, %v7702, 0.0
    %v7860 = vadd.f32 %v7858, %v7859
    %v7861 = vsel %vm6887, %v7703, 0.0
    %v7862 = vadd.f32 %v7860, %v7861
    %v7863 = vsel %vm6887, %v7704, 0.0
    %v7864 = vadd.f32 %v7862, %v7863
    %v7865 = vsel %vm6887, %v7705, 0.0
    %v7866 = vadd.f32 %v7864, %v7865
    %v7867 = vsel %vm6887, %v7706, 0.0
    %v7868 = vadd.f32 %v7866, %v7867
    %v7869 = vsel %vm6887, %v7707, 0.0
    %v7870 = vadd.f32 %v7868, %v7869
    %v7871 = vsel %vm6887, %v7708, 0.0
    %v7872 = vadd.f32 %v7870, %v7871
    %v7873 = vsel %vm6887, %v7709, 0.0
    %v7874 = vadd.f32 %v7872, %v7873
    %v7875 = vsel %vm6887, %v7710, 0.0
    %v7876 = vadd.f32 %v7874, %v7875
    %v7877 = vsel %vm6887, %v7711, 0.0
    %v7878 = vadd.f32 %v7876, %v7877
    %v7879 = vsel %vm6887, %v7712, 0.0
    %v7880 = vadd.f32 %v7878, %v7879
    %v7881 = vsel %vm6887, %v7713, 0.0
    %v7882 = vadd.f32 %v7880, %v7881
    %v7883 = vsel %vm6887, %v7714, 0.0
    %v7884 = vadd.f32 %v7882, %v7883
    %v7885 = vsel %vm6887, %v7715, 0.0
    %v7886 = vadd.f32 %v7884, %v7885
    %v7887 = vsel %vm6887, %v7716, 0.0
    %v7888 = vadd.f32 %v7886, %v7887
    %v7889 = vsel %vm6887, %v7717, 0.0
    %v7890 = vadd.f32 %v7888, %v7889
    %v7891 = vsel %vm6887, %v7718, 0.0
    %v7892 = vadd.f32 %v7890, %v7891
    %v7893 = vsel %vm6887, %v7719, 0.0
    %v7894 = vadd.f32 %v7892, %v7893
    %v7895 = vsel %vm6887, %v7720, 0.0
    %v7896 = vadd.f32 %v7894, %v7895
    %v7897 = vsel %vm6887, %v7721, 0.0
    %v7898 = vadd.f32 %v7896, %v7897
    %v7899 = vsel %vm6887, %v7722, 0.0
    %v7900 = vadd.f32 %v7898, %v7899
    %v7901 = vsel %vm6887, %v7723, 0.0
    %v7902 = vadd.f32 %v7900, %v7901
    %v7903 = vsel %vm6887, %v7724, 0.0
    %v7904 = vadd.f32 %v7902, %v7903
    %v7905 = vsel %vm6887, %v7725, 0.0
    %v7906 = vadd.f32 %v7904, %v7905
    %v7907 = vsel %vm6887, %v7726, 0.0
    %v7908 = vadd.f32 %v7906, %v7907
    %v7909 = vsel %vm6887, %v7727, 0.0
    %v7910 = vadd.f32 %v7908, %v7909
    %v7911 = vsel %vm6887, %v7728, 0.0
    %v7912 = vadd.f32 %v7910, %v7911
    %v7913 = vsel %vm6887, %v7729, 0.0
    %v7914 = vadd.f32 %v7912, %v7913
    %v7915 = vsel %vm6887, %v7730, 0.0
    %v7916 = vadd.f32 %v7914, %v7915
    %v7917 = vsel %vm6887, %v7731, 0.0
    %v7918 = vadd.f32 %v7916, %v7917
    %v7919 = vsel %vm6887, %v7732, 0.0
    %v7920 = vadd.f32 %v7918, %v7919
    %v7921 = vsel %vm6887, %v7733, 0.0
    %v7922 = vadd.f32 %v7920, %v7921
    %v7923 = vsel %vm6887, %v7734, 0.0
    %v7924 = vadd.f32 %v7922, %v7923
    %v7925 = vsel %vm6887, %v7735, 0.0
    %v7926 = vadd.f32 %v7924, %v7925
    %v7927 = vsel %vm6887, %v7736, 0.0
    %v7928 = vadd.f32 %v7926, %v7927
    %v7929 = vsel %vm6887, %v7737, 0.0
    %v7930 = vadd.f32 %v7928, %v7929
    %v7931 = vsel %vm6887, %v7738, 0.0
    %v7932 = vadd.f32 %v7930, %v7931
    %v7933 = vsel %vm6887, %v7739, 0.0
    %v7934 = vadd.f32 %v7932, %v7933
    %v7935 = vsel %vm6887, %v7740, 0.0
    %v7936 = vadd.f32 %v7934, %v7935
    %v7937 = vsel %vm6887, %v7741, 0.0
    %v7938 = vadd.f32 %v7936, %v7937
    %v7939 = vsel %vm6887, %v7742, 0.0
    %v7940 = vadd.f32 %v7938, %v7939
    %v7941 = vsel %vm6887, %v7743, 0.0
    %v7942 = vadd.f32 %v7940, %v7941
    %v7943 = vsel %vm6887, %v7744, 0.0
    %v7944 = vadd.f32 %v7942, %v7943
    %v7945 = vsel %vm6887, %v7745, 0.0
    %v7946 = vadd.f32 %v7944, %v7945
    %v7947 = vsel %vm6887, %v7746, 0.0
    %v7948 = vadd.f32 %v7946, %v7947
    %v7949 = vsel %vm6887, %v7747, 0.0
    %v7950 = vadd.f32 %v7948, %v7949
    %v7951 = vsel %vm6887, %v7748, 0.0
    %v7952 = vadd.f32 %v7950, %v7951
    %v7953 = vsel %vm6887, %v7749, 0.0
    %v7954 = vadd.f32 %v7952, %v7953
    %v7955 = vsel %vm6887, %v7750, 0.0
    %v7956 = vadd.f32 %v7954, %v7955
    %v7957 = vsel %vm6887, %v7751, 0.0
    %v7958 = vadd.f32 %v7956, %v7957
    %v7959 = vsel %vm6887, %v7752, 0.0
    %v7960 = vadd.f32 %v7958, %v7959
    %v7961 = vsel %vm6887, %v7753, 0.0
    %v7962 = vadd.f32 %v7960, %v7961
    %v7963 = vsel %vm6887, %v7754, 0.0
    %v7964 = vadd.f32 %v7962, %v7963
    %v7965 = vsel %vm6887, %v7755, 0.0
    %v7966 = vadd.f32 %v7964, %v7965
    %v7967 = vsel %vm6887, %v7756, 0.0
    %v7968 = vadd.f32 %v7966, %v7967
    %v7969 = vsel %vm6887, %v7757, 0.0
    %v7970 = vadd.f32 %v7968, %v7969
    %v7971 = vsel %vm6887, %v7758, 0.0
    %v7972 = vadd.f32 %v7970, %v7971
    %v7973 = vsel %vm6887, %v7759, 0.0
    %v7974 = vadd.f32 %v7972, %v7973
    %v7975 = vsel %vm6887, %v7760, 0.0
    %v7976 = vadd.f32 %v7974, %v7975
    %v7977 = vsel %vm6887, %v7761, 0.0
    %v7978 = vadd.f32 %v7976, %v7977
    %v7979 = vsel %vm6887, %v7762, 0.0
    %v7980 = vadd.f32 %v7978, %v7979
    %v7981 = vsel %vm6887, %v7763, 0.0
    %v7982 = vadd.f32 %v7980, %v7981
    %v7983 = vsel %vm6887, %v7764, 0.0
    %v7984 = vadd.f32 %v7982, %v7983
    %v7985 = vsel %vm6887, %v7765, 0.0
    %v7986 = vadd.f32 %v7984, %v7985
    %v7987 = vsel %vm6887, %v7766, 0.0
    %v7988 = vadd.f32 %v7986, %v7987
    %v7989 = vsel %vm6887, %v7767, 0.0
    %v7990 = vadd.f32 %v7988, %v7989
    %v7991 = vsel %vm6887, %v7768, 0.0
    %v7992 = vadd.f32 %v7990, %v7991
    %v7993 = vsel %vm6887, %v7769, 0.0
    %v7994 = vadd.f32 %v7992, %v7993
    %v7995 = vsel %vm6887, %v7770, 0.0
    %v7996 = vadd.f32 %v7994, %v7995
    %v7997 = vsel %vm6887, %v7771, 0.0
    %v7998 = vadd.f32 %v7996, %v7997
    %v7999 = vsel %vm6887, %v7772, 0.0
    %v8000 = vadd.f32 %v7998, %v7999
    %v8001 = vsel %vm6887, %v7773, 0.0
    %v8002 = vadd.f32 %v8000, %v8001
    %v8003 = vsel %vm6887, %v7774, 0.0
    %v8004 = vadd.f32 %v8002, %v8003
    %v8005 = vsel %vm6887, %v7775, 0.0
    %v8006 = vadd.f32 %v8004, %v8005
    %v8007 = vsel %vm6887, %v7776, 0.0
    %v8008 = vadd.f32 %v8006, %v8007
    %v8009 = vsel %vm6887, %v7777, 0.0
    %v8010 = vadd.f32 %v8008, %v8009
    %v8011 = vsel %vm6887, %v7778, 0.0
    %v8012 = vadd.f32 %v8010, %v8011
    %v8013 = vsel %vm6887, %v7779, 0.0
    %v8014 = vadd.f32 %v8012, %v8013
    %v8015 = vsel %vm6887, %v7780, 0.0
    %v8016 = vadd.f32 %v8014, %v8015
    %v8017 = vsel %vm6887, %v7781, 0.0
    %v8018 = vadd.f32 %v8016, %v8017
    %v8019 = vsel %vm6887, %v7782, 0.0
    %v8020 = vadd.f32 %v8018, %v8019
    %v8021 = vsel %vm6887, %v7783, 0.0
    %v8022 = vadd.f32 %v8020, %v8021
    %v8023 = vsel %vm6887, %v7784, 0.0
    %v8024 = vadd.f32 %v8022, %v8023
    %v8025 = vsel %vm6887, %v7785, 0.0
    %v8026 = vadd.f32 %v8024, %v8025
    %v8027 = vsel %vm6887, %v7786, 0.0
    %v8028 = vadd.f32 %v8026, %v8027
    %v8029 = vsel %vm6887, %v7787, 0.0
    %v8030 = vadd.f32 %v8028, %v8029
    %v8031 = vsel %vm6887, %v7788, 0.0
    %v8032 = vadd.f32 %v8030, %v8031
    %v8033 = vsel %vm6887, %v7789, 0.0
    %v8034 = vadd.f32 %v8032, %v8033
    %v8035 = vsel %vm6887, %v7790, 0.0
    %v8036 = vadd.f32 %v8034, %v8035
    %v8037 = vsel %vm6887, %v7791, 0.0
    %v8038 = vadd.f32 %v8036, %v8037
    %v8039 = vsel %vm6887, %v7792, 0.0
    %v8040 = vadd.f32 %v8038, %v8039
    %v8041 = vsel %vm6887, %v7793, 0.0
    %v8042 = vadd.f32 %v8040, %v8041
    %v8043 = vsel %vm6887, %v7794, 0.0
    %v8044 = vadd.f32 %v8042, %v8043
    %v8045 = vsel %vm6887, %v7795, 0.0
    %v8046 = vadd.f32 %v8044, %v8045
    %v8047 = vsel %vm6887, %v7796, 0.0
    %v8048 = vadd.f32 %v8046, %v8047
    %v8049 = vsel %vm6887, %v7797, 0.0
    %v8050 = vadd.f32 %v8048, %v8049
    %v8051 = vsel %vm6887, %v7798, 0.0
    %v8052 = vadd.f32 %v8050, %v8051
    %v8053 = vsel %vm6887, %v7799, 0.0
    %v8054 = vadd.f32 %v8052, %v8053
    %8055 = vadd.xlane.f32.xlu0 %v8054
    %v8056 = vpop.xlane.xlu0 %8055
    %v8057 = vrot.slane %v8056, 4
    %v8058 = vadd.f32 %v8056, %v8057
    %v8059 = vrot.slane %v8058, 2
    %v8060 = vadd.f32 %v8058, %v8059
    %v8061 = vrot.slane %v8060, 1
    %v8062 = vadd.f32 %v8060, %v8061
    %s8063 = vtos %v8062
    %v8064 = vlaneseq
    %v8065 = vshrl.u32 %v8064, 7
    %v8066 = vlaneseq
    %v8067 = vand.u32 %v8066, 127
    %vm8068 = vcmp.eq.s32.totalorder %v8065, 0
    %vm8069 = vcmp.eq.s32.totalorder %v8067, 0
    %vm8070 = vmand %vm8068, %vm8069
    %v8071 = vstv %s7151
    %v8072 = vsel %vm8070, %v8071, 0.0
    %vm8073 = vcmp.eq.s32.totalorder %v8067, 1
    %vm8074 = vmand %vm8068, %vm8073
    %v8075 = vstv %s7415
    %v8076 = vsel %vm8074, %v8075, %v8072
    %vm8077 = vcmp.eq.s32.totalorder %v8067, 2
    %vm8078 = vmand %vm8068, %vm8077
    %v8079 = vstv %s8063
    %v8080 = vsel %vm8078, %v8079, %v8076
    %8081 = vst [vmem:[#allocation6] sm:$0xff] %v8080
    // Predicated region
    $region38: #{tpu_custom_call.1} parent=1 // pred_check
      _
    $region39: #{tpu_custom_call.1} parent=1 // pred_check_branch
      %8083 = sbr.rel (0) target = $region41
    $region40: #{tpu_custom_call.1} parent=1 // pred_region
      %s8085 = ssub.s32 128, 128
      %8086 = vsyncadd [#allocation5], %s8085
      %s8088 = sshll.u32 [#allocation6], 4
      %s8089 = int_to_ptr.vmem [resolvable:$true] %s8088
      %8091 = dma.vmem_to_hbm [thread:$0]  %s8089, 128, %s8, [#allocation5]
    $region41: #{tpu_custom_call.1} parent=1 // pred_fallthru
      _
    // Predicated region
    $region42: #{tpu_custom_call.1} parent=1 // pred_check
      _
    $region43: #{tpu_custom_call.1} parent=1 // pred_check_branch
      %8093 = sbr.rel (0) target = $region45
    $region44: #{tpu_custom_call.1} parent=1 // pred_region
      %8094 = dma.done [#allocation5], 128
    $region45: #{tpu_custom_call.1} parent=1 // pred_fallthru
      _
    %8095 = vsyncpa [#allocation4], 1
    %8096 = vsyncpa [#allocation5], 1

</llo_original>
